<compile_context>
chip_gen: v7x
topology: tpu7x:2x2x1
jax: 0.10.0
libtpu: 0.0.40
codegen_flags: <defaults>
</compile_context>

<pallas_src>
import math

import jax
import jax.numpy as jnp
from jax import lax
from jax.experimental import pallas as pl
from jax.experimental.pallas import tpu as pltpu

D_MODEL = 30
N_HEADS = 3
N_OUTPUT = 4
N_BLOCKS = 10
HIDDEN = 200
D_HEAD = D_MODEL // N_HEADS


# ----------------------------- kernel helpers (traced inside the kernel) ------------
def _layer_norm(x, ld, inv_ld):
    # Matches the PyTorch layer_norm(x, L):
    #   mean = sum(x) / (L * D);  std = sqrt(sum((x - mean)^2)) / (L * D)
    s = jnp.sum(jnp.sum(x, axis=2, keepdims=True), axis=1, keepdims=True)  # (BB,1,1)
    mean = s * inv_ld
    xc = x - mean
    ss = jnp.sum(jnp.sum(xc * xc, axis=2, keepdims=True), axis=1, keepdims=True)
    return xc * (ld * lax.rsqrt(ss))          # 1/std = (L*D) * rsqrt(ss)  (EUP rsqrt)


def _swish(x):
    return x * jax.nn.sigmoid(x)


# ----------------------------------- Pallas kernel ----------------------------------
def transformer_kernel(x_ref, L_ref, wqkv_ref, bq_ref, w1_ref, w2_ref,
                       e1_ref, e2_ref, mask_ref, out_ref):
    x = x_ref[...]                              # (BB, T, D) f32 residual stream
    L3 = L_ref[...]                             # (BB, 1, 1)
    T = x.shape[1]

    ld = L3 * float(D_MODEL)                    # hoisted LN / pooling constants
    inv_ld = pl.reciprocal(ld, approx=True)
    inv_lt = pl.reciprocal(L3 * float(T), approx=True)
    # per-head column masks (head h owns columns h::N_HEADS), hoisted out of the loop
    ms = [mask_ref[h] for h in range(N_HEADS)]  # each (1, 1, D) f32

    for blk in range(N_BLOCKS):
        # ---------------- multi-head attention ----------------
        # Fused QKV projection: ONE (BB*T, D) x (D, 3D) bf16 MXU matmul per block.
        # 1/sqrt(D) is folded into the Wq slice / Bq at pack time.
        qkv = jnp.einsum('btd,de->bte', x.astype(jnp.bfloat16), wqkv_ref[blk],
                         preferred_element_type=jnp.float32)       # (BB, T, 3D) f32
        q = qkv[:, :, 0:D_MODEL] + bq_ref[blk]                     # (BB, T, D)
        k = qkv[:, :, D_MODEL:2 * D_MODEL]
        v = qkv[:, :, 2 * D_MODEL:3 * D_MODEL]

        # Stack the masked Qs of all heads along the sublane (row) axis so the whole
        # attention is 2 matmuls: one score matmul, one context matmul.
        qs = jnp.concatenate([q * ms[h] for h in range(N_HEADS)], axis=1)  # (BB,3T,D)
        s = jnp.einsum('bid,bjd->bij', qs.astype(jnp.bfloat16),
                       k.astype(jnp.bfloat16),
                       preferred_element_type=jnp.float32)         # (BB, 3T, T)
        s = s - jnp.max(s, axis=2, keepdims=True)                  # softmax over keys
        p = jnp.exp(s)
        p = p * pl.reciprocal(jnp.sum(p, axis=2, keepdims=True), approx=True)
        ctx = jnp.einsum('bij,bjd->bid', p.astype(jnp.bfloat16),
                         v.astype(jnp.bfloat16),
                         preferred_element_type=jnp.float32)       # (BB, 3T, D)

        # Recombine heads: keep head-h output columns from its T-row group.
        merged = ctx[:, 0:T, :] * ms[0]
        for h in range(1, N_HEADS):
            merged = merged + ctx[:, h * T:(h + 1) * T, :] * ms[h]

        x = merged + x
        x = _layer_norm(x, ld, inv_ld)

        # ---------------- feed-forward ----------------
        h1 = jnp.einsum('btd,de->bte', x.astype(jnp.bfloat16), w1_ref[blk],
                        preferred_element_type=jnp.float32)
        h1 = _swish(h1)
        x = jnp.einsum('bte,ed->btd', h1.astype(jnp.bfloat16), w2_ref[blk],
                       preferred_element_type=jnp.float32) + x
        x = _layer_norm(x, ld, inv_ld)
        # TODO(synk): F.dropout(p=0.1) in training mode is stochastic; the eval
        # (training=False) path is implemented here.

    # ---------------- pooling + output head ----------------
    pooled = jnp.sum(x, axis=1, keepdims=True) * inv_lt                 # (BB,1,D)
    hdn = _swish(jnp.einsum('bod,dk->bok', pooled.astype(jnp.bfloat16), e1_ref[...],
                            preferred_element_type=jnp.float32))        # (BB,1,200)
    out_ref[...] = jnp.einsum('bok,kn->bon', hdn.astype(jnp.bfloat16), e2_ref[...],
                              preferred_element_type=jnp.float32)       # (BB,1,4)


# ----------------------------------- glue / wrapper ----------------------------------
def make_params(key):
    ks = jax.random.split(key, 8)

    def rand(k, shape, scl):
        return jax.random.normal(k, shape, dtype=jnp.float32) * scl

    return dict(
        Wq=rand(ks[0], (N_BLOCKS, D_MODEL, D_MODEL), 0.01),
        Bq=rand(ks[1], (N_BLOCKS, 1, D_MODEL), 0.01),
        Wk=rand(ks[2], (N_BLOCKS, D_MODEL, D_MODEL), 0.01),
        Wv=rand(ks[3], (N_BLOCKS, D_MODEL, D_MODEL), 0.01),
        W1=rand(ks[4], (N_BLOCKS, D_MODEL, D_MODEL), 0.01),
        W2=rand(ks[5], (N_BLOCKS, D_MODEL, D_MODEL), 0.01),
        E1=rand(ks[6], (D_MODEL, HIDDEN), 1.0),
        E2=rand(ks[7], (HIDDEN, N_OUTPUT), 1.0),
    )


def pack_params(params):
    """One-time packing (outside the per-call jit path):
      * fold 1/sqrt(D) into Wq / Bq,
      * fuse Wq|Wk|Wv into one (D, 3D) weight per block,
      * cast all matmul weights to bf16 (single-pass MXU on every TPU generation),
      * precompute per-head column masks (head h owns columns h::N_HEADS)."""
    scale = 1.0 / math.sqrt(D_MODEL)
    col = jnp.arange(D_MODEL)
    masks = jnp.stack(
        [(col % N_HEADS == h).astype(jnp.float32) for h in range(N_HEADS)]
    ).reshape(N_HEADS, 1, 1, D_MODEL)
    wqkv = jnp.concatenate(
        [params['Wq'] * scale, params['Wk'], params['Wv']], axis=-1)   # (10, 30, 90)
    return dict(
        Wqkv=wqkv.astype(jnp.bfloat16),
        Bq=(params['Bq'] * scale).astype(jnp.float32),    # added in f32 after the matmul
        W1=params['W1'].astype(jnp.bfloat16),
        W2=params['W2'].astype(jnp.bfloat16),
        E1=params['E1'].astype(jnp.bfloat16),
        E2=params['E2'].astype(jnp.bfloat16),
        masks=masks,
    )


def _choose_batch_steps(B):
    """v7x has 2 TensorCores/chip -> split the batch across 2 'parallel' grid steps.
    v5e/v6e are single-TC -> one grid step with the whole batch flattened into the
    MXU M dimension (fewer, larger matmuls; no per-step overhead)."""
    kind = ""
    try:
        kind = jax.devices()[0].device_kind.lower()
    except Exception:
        pass
    if ("v7" in kind) and B >= 2 and B % 2 == 0:
        return 2
    return 1


@jax.jit
def transformer_forward(x, L, packed):
    B, T, D = x.shape
    assert D == D_MODEL
    L3 = L.reshape(B, 1, 1).astype(jnp.float32)

    steps = _choose_batch_steps(B)      # trace-time Python; static under jit
    BB = B // steps                     # batch items per grid step

    def full_spec(a):
        nd = a.ndim
        return pl.BlockSpec(a.shape, lambda i, nd=nd: (0,) * nd)   # resident weights

    weights = (packed['Wqkv'], packed['Bq'], packed['W1'], packed['W2'],
               packed['E1'], packed['E2'], packed['masks'])

    out = pl.pallas_call(
        transformer_kernel,
        out_shape=jax.ShapeDtypeStruct((B, 1, N_OUTPUT), jnp.float32),
        grid=(steps,),
        in_specs=[pl.BlockSpec((BB, T, D), lambda i: (i, 0, 0)),      # x : batch block
                  pl.BlockSpec((BB, 1, 1), lambda i: (i, 0, 0))]      # L : per-batch scalar
                 + [full_spec(w) for w in weights],
        out_specs=pl.BlockSpec((BB, 1, N_OUTPUT), lambda i: (i, 0, 0)),
        compiler_params=pltpu.CompilerParams(
            dimension_semantics=("parallel",)),                       # megacore on v7x
    )(x, L3, *weights)
    return out[:, 0, :]


# ------------------------------ pure-JAX reference (for checking) --------------------
def reference_forward(x, L, params):
    B, T, D = x.shape
    H = N_HEADS
    PREC = lax.Precision.HIGHEST

    def layer_norm(x, L):
        mean = (jnp.einsum('bij->b', x) / (L.reshape(-1) * x.shape[2])).reshape(-1, 1, 1)
        std = (jnp.einsum('bij->b', (x - mean) ** 2) ** 0.5
               / (L.reshape(-1) * x.shape[2])).reshape(-1, 1, 1)
        return (x - mean) / std

    def swish(v):
        return v * jax.nn.sigmoid(v)

    for blk in range(N_BLOCKS):
        Wq, Bq = params['Wq'][blk], params['Bq'][blk]
        Wk, Wv = params['Wk'][blk], params['Wv'][blk]
        W1, W2 = params['W1'][blk], params['W2'][blk]
        Q = jnp.matmul(x, Wq, precision=PREC) + Bq
        K = jnp.matmul(x, Wk, precision=PREC)
        V = jnp.matmul(x, Wv, precision=PREC)
        Q = Q.reshape(B, T, D // H, H)
        K = K.reshape(B, T, D // H, H)
        V = V.reshape(B, T, D // H, H)
        s = jnp.einsum('bidh,bjdh->bijh', Q, K, precision=PREC) / math.sqrt(D)
        p = jax.nn.softmax(s, axis=2)
        a = jnp.einsum('bijh,bjdh->bidh', p, V, precision=PREC).reshape(B, T, D)
        x = a + x
        x = layer_norm(x, L)
        x = jnp.matmul(swish(jnp.matmul(x, W1, precision=PREC)), W2, precision=PREC) + x
        x = layer_norm(x, L)

    pooled = jnp.einsum('bjk->bk', x) / (L.reshape(-1, 1) * x.shape[1])
    h = swish(jnp.matmul(pooled, params['E1'], precision=PREC))
    return jnp.matmul(h, params['E2'], precision=PREC)


if __name__ == "__main__":
    key = jax.random.PRNGKey(0)
    kx, kp = jax.random.split(key)

    B, T = 2, 8
    x = jax.random.normal(kx, (B, T, D_MODEL), dtype=jnp.float32)
    L = jnp.array([float(T), float(T - 2)], dtype=jnp.float32)   # per-batch length scalars
    params = make_params(kp)
    packed = pack_params(params)          # packed once, outside the jitted forward

    out = transformer_forward(x, L, packed)
    out = jax.block_until_ready(out)

    ref = reference_forward(x, L, params)
    assert out.shape == (B, N_OUTPUT)
    assert bool(jnp.all(jnp.isfinite(out)))
    err = float(jnp.max(jnp.abs(out - ref)))
    # Kernel uses single-pass bf16 MXU + approx EUP reciprocals; reference is HIGHEST
    # precision.  Branch contributions are small relative to the f32 residual stream,
    # so the 5e-2 relative tolerance holds.
    tol = 5e-2 * (1.0 + float(jnp.max(jnp.abs(ref))))
    assert err < tol, f"kernel/reference mismatch: max|diff|={err} tol={tol}"

    print("KERNEL_OK")
</pallas_src>

<mosaic_0001>
module attributes {stable_mosaic.version = 11 : i64} {
  func.func @transformer_kernel(%arg0: i32, %arg1: memref<2x8x30xf32, #tpu.memory_space<vmem>>, %arg2: memref<2x1x1xf32, #tpu.memory_space<vmem>>, %arg3: memref<10x30x90xbf16, #tpu.memory_space<vmem>>, %arg4: memref<10x1x30xf32, #tpu.memory_space<vmem>>, %arg5: memref<10x30x30xbf16, #tpu.memory_space<vmem>>, %arg6: memref<10x30x30xbf16, #tpu.memory_space<vmem>>, %arg7: memref<30x200xbf16, #tpu.memory_space<vmem>>, %arg8: memref<200x4xbf16, #tpu.memory_space<vmem>>, %arg9: memref<3x1x1x30xf32, #tpu.memory_space<vmem>>, %arg10: memref<2x1x4xf32, #tpu.memory_space<vmem>>) attributes {dimension_semantics = [#tpu.dimension_semantics<parallel>], iteration_bounds = array<i64: 1>, scalar_prefetch = 0 : i64, scratch_operands = 0 : i64, tpu.core_type = #tpu.core_type<tc>, window_params = [{transform_indices = @transform_0, window_bounds = array<i64: 2, 8, 30>}, {transform_indices = @transform_1, window_bounds = array<i64: 2, 1, 1>}, {pipeline_mode = #tpu.pipeline_mode<synchronous>, transform_indices = @transform_2, window_bounds = array<i64: 10, 30, 90>}, {pipeline_mode = #tpu.pipeline_mode<synchronous>, transform_indices = @transform_3, window_bounds = array<i64: 10, 1, 30>}, {pipeline_mode = #tpu.pipeline_mode<synchronous>, transform_indices = @transform_4, window_bounds = array<i64: 10, 30, 30>}, {pipeline_mode = #tpu.pipeline_mode<synchronous>, transform_indices = @transform_5, window_bounds = array<i64: 10, 30, 30>}, {pipeline_mode = #tpu.pipeline_mode<synchronous>, transform_indices = @transform_6, window_bounds = array<i64: 30, 200>}, {pipeline_mode = #tpu.pipeline_mode<synchronous>, transform_indices = @transform_7, window_bounds = array<i64: 200, 4>}, {pipeline_mode = #tpu.pipeline_mode<synchronous>, transform_indices = @transform_8, window_bounds = array<i64: 3, 1, 1, 30>}, {transform_indices = @transform_9, window_bounds = array<i64: 2, 1, 4>}]} {
    %c0 = arith.constant 0 : index
    %c0_0 = arith.constant 0 : index
    %c0_1 = arith.constant 0 : index
    %0 = vector.load %arg1[%c0, %c0_0, %c0_1] : memref<2x8x30xf32, #tpu.memory_space<vmem>>, vector<2x8x30xf32>
    %c0_2 = arith.constant 0 : index
    %c0_3 = arith.constant 0 : index
    %c0_4 = arith.constant 0 : index
    %1 = vector.load %arg2[%c0_2, %c0_3, %c0_4] : memref<2x1x1xf32, #tpu.memory_space<vmem>>, vector<2x1x1xf32>
    %cst = arith.constant 3.000000e+01 : f32
    %2 = vector.broadcast %cst : f32 to vector<2x1x1xf32>
    %3 = arith.mulf %1, %2 : vector<2x1x1xf32>
    %4 = tpu.reciprocal %3 {approx = true} : vector<2x1x1xf32> -> vector<2x1x1xf32>
    %cst_5 = arith.constant 8.000000e+00 : f32
    %5 = vector.broadcast %cst_5 : f32 to vector<2x1x1xf32>
    %6 = arith.mulf %1, %5 : vector<2x1x1xf32>
    %7 = tpu.reciprocal %6 {approx = true} : vector<2x1x1xf32> -> vector<2x1x1xf32>
    %c0_6 = arith.constant 0 : index
    %c0_7 = arith.constant 0 : index
    %c0_8 = arith.constant 0 : index
    %c0_9 = arith.constant 0 : index
    %8 = vector.load %arg9[%c0_6, %c0_7, %c0_8, %c0_9] : memref<3x1x1x30xf32, #tpu.memory_space<vmem>>, vector<1x1x1x30xf32>
    %9 = vector.shape_cast %8 : vector<1x1x1x30xf32> to vector<1x1x30xf32>
    %c1 = arith.constant 1 : index
    %c0_10 = arith.constant 0 : index
    %c0_11 = arith.constant 0 : index
    %c0_12 = arith.constant 0 : index
    %10 = vector.load %arg9[%c1, %c0_10, %c0_11, %c0_12] : memref<3x1x1x30xf32, #tpu.memory_space<vmem>>, vector<1x1x1x30xf32>
    %11 = vector.shape_cast %10 : vector<1x1x1x30xf32> to vector<1x1x30xf32>
    %c2 = arith.constant 2 : index
    %c0_13 = arith.constant 0 : index
    %c0_14 = arith.constant 0 : index
    %c0_15 = arith.constant 0 : index
    %12 = vector.load %arg9[%c2, %c0_13, %c0_14, %c0_15] : memref<3x1x1x30xf32, #tpu.memory_space<vmem>>, vector<1x1x1x30xf32>
    %13 = vector.shape_cast %12 : vector<1x1x1x30xf32> to vector<1x1x30xf32>
    %14 = arith.truncf %0 : vector<2x8x30xf32> to vector<2x8x30xbf16>
    %c0_16 = arith.constant 0 : index
    %c0_17 = arith.constant 0 : index
    %c0_18 = arith.constant 0 : index
    %15 = vector.load %arg3[%c0_16, %c0_17, %c0_18] : memref<10x30x90xbf16, #tpu.memory_space<vmem>>, vector<1x30x90xbf16>
    %16 = vector.shape_cast %15 : vector<1x30x90xbf16> to vector<30x90xbf16>
    "tpu.trace_start"() <{level = 10 : i32, message = "btd,de->bte"}> : () -> ()
    %cst_19 = arith.constant dense<0.000000e+00> : vector<2x8x90xf32>
    %17 = tpu.matmul %14, %16, %cst_19 {dimension_numbers = #tpu.dot_dimension_numbers<[2], [0], [0, 1], [1], [0, 0, 0, 1, 1, 1], [], []>} : vector<2x8x30xbf16>, vector<30x90xbf16>, vector<2x8x90xf32> -> vector<2x8x90xf32>
    "tpu.trace_stop"() : () -> ()
    %18 = vector.extract_strided_slice %17 {offsets = [0, 0, 0], sizes = [2, 8, 30], strides = [1, 1, 1]} : vector<2x8x90xf32> to vector<2x8x30xf32>
    %c0_20 = arith.constant 0 : index
    %c0_21 = arith.constant 0 : index
    %c0_22 = arith.constant 0 : index
    %19 = vector.load %arg4[%c0_20, %c0_21, %c0_22] : memref<10x1x30xf32, #tpu.memory_space<vmem>>, vector<1x1x30xf32>
    %20 = vector.shape_cast %19 : vector<1x1x30xf32> to vector<1x30xf32>
    %21 = vector.shape_cast %20 : vector<1x30xf32> to vector<1x1x30xf32>
    %22 = vector.broadcast %21 : vector<1x1x30xf32> to vector<2x8x30xf32>
    %23 = arith.addf %18, %22 : vector<2x8x30xf32>
    %24 = vector.extract_strided_slice %17 {offsets = [0, 0, 30], sizes = [2, 8, 30], strides = [1, 1, 1]} : vector<2x8x90xf32> to vector<2x8x30xf32>
    %25 = vector.extract_strided_slice %17 {offsets = [0, 0, 60], sizes = [2, 8, 30], strides = [1, 1, 1]} : vector<2x8x90xf32> to vector<2x8x30xf32>
    %26 = vector.broadcast %9 : vector<1x1x30xf32> to vector<2x8x30xf32>
    %27 = arith.mulf %23, %26 : vector<2x8x30xf32>
    %28 = vector.broadcast %11 : vector<1x1x30xf32> to vector<2x8x30xf32>
    %29 = arith.mulf %23, %28 : vector<2x8x30xf32>
    %30 = vector.broadcast %13 : vector<1x1x30xf32> to vector<2x8x30xf32>
    %31 = arith.mulf %23, %30 : vector<2x8x30xf32>
    %32 = tpu.concatenate %27, %29, %31 in 1 : vector<2x8x30xf32>, vector<2x8x30xf32>, vector<2x8x30xf32> -> vector<2x24x30xf32>
    %33 = arith.truncf %32 : vector<2x24x30xf32> to vector<2x24x30xbf16>
    %34 = arith.truncf %24 : vector<2x8x30xf32> to vector<2x8x30xbf16>
    "tpu.trace_start"() <{level = 10 : i32, message = "bid,bjd->bij"}> : () -> ()
    %cst_23 = arith.constant dense<0.000000e+00> : vector<2x24x8xf32>
    %35 = tpu.matmul %33, %34, %cst_23 {dimension_numbers = #tpu.dot_dimension_numbers<[2], [2], [1], [1], [0, 0, 0, 1, 1, 1], [0], [0]>} : vector<2x24x30xbf16>, vector<2x8x30xbf16>, vector<2x24x8xf32> -> vector<2x24x8xf32>
    "tpu.trace_stop"() : () -> ()
    %cst_24 = arith.constant dense<0xFF800000> : vector<2x24xf32>
    %36 = vector.multi_reduction <maximumf>, %35, %cst_24 [2] : vector<2x24x8xf32> to vector<2x24xf32>
    %37 = vector.shape_cast %36 : vector<2x24xf32> to vector<2x24x1xf32>
    %38 = vector.broadcast %37 : vector<2x24x1xf32> to vector<2x24x8xf32>
    %39 = arith.subf %35, %38 : vector<2x24x8xf32>
    %40 = math.exp %39 : vector<2x24x8xf32>
    %cst_25 = arith.constant dense<0.000000e+00> : vector<2x24xf32>
    %41 = vector.multi_reduction <add>, %40, %cst_25 [2] : vector<2x24x8xf32> to vector<2x24xf32>
    %42 = vector.shape_cast %41 : vector<2x24xf32> to vector<2x24x1xf32>
    %43 = tpu.reciprocal %42 {approx = true} : vector<2x24x1xf32> -> vector<2x24x1xf32>
    %44 = vector.broadcast %43 : vector<2x24x1xf32> to vector<2x24x8xf32>
    %45 = arith.mulf %40, %44 : vector<2x24x8xf32>
    %46 = arith.truncf %45 : vector<2x24x8xf32> to vector<2x24x8xbf16>
    %47 = arith.truncf %25 : vector<2x8x30xf32> to vector<2x8x30xbf16>
    "tpu.trace_start"() <{level = 10 : i32, message = "bij,bjd->bid"}> : () -> ()
    %cst_26 = arith.constant dense<0.000000e+00> : vector<2x24x30xf32>
    %48 = tpu.matmul %46, %47, %cst_26 {dimension_numbers = #tpu.dot_dimension_numbers<[2], [1], [1], [2], [0, 0, 0, 1, 1, 2], [0], [0]>} : vector<2x24x8xbf16>, vector<2x8x30xbf16>, vector<2x24x30xf32> -> vector<2x24x30xf32>
    "tpu.trace_stop"() : () -> ()
    %49 = vector.extract_strided_slice %48 {offsets = [0, 0, 0], sizes = [2, 8, 30], strides = [1, 1, 1]} : vector<2x24x30xf32> to vector<2x8x30xf32>
    %50 = vector.broadcast %9 : vector<1x1x30xf32> to vector<2x8x30xf32>
    %51 = arith.mulf %49, %50 : vector<2x8x30xf32>
    %52 = vector.extract_strided_slice %48 {offsets = [0, 8, 0], sizes = [2, 8, 30], strides = [1, 1, 1]} : vector<2x24x30xf32> to vector<2x8x30xf32>
    %53 = vector.broadcast %11 : vector<1x1x30xf32> to vector<2x8x30xf32>
    %54 = arith.mulf %52, %53 : vector<2x8x30xf32>
    %55 = arith.addf %51, %54 : vector<2x8x30xf32>
    %56 = vector.extract_strided_slice %48 {offsets = [0, 16, 0], sizes = [2, 8, 30], strides = [1, 1, 1]} : vector<2x24x30xf32> to vector<2x8x30xf32>
    %57 = vector.broadcast %13 : vector<1x1x30xf32> to vector<2x8x30xf32>
    %58 = arith.mulf %56, %57 : vector<2x8x30xf32>
    %59 = arith.addf %55, %58 : vector<2x8x30xf32>
    %60 = arith.addf %59, %0 : vector<2x8x30xf32>
    %cst_27 = arith.constant dense<0.000000e+00> : vector<2x8xf32>
    %61 = vector.multi_reduction <add>, %60, %cst_27 [2] : vector<2x8x30xf32> to vector<2x8xf32>
    %62 = vector.shape_cast %61 : vector<2x8xf32> to vector<2x8x1xf32>
    %cst_28 = arith.constant dense<0.000000e+00> : vector<2x1xf32>
    %63 = vector.multi_reduction <add>, %62, %cst_28 [1] : vector<2x8x1xf32> to vector<2x1xf32>
    %64 = vector.shape_cast %63 : vector<2x1xf32> to vector<2x1x1xf32>
    %65 = arith.mulf %64, %4 : vector<2x1x1xf32>
    %66 = vector.broadcast %65 : vector<2x1x1xf32> to vector<2x8x30xf32>
    %67 = arith.subf %60, %66 : vector<2x8x30xf32>
    %68 = arith.mulf %67, %67 : vector<2x8x30xf32>
    %cst_29 = arith.constant dense<0.000000e+00> : vector<2x8xf32>
    %69 = vector.multi_reduction <add>, %68, %cst_29 [2] : vector<2x8x30xf32> to vector<2x8xf32>
    %70 = vector.shape_cast %69 : vector<2x8xf32> to vector<2x8x1xf32>
    %cst_30 = arith.constant dense<0.000000e+00> : vector<2x1xf32>
    %71 = vector.multi_reduction <add>, %70, %cst_30 [1] : vector<2x8x1xf32> to vector<2x1xf32>
    %72 = vector.shape_cast %71 : vector<2x1xf32> to vector<2x1x1xf32>
    %73 = math.rsqrt %72 : vector<2x1x1xf32>
    %74 = arith.mulf %3, %73 : vector<2x1x1xf32>
    %75 = vector.broadcast %74 : vector<2x1x1xf32> to vector<2x8x30xf32>
    %76 = arith.mulf %67, %75 : vector<2x8x30xf32>
    %77 = arith.truncf %76 : vector<2x8x30xf32> to vector<2x8x30xbf16>
    %c0_31 = arith.constant 0 : index
    %c0_32 = arith.constant 0 : index
    %c0_33 = arith.constant 0 : index
    %78 = vector.load %arg5[%c0_31, %c0_32, %c0_33] : memref<10x30x30xbf16, #tpu.memory_space<vmem>>, vector<1x30x30xbf16>
    %79 = vector.shape_cast %78 : vector<1x30x30xbf16> to vector<30x30xbf16>
    "tpu.trace_start"() <{level = 10 : i32, message = "btd,de->bte"}> : () -> ()
    %cst_34 = arith.constant dense<0.000000e+00> : vector<2x8x30xf32>
    %80 = tpu.matmul %77, %79, %cst_34 {dimension_numbers = #tpu.dot_dimension_numbers<[2], [0], [0, 1], [1], [0, 0, 0, 1, 1, 1], [], []>} : vector<2x8x30xbf16>, vector<30x30xbf16>, vector<2x8x30xf32> -> vector<2x8x30xf32>
    "tpu.trace_stop"() : () -> ()
    %81 = arith.negf %80 : vector<2x8x30xf32>
    %82 = math.exp %81 : vector<2x8x30xf32>
    %cst_35 = arith.constant 1.000000e+00 : f32
    %83 = vector.broadcast %cst_35 : f32 to vector<2x8x30xf32>
    %84 = arith.addf %83, %82 : vector<2x8x30xf32>
    %85 = arith.divf %83, %84 : vector<2x8x30xf32>
    %86 = arith.mulf %80, %85 : vector<2x8x30xf32>
    %87 = arith.truncf %86 : vector<2x8x30xf32> to vector<2x8x30xbf16>
    %c0_36 = arith.constant 0 : index
    %c0_37 = arith.constant 0 : index
    %c0_38 = arith.constant 0 : index
    %88 = vector.load %arg6[%c0_36, %c0_37, %c0_38] : memref<10x30x30xbf16, #tpu.memory_space<vmem>>, vector<1x30x30xbf16>
    %89 = vector.shape_cast %88 : vector<1x30x30xbf16> to vector<30x30xbf16>
    "tpu.trace_start"() <{level = 10 : i32, message = "bte,ed->btd"}> : () -> ()
    %cst_39 = arith.constant dense<0.000000e+00> : vector<2x8x30xf32>
    %90 = tpu.matmul %87, %89, %cst_39 {dimension_numbers = #tpu.dot_dimension_numbers<[2], [0], [0, 1], [1], [0, 0, 0, 1, 1, 1], [], []>} : vector<2x8x30xbf16>, vector<30x30xbf16>, vector<2x8x30xf32> -> vector<2x8x30xf32>
    "tpu.trace_stop"() : () -> ()
    %91 = arith.addf %90, %76 : vector<2x8x30xf32>
    %cst_40 = arith.constant dense<0.000000e+00> : vector<2x8xf32>
    %92 = vector.multi_reduction <add>, %91, %cst_40 [2] : vector<2x8x30xf32> to vector<2x8xf32>
    %93 = vector.shape_cast %92 : vector<2x8xf32> to vector<2x8x1xf32>
    %cst_41 = arith.constant dense<0.000000e+00> : vector<2x1xf32>
    %94 = vector.multi_reduction <add>, %93, %cst_41 [1] : vector<2x8x1xf32> to vector<2x1xf32>
    %95 = vector.shape_cast %94 : vector<2x1xf32> to vector<2x1x1xf32>
    %96 = arith.mulf %95, %4 : vector<2x1x1xf32>
    %97 = vector.broadcast %96 : vector<2x1x1xf32> to vector<2x8x30xf32>
    %98 = arith.subf %91, %97 : vector<2x8x30xf32>
    %99 = arith.mulf %98, %98 : vector<2x8x30xf32>
    %cst_42 = arith.constant dense<0.000000e+00> : vector<2x8xf32>
    %100 = vector.multi_reduction <add>, %99, %cst_42 [2] : vector<2x8x30xf32> to vector<2x8xf32>
    %101 = vector.shape_cast %100 : vector<2x8xf32> to vector<2x8x1xf32>
    %cst_43 = arith.constant dense<0.000000e+00> : vector<2x1xf32>
    %102 = vector.multi_reduction <add>, %101, %cst_43 [1] : vector<2x8x1xf32> to vector<2x1xf32>
    %103 = vector.shape_cast %102 : vector<2x1xf32> to vector<2x1x1xf32>
    %104 = math.rsqrt %103 : vector<2x1x1xf32>
    %105 = arith.mulf %3, %104 : vector<2x1x1xf32>
    %106 = vector.broadcast %105 : vector<2x1x1xf32> to vector<2x8x30xf32>
    %107 = arith.mulf %98, %106 : vector<2x8x30xf32>
    %108 = arith.truncf %107 : vector<2x8x30xf32> to vector<2x8x30xbf16>
    %c1_44 = arith.constant 1 : index
    %c0_45 = arith.constant 0 : index
    %c0_46 = arith.constant 0 : index
    %109 = vector.load %arg3[%c1_44, %c0_45, %c0_46] : memref<10x30x90xbf16, #tpu.memory_space<vmem>>, vector<1x30x90xbf16>
    %110 = vector.shape_cast %109 : vector<1x30x90xbf16> to vector<30x90xbf16>
    "tpu.trace_start"() <{level = 10 : i32, message = "btd,de->bte"}> : () -> ()
    %cst_47 = arith.constant dense<0.000000e+00> : vector<2x8x90xf32>
    %111 = tpu.matmul %108, %110, %cst_47 {dimension_numbers = #tpu.dot_dimension_numbers<[2], [0], [0, 1], [1], [0, 0, 0, 1, 1, 1], [], []>} : vector<2x8x30xbf16>, vector<30x90xbf16>, vector<2x8x90xf32> -> vector<2x8x90xf32>
    "tpu.trace_stop"() : () -> ()
    %112 = vector.extract_strided_slice %111 {offsets = [0, 0, 0], sizes = [2, 8, 30], strides = [1, 1, 1]} : vector<2x8x90xf32> to vector<2x8x30xf32>
    %c1_48 = arith.constant 1 : index
    %c0_49 = arith.constant 0 : index
    %c0_50 = arith.constant 0 : index
    %113 = vector.load %arg4[%c1_48, %c0_49, %c0_50] : memref<10x1x30xf32, #tpu.memory_space<vmem>>, vector<1x1x30xf32>
    %114 = vector.shape_cast %113 : vector<1x1x30xf32> to vector<1x30xf32>
    %115 = vector.shape_cast %114 : vector<1x30xf32> to vector<1x1x30xf32>
    %116 = vector.broadcast %115 : vector<1x1x30xf32> to vector<2x8x30xf32>
    %117 = arith.addf %112, %116 : vector<2x8x30xf32>
    %118 = vector.extract_strided_slice %111 {offsets = [0, 0, 30], sizes = [2, 8, 30], strides = [1, 1, 1]} : vector<2x8x90xf32> to vector<2x8x30xf32>
    %119 = vector.extract_strided_slice %111 {offsets = [0, 0, 60], sizes = [2, 8, 30], strides = [1, 1, 1]} : vector<2x8x90xf32> to vector<2x8x30xf32>
    %120 = vector.broadcast %9 : vector<1x1x30xf32> to vector<2x8x30xf32>
    %121 = arith.mulf %117, %120 : vector<2x8x30xf32>
    %122 = vector.broadcast %11 : vector<1x1x30xf32> to vector<2x8x30xf32>
    %123 = arith.mulf %117, %122 : vector<2x8x30xf32>
    %124 = vector.broadcast %13 : vector<1x1x30xf32> to vector<2x8x30xf32>
    %125 = arith.mulf %117, %124 : vector<2x8x30xf32>
    %126 = tpu.concatenate %121, %123, %125 in 1 : vector<2x8x30xf32>, vector<2x8x30xf32>, vector<2x8x30xf32> -> vector<2x24x30xf32>
    %127 = arith.truncf %126 : vector<2x24x30xf32> to vector<2x24x30xbf16>
    %128 = arith.truncf %118 : vector<2x8x30xf32> to vector<2x8x30xbf16>
    "tpu.trace_start"() <{level = 10 : i32, message = "bid,bjd->bij"}> : () -> ()
    %cst_51 = arith.constant dense<0.000000e+00> : vector<2x24x8xf32>
    %129 = tpu.matmul %127, %128, %cst_51 {dimension_numbers = #tpu.dot_dimension_numbers<[2], [2], [1], [1], [0, 0, 0, 1, 1, 1], [0], [0]>} : vector<2x24x30xbf16>, vector<2x8x30xbf16>, vector<2x24x8xf32> -> vector<2x24x8xf32>
    "tpu.trace_stop"() : () -> ()
    %cst_52 = arith.constant dense<0xFF800000> : vector<2x24xf32>
    %130 = vector.multi_reduction <maximumf>, %129, %cst_52 [2] : vector<2x24x8xf32> to vector<2x24xf32>
    %131 = vector.shape_cast %130 : vector<2x24xf32> to vector<2x24x1xf32>
    %132 = vector.broadcast %131 : vector<2x24x1xf32> to vector<2x24x8xf32>
    %133 = arith.subf %129, %132 : vector<2x24x8xf32>
    %134 = math.exp %133 : vector<2x24x8xf32>
    %cst_53 = arith.constant dense<0.000000e+00> : vector<2x24xf32>
    %135 = vector.multi_reduction <add>, %134, %cst_53 [2] : vector<2x24x8xf32> to vector<2x24xf32>
    %136 = vector.shape_cast %135 : vector<2x24xf32> to vector<2x24x1xf32>
    %137 = tpu.reciprocal %136 {approx = true} : vector<2x24x1xf32> -> vector<2x24x1xf32>
    %138 = vector.broadcast %137 : vector<2x24x1xf32> to vector<2x24x8xf32>
    %139 = arith.mulf %134, %138 : vector<2x24x8xf32>
    %140 = arith.truncf %139 : vector<2x24x8xf32> to vector<2x24x8xbf16>
    %141 = arith.truncf %119 : vector<2x8x30xf32> to vector<2x8x30xbf16>
    "tpu.trace_start"() <{level = 10 : i32, message = "bij,bjd->bid"}> : () -> ()
    %cst_54 = arith.constant dense<0.000000e+00> : vector<2x24x30xf32>
    %142 = tpu.matmul %140, %141, %cst_54 {dimension_numbers = #tpu.dot_dimension_numbers<[2], [1], [1], [2], [0, 0, 0, 1, 1, 2], [0], [0]>} : vector<2x24x8xbf16>, vector<2x8x30xbf16>, vector<2x24x30xf32> -> vector<2x24x30xf32>
    "tpu.trace_stop"() : () -> ()
    %143 = vector.extract_strided_slice %142 {offsets = [0, 0, 0], sizes = [2, 8, 30], strides = [1, 1, 1]} : vector<2x24x30xf32> to vector<2x8x30xf32>
    %144 = vector.broadcast %9 : vector<1x1x30xf32> to vector<2x8x30xf32>
    %145 = arith.mulf %143, %144 : vector<2x8x30xf32>
    %146 = vector.extract_strided_slice %142 {offsets = [0, 8, 0], sizes = [2, 8, 30], strides = [1, 1, 1]} : vector<2x24x30xf32> to vector<2x8x30xf32>
    %147 = vector.broadcast %11 : vector<1x1x30xf32> to vector<2x8x30xf32>
    %148 = arith.mulf %146, %147 : vector<2x8x30xf32>
    %149 = arith.addf %145, %148 : vector<2x8x30xf32>
    %150 = vector.extract_strided_slice %142 {offsets = [0, 16, 0], sizes = [2, 8, 30], strides = [1, 1, 1]} : vector<2x24x30xf32> to vector<2x8x30xf32>
    %151 = vector.broadcast %13 : vector<1x1x30xf32> to vector<2x8x30xf32>
    %152 = arith.mulf %150, %151 : vector<2x8x30xf32>
    %153 = arith.addf %149, %152 : vector<2x8x30xf32>
    %154 = arith.addf %153, %107 : vector<2x8x30xf32>
    %cst_55 = arith.constant dense<0.000000e+00> : vector<2x8xf32>
    %155 = vector.multi_reduction <add>, %154, %cst_55 [2] : vector<2x8x30xf32> to vector<2x8xf32>
    %156 = vector.shape_cast %155 : vector<2x8xf32> to vector<2x8x1xf32>
    %cst_56 = arith.constant dense<0.000000e+00> : vector<2x1xf32>
    %157 = vector.multi_reduction <add>, %156, %cst_56 [1] : vector<2x8x1xf32> to vector<2x1xf32>
    %158 = vector.shape_cast %157 : vector<2x1xf32> to vector<2x1x1xf32>
    %159 = arith.mulf %158, %4 : vector<2x1x1xf32>
    %160 = vector.broadcast %159 : vector<2x1x1xf32> to vector<2x8x30xf32>
    %161 = arith.subf %154, %160 : vector<2x8x30xf32>
    %162 = arith.mulf %161, %161 : vector<2x8x30xf32>
    %cst_57 = arith.constant dense<0.000000e+00> : vector<2x8xf32>
    %163 = vector.multi_reduction <add>, %162, %cst_57 [2] : vector<2x8x30xf32> to vector<2x8xf32>
    %164 = vector.shape_cast %163 : vector<2x8xf32> to vector<2x8x1xf32>
    %cst_58 = arith.constant dense<0.000000e+00> : vector<2x1xf32>
    %165 = vector.multi_reduction <add>, %164, %cst_58 [1] : vector<2x8x1xf32> to vector<2x1xf32>
    %166 = vector.shape_cast %165 : vector<2x1xf32> to vector<2x1x1xf32>
    %167 = math.rsqrt %166 : vector<2x1x1xf32>
    %168 = arith.mulf %3, %167 : vector<2x1x1xf32>
    %169 = vector.broadcast %168 : vector<2x1x1xf32> to vector<2x8x30xf32>
    %170 = arith.mulf %161, %169 : vector<2x8x30xf32>
    %171 = arith.truncf %170 : vector<2x8x30xf32> to vector<2x8x30xbf16>
    %c1_59 = arith.constant 1 : index
    %c0_60 = arith.constant 0 : index
    %c0_61 = arith.constant 0 : index
    %172 = vector.load %arg5[%c1_59, %c0_60, %c0_61] : memref<10x30x30xbf16, #tpu.memory_space<vmem>>, vector<1x30x30xbf16>
    %173 = vector.shape_cast %172 : vector<1x30x30xbf16> to vector<30x30xbf16>
    "tpu.trace_start"() <{level = 10 : i32, message = "btd,de->bte"}> : () -> ()
    %cst_62 = arith.constant dense<0.000000e+00> : vector<2x8x30xf32>
    %174 = tpu.matmul %171, %173, %cst_62 {dimension_numbers = #tpu.dot_dimension_numbers<[2], [0], [0, 1], [1], [0, 0, 0, 1, 1, 1], [], []>} : vector<2x8x30xbf16>, vector<30x30xbf16>, vector<2x8x30xf32> -> vector<2x8x30xf32>
    "tpu.trace_stop"() : () -> ()
    %175 = arith.negf %174 : vector<2x8x30xf32>
    %176 = math.exp %175 : vector<2x8x30xf32>
    %cst_63 = arith.constant 1.000000e+00 : f32
    %177 = vector.broadcast %cst_63 : f32 to vector<2x8x30xf32>
    %178 = arith.addf %177, %176 : vector<2x8x30xf32>
    %179 = arith.divf %177, %178 : vector<2x8x30xf32>
    %180 = arith.mulf %174, %179 : vector<2x8x30xf32>
    %181 = arith.truncf %180 : vector<2x8x30xf32> to vector<2x8x30xbf16>
    %c1_64 = arith.constant 1 : index
    %c0_65 = arith.constant 0 : index
    %c0_66 = arith.constant 0 : index
    %182 = vector.load %arg6[%c1_64, %c0_65, %c0_66] : memref<10x30x30xbf16, #tpu.memory_space<vmem>>, vector<1x30x30xbf16>
    %183 = vector.shape_cast %182 : vector<1x30x30xbf16> to vector<30x30xbf16>
    "tpu.trace_start"() <{level = 10 : i32, message = "bte,ed->btd"}> : () -> ()
    %cst_67 = arith.constant dense<0.000000e+00> : vector<2x8x30xf32>
    %184 = tpu.matmul %181, %183, %cst_67 {dimension_numbers = #tpu.dot_dimension_numbers<[2], [0], [0, 1], [1], [0, 0, 0, 1, 1, 1], [], []>} : vector<2x8x30xbf16>, vector<30x30xbf16>, vector<2x8x30xf32> -> vector<2x8x30xf32>
    "tpu.trace_stop"() : () -> ()
    %185 = arith.addf %184, %170 : vector<2x8x30xf32>
    %cst_68 = arith.constant dense<0.000000e+00> : vector<2x8xf32>
    %186 = vector.multi_reduction <add>, %185, %cst_68 [2] : vector<2x8x30xf32> to vector<2x8xf32>
    %187 = vector.shape_cast %186 : vector<2x8xf32> to vector<2x8x1xf32>
    %cst_69 = arith.constant dense<0.000000e+00> : vector<2x1xf32>
    %188 = vector.multi_reduction <add>, %187, %cst_69 [1] : vector<2x8x1xf32> to vector<2x1xf32>
    %189 = vector.shape_cast %188 : vector<2x1xf32> to vector<2x1x1xf32>
    %190 = arith.mulf %189, %4 : vector<2x1x1xf32>
    %191 = vector.broadcast %190 : vector<2x1x1xf32> to vector<2x8x30xf32>
    %192 = arith.subf %185, %191 : vector<2x8x30xf32>
    %193 = arith.mulf %192, %192 : vector<2x8x30xf32>
    %cst_70 = arith.constant dense<0.000000e+00> : vector<2x8xf32>
    %194 = vector.multi_reduction <add>, %193, %cst_70 [2] : vector<2x8x30xf32> to vector<2x8xf32>
    %195 = vector.shape_cast %194 : vector<2x8xf32> to vector<2x8x1xf32>
    %cst_71 = arith.constant dense<0.000000e+00> : vector<2x1xf32>
    %196 = vector.multi_reduction <add>, %195, %cst_71 [1] : vector<2x8x1xf32> to vector<2x1xf32>
    %197 = vector.shape_cast %196 : vector<2x1xf32> to vector<2x1x1xf32>
    %198 = math.rsqrt %197 : vector<2x1x1xf32>
    %199 = arith.mulf %3, %198 : vector<2x1x1xf32>
    %200 = vector.broadcast %199 : vector<2x1x1xf32> to vector<2x8x30xf32>
    %201 = arith.mulf %192, %200 : vector<2x8x30xf32>
    %202 = arith.truncf %201 : vector<2x8x30xf32> to vector<2x8x30xbf16>
    %c2_72 = arith.constant 2 : index
    %c0_73 = arith.constant 0 : index
    %c0_74 = arith.constant 0 : index
    %203 = vector.load %arg3[%c2_72, %c0_73, %c0_74] : memref<10x30x90xbf16, #tpu.memory_space<vmem>>, vector<1x30x90xbf16>
    %204 = vector.shape_cast %203 : vector<1x30x90xbf16> to vector<30x90xbf16>
    "tpu.trace_start"() <{level = 10 : i32, message = "btd,de->bte"}> : () -> ()
    %cst_75 = arith.constant dense<0.000000e+00> : vector<2x8x90xf32>
    %205 = tpu.matmul %202, %204, %cst_75 {dimension_numbers = #tpu.dot_dimension_numbers<[2], [0], [0, 1], [1], [0, 0, 0, 1, 1, 1], [], []>} : vector<2x8x30xbf16>, vector<30x90xbf16>, vector<2x8x90xf32> -> vector<2x8x90xf32>
    "tpu.trace_stop"() : () -> ()
    %206 = vector.extract_strided_slice %205 {offsets = [0, 0, 0], sizes = [2, 8, 30], strides = [1, 1, 1]} : vector<2x8x90xf32> to vector<2x8x30xf32>
    %c2_76 = arith.constant 2 : index
    %c0_77 = arith.constant 0 : index
    %c0_78 = arith.constant 0 : index
    %207 = vector.load %arg4[%c2_76, %c0_77, %c0_78] : memref<10x1x30xf32, #tpu.memory_space<vmem>>, vector<1x1x30xf32>
    %208 = vector.shape_cast %207 : vector<1x1x30xf32> to vector<1x30xf32>
    %209 = vector.shape_cast %208 : vector<1x30xf32> to vector<1x1x30xf32>
    %210 = vector.broadcast %209 : vector<1x1x30xf32> to vector<2x8x30xf32>
    %211 = arith.addf %206, %210 : vector<2x8x30xf32>
    %212 = vector.extract_strided_slice %205 {offsets = [0, 0, 30], sizes = [2, 8, 30], strides = [1, 1, 1]} : vector<2x8x90xf32> to vector<2x8x30xf32>
    %213 = vector.extract_strided_slice %205 {offsets = [0, 0, 60], sizes = [2, 8, 30], strides = [1, 1, 1]} : vector<2x8x90xf32> to vector<2x8x30xf32>
    %214 = vector.broadcast %9 : vector<1x1x30xf32> to vector<2x8x30xf32>
    %215 = arith.mulf %211, %214 : vector<2x8x30xf32>
    %216 = vector.broadcast %11 : vector<1x1x30xf32> to vector<2x8x30xf32>
    %217 = arith.mulf %211, %216 : vector<2x8x30xf32>
    %218 = vector.broadcast %13 : vector<1x1x30xf32> to vector<2x8x30xf32>
    %219 = arith.mulf %211, %218 : vector<2x8x30xf32>
    %220 = tpu.concatenate %215, %217, %219 in 1 : vector<2x8x30xf32>, vector<2x8x30xf32>, vector<2x8x30xf32> -> vector<2x24x30xf32>
    %221 = arith.truncf %220 : vector<2x24x30xf32> to vector<2x24x30xbf16>
    %222 = arith.truncf %212 : vector<2x8x30xf32> to vector<2x8x30xbf16>
    "tpu.trace_start"() <{level = 10 : i32, message = "bid,bjd->bij"}> : () -> ()
    %cst_79 = arith.constant dense<0.000000e+00> : vector<2x24x8xf32>
    %223 = tpu.matmul %221, %222, %cst_79 {dimension_numbers = #tpu.dot_dimension_numbers<[2], [2], [1], [1], [0, 0, 0, 1, 1, 1], [0], [0]>} : vector<2x24x30xbf16>, vector<2x8x30xbf16>, vector<2x24x8xf32> -> vector<2x24x8xf32>
    "tpu.trace_stop"() : () -> ()
    %cst_80 = arith.constant dense<0xFF800000> : vector<2x24xf32>
    %224 = vector.multi_reduction <maximumf>, %223, %cst_80 [2] : vector<2x24x8xf32> to vector<2x24xf32>
    %225 = vector.shape_cast %224 : vector<2x24xf32> to vector<2x24x1xf32>
    %226 = vector.broadcast %225 : vector<2x24x1xf32> to vector<2x24x8xf32>
    %227 = arith.subf %223, %226 : vector<2x24x8xf32>
    %228 = math.exp %227 : vector<2x24x8xf32>
    %cst_81 = arith.constant dense<0.000000e+00> : vector<2x24xf32>
    %229 = vector.multi_reduction <add>, %228, %cst_81 [2] : vector<2x24x8xf32> to vector<2x24xf32>
    %230 = vector.shape_cast %229 : vector<2x24xf32> to vector<2x24x1xf32>
    %231 = tpu.reciprocal %230 {approx = true} : vector<2x24x1xf32> -> vector<2x24x1xf32>
    %232 = vector.broadcast %231 : vector<2x24x1xf32> to vector<2x24x8xf32>
    %233 = arith.mulf %228, %232 : vector<2x24x8xf32>
    %234 = arith.truncf %233 : vector<2x24x8xf32> to vector<2x24x8xbf16>
    %235 = arith.truncf %213 : vector<2x8x30xf32> to vector<2x8x30xbf16>
    "tpu.trace_start"() <{level = 10 : i32, message = "bij,bjd->bid"}> : () -> ()
    %cst_82 = arith.constant dense<0.000000e+00> : vector<2x24x30xf32>
    %236 = tpu.matmul %234, %235, %cst_82 {dimension_numbers = #tpu.dot_dimension_numbers<[2], [1], [1], [2], [0, 0, 0, 1, 1, 2], [0], [0]>} : vector<2x24x8xbf16>, vector<2x8x30xbf16>, vector<2x24x30xf32> -> vector<2x24x30xf32>
    "tpu.trace_stop"() : () -> ()
    %237 = vector.extract_strided_slice %236 {offsets = [0, 0, 0], sizes = [2, 8, 30], strides = [1, 1, 1]} : vector<2x24x30xf32> to vector<2x8x30xf32>
    %238 = vector.broadcast %9 : vector<1x1x30xf32> to vector<2x8x30xf32>
    %239 = arith.mulf %237, %238 : vector<2x8x30xf32>
    %240 = vector.extract_strided_slice %236 {offsets = [0, 8, 0], sizes = [2, 8, 30], strides = [1, 1, 1]} : vector<2x24x30xf32> to vector<2x8x30xf32>
    %241 = vector.broadcast %11 : vector<1x1x30xf32> to vector<2x8x30xf32>
    %242 = arith.mulf %240, %241 : vector<2x8x30xf32>
    %243 = arith.addf %239, %242 : vector<2x8x30xf32>
    %244 = vector.extract_strided_slice %236 {offsets = [0, 16, 0], sizes = [2, 8, 30], strides = [1, 1, 1]} : vector<2x24x30xf32> to vector<2x8x30xf32>
    %245 = vector.broadcast %13 : vector<1x1x30xf32> to vector<2x8x30xf32>
    %246 = arith.mulf %244, %245 : vector<2x8x30xf32>
    %247 = arith.addf %243, %246 : vector<2x8x30xf32>
    %248 = arith.addf %247, %201 : vector<2x8x30xf32>
    %cst_83 = arith.constant dense<0.000000e+00> : vector<2x8xf32>
    %249 = vector.multi_reduction <add>, %248, %cst_83 [2] : vector<2x8x30xf32> to vector<2x8xf32>
    %250 = vector.shape_cast %249 : vector<2x8xf32> to vector<2x8x1xf32>
    %cst_84 = arith.constant dense<0.000000e+00> : vector<2x1xf32>
    %251 = vector.multi_reduction <add>, %250, %cst_84 [1] : vector<2x8x1xf32> to vector<2x1xf32>
    %252 = vector.shape_cast %251 : vector<2x1xf32> to vector<2x1x1xf32>
    %253 = arith.mulf %252, %4 : vector<2x1x1xf32>
    %254 = vector.broadcast %253 : vector<2x1x1xf32> to vector<2x8x30xf32>
    %255 = arith.subf %248, %254 : vector<2x8x30xf32>
    %256 = arith.mulf %255, %255 : vector<2x8x30xf32>
    %cst_85 = arith.constant dense<0.000000e+00> : vector<2x8xf32>
    %257 = vector.multi_reduction <add>, %256, %cst_85 [2] : vector<2x8x30xf32> to vector<2x8xf32>
    %258 = vector.shape_cast %257 : vector<2x8xf32> to vector<2x8x1xf32>
    %cst_86 = arith.constant dense<0.000000e+00> : vector<2x1xf32>
    %259 = vector.multi_reduction <add>, %258, %cst_86 [1] : vector<2x8x1xf32> to vector<2x1xf32>
    %260 = vector.shape_cast %259 : vector<2x1xf32> to vector<2x1x1xf32>
    %261 = math.rsqrt %260 : vector<2x1x1xf32>
    %262 = arith.mulf %3, %261 : vector<2x1x1xf32>
    %263 = vector.broadcast %262 : vector<2x1x1xf32> to vector<2x8x30xf32>
    %264 = arith.mulf %255, %263 : vector<2x8x30xf32>
    %265 = arith.truncf %264 : vector<2x8x30xf32> to vector<2x8x30xbf16>
    %c2_87 = arith.constant 2 : index
    %c0_88 = arith.constant 0 : index
    %c0_89 = arith.constant 0 : index
    %266 = vector.load %arg5[%c2_87, %c0_88, %c0_89] : memref<10x30x30xbf16, #tpu.memory_space<vmem>>, vector<1x30x30xbf16>
    %267 = vector.shape_cast %266 : vector<1x30x30xbf16> to vector<30x30xbf16>
    "tpu.trace_start"() <{level = 10 : i32, message = "btd,de->bte"}> : () -> ()
    %cst_90 = arith.constant dense<0.000000e+00> : vector<2x8x30xf32>
    %268 = tpu.matmul %265, %267, %cst_90 {dimension_numbers = #tpu.dot_dimension_numbers<[2], [0], [0, 1], [1], [0, 0, 0, 1, 1, 1], [], []>} : vector<2x8x30xbf16>, vector<30x30xbf16>, vector<2x8x30xf32> -> vector<2x8x30xf32>
    "tpu.trace_stop"() : () -> ()
    %269 = arith.negf %268 : vector<2x8x30xf32>
    %270 = math.exp %269 : vector<2x8x30xf32>
    %cst_91 = arith.constant 1.000000e+00 : f32
    %271 = vector.broadcast %cst_91 : f32 to vector<2x8x30xf32>
    %272 = arith.addf %271, %270 : vector<2x8x30xf32>
    %273 = arith.divf %271, %272 : vector<2x8x30xf32>
    %274 = arith.mulf %268, %273 : vector<2x8x30xf32>
    %275 = arith.truncf %274 : vector<2x8x30xf32> to vector<2x8x30xbf16>
    %c2_92 = arith.constant 2 : index
    %c0_93 = arith.constant 0 : index
    %c0_94 = arith.constant 0 : index
    %276 = vector.load %arg6[%c2_92, %c0_93, %c0_94] : memref<10x30x30xbf16, #tpu.memory_space<vmem>>, vector<1x30x30xbf16>
    %277 = vector.shape_cast %276 : vector<1x30x30xbf16> to vector<30x30xbf16>
    "tpu.trace_start"() <{level = 10 : i32, message = "bte,ed->btd"}> : () -> ()
    %cst_95 = arith.constant dense<0.000000e+00> : vector<2x8x30xf32>
    %278 = tpu.matmul %275, %277, %cst_95 {dimension_numbers = #tpu.dot_dimension_numbers<[2], [0], [0, 1], [1], [0, 0, 0, 1, 1, 1], [], []>} : vector<2x8x30xbf16>, vector<30x30xbf16>, vector<2x8x30xf32> -> vector<2x8x30xf32>
    "tpu.trace_stop"() : () -> ()
    %279 = arith.addf %278, %264 : vector<2x8x30xf32>
    %cst_96 = arith.constant dense<0.000000e+00> : vector<2x8xf32>
    %280 = vector.multi_reduction <add>, %279, %cst_96 [2] : vector<2x8x30xf32> to vector<2x8xf32>
    %281 = vector.shape_cast %280 : vector<2x8xf32> to vector<2x8x1xf32>
    %cst_97 = arith.constant dense<0.000000e+00> : vector<2x1xf32>
    %282 = vector.multi_reduction <add>, %281, %cst_97 [1] : vector<2x8x1xf32> to vector<2x1xf32>
    %283 = vector.shape_cast %282 : vector<2x1xf32> to vector<2x1x1xf32>
    %284 = arith.mulf %283, %4 : vector<2x1x1xf32>
    %285 = vector.broadcast %284 : vector<2x1x1xf32> to vector<2x8x30xf32>
    %286 = arith.subf %279, %285 : vector<2x8x30xf32>
    %287 = arith.mulf %286, %286 : vector<2x8x30xf32>
    %cst_98 = arith.constant dense<0.000000e+00> : vector<2x8xf32>
    %288 = vector.multi_reduction <add>, %287, %cst_98 [2] : vector<2x8x30xf32> to vector<2x8xf32>
    %289 = vector.shape_cast %288 : vector<2x8xf32> to vector<2x8x1xf32>
    %cst_99 = arith.constant dense<0.000000e+00> : vector<2x1xf32>
    %290 = vector.multi_reduction <add>, %289, %cst_99 [1] : vector<2x8x1xf32> to vector<2x1xf32>
    %291 = vector.shape_cast %290 : vector<2x1xf32> to vector<2x1x1xf32>
    %292 = math.rsqrt %291 : vector<2x1x1xf32>
    %293 = arith.mulf %3, %292 : vector<2x1x1xf32>
    %294 = vector.broadcast %293 : vector<2x1x1xf32> to vector<2x8x30xf32>
    %295 = arith.mulf %286, %294 : vector<2x8x30xf32>
    %296 = arith.truncf %295 : vector<2x8x30xf32> to vector<2x8x30xbf16>
    %c3 = arith.constant 3 : index
    %c0_100 = arith.constant 0 : index
    %c0_101 = arith.constant 0 : index
    %297 = vector.load %arg3[%c3, %c0_100, %c0_101] : memref<10x30x90xbf16, #tpu.memory_space<vmem>>, vector<1x30x90xbf16>
    %298 = vector.shape_cast %297 : vector<1x30x90xbf16> to vector<30x90xbf16>
    "tpu.trace_start"() <{level = 10 : i32, message = "btd,de->bte"}> : () -> ()
    %cst_102 = arith.constant dense<0.000000e+00> : vector<2x8x90xf32>
    %299 = tpu.matmul %296, %298, %cst_102 {dimension_numbers = #tpu.dot_dimension_numbers<[2], [0], [0, 1], [1], [0, 0, 0, 1, 1, 1], [], []>} : vector<2x8x30xbf16>, vector<30x90xbf16>, vector<2x8x90xf32> -> vector<2x8x90xf32>
    "tpu.trace_stop"() : () -> ()
    %300 = vector.extract_strided_slice %299 {offsets = [0, 0, 0], sizes = [2, 8, 30], strides = [1, 1, 1]} : vector<2x8x90xf32> to vector<2x8x30xf32>
    %c3_103 = arith.constant 3 : index
    %c0_104 = arith.constant 0 : index
    %c0_105 = arith.constant 0 : index
    %301 = vector.load %arg4[%c3_103, %c0_104, %c0_105] : memref<10x1x30xf32, #tpu.memory_space<vmem>>, vector<1x1x30xf32>
    %302 = vector.shape_cast %301 : vector<1x1x30xf32> to vector<1x30xf32>
    %303 = vector.shape_cast %302 : vector<1x30xf32> to vector<1x1x30xf32>
    %304 = vector.broadcast %303 : vector<1x1x30xf32> to vector<2x8x30xf32>
    %305 = arith.addf %300, %304 : vector<2x8x30xf32>
    %306 = vector.extract_strided_slice %299 {offsets = [0, 0, 30], sizes = [2, 8, 30], strides = [1, 1, 1]} : vector<2x8x90xf32> to vector<2x8x30xf32>
    %307 = vector.extract_strided_slice %299 {offsets = [0, 0, 60], sizes = [2, 8, 30], strides = [1, 1, 1]} : vector<2x8x90xf32> to vector<2x8x30xf32>
    %308 = vector.broadcast %9 : vector<1x1x30xf32> to vector<2x8x30xf32>
    %309 = arith.mulf %305, %308 : vector<2x8x30xf32>
    %310 = vector.broadcast %11 : vector<1x1x30xf32> to vector<2x8x30xf32>
    %311 = arith.mulf %305, %310 : vector<2x8x30xf32>
    %312 = vector.broadcast %13 : vector<1x1x30xf32> to vector<2x8x30xf32>
    %313 = arith.mulf %305, %312 : vector<2x8x30xf32>
    %314 = tpu.concatenate %309, %311, %313 in 1 : vector<2x8x30xf32>, vector<2x8x30xf32>, vector<2x8x30xf32> -> vector<2x24x30xf32>
    %315 = arith.truncf %314 : vector<2x24x30xf32> to vector<2x24x30xbf16>
    %316 = arith.truncf %306 : vector<2x8x30xf32> to vector<2x8x30xbf16>
    "tpu.trace_start"() <{level = 10 : i32, message = "bid,bjd->bij"}> : () -> ()
    %cst_106 = arith.constant dense<0.000000e+00> : vector<2x24x8xf32>
    %317 = tpu.matmul %315, %316, %cst_106 {dimension_numbers = #tpu.dot_dimension_numbers<[2], [2], [1], [1], [0, 0, 0, 1, 1, 1], [0], [0]>} : vector<2x24x30xbf16>, vector<2x8x30xbf16>, vector<2x24x8xf32> -> vector<2x24x8xf32>
    "tpu.trace_stop"() : () -> ()
    %cst_107 = arith.constant dense<0xFF800000> : vector<2x24xf32>
    %318 = vector.multi_reduction <maximumf>, %317, %cst_107 [2] : vector<2x24x8xf32> to vector<2x24xf32>
    %319 = vector.shape_cast %318 : vector<2x24xf32> to vector<2x24x1xf32>
    %320 = vector.broadcast %319 : vector<2x24x1xf32> to vector<2x24x8xf32>
    %321 = arith.subf %317, %320 : vector<2x24x8xf32>
    %322 = math.exp %321 : vector<2x24x8xf32>
    %cst_108 = arith.constant dense<0.000000e+00> : vector<2x24xf32>
    %323 = vector.multi_reduction <add>, %322, %cst_108 [2] : vector<2x24x8xf32> to vector<2x24xf32>
    %324 = vector.shape_cast %323 : vector<2x24xf32> to vector<2x24x1xf32>
    %325 = tpu.reciprocal %324 {approx = true} : vector<2x24x1xf32> -> vector<2x24x1xf32>
    %326 = vector.broadcast %325 : vector<2x24x1xf32> to vector<2x24x8xf32>
    %327 = arith.mulf %322, %326 : vector<2x24x8xf32>
    %328 = arith.truncf %327 : vector<2x24x8xf32> to vector<2x24x8xbf16>
    %329 = arith.truncf %307 : vector<2x8x30xf32> to vector<2x8x30xbf16>
    "tpu.trace_start"() <{level = 10 : i32, message = "bij,bjd->bid"}> : () -> ()
    %cst_109 = arith.constant dense<0.000000e+00> : vector<2x24x30xf32>
    %330 = tpu.matmul %328, %329, %cst_109 {dimension_numbers = #tpu.dot_dimension_numbers<[2], [1], [1], [2], [0, 0, 0, 1, 1, 2], [0], [0]>} : vector<2x24x8xbf16>, vector<2x8x30xbf16>, vector<2x24x30xf32> -> vector<2x24x30xf32>
    "tpu.trace_stop"() : () -> ()
    %331 = vector.extract_strided_slice %330 {offsets = [0, 0, 0], sizes = [2, 8, 30], strides = [1, 1, 1]} : vector<2x24x30xf32> to vector<2x8x30xf32>
    %332 = vector.broadcast %9 : vector<1x1x30xf32> to vector<2x8x30xf32>
    %333 = arith.mulf %331, %332 : vector<2x8x30xf32>
    %334 = vector.extract_strided_slice %330 {offsets = [0, 8, 0], sizes = [2, 8, 30], strides = [1, 1, 1]} : vector<2x24x30xf32> to vector<2x8x30xf32>
    %335 = vector.broadcast %11 : vector<1x1x30xf32> to vector<2x8x30xf32>
    %336 = arith.mulf %334, %335 : vector<2x8x30xf32>
    %337 = arith.addf %333, %336 : vector<2x8x30xf32>
    %338 = vector.extract_strided_slice %330 {offsets = [0, 16, 0], sizes = [2, 8, 30], strides = [1, 1, 1]} : vector<2x24x30xf32> to vector<2x8x30xf32>
    %339 = vector.broadcast %13 : vector<1x1x30xf32> to vector<2x8x30xf32>
    %340 = arith.mulf %338, %339 : vector<2x8x30xf32>
    %341 = arith.addf %337, %340 : vector<2x8x30xf32>
    %342 = arith.addf %341, %295 : vector<2x8x30xf32>
    %cst_110 = arith.constant dense<0.000000e+00> : vector<2x8xf32>
    %343 = vector.multi_reduction <add>, %342, %cst_110 [2] : vector<2x8x30xf32> to vector<2x8xf32>
    %344 = vector.shape_cast %343 : vector<2x8xf32> to vector<2x8x1xf32>
    %cst_111 = arith.constant dense<0.000000e+00> : vector<2x1xf32>
    %345 = vector.multi_reduction <add>, %344, %cst_111 [1] : vector<2x8x1xf32> to vector<2x1xf32>
    %346 = vector.shape_cast %345 : vector<2x1xf32> to vector<2x1x1xf32>
    %347 = arith.mulf %346, %4 : vector<2x1x1xf32>
    %348 = vector.broadcast %347 : vector<2x1x1xf32> to vector<2x8x30xf32>
    %349 = arith.subf %342, %348 : vector<2x8x30xf32>
    %350 = arith.mulf %349, %349 : vector<2x8x30xf32>
    %cst_112 = arith.constant dense<0.000000e+00> : vector<2x8xf32>
    %351 = vector.multi_reduction <add>, %350, %cst_112 [2] : vector<2x8x30xf32> to vector<2x8xf32>
    %352 = vector.shape_cast %351 : vector<2x8xf32> to vector<2x8x1xf32>
    %cst_113 = arith.constant dense<0.000000e+00> : vector<2x1xf32>
    %353 = vector.multi_reduction <add>, %352, %cst_113 [1] : vector<2x8x1xf32> to vector<2x1xf32>
    %354 = vector.shape_cast %353 : vector<2x1xf32> to vector<2x1x1xf32>
    %355 = math.rsqrt %354 : vector<2x1x1xf32>
    %356 = arith.mulf %3, %355 : vector<2x1x1xf32>
    %357 = vector.broadcast %356 : vector<2x1x1xf32> to vector<2x8x30xf32>
    %358 = arith.mulf %349, %357 : vector<2x8x30xf32>
    %359 = arith.truncf %358 : vector<2x8x30xf32> to vector<2x8x30xbf16>
    %c3_114 = arith.constant 3 : index
    %c0_115 = arith.constant 0 : index
    %c0_116 = arith.constant 0 : index
    %360 = vector.load %arg5[%c3_114, %c0_115, %c0_116] : memref<10x30x30xbf16, #tpu.memory_space<vmem>>, vector<1x30x30xbf16>
    %361 = vector.shape_cast %360 : vector<1x30x30xbf16> to vector<30x30xbf16>
    "tpu.trace_start"() <{level = 10 : i32, message = "btd,de->bte"}> : () -> ()
    %cst_117 = arith.constant dense<0.000000e+00> : vector<2x8x30xf32>
    %362 = tpu.matmul %359, %361, %cst_117 {dimension_numbers = #tpu.dot_dimension_numbers<[2], [0], [0, 1], [1], [0, 0, 0, 1, 1, 1], [], []>} : vector<2x8x30xbf16>, vector<30x30xbf16>, vector<2x8x30xf32> -> vector<2x8x30xf32>
    "tpu.trace_stop"() : () -> ()
    %363 = arith.negf %362 : vector<2x8x30xf32>
    %364 = math.exp %363 : vector<2x8x30xf32>
    %cst_118 = arith.constant 1.000000e+00 : f32
    %365 = vector.broadcast %cst_118 : f32 to vector<2x8x30xf32>
    %366 = arith.addf %365, %364 : vector<2x8x30xf32>
    %367 = arith.divf %365, %366 : vector<2x8x30xf32>
    %368 = arith.mulf %362, %367 : vector<2x8x30xf32>
    %369 = arith.truncf %368 : vector<2x8x30xf32> to vector<2x8x30xbf16>
    %c3_119 = arith.constant 3 : index
    %c0_120 = arith.constant 0 : index
    %c0_121 = arith.constant 0 : index
    %370 = vector.load %arg6[%c3_119, %c0_120, %c0_121] : memref<10x30x30xbf16, #tpu.memory_space<vmem>>, vector<1x30x30xbf16>
    %371 = vector.shape_cast %370 : vector<1x30x30xbf16> to vector<30x30xbf16>
    "tpu.trace_start"() <{level = 10 : i32, message = "bte,ed->btd"}> : () -> ()
    %cst_122 = arith.constant dense<0.000000e+00> : vector<2x8x30xf32>
    %372 = tpu.matmul %369, %371, %cst_122 {dimension_numbers = #tpu.dot_dimension_numbers<[2], [0], [0, 1], [1], [0, 0, 0, 1, 1, 1], [], []>} : vector<2x8x30xbf16>, vector<30x30xbf16>, vector<2x8x30xf32> -> vector<2x8x30xf32>
    "tpu.trace_stop"() : () -> ()
    %373 = arith.addf %372, %358 : vector<2x8x30xf32>
    %cst_123 = arith.constant dense<0.000000e+00> : vector<2x8xf32>
    %374 = vector.multi_reduction <add>, %373, %cst_123 [2] : vector<2x8x30xf32> to vector<2x8xf32>
    %375 = vector.shape_cast %374 : vector<2x8xf32> to vector<2x8x1xf32>
    %cst_124 = arith.constant dense<0.000000e+00> : vector<2x1xf32>
    %376 = vector.multi_reduction <add>, %375, %cst_124 [1] : vector<2x8x1xf32> to vector<2x1xf32>
    %377 = vector.shape_cast %376 : vector<2x1xf32> to vector<2x1x1xf32>
    %378 = arith.mulf %377, %4 : vector<2x1x1xf32>
    %379 = vector.broadcast %378 : vector<2x1x1xf32> to vector<2x8x30xf32>
    %380 = arith.subf %373, %379 : vector<2x8x30xf32>
    %381 = arith.mulf %380, %380 : vector<2x8x30xf32>
    %cst_125 = arith.constant dense<0.000000e+00> : vector<2x8xf32>
    %382 = vector.multi_reduction <add>, %381, %cst_125 [2] : vector<2x8x30xf32> to vector<2x8xf32>
    %383 = vector.shape_cast %382 : vector<2x8xf32> to vector<2x8x1xf32>
    %cst_126 = arith.constant dense<0.000000e+00> : vector<2x1xf32>
    %384 = vector.multi_reduction <add>, %383, %cst_126 [1] : vector<2x8x1xf32> to vector<2x1xf32>
    %385 = vector.shape_cast %384 : vector<2x1xf32> to vector<2x1x1xf32>
    %386 = math.rsqrt %385 : vector<2x1x1xf32>
    %387 = arith.mulf %3, %386 : vector<2x1x1xf32>
    %388 = vector.broadcast %387 : vector<2x1x1xf32> to vector<2x8x30xf32>
    %389 = arith.mulf %380, %388 : vector<2x8x30xf32>
    %390 = arith.truncf %389 : vector<2x8x30xf32> to vector<2x8x30xbf16>
    %c4 = arith.constant 4 : index
    %c0_127 = arith.constant 0 : index
    %c0_128 = arith.constant 0 : index
    %391 = vector.load %arg3[%c4, %c0_127, %c0_128] : memref<10x30x90xbf16, #tpu.memory_space<vmem>>, vector<1x30x90xbf16>
    %392 = vector.shape_cast %391 : vector<1x30x90xbf16> to vector<30x90xbf16>
    "tpu.trace_start"() <{level = 10 : i32, message = "btd,de->bte"}> : () -> ()
    %cst_129 = arith.constant dense<0.000000e+00> : vector<2x8x90xf32>
    %393 = tpu.matmul %390, %392, %cst_129 {dimension_numbers = #tpu.dot_dimension_numbers<[2], [0], [0, 1], [1], [0, 0, 0, 1, 1, 1], [], []>} : vector<2x8x30xbf16>, vector<30x90xbf16>, vector<2x8x90xf32> -> vector<2x8x90xf32>
    "tpu.trace_stop"() : () -> ()
    %394 = vector.extract_strided_slice %393 {offsets = [0, 0, 0], sizes = [2, 8, 30], strides = [1, 1, 1]} : vector<2x8x90xf32> to vector<2x8x30xf32>
    %c4_130 = arith.constant 4 : index
    %c0_131 = arith.constant 0 : index
    %c0_132 = arith.constant 0 : index
    %395 = vector.load %arg4[%c4_130, %c0_131, %c0_132] : memref<10x1x30xf32, #tpu.memory_space<vmem>>, vector<1x1x30xf32>
    %396 = vector.shape_cast %395 : vector<1x1x30xf32> to vector<1x30xf32>
    %397 = vector.shape_cast %396 : vector<1x30xf32> to vector<1x1x30xf32>
    %398 = vector.broadcast %397 : vector<1x1x30xf32> to vector<2x8x30xf32>
    %399 = arith.addf %394, %398 : vector<2x8x30xf32>
    %400 = vector.extract_strided_slice %393 {offsets = [0, 0, 30], sizes = [2, 8, 30], strides = [1, 1, 1]} : vector<2x8x90xf32> to vector<2x8x30xf32>
    %401 = vector.extract_strided_slice %393 {offsets = [0, 0, 60], sizes = [2, 8, 30], strides = [1, 1, 1]} : vector<2x8x90xf32> to vector<2x8x30xf32>
    %402 = vector.broadcast %9 : vector<1x1x30xf32> to vector<2x8x30xf32>
    %403 = arith.mulf %399, %402 : vector<2x8x30xf32>
    %404 = vector.broadcast %11 : vector<1x1x30xf32> to vector<2x8x30xf32>
    %405 = arith.mulf %399, %404 : vector<2x8x30xf32>
    %406 = vector.broadcast %13 : vector<1x1x30xf32> to vector<2x8x30xf32>
    %407 = arith.mulf %399, %406 : vector<2x8x30xf32>
    %408 = tpu.concatenate %403, %405, %407 in 1 : vector<2x8x30xf32>, vector<2x8x30xf32>, vector<2x8x30xf32> -> vector<2x24x30xf32>
    %409 = arith.truncf %408 : vector<2x24x30xf32> to vector<2x24x30xbf16>
    %410 = arith.truncf %400 : vector<2x8x30xf32> to vector<2x8x30xbf16>
    "tpu.trace_start"() <{level = 10 : i32, message = "bid,bjd->bij"}> : () -> ()
    %cst_133 = arith.constant dense<0.000000e+00> : vector<2x24x8xf32>
    %411 = tpu.matmul %409, %410, %cst_133 {dimension_numbers = #tpu.dot_dimension_numbers<[2], [2], [1], [1], [0, 0, 0, 1, 1, 1], [0], [0]>} : vector<2x24x30xbf16>, vector<2x8x30xbf16>, vector<2x24x8xf32> -> vector<2x24x8xf32>
    "tpu.trace_stop"() : () -> ()
    %cst_134 = arith.constant dense<0xFF800000> : vector<2x24xf32>
    %412 = vector.multi_reduction <maximumf>, %411, %cst_134 [2] : vector<2x24x8xf32> to vector<2x24xf32>
    %413 = vector.shape_cast %412 : vector<2x24xf32> to vector<2x24x1xf32>
    %414 = vector.broadcast %413 : vector<2x24x1xf32> to vector<2x24x8xf32>
    %415 = arith.subf %411, %414 : vector<2x24x8xf32>
    %416 = math.exp %415 : vector<2x24x8xf32>
    %cst_135 = arith.constant dense<0.000000e+00> : vector<2x24xf32>
    %417 = vector.multi_reduction <add>, %416, %cst_135 [2] : vector<2x24x8xf32> to vector<2x24xf32>
    %418 = vector.shape_cast %417 : vector<2x24xf32> to vector<2x24x1xf32>
    %419 = tpu.reciprocal %418 {approx = true} : vector<2x24x1xf32> -> vector<2x24x1xf32>
    %420 = vector.broadcast %419 : vector<2x24x1xf32> to vector<2x24x8xf32>
    %421 = arith.mulf %416, %420 : vector<2x24x8xf32>
    %422 = arith.truncf %421 : vector<2x24x8xf32> to vector<2x24x8xbf16>
    %423 = arith.truncf %401 : vector<2x8x30xf32> to vector<2x8x30xbf16>
    "tpu.trace_start"() <{level = 10 : i32, message = "bij,bjd->bid"}> : () -> ()
    %cst_136 = arith.constant dense<0.000000e+00> : vector<2x24x30xf32>
    %424 = tpu.matmul %422, %423, %cst_136 {dimension_numbers = #tpu.dot_dimension_numbers<[2], [1], [1], [2], [0, 0, 0, 1, 1, 2], [0], [0]>} : vector<2x24x8xbf16>, vector<2x8x30xbf16>, vector<2x24x30xf32> -> vector<2x24x30xf32>
    "tpu.trace_stop"() : () -> ()
    %425 = vector.extract_strided_slice %424 {offsets = [0, 0, 0], sizes = [2, 8, 30], strides = [1, 1, 1]} : vector<2x24x30xf32> to vector<2x8x30xf32>
    %426 = vector.broadcast %9 : vector<1x1x30xf32> to vector<2x8x30xf32>
    %427 = arith.mulf %425, %426 : vector<2x8x30xf32>
    %428 = vector.extract_strided_slice %424 {offsets = [0, 8, 0], sizes = [2, 8, 30], strides = [1, 1, 1]} : vector<2x24x30xf32> to vector<2x8x30xf32>
    %429 = vector.broadcast %11 : vector<1x1x30xf32> to vector<2x8x30xf32>
    %430 = arith.mulf %428, %429 : vector<2x8x30xf32>
    %431 = arith.addf %427, %430 : vector<2x8x30xf32>
    %432 = vector.extract_strided_slice %424 {offsets = [0, 16, 0], sizes = [2, 8, 30], strides = [1, 1, 1]} : vector<2x24x30xf32> to vector<2x8x30xf32>
    %433 = vector.broadcast %13 : vector<1x1x30xf32> to vector<2x8x30xf32>
    %434 = arith.mulf %432, %433 : vector<2x8x30xf32>
    %435 = arith.addf %431, %434 : vector<2x8x30xf32>
    %436 = arith.addf %435, %389 : vector<2x8x30xf32>
    %cst_137 = arith.constant dense<0.000000e+00> : vector<2x8xf32>
    %437 = vector.multi_reduction <add>, %436, %cst_137 [2] : vector<2x8x30xf32> to vector<2x8xf32>
    %438 = vector.shape_cast %437 : vector<2x8xf32> to vector<2x8x1xf32>
    %cst_138 = arith.constant dense<0.000000e+00> : vector<2x1xf32>
    %439 = vector.multi_reduction <add>, %438, %cst_138 [1] : vector<2x8x1xf32> to vector<2x1xf32>
    %440 = vector.shape_cast %439 : vector<2x1xf32> to vector<2x1x1xf32>
    %441 = arith.mulf %440, %4 : vector<2x1x1xf32>
    %442 = vector.broadcast %441 : vector<2x1x1xf32> to vector<2x8x30xf32>
    %443 = arith.subf %436, %442 : vector<2x8x30xf32>
    %444 = arith.mulf %443, %443 : vector<2x8x30xf32>
    %cst_139 = arith.constant dense<0.000000e+00> : vector<2x8xf32>
    %445 = vector.multi_reduction <add>, %444, %cst_139 [2] : vector<2x8x30xf32> to vector<2x8xf32>
    %446 = vector.shape_cast %445 : vector<2x8xf32> to vector<2x8x1xf32>
    %cst_140 = arith.constant dense<0.000000e+00> : vector<2x1xf32>
    %447 = vector.multi_reduction <add>, %446, %cst_140 [1] : vector<2x8x1xf32> to vector<2x1xf32>
    %448 = vector.shape_cast %447 : vector<2x1xf32> to vector<2x1x1xf32>
    %449 = math.rsqrt %448 : vector<2x1x1xf32>
    %450 = arith.mulf %3, %449 : vector<2x1x1xf32>
    %451 = vector.broadcast %450 : vector<2x1x1xf32> to vector<2x8x30xf32>
    %452 = arith.mulf %443, %451 : vector<2x8x30xf32>
    %453 = arith.truncf %452 : vector<2x8x30xf32> to vector<2x8x30xbf16>
    %c4_141 = arith.constant 4 : index
    %c0_142 = arith.constant 0 : index
    %c0_143 = arith.constant 0 : index
    %454 = vector.load %arg5[%c4_141, %c0_142, %c0_143] : memref<10x30x30xbf16, #tpu.memory_space<vmem>>, vector<1x30x30xbf16>
    %455 = vector.shape_cast %454 : vector<1x30x30xbf16> to vector<30x30xbf16>
    "tpu.trace_start"() <{level = 10 : i32, message = "btd,de->bte"}> : () -> ()
    %cst_144 = arith.constant dense<0.000000e+00> : vector<2x8x30xf32>
    %456 = tpu.matmul %453, %455, %cst_144 {dimension_numbers = #tpu.dot_dimension_numbers<[2], [0], [0, 1], [1], [0, 0, 0, 1, 1, 1], [], []>} : vector<2x8x30xbf16>, vector<30x30xbf16>, vector<2x8x30xf32> -> vector<2x8x30xf32>
    "tpu.trace_stop"() : () -> ()
    %457 = arith.negf %456 : vector<2x8x30xf32>
    %458 = math.exp %457 : vector<2x8x30xf32>
    %cst_145 = arith.constant 1.000000e+00 : f32
    %459 = vector.broadcast %cst_145 : f32 to vector<2x8x30xf32>
    %460 = arith.addf %459, %458 : vector<2x8x30xf32>
    %461 = arith.divf %459, %460 : vector<2x8x30xf32>
    %462 = arith.mulf %456, %461 : vector<2x8x30xf32>
    %463 = arith.truncf %462 : vector<2x8x30xf32> to vector<2x8x30xbf16>
    %c4_146 = arith.constant 4 : index
    %c0_147 = arith.constant 0 : index
    %c0_148 = arith.constant 0 : index
    %464 = vector.load %arg6[%c4_146, %c0_147, %c0_148] : memref<10x30x30xbf16, #tpu.memory_space<vmem>>, vector<1x30x30xbf16>
    %465 = vector.shape_cast %464 : vector<1x30x30xbf16> to vector<30x30xbf16>
    "tpu.trace_start"() <{level = 10 : i32, message = "bte,ed->btd"}> : () -> ()
    %cst_149 = arith.constant dense<0.000000e+00> : vector<2x8x30xf32>
    %466 = tpu.matmul %463, %465, %cst_149 {dimension_numbers = #tpu.dot_dimension_numbers<[2], [0], [0, 1], [1], [0, 0, 0, 1, 1, 1], [], []>} : vector<2x8x30xbf16>, vector<30x30xbf16>, vector<2x8x30xf32> -> vector<2x8x30xf32>
    "tpu.trace_stop"() : () -> ()
    %467 = arith.addf %466, %452 : vector<2x8x30xf32>
    %cst_150 = arith.constant dense<0.000000e+00> : vector<2x8xf32>
    %468 = vector.multi_reduction <add>, %467, %cst_150 [2] : vector<2x8x30xf32> to vector<2x8xf32>
    %469 = vector.shape_cast %468 : vector<2x8xf32> to vector<2x8x1xf32>
    %cst_151 = arith.constant dense<0.000000e+00> : vector<2x1xf32>
    %470 = vector.multi_reduction <add>, %469, %cst_151 [1] : vector<2x8x1xf32> to vector<2x1xf32>
    %471 = vector.shape_cast %470 : vector<2x1xf32> to vector<2x1x1xf32>
    %472 = arith.mulf %471, %4 : vector<2x1x1xf32>
    %473 = vector.broadcast %472 : vector<2x1x1xf32> to vector<2x8x30xf32>
    %474 = arith.subf %467, %473 : vector<2x8x30xf32>
    %475 = arith.mulf %474, %474 : vector<2x8x30xf32>
    %cst_152 = arith.constant dense<0.000000e+00> : vector<2x8xf32>
    %476 = vector.multi_reduction <add>, %475, %cst_152 [2] : vector<2x8x30xf32> to vector<2x8xf32>
    %477 = vector.shape_cast %476 : vector<2x8xf32> to vector<2x8x1xf32>
    %cst_153 = arith.constant dense<0.000000e+00> : vector<2x1xf32>
    %478 = vector.multi_reduction <add>, %477, %cst_153 [1] : vector<2x8x1xf32> to vector<2x1xf32>
    %479 = vector.shape_cast %478 : vector<2x1xf32> to vector<2x1x1xf32>
    %480 = math.rsqrt %479 : vector<2x1x1xf32>
    %481 = arith.mulf %3, %480 : vector<2x1x1xf32>
    %482 = vector.broadcast %481 : vector<2x1x1xf32> to vector<2x8x30xf32>
    %483 = arith.mulf %474, %482 : vector<2x8x30xf32>
    %484 = arith.truncf %483 : vector<2x8x30xf32> to vector<2x8x30xbf16>
    %c5 = arith.constant 5 : index
    %c0_154 = arith.constant 0 : index
    %c0_155 = arith.constant 0 : index
    %485 = vector.load %arg3[%c5, %c0_154, %c0_155] : memref<10x30x90xbf16, #tpu.memory_space<vmem>>, vector<1x30x90xbf16>
    %486 = vector.shape_cast %485 : vector<1x30x90xbf16> to vector<30x90xbf16>
    "tpu.trace_start"() <{level = 10 : i32, message = "btd,de->bte"}> : () -> ()
    %cst_156 = arith.constant dense<0.000000e+00> : vector<2x8x90xf32>
    %487 = tpu.matmul %484, %486, %cst_156 {dimension_numbers = #tpu.dot_dimension_numbers<[2], [0], [0, 1], [1], [0, 0, 0, 1, 1, 1], [], []>} : vector<2x8x30xbf16>, vector<30x90xbf16>, vector<2x8x90xf32> -> vector<2x8x90xf32>
    "tpu.trace_stop"() : () -> ()
    %488 = vector.extract_strided_slice %487 {offsets = [0, 0, 0], sizes = [2, 8, 30], strides = [1, 1, 1]} : vector<2x8x90xf32> to vector<2x8x30xf32>
    %c5_157 = arith.constant 5 : index
    %c0_158 = arith.constant 0 : index
    %c0_159 = arith.constant 0 : index
    %489 = vector.load %arg4[%c5_157, %c0_158, %c0_159] : memref<10x1x30xf32, #tpu.memory_space<vmem>>, vector<1x1x30xf32>
    %490 = vector.shape_cast %489 : vector<1x1x30xf32> to vector<1x30xf32>
    %491 = vector.shape_cast %490 : vector<1x30xf32> to vector<1x1x30xf32>
    %492 = vector.broadcast %491 : vector<1x1x30xf32> to vector<2x8x30xf32>
    %493 = arith.addf %488, %492 : vector<2x8x30xf32>
    %494 = vector.extract_strided_slice %487 {offsets = [0, 0, 30], sizes = [2, 8, 30], strides = [1, 1, 1]} : vector<2x8x90xf32> to vector<2x8x30xf32>
    %495 = vector.extract_strided_slice %487 {offsets = [0, 0, 60], sizes = [2, 8, 30], strides = [1, 1, 1]} : vector<2x8x90xf32> to vector<2x8x30xf32>
    %496 = vector.broadcast %9 : vector<1x1x30xf32> to vector<2x8x30xf32>
    %497 = arith.mulf %493, %496 : vector<2x8x30xf32>
    %498 = vector.broadcast %11 : vector<1x1x30xf32> to vector<2x8x30xf32>
    %499 = arith.mulf %493, %498 : vector<2x8x30xf32>
    %500 = vector.broadcast %13 : vector<1x1x30xf32> to vector<2x8x30xf32>
    %501 = arith.mulf %493, %500 : vector<2x8x30xf32>
    %502 = tpu.concatenate %497, %499, %501 in 1 : vector<2x8x30xf32>, vector<2x8x30xf32>, vector<2x8x30xf32> -> vector<2x24x30xf32>
    %503 = arith.truncf %502 : vector<2x24x30xf32> to vector<2x24x30xbf16>
    %504 = arith.truncf %494 : vector<2x8x30xf32> to vector<2x8x30xbf16>
    "tpu.trace_start"() <{level = 10 : i32, message = "bid,bjd->bij"}> : () -> ()
    %cst_160 = arith.constant dense<0.000000e+00> : vector<2x24x8xf32>
    %505 = tpu.matmul %503, %504, %cst_160 {dimension_numbers = #tpu.dot_dimension_numbers<[2], [2], [1], [1], [0, 0, 0, 1, 1, 1], [0], [0]>} : vector<2x24x30xbf16>, vector<2x8x30xbf16>, vector<2x24x8xf32> -> vector<2x24x8xf32>
    "tpu.trace_stop"() : () -> ()
    %cst_161 = arith.constant dense<0xFF800000> : vector<2x24xf32>
    %506 = vector.multi_reduction <maximumf>, %505, %cst_161 [2] : vector<2x24x8xf32> to vector<2x24xf32>
    %507 = vector.shape_cast %506 : vector<2x24xf32> to vector<2x24x1xf32>
    %508 = vector.broadcast %507 : vector<2x24x1xf32> to vector<2x24x8xf32>
    %509 = arith.subf %505, %508 : vector<2x24x8xf32>
    %510 = math.exp %509 : vector<2x24x8xf32>
    %cst_162 = arith.constant dense<0.000000e+00> : vector<2x24xf32>
    %511 = vector.multi_reduction <add>, %510, %cst_162 [2] : vector<2x24x8xf32> to vector<2x24xf32>
    %512 = vector.shape_cast %511 : vector<2x24xf32> to vector<2x24x1xf32>
    %513 = tpu.reciprocal %512 {approx = true} : vector<2x24x1xf32> -> vector<2x24x1xf32>
    %514 = vector.broadcast %513 : vector<2x24x1xf32> to vector<2x24x8xf32>
    %515 = arith.mulf %510, %514 : vector<2x24x8xf32>
    %516 = arith.truncf %515 : vector<2x24x8xf32> to vector<2x24x8xbf16>
    %517 = arith.truncf %495 : vector<2x8x30xf32> to vector<2x8x30xbf16>
    "tpu.trace_start"() <{level = 10 : i32, message = "bij,bjd->bid"}> : () -> ()
    %cst_163 = arith.constant dense<0.000000e+00> : vector<2x24x30xf32>
    %518 = tpu.matmul %516, %517, %cst_163 {dimension_numbers = #tpu.dot_dimension_numbers<[2], [1], [1], [2], [0, 0, 0, 1, 1, 2], [0], [0]>} : vector<2x24x8xbf16>, vector<2x8x30xbf16>, vector<2x24x30xf32> -> vector<2x24x30xf32>
    "tpu.trace_stop"() : () -> ()
    %519 = vector.extract_strided_slice %518 {offsets = [0, 0, 0], sizes = [2, 8, 30], strides = [1, 1, 1]} : vector<2x24x30xf32> to vector<2x8x30xf32>
    %520 = vector.broadcast %9 : vector<1x1x30xf32> to vector<2x8x30xf32>
    %521 = arith.mulf %519, %520 : vector<2x8x30xf32>
    %522 = vector.extract_strided_slice %518 {offsets = [0, 8, 0], sizes = [2, 8, 30], strides = [1, 1, 1]} : vector<2x24x30xf32> to vector<2x8x30xf32>
    %523 = vector.broadcast %11 : vector<1x1x30xf32> to vector<2x8x30xf32>
    %524 = arith.mulf %522, %523 : vector<2x8x30xf32>
    %525 = arith.addf %521, %524 : vector<2x8x30xf32>
    %526 = vector.extract_strided_slice %518 {offsets = [0, 16, 0], sizes = [2, 8, 30], strides = [1, 1, 1]} : vector<2x24x30xf32> to vector<2x8x30xf32>
    %527 = vector.broadcast %13 : vector<1x1x30xf32> to vector<2x8x30xf32>
    %528 = arith.mulf %526, %527 : vector<2x8x30xf32>
    %529 = arith.addf %525, %528 : vector<2x8x30xf32>
    %530 = arith.addf %529, %483 : vector<2x8x30xf32>
    %cst_164 = arith.constant dense<0.000000e+00> : vector<2x8xf32>
    %531 = vector.multi_reduction <add>, %530, %cst_164 [2] : vector<2x8x30xf32> to vector<2x8xf32>
    %532 = vector.shape_cast %531 : vector<2x8xf32> to vector<2x8x1xf32>
    %cst_165 = arith.constant dense<0.000000e+00> : vector<2x1xf32>
    %533 = vector.multi_reduction <add>, %532, %cst_165 [1] : vector<2x8x1xf32> to vector<2x1xf32>
    %534 = vector.shape_cast %533 : vector<2x1xf32> to vector<2x1x1xf32>
    %535 = arith.mulf %534, %4 : vector<2x1x1xf32>
    %536 = vector.broadcast %535 : vector<2x1x1xf32> to vector<2x8x30xf32>
    %537 = arith.subf %530, %536 : vector<2x8x30xf32>
    %538 = arith.mulf %537, %537 : vector<2x8x30xf32>
    %cst_166 = arith.constant dense<0.000000e+00> : vector<2x8xf32>
    %539 = vector.multi_reduction <add>, %538, %cst_166 [2] : vector<2x8x30xf32> to vector<2x8xf32>
    %540 = vector.shape_cast %539 : vector<2x8xf32> to vector<2x8x1xf32>
    %cst_167 = arith.constant dense<0.000000e+00> : vector<2x1xf32>
    %541 = vector.multi_reduction <add>, %540, %cst_167 [1] : vector<2x8x1xf32> to vector<2x1xf32>
    %542 = vector.shape_cast %541 : vector<2x1xf32> to vector<2x1x1xf32>
    %543 = math.rsqrt %542 : vector<2x1x1xf32>
    %544 = arith.mulf %3, %543 : vector<2x1x1xf32>
    %545 = vector.broadcast %544 : vector<2x1x1xf32> to vector<2x8x30xf32>
    %546 = arith.mulf %537, %545 : vector<2x8x30xf32>
    %547 = arith.truncf %546 : vector<2x8x30xf32> to vector<2x8x30xbf16>
    %c5_168 = arith.constant 5 : index
    %c0_169 = arith.constant 0 : index
    %c0_170 = arith.constant 0 : index
    %548 = vector.load %arg5[%c5_168, %c0_169, %c0_170] : memref<10x30x30xbf16, #tpu.memory_space<vmem>>, vector<1x30x30xbf16>
    %549 = vector.shape_cast %548 : vector<1x30x30xbf16> to vector<30x30xbf16>
    "tpu.trace_start"() <{level = 10 : i32, message = "btd,de->bte"}> : () -> ()
    %cst_171 = arith.constant dense<0.000000e+00> : vector<2x8x30xf32>
    %550 = tpu.matmul %547, %549, %cst_171 {dimension_numbers = #tpu.dot_dimension_numbers<[2], [0], [0, 1], [1], [0, 0, 0, 1, 1, 1], [], []>} : vector<2x8x30xbf16>, vector<30x30xbf16>, vector<2x8x30xf32> -> vector<2x8x30xf32>
    "tpu.trace_stop"() : () -> ()
    %551 = arith.negf %550 : vector<2x8x30xf32>
    %552 = math.exp %551 : vector<2x8x30xf32>
    %cst_172 = arith.constant 1.000000e+00 : f32
    %553 = vector.broadcast %cst_172 : f32 to vector<2x8x30xf32>
    %554 = arith.addf %553, %552 : vector<2x8x30xf32>
    %555 = arith.divf %553, %554 : vector<2x8x30xf32>
    %556 = arith.mulf %550, %555 : vector<2x8x30xf32>
    %557 = arith.truncf %556 : vector<2x8x30xf32> to vector<2x8x30xbf16>
    %c5_173 = arith.constant 5 : index
    %c0_174 = arith.constant 0 : index
    %c0_175 = arith.constant 0 : index
    %558 = vector.load %arg6[%c5_173, %c0_174, %c0_175] : memref<10x30x30xbf16, #tpu.memory_space<vmem>>, vector<1x30x30xbf16>
    %559 = vector.shape_cast %558 : vector<1x30x30xbf16> to vector<30x30xbf16>
    "tpu.trace_start"() <{level = 10 : i32, message = "bte,ed->btd"}> : () -> ()
    %cst_176 = arith.constant dense<0.000000e+00> : vector<2x8x30xf32>
    %560 = tpu.matmul %557, %559, %cst_176 {dimension_numbers = #tpu.dot_dimension_numbers<[2], [0], [0, 1], [1], [0, 0, 0, 1, 1, 1], [], []>} : vector<2x8x30xbf16>, vector<30x30xbf16>, vector<2x8x30xf32> -> vector<2x8x30xf32>
    "tpu.trace_stop"() : () -> ()
    %561 = arith.addf %560, %546 : vector<2x8x30xf32>
    %cst_177 = arith.constant dense<0.000000e+00> : vector<2x8xf32>
    %562 = vector.multi_reduction <add>, %561, %cst_177 [2] : vector<2x8x30xf32> to vector<2x8xf32>
    %563 = vector.shape_cast %562 : vector<2x8xf32> to vector<2x8x1xf32>
    %cst_178 = arith.constant dense<0.000000e+00> : vector<2x1xf32>
    %564 = vector.multi_reduction <add>, %563, %cst_178 [1] : vector<2x8x1xf32> to vector<2x1xf32>
    %565 = vector.shape_cast %564 : vector<2x1xf32> to vector<2x1x1xf32>
    %566 = arith.mulf %565, %4 : vector<2x1x1xf32>
    %567 = vector.broadcast %566 : vector<2x1x1xf32> to vector<2x8x30xf32>
    %568 = arith.subf %561, %567 : vector<2x8x30xf32>
    %569 = arith.mulf %568, %568 : vector<2x8x30xf32>
    %cst_179 = arith.constant dense<0.000000e+00> : vector<2x8xf32>
    %570 = vector.multi_reduction <add>, %569, %cst_179 [2] : vector<2x8x30xf32> to vector<2x8xf32>
    %571 = vector.shape_cast %570 : vector<2x8xf32> to vector<2x8x1xf32>
    %cst_180 = arith.constant dense<0.000000e+00> : vector<2x1xf32>
    %572 = vector.multi_reduction <add>, %571, %cst_180 [1] : vector<2x8x1xf32> to vector<2x1xf32>
    %573 = vector.shape_cast %572 : vector<2x1xf32> to vector<2x1x1xf32>
    %574 = math.rsqrt %573 : vector<2x1x1xf32>
    %575 = arith.mulf %3, %574 : vector<2x1x1xf32>
    %576 = vector.broadcast %575 : vector<2x1x1xf32> to vector<2x8x30xf32>
    %577 = arith.mulf %568, %576 : vector<2x8x30xf32>
    %578 = arith.truncf %577 : vector<2x8x30xf32> to vector<2x8x30xbf16>
    %c6 = arith.constant 6 : index
    %c0_181 = arith.constant 0 : index
    %c0_182 = arith.constant 0 : index
    %579 = vector.load %arg3[%c6, %c0_181, %c0_182] : memref<10x30x90xbf16, #tpu.memory_space<vmem>>, vector<1x30x90xbf16>
    %580 = vector.shape_cast %579 : vector<1x30x90xbf16> to vector<30x90xbf16>
    "tpu.trace_start"() <{level = 10 : i32, message = "btd,de->bte"}> : () -> ()
    %cst_183 = arith.constant dense<0.000000e+00> : vector<2x8x90xf32>
    %581 = tpu.matmul %578, %580, %cst_183 {dimension_numbers = #tpu.dot_dimension_numbers<[2], [0], [0, 1], [1], [0, 0, 0, 1, 1, 1], [], []>} : vector<2x8x30xbf16>, vector<30x90xbf16>, vector<2x8x90xf32> -> vector<2x8x90xf32>
    "tpu.trace_stop"() : () -> ()
    %582 = vector.extract_strided_slice %581 {offsets = [0, 0, 0], sizes = [2, 8, 30], strides = [1, 1, 1]} : vector<2x8x90xf32> to vector<2x8x30xf32>
    %c6_184 = arith.constant 6 : index
    %c0_185 = arith.constant 0 : index
    %c0_186 = arith.constant 0 : index
    %583 = vector.load %arg4[%c6_184, %c0_185, %c0_186] : memref<10x1x30xf32, #tpu.memory_space<vmem>>, vector<1x1x30xf32>
    %584 = vector.shape_cast %583 : vector<1x1x30xf32> to vector<1x30xf32>
    %585 = vector.shape_cast %584 : vector<1x30xf32> to vector<1x1x30xf32>
    %586 = vector.broadcast %585 : vector<1x1x30xf32> to vector<2x8x30xf32>
    %587 = arith.addf %582, %586 : vector<2x8x30xf32>
    %588 = vector.extract_strided_slice %581 {offsets = [0, 0, 30], sizes = [2, 8, 30], strides = [1, 1, 1]} : vector<2x8x90xf32> to vector<2x8x30xf32>
    %589 = vector.extract_strided_slice %581 {offsets = [0, 0, 60], sizes = [2, 8, 30], strides = [1, 1, 1]} : vector<2x8x90xf32> to vector<2x8x30xf32>
    %590 = vector.broadcast %9 : vector<1x1x30xf32> to vector<2x8x30xf32>
    %591 = arith.mulf %587, %590 : vector<2x8x30xf32>
    %592 = vector.broadcast %11 : vector<1x1x30xf32> to vector<2x8x30xf32>
    %593 = arith.mulf %587, %592 : vector<2x8x30xf32>
    %594 = vector.broadcast %13 : vector<1x1x30xf32> to vector<2x8x30xf32>
    %595 = arith.mulf %587, %594 : vector<2x8x30xf32>
    %596 = tpu.concatenate %591, %593, %595 in 1 : vector<2x8x30xf32>, vector<2x8x30xf32>, vector<2x8x30xf32> -> vector<2x24x30xf32>
    %597 = arith.truncf %596 : vector<2x24x30xf32> to vector<2x24x30xbf16>
    %598 = arith.truncf %588 : vector<2x8x30xf32> to vector<2x8x30xbf16>
    "tpu.trace_start"() <{level = 10 : i32, message = "bid,bjd->bij"}> : () -> ()
    %cst_187 = arith.constant dense<0.000000e+00> : vector<2x24x8xf32>
    %599 = tpu.matmul %597, %598, %cst_187 {dimension_numbers = #tpu.dot_dimension_numbers<[2], [2], [1], [1], [0, 0, 0, 1, 1, 1], [0], [0]>} : vector<2x24x30xbf16>, vector<2x8x30xbf16>, vector<2x24x8xf32> -> vector<2x24x8xf32>
    "tpu.trace_stop"() : () -> ()
    %cst_188 = arith.constant dense<0xFF800000> : vector<2x24xf32>
    %600 = vector.multi_reduction <maximumf>, %599, %cst_188 [2] : vector<2x24x8xf32> to vector<2x24xf32>
    %601 = vector.shape_cast %600 : vector<2x24xf32> to vector<2x24x1xf32>
    %602 = vector.broadcast %601 : vector<2x24x1xf32> to vector<2x24x8xf32>
    %603 = arith.subf %599, %602 : vector<2x24x8xf32>
    %604 = math.exp %603 : vector<2x24x8xf32>
    %cst_189 = arith.constant dense<0.000000e+00> : vector<2x24xf32>
    %605 = vector.multi_reduction <add>, %604, %cst_189 [2] : vector<2x24x8xf32> to vector<2x24xf32>
    %606 = vector.shape_cast %605 : vector<2x24xf32> to vector<2x24x1xf32>
    %607 = tpu.reciprocal %606 {approx = true} : vector<2x24x1xf32> -> vector<2x24x1xf32>
    %608 = vector.broadcast %607 : vector<2x24x1xf32> to vector<2x24x8xf32>
    %609 = arith.mulf %604, %608 : vector<2x24x8xf32>
    %610 = arith.truncf %609 : vector<2x24x8xf32> to vector<2x24x8xbf16>
    %611 = arith.truncf %589 : vector<2x8x30xf32> to vector<2x8x30xbf16>
    "tpu.trace_start"() <{level = 10 : i32, message = "bij,bjd->bid"}> : () -> ()
    %cst_190 = arith.constant dense<0.000000e+00> : vector<2x24x30xf32>
    %612 = tpu.matmul %610, %611, %cst_190 {dimension_numbers = #tpu.dot_dimension_numbers<[2], [1], [1], [2], [0, 0, 0, 1, 1, 2], [0], [0]>} : vector<2x24x8xbf16>, vector<2x8x30xbf16>, vector<2x24x30xf32> -> vector<2x24x30xf32>
    "tpu.trace_stop"() : () -> ()
    %613 = vector.extract_strided_slice %612 {offsets = [0, 0, 0], sizes = [2, 8, 30], strides = [1, 1, 1]} : vector<2x24x30xf32> to vector<2x8x30xf32>
    %614 = vector.broadcast %9 : vector<1x1x30xf32> to vector<2x8x30xf32>
    %615 = arith.mulf %613, %614 : vector<2x8x30xf32>
    %616 = vector.extract_strided_slice %612 {offsets = [0, 8, 0], sizes = [2, 8, 30], strides = [1, 1, 1]} : vector<2x24x30xf32> to vector<2x8x30xf32>
    %617 = vector.broadcast %11 : vector<1x1x30xf32> to vector<2x8x30xf32>
    %618 = arith.mulf %616, %617 : vector<2x8x30xf32>
    %619 = arith.addf %615, %618 : vector<2x8x30xf32>
    %620 = vector.extract_strided_slice %612 {offsets = [0, 16, 0], sizes = [2, 8, 30], strides = [1, 1, 1]} : vector<2x24x30xf32> to vector<2x8x30xf32>
    %621 = vector.broadcast %13 : vector<1x1x30xf32> to vector<2x8x30xf32>
    %622 = arith.mulf %620, %621 : vector<2x8x30xf32>
    %623 = arith.addf %619, %622 : vector<2x8x30xf32>
    %624 = arith.addf %623, %577 : vector<2x8x30xf32>
    %cst_191 = arith.constant dense<0.000000e+00> : vector<2x8xf32>
    %625 = vector.multi_reduction <add>, %624, %cst_191 [2] : vector<2x8x30xf32> to vector<2x8xf32>
    %626 = vector.shape_cast %625 : vector<2x8xf32> to vector<2x8x1xf32>
    %cst_192 = arith.constant dense<0.000000e+00> : vector<2x1xf32>
    %627 = vector.multi_reduction <add>, %626, %cst_192 [1] : vector<2x8x1xf32> to vector<2x1xf32>
    %628 = vector.shape_cast %627 : vector<2x1xf32> to vector<2x1x1xf32>
    %629 = arith.mulf %628, %4 : vector<2x1x1xf32>
    %630 = vector.broadcast %629 : vector<2x1x1xf32> to vector<2x8x30xf32>
    %631 = arith.subf %624, %630 : vector<2x8x30xf32>
    %632 = arith.mulf %631, %631 : vector<2x8x30xf32>
    %cst_193 = arith.constant dense<0.000000e+00> : vector<2x8xf32>
    %633 = vector.multi_reduction <add>, %632, %cst_193 [2] : vector<2x8x30xf32> to vector<2x8xf32>
    %634 = vector.shape_cast %633 : vector<2x8xf32> to vector<2x8x1xf32>
    %cst_194 = arith.constant dense<0.000000e+00> : vector<2x1xf32>
    %635 = vector.multi_reduction <add>, %634, %cst_194 [1] : vector<2x8x1xf32> to vector<2x1xf32>
    %636 = vector.shape_cast %635 : vector<2x1xf32> to vector<2x1x1xf32>
    %637 = math.rsqrt %636 : vector<2x1x1xf32>
    %638 = arith.mulf %3, %637 : vector<2x1x1xf32>
    %639 = vector.broadcast %638 : vector<2x1x1xf32> to vector<2x8x30xf32>
    %640 = arith.mulf %631, %639 : vector<2x8x30xf32>
    %641 = arith.truncf %640 : vector<2x8x30xf32> to vector<2x8x30xbf16>
    %c6_195 = arith.constant 6 : index
    %c0_196 = arith.constant 0 : index
    %c0_197 = arith.constant 0 : index
    %642 = vector.load %arg5[%c6_195, %c0_196, %c0_197] : memref<10x30x30xbf16, #tpu.memory_space<vmem>>, vector<1x30x30xbf16>
    %643 = vector.shape_cast %642 : vector<1x30x30xbf16> to vector<30x30xbf16>
    "tpu.trace_start"() <{level = 10 : i32, message = "btd,de->bte"}> : () -> ()
    %cst_198 = arith.constant dense<0.000000e+00> : vector<2x8x30xf32>
    %644 = tpu.matmul %641, %643, %cst_198 {dimension_numbers = #tpu.dot_dimension_numbers<[2], [0], [0, 1], [1], [0, 0, 0, 1, 1, 1], [], []>} : vector<2x8x30xbf16>, vector<30x30xbf16>, vector<2x8x30xf32> -> vector<2x8x30xf32>
    "tpu.trace_stop"() : () -> ()
    %645 = arith.negf %644 : vector<2x8x30xf32>
    %646 = math.exp %645 : vector<2x8x30xf32>
    %cst_199 = arith.constant 1.000000e+00 : f32
    %647 = vector.broadcast %cst_199 : f32 to vector<2x8x30xf32>
    %648 = arith.addf %647, %646 : vector<2x8x30xf32>
    %649 = arith.divf %647, %648 : vector<2x8x30xf32>
    %650 = arith.mulf %644, %649 : vector<2x8x30xf32>
    %651 = arith.truncf %650 : vector<2x8x30xf32> to vector<2x8x30xbf16>
    %c6_200 = arith.constant 6 : index
    %c0_201 = arith.constant 0 : index
    %c0_202 = arith.constant 0 : index
    %652 = vector.load %arg6[%c6_200, %c0_201, %c0_202] : memref<10x30x30xbf16, #tpu.memory_space<vmem>>, vector<1x30x30xbf16>
    %653 = vector.shape_cast %652 : vector<1x30x30xbf16> to vector<30x30xbf16>
    "tpu.trace_start"() <{level = 10 : i32, message = "bte,ed->btd"}> : () -> ()
    %cst_203 = arith.constant dense<0.000000e+00> : vector<2x8x30xf32>
    %654 = tpu.matmul %651, %653, %cst_203 {dimension_numbers = #tpu.dot_dimension_numbers<[2], [0], [0, 1], [1], [0, 0, 0, 1, 1, 1], [], []>} : vector<2x8x30xbf16>, vector<30x30xbf16>, vector<2x8x30xf32> -> vector<2x8x30xf32>
    "tpu.trace_stop"() : () -> ()
    %655 = arith.addf %654, %640 : vector<2x8x30xf32>
    %cst_204 = arith.constant dense<0.000000e+00> : vector<2x8xf32>
    %656 = vector.multi_reduction <add>, %655, %cst_204 [2] : vector<2x8x30xf32> to vector<2x8xf32>
    %657 = vector.shape_cast %656 : vector<2x8xf32> to vector<2x8x1xf32>
    %cst_205 = arith.constant dense<0.000000e+00> : vector<2x1xf32>
    %658 = vector.multi_reduction <add>, %657, %cst_205 [1] : vector<2x8x1xf32> to vector<2x1xf32>
    %659 = vector.shape_cast %658 : vector<2x1xf32> to vector<2x1x1xf32>
    %660 = arith.mulf %659, %4 : vector<2x1x1xf32>
    %661 = vector.broadcast %660 : vector<2x1x1xf32> to vector<2x8x30xf32>
    %662 = arith.subf %655, %661 : vector<2x8x30xf32>
    %663 = arith.mulf %662, %662 : vector<2x8x30xf32>
    %cst_206 = arith.constant dense<0.000000e+00> : vector<2x8xf32>
    %664 = vector.multi_reduction <add>, %663, %cst_206 [2] : vector<2x8x30xf32> to vector<2x8xf32>
    %665 = vector.shape_cast %664 : vector<2x8xf32> to vector<2x8x1xf32>
    %cst_207 = arith.constant dense<0.000000e+00> : vector<2x1xf32>
    %666 = vector.multi_reduction <add>, %665, %cst_207 [1] : vector<2x8x1xf32> to vector<2x1xf32>
    %667 = vector.shape_cast %666 : vector<2x1xf32> to vector<2x1x1xf32>
    %668 = math.rsqrt %667 : vector<2x1x1xf32>
    %669 = arith.mulf %3, %668 : vector<2x1x1xf32>
    %670 = vector.broadcast %669 : vector<2x1x1xf32> to vector<2x8x30xf32>
    %671 = arith.mulf %662, %670 : vector<2x8x30xf32>
    %672 = arith.truncf %671 : vector<2x8x30xf32> to vector<2x8x30xbf16>
    %c7 = arith.constant 7 : index
    %c0_208 = arith.constant 0 : index
    %c0_209 = arith.constant 0 : index
    %673 = vector.load %arg3[%c7, %c0_208, %c0_209] : memref<10x30x90xbf16, #tpu.memory_space<vmem>>, vector<1x30x90xbf16>
    %674 = vector.shape_cast %673 : vector<1x30x90xbf16> to vector<30x90xbf16>
    "tpu.trace_start"() <{level = 10 : i32, message = "btd,de->bte"}> : () -> ()
    %cst_210 = arith.constant dense<0.000000e+00> : vector<2x8x90xf32>
    %675 = tpu.matmul %672, %674, %cst_210 {dimension_numbers = #tpu.dot_dimension_numbers<[2], [0], [0, 1], [1], [0, 0, 0, 1, 1, 1], [], []>} : vector<2x8x30xbf16>, vector<30x90xbf16>, vector<2x8x90xf32> -> vector<2x8x90xf32>
    "tpu.trace_stop"() : () -> ()
    %676 = vector.extract_strided_slice %675 {offsets = [0, 0, 0], sizes = [2, 8, 30], strides = [1, 1, 1]} : vector<2x8x90xf32> to vector<2x8x30xf32>
    %c7_211 = arith.constant 7 : index
    %c0_212 = arith.constant 0 : index
    %c0_213 = arith.constant 0 : index
    %677 = vector.load %arg4[%c7_211, %c0_212, %c0_213] : memref<10x1x30xf32, #tpu.memory_space<vmem>>, vector<1x1x30xf32>
    %678 = vector.shape_cast %677 : vector<1x1x30xf32> to vector<1x30xf32>
    %679 = vector.shape_cast %678 : vector<1x30xf32> to vector<1x1x30xf32>
    %680 = vector.broadcast %679 : vector<1x1x30xf32> to vector<2x8x30xf32>
    %681 = arith.addf %676, %680 : vector<2x8x30xf32>
    %682 = vector.extract_strided_slice %675 {offsets = [0, 0, 30], sizes = [2, 8, 30], strides = [1, 1, 1]} : vector<2x8x90xf32> to vector<2x8x30xf32>
    %683 = vector.extract_strided_slice %675 {offsets = [0, 0, 60], sizes = [2, 8, 30], strides = [1, 1, 1]} : vector<2x8x90xf32> to vector<2x8x30xf32>
    %684 = vector.broadcast %9 : vector<1x1x30xf32> to vector<2x8x30xf32>
    %685 = arith.mulf %681, %684 : vector<2x8x30xf32>
    %686 = vector.broadcast %11 : vector<1x1x30xf32> to vector<2x8x30xf32>
    %687 = arith.mulf %681, %686 : vector<2x8x30xf32>
    %688 = vector.broadcast %13 : vector<1x1x30xf32> to vector<2x8x30xf32>
    %689 = arith.mulf %681, %688 : vector<2x8x30xf32>
    %690 = tpu.concatenate %685, %687, %689 in 1 : vector<2x8x30xf32>, vector<2x8x30xf32>, vector<2x8x30xf32> -> vector<2x24x30xf32>
    %691 = arith.truncf %690 : vector<2x24x30xf32> to vector<2x24x30xbf16>
    %692 = arith.truncf %682 : vector<2x8x30xf32> to vector<2x8x30xbf16>
    "tpu.trace_start"() <{level = 10 : i32, message = "bid,bjd->bij"}> : () -> ()
    %cst_214 = arith.constant dense<0.000000e+00> : vector<2x24x8xf32>
    %693 = tpu.matmul %691, %692, %cst_214 {dimension_numbers = #tpu.dot_dimension_numbers<[2], [2], [1], [1], [0, 0, 0, 1, 1, 1], [0], [0]>} : vector<2x24x30xbf16>, vector<2x8x30xbf16>, vector<2x24x8xf32> -> vector<2x24x8xf32>
    "tpu.trace_stop"() : () -> ()
    %cst_215 = arith.constant dense<0xFF800000> : vector<2x24xf32>
    %694 = vector.multi_reduction <maximumf>, %693, %cst_215 [2] : vector<2x24x8xf32> to vector<2x24xf32>
    %695 = vector.shape_cast %694 : vector<2x24xf32> to vector<2x24x1xf32>
    %696 = vector.broadcast %695 : vector<2x24x1xf32> to vector<2x24x8xf32>
    %697 = arith.subf %693, %696 : vector<2x24x8xf32>
    %698 = math.exp %697 : vector<2x24x8xf32>
    %cst_216 = arith.constant dense<0.000000e+00> : vector<2x24xf32>
    %699 = vector.multi_reduction <add>, %698, %cst_216 [2] : vector<2x24x8xf32> to vector<2x24xf32>
    %700 = vector.shape_cast %699 : vector<2x24xf32> to vector<2x24x1xf32>
    %701 = tpu.reciprocal %700 {approx = true} : vector<2x24x1xf32> -> vector<2x24x1xf32>
    %702 = vector.broadcast %701 : vector<2x24x1xf32> to vector<2x24x8xf32>
    %703 = arith.mulf %698, %702 : vector<2x24x8xf32>
    %704 = arith.truncf %703 : vector<2x24x8xf32> to vector<2x24x8xbf16>
    %705 = arith.truncf %683 : vector<2x8x30xf32> to vector<2x8x30xbf16>
    "tpu.trace_start"() <{level = 10 : i32, message = "bij,bjd->bid"}> : () -> ()
    %cst_217 = arith.constant dense<0.000000e+00> : vector<2x24x30xf32>
    %706 = tpu.matmul %704, %705, %cst_217 {dimension_numbers = #tpu.dot_dimension_numbers<[2], [1], [1], [2], [0, 0, 0, 1, 1, 2], [0], [0]>} : vector<2x24x8xbf16>, vector<2x8x30xbf16>, vector<2x24x30xf32> -> vector<2x24x30xf32>
    "tpu.trace_stop"() : () -> ()
    %707 = vector.extract_strided_slice %706 {offsets = [0, 0, 0], sizes = [2, 8, 30], strides = [1, 1, 1]} : vector<2x24x30xf32> to vector<2x8x30xf32>
    %708 = vector.broadcast %9 : vector<1x1x30xf32> to vector<2x8x30xf32>
    %709 = arith.mulf %707, %708 : vector<2x8x30xf32>
    %710 = vector.extract_strided_slice %706 {offsets = [0, 8, 0], sizes = [2, 8, 30], strides = [1, 1, 1]} : vector<2x24x30xf32> to vector<2x8x30xf32>
    %711 = vector.broadcast %11 : vector<1x1x30xf32> to vector<2x8x30xf32>
    %712 = arith.mulf %710, %711 : vector<2x8x30xf32>
    %713 = arith.addf %709, %712 : vector<2x8x30xf32>
    %714 = vector.extract_strided_slice %706 {offsets = [0, 16, 0], sizes = [2, 8, 30], strides = [1, 1, 1]} : vector<2x24x30xf32> to vector<2x8x30xf32>
    %715 = vector.broadcast %13 : vector<1x1x30xf32> to vector<2x8x30xf32>
    %716 = arith.mulf %714, %715 : vector<2x8x30xf32>
    %717 = arith.addf %713, %716 : vector<2x8x30xf32>
    %718 = arith.addf %717, %671 : vector<2x8x30xf32>
    %cst_218 = arith.constant dense<0.000000e+00> : vector<2x8xf32>
    %719 = vector.multi_reduction <add>, %718, %cst_218 [2] : vector<2x8x30xf32> to vector<2x8xf32>
    %720 = vector.shape_cast %719 : vector<2x8xf32> to vector<2x8x1xf32>
    %cst_219 = arith.constant dense<0.000000e+00> : vector<2x1xf32>
    %721 = vector.multi_reduction <add>, %720, %cst_219 [1] : vector<2x8x1xf32> to vector<2x1xf32>
    %722 = vector.shape_cast %721 : vector<2x1xf32> to vector<2x1x1xf32>
    %723 = arith.mulf %722, %4 : vector<2x1x1xf32>
    %724 = vector.broadcast %723 : vector<2x1x1xf32> to vector<2x8x30xf32>
    %725 = arith.subf %718, %724 : vector<2x8x30xf32>
    %726 = arith.mulf %725, %725 : vector<2x8x30xf32>
    %cst_220 = arith.constant dense<0.000000e+00> : vector<2x8xf32>
    %727 = vector.multi_reduction <add>, %726, %cst_220 [2] : vector<2x8x30xf32> to vector<2x8xf32>
    %728 = vector.shape_cast %727 : vector<2x8xf32> to vector<2x8x1xf32>
    %cst_221 = arith.constant dense<0.000000e+00> : vector<2x1xf32>
    %729 = vector.multi_reduction <add>, %728, %cst_221 [1] : vector<2x8x1xf32> to vector<2x1xf32>
    %730 = vector.shape_cast %729 : vector<2x1xf32> to vector<2x1x1xf32>
    %731 = math.rsqrt %730 : vector<2x1x1xf32>
    %732 = arith.mulf %3, %731 : vector<2x1x1xf32>
    %733 = vector.broadcast %732 : vector<2x1x1xf32> to vector<2x8x30xf32>
    %734 = arith.mulf %725, %733 : vector<2x8x30xf32>
    %735 = arith.truncf %734 : vector<2x8x30xf32> to vector<2x8x30xbf16>
    %c7_222 = arith.constant 7 : index
    %c0_223 = arith.constant 0 : index
    %c0_224 = arith.constant 0 : index
    %736 = vector.load %arg5[%c7_222, %c0_223, %c0_224] : memref<10x30x30xbf16, #tpu.memory_space<vmem>>, vector<1x30x30xbf16>
    %737 = vector.shape_cast %736 : vector<1x30x30xbf16> to vector<30x30xbf16>
    "tpu.trace_start"() <{level = 10 : i32, message = "btd,de->bte"}> : () -> ()
    %cst_225 = arith.constant dense<0.000000e+00> : vector<2x8x30xf32>
    %738 = tpu.matmul %735, %737, %cst_225 {dimension_numbers = #tpu.dot_dimension_numbers<[2], [0], [0, 1], [1], [0, 0, 0, 1, 1, 1], [], []>} : vector<2x8x30xbf16>, vector<30x30xbf16>, vector<2x8x30xf32> -> vector<2x8x30xf32>
    "tpu.trace_stop"() : () -> ()
    %739 = arith.negf %738 : vector<2x8x30xf32>
    %740 = math.exp %739 : vector<2x8x30xf32>
    %cst_226 = arith.constant 1.000000e+00 : f32
    %741 = vector.broadcast %cst_226 : f32 to vector<2x8x30xf32>
    %742 = arith.addf %741, %740 : vector<2x8x30xf32>
    %743 = arith.divf %741, %742 : vector<2x8x30xf32>
    %744 = arith.mulf %738, %743 : vector<2x8x30xf32>
    %745 = arith.truncf %744 : vector<2x8x30xf32> to vector<2x8x30xbf16>
    %c7_227 = arith.constant 7 : index
    %c0_228 = arith.constant 0 : index
    %c0_229 = arith.constant 0 : index
    %746 = vector.load %arg6[%c7_227, %c0_228, %c0_229] : memref<10x30x30xbf16, #tpu.memory_space<vmem>>, vector<1x30x30xbf16>
    %747 = vector.shape_cast %746 : vector<1x30x30xbf16> to vector<30x30xbf16>
    "tpu.trace_start"() <{level = 10 : i32, message = "bte,ed->btd"}> : () -> ()
    %cst_230 = arith.constant dense<0.000000e+00> : vector<2x8x30xf32>
    %748 = tpu.matmul %745, %747, %cst_230 {dimension_numbers = #tpu.dot_dimension_numbers<[2], [0], [0, 1], [1], [0, 0, 0, 1, 1, 1], [], []>} : vector<2x8x30xbf16>, vector<30x30xbf16>, vector<2x8x30xf32> -> vector<2x8x30xf32>
    "tpu.trace_stop"() : () -> ()
    %749 = arith.addf %748, %734 : vector<2x8x30xf32>
    %cst_231 = arith.constant dense<0.000000e+00> : vector<2x8xf32>
    %750 = vector.multi_reduction <add>, %749, %cst_231 [2] : vector<2x8x30xf32> to vector<2x8xf32>
    %751 = vector.shape_cast %750 : vector<2x8xf32> to vector<2x8x1xf32>
    %cst_232 = arith.constant dense<0.000000e+00> : vector<2x1xf32>
    %752 = vector.multi_reduction <add>, %751, %cst_232 [1] : vector<2x8x1xf32> to vector<2x1xf32>
    %753 = vector.shape_cast %752 : vector<2x1xf32> to vector<2x1x1xf32>
    %754 = arith.mulf %753, %4 : vector<2x1x1xf32>
    %755 = vector.broadcast %754 : vector<2x1x1xf32> to vector<2x8x30xf32>
    %756 = arith.subf %749, %755 : vector<2x8x30xf32>
    %757 = arith.mulf %756, %756 : vector<2x8x30xf32>
    %cst_233 = arith.constant dense<0.000000e+00> : vector<2x8xf32>
    %758 = vector.multi_reduction <add>, %757, %cst_233 [2] : vector<2x8x30xf32> to vector<2x8xf32>
    %759 = vector.shape_cast %758 : vector<2x8xf32> to vector<2x8x1xf32>
    %cst_234 = arith.constant dense<0.000000e+00> : vector<2x1xf32>
    %760 = vector.multi_reduction <add>, %759, %cst_234 [1] : vector<2x8x1xf32> to vector<2x1xf32>
    %761 = vector.shape_cast %760 : vector<2x1xf32> to vector<2x1x1xf32>
    %762 = math.rsqrt %761 : vector<2x1x1xf32>
    %763 = arith.mulf %3, %762 : vector<2x1x1xf32>
    %764 = vector.broadcast %763 : vector<2x1x1xf32> to vector<2x8x30xf32>
    %765 = arith.mulf %756, %764 : vector<2x8x30xf32>
    %766 = arith.truncf %765 : vector<2x8x30xf32> to vector<2x8x30xbf16>
    %c8 = arith.constant 8 : index
    %c0_235 = arith.constant 0 : index
    %c0_236 = arith.constant 0 : index
    %767 = vector.load %arg3[%c8, %c0_235, %c0_236] : memref<10x30x90xbf16, #tpu.memory_space<vmem>>, vector<1x30x90xbf16>
    %768 = vector.shape_cast %767 : vector<1x30x90xbf16> to vector<30x90xbf16>
    "tpu.trace_start"() <{level = 10 : i32, message = "btd,de->bte"}> : () -> ()
    %cst_237 = arith.constant dense<0.000000e+00> : vector<2x8x90xf32>
    %769 = tpu.matmul %766, %768, %cst_237 {dimension_numbers = #tpu.dot_dimension_numbers<[2], [0], [0, 1], [1], [0, 0, 0, 1, 1, 1], [], []>} : vector<2x8x30xbf16>, vector<30x90xbf16>, vector<2x8x90xf32> -> vector<2x8x90xf32>
    "tpu.trace_stop"() : () -> ()
    %770 = vector.extract_strided_slice %769 {offsets = [0, 0, 0], sizes = [2, 8, 30], strides = [1, 1, 1]} : vector<2x8x90xf32> to vector<2x8x30xf32>
    %c8_238 = arith.constant 8 : index
    %c0_239 = arith.constant 0 : index
    %c0_240 = arith.constant 0 : index
    %771 = vector.load %arg4[%c8_238, %c0_239, %c0_240] : memref<10x1x30xf32, #tpu.memory_space<vmem>>, vector<1x1x30xf32>
    %772 = vector.shape_cast %771 : vector<1x1x30xf32> to vector<1x30xf32>
    %773 = vector.shape_cast %772 : vector<1x30xf32> to vector<1x1x30xf32>
    %774 = vector.broadcast %773 : vector<1x1x30xf32> to vector<2x8x30xf32>
    %775 = arith.addf %770, %774 : vector<2x8x30xf32>
    %776 = vector.extract_strided_slice %769 {offsets = [0, 0, 30], sizes = [2, 8, 30], strides = [1, 1, 1]} : vector<2x8x90xf32> to vector<2x8x30xf32>
    %777 = vector.extract_strided_slice %769 {offsets = [0, 0, 60], sizes = [2, 8, 30], strides = [1, 1, 1]} : vector<2x8x90xf32> to vector<2x8x30xf32>
    %778 = vector.broadcast %9 : vector<1x1x30xf32> to vector<2x8x30xf32>
    %779 = arith.mulf %775, %778 : vector<2x8x30xf32>
    %780 = vector.broadcast %11 : vector<1x1x30xf32> to vector<2x8x30xf32>
    %781 = arith.mulf %775, %780 : vector<2x8x30xf32>
    %782 = vector.broadcast %13 : vector<1x1x30xf32> to vector<2x8x30xf32>
    %783 = arith.mulf %775, %782 : vector<2x8x30xf32>
    %784 = tpu.concatenate %779, %781, %783 in 1 : vector<2x8x30xf32>, vector<2x8x30xf32>, vector<2x8x30xf32> -> vector<2x24x30xf32>
    %785 = arith.truncf %784 : vector<2x24x30xf32> to vector<2x24x30xbf16>
    %786 = arith.truncf %776 : vector<2x8x30xf32> to vector<2x8x30xbf16>
    "tpu.trace_start"() <{level = 10 : i32, message = "bid,bjd->bij"}> : () -> ()
    %cst_241 = arith.constant dense<0.000000e+00> : vector<2x24x8xf32>
    %787 = tpu.matmul %785, %786, %cst_241 {dimension_numbers = #tpu.dot_dimension_numbers<[2], [2], [1], [1], [0, 0, 0, 1, 1, 1], [0], [0]>} : vector<2x24x30xbf16>, vector<2x8x30xbf16>, vector<2x24x8xf32> -> vector<2x24x8xf32>
    "tpu.trace_stop"() : () -> ()
    %cst_242 = arith.constant dense<0xFF800000> : vector<2x24xf32>
    %788 = vector.multi_reduction <maximumf>, %787, %cst_242 [2] : vector<2x24x8xf32> to vector<2x24xf32>
    %789 = vector.shape_cast %788 : vector<2x24xf32> to vector<2x24x1xf32>
    %790 = vector.broadcast %789 : vector<2x24x1xf32> to vector<2x24x8xf32>
    %791 = arith.subf %787, %790 : vector<2x24x8xf32>
    %792 = math.exp %791 : vector<2x24x8xf32>
    %cst_243 = arith.constant dense<0.000000e+00> : vector<2x24xf32>
    %793 = vector.multi_reduction <add>, %792, %cst_243 [2] : vector<2x24x8xf32> to vector<2x24xf32>
    %794 = vector.shape_cast %793 : vector<2x24xf32> to vector<2x24x1xf32>
    %795 = tpu.reciprocal %794 {approx = true} : vector<2x24x1xf32> -> vector<2x24x1xf32>
    %796 = vector.broadcast %795 : vector<2x24x1xf32> to vector<2x24x8xf32>
    %797 = arith.mulf %792, %796 : vector<2x24x8xf32>
    %798 = arith.truncf %797 : vector<2x24x8xf32> to vector<2x24x8xbf16>
    %799 = arith.truncf %777 : vector<2x8x30xf32> to vector<2x8x30xbf16>
    "tpu.trace_start"() <{level = 10 : i32, message = "bij,bjd->bid"}> : () -> ()
    %cst_244 = arith.constant dense<0.000000e+00> : vector<2x24x30xf32>
    %800 = tpu.matmul %798, %799, %cst_244 {dimension_numbers = #tpu.dot_dimension_numbers<[2], [1], [1], [2], [0, 0, 0, 1, 1, 2], [0], [0]>} : vector<2x24x8xbf16>, vector<2x8x30xbf16>, vector<2x24x30xf32> -> vector<2x24x30xf32>
    "tpu.trace_stop"() : () -> ()
    %801 = vector.extract_strided_slice %800 {offsets = [0, 0, 0], sizes = [2, 8, 30], strides = [1, 1, 1]} : vector<2x24x30xf32> to vector<2x8x30xf32>
    %802 = vector.broadcast %9 : vector<1x1x30xf32> to vector<2x8x30xf32>
    %803 = arith.mulf %801, %802 : vector<2x8x30xf32>
    %804 = vector.extract_strided_slice %800 {offsets = [0, 8, 0], sizes = [2, 8, 30], strides = [1, 1, 1]} : vector<2x24x30xf32> to vector<2x8x30xf32>
    %805 = vector.broadcast %11 : vector<1x1x30xf32> to vector<2x8x30xf32>
    %806 = arith.mulf %804, %805 : vector<2x8x30xf32>
    %807 = arith.addf %803, %806 : vector<2x8x30xf32>
    %808 = vector.extract_strided_slice %800 {offsets = [0, 16, 0], sizes = [2, 8, 30], strides = [1, 1, 1]} : vector<2x24x30xf32> to vector<2x8x30xf32>
    %809 = vector.broadcast %13 : vector<1x1x30xf32> to vector<2x8x30xf32>
    %810 = arith.mulf %808, %809 : vector<2x8x30xf32>
    %811 = arith.addf %807, %810 : vector<2x8x30xf32>
    %812 = arith.addf %811, %765 : vector<2x8x30xf32>
    %cst_245 = arith.constant dense<0.000000e+00> : vector<2x8xf32>
    %813 = vector.multi_reduction <add>, %812, %cst_245 [2] : vector<2x8x30xf32> to vector<2x8xf32>
    %814 = vector.shape_cast %813 : vector<2x8xf32> to vector<2x8x1xf32>
    %cst_246 = arith.constant dense<0.000000e+00> : vector<2x1xf32>
    %815 = vector.multi_reduction <add>, %814, %cst_246 [1] : vector<2x8x1xf32> to vector<2x1xf32>
    %816 = vector.shape_cast %815 : vector<2x1xf32> to vector<2x1x1xf32>
    %817 = arith.mulf %816, %4 : vector<2x1x1xf32>
    %818 = vector.broadcast %817 : vector<2x1x1xf32> to vector<2x8x30xf32>
    %819 = arith.subf %812, %818 : vector<2x8x30xf32>
    %820 = arith.mulf %819, %819 : vector<2x8x30xf32>
    %cst_247 = arith.constant dense<0.000000e+00> : vector<2x8xf32>
    %821 = vector.multi_reduction <add>, %820, %cst_247 [2] : vector<2x8x30xf32> to vector<2x8xf32>
    %822 = vector.shape_cast %821 : vector<2x8xf32> to vector<2x8x1xf32>
    %cst_248 = arith.constant dense<0.000000e+00> : vector<2x1xf32>
    %823 = vector.multi_reduction <add>, %822, %cst_248 [1] : vector<2x8x1xf32> to vector<2x1xf32>
    %824 = vector.shape_cast %823 : vector<2x1xf32> to vector<2x1x1xf32>
    %825 = math.rsqrt %824 : vector<2x1x1xf32>
    %826 = arith.mulf %3, %825 : vector<2x1x1xf32>
    %827 = vector.broadcast %826 : vector<2x1x1xf32> to vector<2x8x30xf32>
    %828 = arith.mulf %819, %827 : vector<2x8x30xf32>
    %829 = arith.truncf %828 : vector<2x8x30xf32> to vector<2x8x30xbf16>
    %c8_249 = arith.constant 8 : index
    %c0_250 = arith.constant 0 : index
    %c0_251 = arith.constant 0 : index
    %830 = vector.load %arg5[%c8_249, %c0_250, %c0_251] : memref<10x30x30xbf16, #tpu.memory_space<vmem>>, vector<1x30x30xbf16>
    %831 = vector.shape_cast %830 : vector<1x30x30xbf16> to vector<30x30xbf16>
    "tpu.trace_start"() <{level = 10 : i32, message = "btd,de->bte"}> : () -> ()
    %cst_252 = arith.constant dense<0.000000e+00> : vector<2x8x30xf32>
    %832 = tpu.matmul %829, %831, %cst_252 {dimension_numbers = #tpu.dot_dimension_numbers<[2], [0], [0, 1], [1], [0, 0, 0, 1, 1, 1], [], []>} : vector<2x8x30xbf16>, vector<30x30xbf16>, vector<2x8x30xf32> -> vector<2x8x30xf32>
    "tpu.trace_stop"() : () -> ()
    %833 = arith.negf %832 : vector<2x8x30xf32>
    %834 = math.exp %833 : vector<2x8x30xf32>
    %cst_253 = arith.constant 1.000000e+00 : f32
    %835 = vector.broadcast %cst_253 : f32 to vector<2x8x30xf32>
    %836 = arith.addf %835, %834 : vector<2x8x30xf32>
    %837 = arith.divf %835, %836 : vector<2x8x30xf32>
    %838 = arith.mulf %832, %837 : vector<2x8x30xf32>
    %839 = arith.truncf %838 : vector<2x8x30xf32> to vector<2x8x30xbf16>
    %c8_254 = arith.constant 8 : index
    %c0_255 = arith.constant 0 : index
    %c0_256 = arith.constant 0 : index
    %840 = vector.load %arg6[%c8_254, %c0_255, %c0_256] : memref<10x30x30xbf16, #tpu.memory_space<vmem>>, vector<1x30x30xbf16>
    %841 = vector.shape_cast %840 : vector<1x30x30xbf16> to vector<30x30xbf16>
    "tpu.trace_start"() <{level = 10 : i32, message = "bte,ed->btd"}> : () -> ()
    %cst_257 = arith.constant dense<0.000000e+00> : vector<2x8x30xf32>
    %842 = tpu.matmul %839, %841, %cst_257 {dimension_numbers = #tpu.dot_dimension_numbers<[2], [0], [0, 1], [1], [0, 0, 0, 1, 1, 1], [], []>} : vector<2x8x30xbf16>, vector<30x30xbf16>, vector<2x8x30xf32> -> vector<2x8x30xf32>
    "tpu.trace_stop"() : () -> ()
    %843 = arith.addf %842, %828 : vector<2x8x30xf32>
    %cst_258 = arith.constant dense<0.000000e+00> : vector<2x8xf32>
    %844 = vector.multi_reduction <add>, %843, %cst_258 [2] : vector<2x8x30xf32> to vector<2x8xf32>
    %845 = vector.shape_cast %844 : vector<2x8xf32> to vector<2x8x1xf32>
    %cst_259 = arith.constant dense<0.000000e+00> : vector<2x1xf32>
    %846 = vector.multi_reduction <add>, %845, %cst_259 [1] : vector<2x8x1xf32> to vector<2x1xf32>
    %847 = vector.shape_cast %846 : vector<2x1xf32> to vector<2x1x1xf32>
    %848 = arith.mulf %847, %4 : vector<2x1x1xf32>
    %849 = vector.broadcast %848 : vector<2x1x1xf32> to vector<2x8x30xf32>
    %850 = arith.subf %843, %849 : vector<2x8x30xf32>
    %851 = arith.mulf %850, %850 : vector<2x8x30xf32>
    %cst_260 = arith.constant dense<0.000000e+00> : vector<2x8xf32>
    %852 = vector.multi_reduction <add>, %851, %cst_260 [2] : vector<2x8x30xf32> to vector<2x8xf32>
    %853 = vector.shape_cast %852 : vector<2x8xf32> to vector<2x8x1xf32>
    %cst_261 = arith.constant dense<0.000000e+00> : vector<2x1xf32>
    %854 = vector.multi_reduction <add>, %853, %cst_261 [1] : vector<2x8x1xf32> to vector<2x1xf32>
    %855 = vector.shape_cast %854 : vector<2x1xf32> to vector<2x1x1xf32>
    %856 = math.rsqrt %855 : vector<2x1x1xf32>
    %857 = arith.mulf %3, %856 : vector<2x1x1xf32>
    %858 = vector.broadcast %857 : vector<2x1x1xf32> to vector<2x8x30xf32>
    %859 = arith.mulf %850, %858 : vector<2x8x30xf32>
    %860 = arith.truncf %859 : vector<2x8x30xf32> to vector<2x8x30xbf16>
    %c9 = arith.constant 9 : index
    %c0_262 = arith.constant 0 : index
    %c0_263 = arith.constant 0 : index
    %861 = vector.load %arg3[%c9, %c0_262, %c0_263] : memref<10x30x90xbf16, #tpu.memory_space<vmem>>, vector<1x30x90xbf16>
    %862 = vector.shape_cast %861 : vector<1x30x90xbf16> to vector<30x90xbf16>
    "tpu.trace_start"() <{level = 10 : i32, message = "btd,de->bte"}> : () -> ()
    %cst_264 = arith.constant dense<0.000000e+00> : vector<2x8x90xf32>
    %863 = tpu.matmul %860, %862, %cst_264 {dimension_numbers = #tpu.dot_dimension_numbers<[2], [0], [0, 1], [1], [0, 0, 0, 1, 1, 1], [], []>} : vector<2x8x30xbf16>, vector<30x90xbf16>, vector<2x8x90xf32> -> vector<2x8x90xf32>
    "tpu.trace_stop"() : () -> ()
    %864 = vector.extract_strided_slice %863 {offsets = [0, 0, 0], sizes = [2, 8, 30], strides = [1, 1, 1]} : vector<2x8x90xf32> to vector<2x8x30xf32>
    %c9_265 = arith.constant 9 : index
    %c0_266 = arith.constant 0 : index
    %c0_267 = arith.constant 0 : index
    %865 = vector.load %arg4[%c9_265, %c0_266, %c0_267] : memref<10x1x30xf32, #tpu.memory_space<vmem>>, vector<1x1x30xf32>
    %866 = vector.shape_cast %865 : vector<1x1x30xf32> to vector<1x30xf32>
    %867 = vector.shape_cast %866 : vector<1x30xf32> to vector<1x1x30xf32>
    %868 = vector.broadcast %867 : vector<1x1x30xf32> to vector<2x8x30xf32>
    %869 = arith.addf %864, %868 : vector<2x8x30xf32>
    %870 = vector.extract_strided_slice %863 {offsets = [0, 0, 30], sizes = [2, 8, 30], strides = [1, 1, 1]} : vector<2x8x90xf32> to vector<2x8x30xf32>
    %871 = vector.extract_strided_slice %863 {offsets = [0, 0, 60], sizes = [2, 8, 30], strides = [1, 1, 1]} : vector<2x8x90xf32> to vector<2x8x30xf32>
    %872 = vector.broadcast %9 : vector<1x1x30xf32> to vector<2x8x30xf32>
    %873 = arith.mulf %869, %872 : vector<2x8x30xf32>
    %874 = vector.broadcast %11 : vector<1x1x30xf32> to vector<2x8x30xf32>
    %875 = arith.mulf %869, %874 : vector<2x8x30xf32>
    %876 = vector.broadcast %13 : vector<1x1x30xf32> to vector<2x8x30xf32>
    %877 = arith.mulf %869, %876 : vector<2x8x30xf32>
    %878 = tpu.concatenate %873, %875, %877 in 1 : vector<2x8x30xf32>, vector<2x8x30xf32>, vector<2x8x30xf32> -> vector<2x24x30xf32>
    %879 = arith.truncf %878 : vector<2x24x30xf32> to vector<2x24x30xbf16>
    %880 = arith.truncf %870 : vector<2x8x30xf32> to vector<2x8x30xbf16>
    "tpu.trace_start"() <{level = 10 : i32, message = "bid,bjd->bij"}> : () -> ()
    %cst_268 = arith.constant dense<0.000000e+00> : vector<2x24x8xf32>
    %881 = tpu.matmul %879, %880, %cst_268 {dimension_numbers = #tpu.dot_dimension_numbers<[2], [2], [1], [1], [0, 0, 0, 1, 1, 1], [0], [0]>} : vector<2x24x30xbf16>, vector<2x8x30xbf16>, vector<2x24x8xf32> -> vector<2x24x8xf32>
    "tpu.trace_stop"() : () -> ()
    %cst_269 = arith.constant dense<0xFF800000> : vector<2x24xf32>
    %882 = vector.multi_reduction <maximumf>, %881, %cst_269 [2] : vector<2x24x8xf32> to vector<2x24xf32>
    %883 = vector.shape_cast %882 : vector<2x24xf32> to vector<2x24x1xf32>
    %884 = vector.broadcast %883 : vector<2x24x1xf32> to vector<2x24x8xf32>
    %885 = arith.subf %881, %884 : vector<2x24x8xf32>
    %886 = math.exp %885 : vector<2x24x8xf32>
    %cst_270 = arith.constant dense<0.000000e+00> : vector<2x24xf32>
    %887 = vector.multi_reduction <add>, %886, %cst_270 [2] : vector<2x24x8xf32> to vector<2x24xf32>
    %888 = vector.shape_cast %887 : vector<2x24xf32> to vector<2x24x1xf32>
    %889 = tpu.reciprocal %888 {approx = true} : vector<2x24x1xf32> -> vector<2x24x1xf32>
    %890 = vector.broadcast %889 : vector<2x24x1xf32> to vector<2x24x8xf32>
    %891 = arith.mulf %886, %890 : vector<2x24x8xf32>
    %892 = arith.truncf %891 : vector<2x24x8xf32> to vector<2x24x8xbf16>
    %893 = arith.truncf %871 : vector<2x8x30xf32> to vector<2x8x30xbf16>
    "tpu.trace_start"() <{level = 10 : i32, message = "bij,bjd->bid"}> : () -> ()
    %cst_271 = arith.constant dense<0.000000e+00> : vector<2x24x30xf32>
    %894 = tpu.matmul %892, %893, %cst_271 {dimension_numbers = #tpu.dot_dimension_numbers<[2], [1], [1], [2], [0, 0, 0, 1, 1, 2], [0], [0]>} : vector<2x24x8xbf16>, vector<2x8x30xbf16>, vector<2x24x30xf32> -> vector<2x24x30xf32>
    "tpu.trace_stop"() : () -> ()
    %895 = vector.extract_strided_slice %894 {offsets = [0, 0, 0], sizes = [2, 8, 30], strides = [1, 1, 1]} : vector<2x24x30xf32> to vector<2x8x30xf32>
    %896 = vector.broadcast %9 : vector<1x1x30xf32> to vector<2x8x30xf32>
    %897 = arith.mulf %895, %896 : vector<2x8x30xf32>
    %898 = vector.extract_strided_slice %894 {offsets = [0, 8, 0], sizes = [2, 8, 30], strides = [1, 1, 1]} : vector<2x24x30xf32> to vector<2x8x30xf32>
    %899 = vector.broadcast %11 : vector<1x1x30xf32> to vector<2x8x30xf32>
    %900 = arith.mulf %898, %899 : vector<2x8x30xf32>
    %901 = arith.addf %897, %900 : vector<2x8x30xf32>
    %902 = vector.extract_strided_slice %894 {offsets = [0, 16, 0], sizes = [2, 8, 30], strides = [1, 1, 1]} : vector<2x24x30xf32> to vector<2x8x30xf32>
    %903 = vector.broadcast %13 : vector<1x1x30xf32> to vector<2x8x30xf32>
    %904 = arith.mulf %902, %903 : vector<2x8x30xf32>
    %905 = arith.addf %901, %904 : vector<2x8x30xf32>
    %906 = arith.addf %905, %859 : vector<2x8x30xf32>
    %cst_272 = arith.constant dense<0.000000e+00> : vector<2x8xf32>
    %907 = vector.multi_reduction <add>, %906, %cst_272 [2] : vector<2x8x30xf32> to vector<2x8xf32>
    %908 = vector.shape_cast %907 : vector<2x8xf32> to vector<2x8x1xf32>
    %cst_273 = arith.constant dense<0.000000e+00> : vector<2x1xf32>
    %909 = vector.multi_reduction <add>, %908, %cst_273 [1] : vector<2x8x1xf32> to vector<2x1xf32>
    %910 = vector.shape_cast %909 : vector<2x1xf32> to vector<2x1x1xf32>
    %911 = arith.mulf %910, %4 : vector<2x1x1xf32>
    %912 = vector.broadcast %911 : vector<2x1x1xf32> to vector<2x8x30xf32>
    %913 = arith.subf %906, %912 : vector<2x8x30xf32>
    %914 = arith.mulf %913, %913 : vector<2x8x30xf32>
    %cst_274 = arith.constant dense<0.000000e+00> : vector<2x8xf32>
    %915 = vector.multi_reduction <add>, %914, %cst_274 [2] : vector<2x8x30xf32> to vector<2x8xf32>
    %916 = vector.shape_cast %915 : vector<2x8xf32> to vector<2x8x1xf32>
    %cst_275 = arith.constant dense<0.000000e+00> : vector<2x1xf32>
    %917 = vector.multi_reduction <add>, %916, %cst_275 [1] : vector<2x8x1xf32> to vector<2x1xf32>
    %918 = vector.shape_cast %917 : vector<2x1xf32> to vector<2x1x1xf32>
    %919 = math.rsqrt %918 : vector<2x1x1xf32>
    %920 = arith.mulf %3, %919 : vector<2x1x1xf32>
    %921 = vector.broadcast %920 : vector<2x1x1xf32> to vector<2x8x30xf32>
    %922 = arith.mulf %913, %921 : vector<2x8x30xf32>
    %923 = arith.truncf %922 : vector<2x8x30xf32> to vector<2x8x30xbf16>
    %c9_276 = arith.constant 9 : index
    %c0_277 = arith.constant 0 : index
    %c0_278 = arith.constant 0 : index
    %924 = vector.load %arg5[%c9_276, %c0_277, %c0_278] : memref<10x30x30xbf16, #tpu.memory_space<vmem>>, vector<1x30x30xbf16>
    %925 = vector.shape_cast %924 : vector<1x30x30xbf16> to vector<30x30xbf16>
    "tpu.trace_start"() <{level = 10 : i32, message = "btd,de->bte"}> : () -> ()
    %cst_279 = arith.constant dense<0.000000e+00> : vector<2x8x30xf32>
    %926 = tpu.matmul %923, %925, %cst_279 {dimension_numbers = #tpu.dot_dimension_numbers<[2], [0], [0, 1], [1], [0, 0, 0, 1, 1, 1], [], []>} : vector<2x8x30xbf16>, vector<30x30xbf16>, vector<2x8x30xf32> -> vector<2x8x30xf32>
    "tpu.trace_stop"() : () -> ()
    %927 = arith.negf %926 : vector<2x8x30xf32>
    %928 = math.exp %927 : vector<2x8x30xf32>
    %cst_280 = arith.constant 1.000000e+00 : f32
    %929 = vector.broadcast %cst_280 : f32 to vector<2x8x30xf32>
    %930 = arith.addf %929, %928 : vector<2x8x30xf32>
    %931 = arith.divf %929, %930 : vector<2x8x30xf32>
    %932 = arith.mulf %926, %931 : vector<2x8x30xf32>
    %933 = arith.truncf %932 : vector<2x8x30xf32> to vector<2x8x30xbf16>
    %c9_281 = arith.constant 9 : index
    %c0_282 = arith.constant 0 : index
    %c0_283 = arith.constant 0 : index
    %934 = vector.load %arg6[%c9_281, %c0_282, %c0_283] : memref<10x30x30xbf16, #tpu.memory_space<vmem>>, vector<1x30x30xbf16>
    %935 = vector.shape_cast %934 : vector<1x30x30xbf16> to vector<30x30xbf16>
    "tpu.trace_start"() <{level = 10 : i32, message = "bte,ed->btd"}> : () -> ()
    %cst_284 = arith.constant dense<0.000000e+00> : vector<2x8x30xf32>
    %936 = tpu.matmul %933, %935, %cst_284 {dimension_numbers = #tpu.dot_dimension_numbers<[2], [0], [0, 1], [1], [0, 0, 0, 1, 1, 1], [], []>} : vector<2x8x30xbf16>, vector<30x30xbf16>, vector<2x8x30xf32> -> vector<2x8x30xf32>
    "tpu.trace_stop"() : () -> ()
    %937 = arith.addf %936, %922 : vector<2x8x30xf32>
    %cst_285 = arith.constant dense<0.000000e+00> : vector<2x8xf32>
    %938 = vector.multi_reduction <add>, %937, %cst_285 [2] : vector<2x8x30xf32> to vector<2x8xf32>
    %939 = vector.shape_cast %938 : vector<2x8xf32> to vector<2x8x1xf32>
    %cst_286 = arith.constant dense<0.000000e+00> : vector<2x1xf32>
    %940 = vector.multi_reduction <add>, %939, %cst_286 [1] : vector<2x8x1xf32> to vector<2x1xf32>
    %941 = vector.shape_cast %940 : vector<2x1xf32> to vector<2x1x1xf32>
    %942 = arith.mulf %941, %4 : vector<2x1x1xf32>
    %943 = vector.broadcast %942 : vector<2x1x1xf32> to vector<2x8x30xf32>
    %944 = arith.subf %937, %943 : vector<2x8x30xf32>
    %945 = arith.mulf %944, %944 : vector<2x8x30xf32>
    %cst_287 = arith.constant dense<0.000000e+00> : vector<2x8xf32>
    %946 = vector.multi_reduction <add>, %945, %cst_287 [2] : vector<2x8x30xf32> to vector<2x8xf32>
    %947 = vector.shape_cast %946 : vector<2x8xf32> to vector<2x8x1xf32>
    %cst_288 = arith.constant dense<0.000000e+00> : vector<2x1xf32>
    %948 = vector.multi_reduction <add>, %947, %cst_288 [1] : vector<2x8x1xf32> to vector<2x1xf32>
    %949 = vector.shape_cast %948 : vector<2x1xf32> to vector<2x1x1xf32>
    %950 = math.rsqrt %949 : vector<2x1x1xf32>
    %951 = arith.mulf %3, %950 : vector<2x1x1xf32>
    %952 = vector.broadcast %951 : vector<2x1x1xf32> to vector<2x8x30xf32>
    %953 = arith.mulf %944, %952 : vector<2x8x30xf32>
    %cst_289 = arith.constant dense<0.000000e+00> : vector<2x30xf32>
    %954 = vector.multi_reduction <add>, %953, %cst_289 [1] : vector<2x8x30xf32> to vector<2x30xf32>
    %955 = vector.shape_cast %954 : vector<2x30xf32> to vector<2x1x30xf32>
    %956 = vector.broadcast %7 : vector<2x1x1xf32> to vector<2x1x30xf32>
    %957 = arith.mulf %955, %956 : vector<2x1x30xf32>
    %958 = arith.truncf %957 : vector<2x1x30xf32> to vector<2x1x30xbf16>
    %c0_290 = arith.constant 0 : index
    %c0_291 = arith.constant 0 : index
    %959 = vector.load %arg7[%c0_290, %c0_291] : memref<30x200xbf16, #tpu.memory_space<vmem>>, vector<30x200xbf16>
    "tpu.trace_start"() <{level = 10 : i32, message = "bod,dk->bok"}> : () -> ()
    %cst_292 = arith.constant dense<0.000000e+00> : vector<2x1x200xf32>
    %960 = tpu.matmul %958, %959, %cst_292 {dimension_numbers = #tpu.dot_dimension_numbers<[2], [0], [0, 1], [1], [0, 0, 0, 1, 1, 1], [], []>} : vector<2x1x30xbf16>, vector<30x200xbf16>, vector<2x1x200xf32> -> vector<2x1x200xf32>
    "tpu.trace_stop"() : () -> ()
    %961 = arith.negf %960 : vector<2x1x200xf32>
    %962 = math.exp %961 : vector<2x1x200xf32>
    %cst_293 = arith.constant 1.000000e+00 : f32
    %963 = vector.broadcast %cst_293 : f32 to vector<2x1x200xf32>
    %964 = arith.addf %963, %962 : vector<2x1x200xf32>
    %965 = arith.divf %963, %964 : vector<2x1x200xf32>
    %966 = arith.mulf %960, %965 : vector<2x1x200xf32>
    %967 = arith.truncf %966 : vector<2x1x200xf32> to vector<2x1x200xbf16>
    %c0_294 = arith.constant 0 : index
    %c0_295 = arith.constant 0 : index
    %968 = vector.load %arg8[%c0_294, %c0_295] : memref<200x4xbf16, #tpu.memory_space<vmem>>, vector<200x4xbf16>
    "tpu.trace_start"() <{level = 10 : i32, message = "bok,kn->bon"}> : () -> ()
    %cst_296 = arith.constant dense<0.000000e+00> : vector<2x1x4xf32>
    %969 = tpu.matmul %967, %968, %cst_296 {dimension_numbers = #tpu.dot_dimension_numbers<[2], [0], [0, 1], [1], [0, 0, 0, 1, 1, 1], [], []>} : vector<2x1x200xbf16>, vector<200x4xbf16>, vector<2x1x4xf32> -> vector<2x1x4xf32>
    "tpu.trace_stop"() : () -> ()
    %c0_297 = arith.constant 0 : index
    %c0_298 = arith.constant 0 : index
    %c0_299 = arith.constant 0 : index
    %970 = vector.load %arg10[%c0_297, %c0_298, %c0_299] : memref<2x1x4xf32, #tpu.memory_space<vmem>>, vector<2x1x4xf32>
    tpu.vector_store %arg10[%c0_297, %c0_298, %c0_299], %969 {strides = array<i32>} : memref<2x1x4xf32, #tpu.memory_space<vmem>>, vector<2x1x4xf32>,
    return
  }
  func.func @transform_0(%arg0: i32) -> (i32, i32, i32) {
    %c0_i32 = arith.constant 0 : i32
    %c0_i32_0 = arith.constant 0 : i32
    %c0_i32_1 = arith.constant 0 : i32
    return %arg0, %c0_i32, %c0_i32_0 : i32, i32, i32
  }
  func.func @transform_1(%arg0: i32) -> (i32, i32, i32) {
    %c0_i32 = arith.constant 0 : i32
    %c0_i32_0 = arith.constant 0 : i32
    %c0_i32_1 = arith.constant 0 : i32
    return %arg0, %c0_i32, %c0_i32_0 : i32, i32, i32
  }
  func.func @transform_2(%arg0: i32) -> (i32, i32, i32) {
    %c0_i32 = arith.constant 0 : i32
    %c0_i32_0 = arith.constant 0 : i32
    %c0_i32_1 = arith.constant 0 : i32
    %c0_i32_2 = arith.constant 0 : i32
    return %c0_i32, %c0_i32_0, %c0_i32_1 : i32, i32, i32
  }
  func.func @transform_3(%arg0: i32) -> (i32, i32, i32) {
    %c0_i32 = arith.constant 0 : i32
    %c0_i32_0 = arith.constant 0 : i32
    %c0_i32_1 = arith.constant 0 : i32
    %c0_i32_2 = arith.constant 0 : i32
    return %c0_i32, %c0_i32_0, %c0_i32_1 : i32, i32, i32
  }
  func.func @transform_4(%arg0: i32) -> (i32, i32, i32) {
    %c0_i32 = arith.constant 0 : i32
    %c0_i32_0 = arith.constant 0 : i32
    %c0_i32_1 = arith.constant 0 : i32
    %c0_i32_2 = arith.constant 0 : i32
    return %c0_i32, %c0_i32_0, %c0_i32_1 : i32, i32, i32
  }
  func.func @transform_5(%arg0: i32) -> (i32, i32, i32) {
    %c0_i32 = arith.constant 0 : i32
    %c0_i32_0 = arith.constant 0 : i32
    %c0_i32_1 = arith.constant 0 : i32
    %c0_i32_2 = arith.constant 0 : i32
    return %c0_i32, %c0_i32_0, %c0_i32_1 : i32, i32, i32
  }
  func.func @transform_6(%arg0: i32) -> (i32, i32) {
    %c0_i32 = arith.constant 0 : i32
    %c0_i32_0 = arith.constant 0 : i32
    %c0_i32_1 = arith.constant 0 : i32
    return %c0_i32, %c0_i32_0 : i32, i32
  }
  func.func @transform_7(%arg0: i32) -> (i32, i32) {
    %c0_i32 = arith.constant 0 : i32
    %c0_i32_0 = arith.constant 0 : i32
    %c0_i32_1 = arith.constant 0 : i32
    return %c0_i32, %c0_i32_0 : i32, i32
  }
  func.func @transform_8(%arg0: i32) -> (i32, i32, i32, i32) {
    %c0_i32 = arith.constant 0 : i32
    %c0_i32_0 = arith.constant 0 : i32
    %c0_i32_1 = arith.constant 0 : i32
    %c0_i32_2 = arith.constant 0 : i32
    %c0_i32_3 = arith.constant 0 : i32
    return %c0_i32, %c0_i32_0, %c0_i32_1, %c0_i32_2 : i32, i32, i32, i32
  }
  func.func @transform_9(%arg0: i32) -> (i32, i32, i32) {
    %c0_i32 = arith.constant 0 : i32
    %c0_i32_0 = arith.constant 0 : i32
    %c0_i32_1 = arith.constant 0 : i32
    return %arg0, %c0_i32, %c0_i32_0 : i32, i32, i32
  }
}

</mosaic_0001>

<llo_original>
// kernel: transformer_forward.1
$region0: #{transformer_forward.1}
  #allocation0 [shape = 'u32[]', space=smem, size = 0x4, offset = 0x4, fixed_abs, tag = 'smem constant byte address 0x4 - core index']
  #allocation1 [shape = 'u32[144,128]{1,0:T(1,128)}', space=vmem, size = 0x12000, scoped, tag = 'internal scratch']
  %s0 = inlined_call_operand.vmem [shape: f32[2,8,30], index: 0, kind: input, shape index: {}]
  %s1 = inlined_call_operand.vmem [shape: f32[2,1,1], index: 1, kind: input, shape index: {}]
  %s2 = inlined_call_operand.hbm [shape: bf16[10,30,90], index: 2, kind: input, shape index: {}]
  %s3 = inlined_call_operand.vmem [shape: f32[10,1,30], index: 3, kind: input, shape index: {}]
  %s4 = inlined_call_operand.hbm [shape: bf16[10,30,30], index: 4, kind: input, shape index: {}]
  %s5 = inlined_call_operand.hbm [shape: bf16[10,30,30], index: 5, kind: input, shape index: {}]
  %s6 = inlined_call_operand.vmem [shape: bf16[30,200], index: 6, kind: input, shape index: {}]
  %s7 = inlined_call_operand.vmem [shape: bf16[200,4], index: 7, kind: input, shape index: {}]
  %s8 = inlined_call_operand.vmem [shape: f32[3,1,1,30], index: 8, kind: input, shape index: {}]
  %s9 = inlined_call_operand.hbm [shape: f32[2,1,4], index: 9, kind: output, shape index: {}]
  %s10 = sld [smem:[#allocation0]]
  $region58: #{transformer_forward.1} parent=0
    _
  %s12 = ssub.s32 1, %s10
  %s13 = scalar_select 0, %s12, %s10
  $region1: #{transformer_forward.1} parent=0
    #allocation2 [shape = 'u8[81920]{0}', space=vmem, size = 0x14000, scoped, tag = 'input window, operand 2, single buffered']
    #allocation3 [shape = 's32[1]{0}', space=sflag, size = 0x4, scoped, tag = 'scoped memory for transformer_forward.1']
    #allocation4 [shape = 's32[1]{0}', space=sflag, size = 0x4, scoped, tag = 'scoped memory for transformer_forward.1']
    #allocation5 [shape = 'u8[81920]{0}', space=vmem, size = 0x14000, scoped, tag = 'input window, operand 4, single buffered']
    #allocation6 [shape = 's32[1]{0}', space=sflag, size = 0x4, scoped, tag = 'scoped memory for transformer_forward.1']
    #allocation7 [shape = 'u8[81920]{0}', space=vmem, size = 0x14000, scoped, tag = 'input window, operand 5, single buffered']
    #allocation8 [shape = 'u8[1024]{0}', space=vmem, size = 0x400, scoped, tag = 'output window, operand 0, single buffered']
    %14 = vsyncpa [#allocation3], 0
    %15 = vsyncpa [#allocation6], 0
    %16 = vsyncpa [#allocation4], 0
    // Predicated region
    $region2: #{transformer_forward.1} parent=1 // pred_check
      _
    $region3: #{transformer_forward.1} parent=1 // pred_check_branch
      %18 = sbr.rel (0) target = $region5
    $region4: #{transformer_forward.1} parent=1 // pred_region
      _
    $region5: #{transformer_forward.1} parent=1 // pred_fallthru
      _
    // Predicated region
    $region6: #{transformer_forward.1} parent=1 // pred_check
      _
    $region7: #{transformer_forward.1} parent=1 // pred_check_branch
      %20 = sbr.rel (0) target = $region9
    $region8: #{transformer_forward.1} parent=1 // pred_region
      _
    $region9: #{transformer_forward.1} parent=1 // pred_fallthru
      _
    // Predicated region
    $region10: #{transformer_forward.1} parent=1 // pred_check
      _
    $region11: #{transformer_forward.1} parent=1 // pred_check_branch
      %22 = sbr.rel (0) target = $region13
    $region12: #{transformer_forward.1} parent=1 // pred_region
      %s24 = ssub.s32 2560, 2560
      %25 = vsyncadd [#allocation3], %s24
      %s26 = sshll.u32 [#allocation2], 4
      %s27 = int_to_ptr.vmem [resolvable:$true] %s26
      %32 = dma.hbm_to_vmem [thread:$0]  %s2, 2560, %s27, [#allocation3], 64, 64, 4
    $region13: #{transformer_forward.1} parent=1 // pred_fallthru
      _
    // Predicated region
    $region14: #{transformer_forward.1} parent=1 // pred_check
      _
    $region15: #{transformer_forward.1} parent=1 // pred_check_branch
      %34 = sbr.rel (0) target = $region17
    $region16: #{transformer_forward.1} parent=1 // pred_region
      _
    $region17: #{transformer_forward.1} parent=1 // pred_fallthru
      _
    // Predicated region
    $region18: #{transformer_forward.1} parent=1 // pred_check
      _
    $region19: #{transformer_forward.1} parent=1 // pred_check_branch
      %36 = sbr.rel (0) target = $region21
    $region20: #{transformer_forward.1} parent=1 // pred_region
      %s38 = ssub.s32 2560, 2560
      %39 = vsyncadd [#allocation6], %s38
      %s40 = sshll.u32 [#allocation5], 4
      %s41 = int_to_ptr.vmem [resolvable:$true] %s40
      %46 = dma.hbm_to_vmem [thread:$0]  %s4, 2560, %s41, [#allocation6], 64, 64, 4
    $region21: #{transformer_forward.1} parent=1 // pred_fallthru
      _
    // Predicated region
    $region22: #{transformer_forward.1} parent=1 // pred_check
      _
    $region23: #{transformer_forward.1} parent=1 // pred_check_branch
      %48 = sbr.rel (0) target = $region25
    $region24: #{transformer_forward.1} parent=1 // pred_region
      %s50 = ssub.s32 2560, 2560
      %51 = vsyncadd [#allocation6], %s50
      %s52 = sshll.u32 [#allocation7], 4
      %s53 = int_to_ptr.vmem [resolvable:$true] %s52
      %58 = dma.hbm_to_vmem [thread:$0]  %s5, 2560, %s53, [#allocation6], 64, 64, 4
    $region25: #{transformer_forward.1} parent=1 // pred_fallthru
      _
    // Predicated region
    $region26: #{transformer_forward.1} parent=1 // pred_check
      _
    $region27: #{transformer_forward.1} parent=1 // pred_check_branch
      %60 = sbr.rel (0) target = $region29
    $region28: #{transformer_forward.1} parent=1 // pred_region
      _
    $region29: #{transformer_forward.1} parent=1 // pred_fallthru
      _
    // Predicated region
    $region30: #{transformer_forward.1} parent=1 // pred_check
      _
    $region31: #{transformer_forward.1} parent=1 // pred_check_branch
      %62 = sbr.rel (0) target = $region33
    $region32: #{transformer_forward.1} parent=1 // pred_region
      _
    $region33: #{transformer_forward.1} parent=1 // pred_fallthru
      _
    // Predicated region
    $region34: #{transformer_forward.1} parent=1 // pred_check
      _
    $region35: #{transformer_forward.1} parent=1 // pred_check_branch
      %64 = sbr.rel (0) target = $region37
    $region36: #{transformer_forward.1} parent=1 // pred_region
      _
    $region37: #{transformer_forward.1} parent=1 // pred_fallthru
      _
    // Predicated region
    $region38: #{transformer_forward.1} parent=1 // pred_check
      _
    $region39: #{transformer_forward.1} parent=1 // pred_check_branch
      %66 = sbr.rel (0) target = $region41
    $region40: #{transformer_forward.1} parent=1 // pred_region
      %67 = dma.done [#allocation3], 2560
    $region41: #{transformer_forward.1} parent=1 // pred_fallthru
      _
    // Predicated region
    $region42: #{transformer_forward.1} parent=1 // pred_check
      _
    $region43: #{transformer_forward.1} parent=1 // pred_check_branch
      %69 = sbr.rel (0) target = $region45
    $region44: #{transformer_forward.1} parent=1 // pred_region
      %70 = dma.done [#allocation6], 2560
    $region45: #{transformer_forward.1} parent=1 // pred_fallthru
      _
    // Predicated region
    $region46: #{transformer_forward.1} parent=1 // pred_check
      _
    $region47: #{transformer_forward.1} parent=1 // pred_check_branch
      %72 = sbr.rel (0) target = $region49
    $region48: #{transformer_forward.1} parent=1 // pred_region
      %73 = dma.done [#allocation6], 2560
    $region49: #{transformer_forward.1} parent=1 // pred_fallthru
      _
    %v75 = vld [vmem:[%s0] sm:$0xff]
    %v76 = vld [vmem:[%s0 + $0x8] sm:$0xff]
    %v77 = vld [vmem:[%s1] sm:$0x1]
    %v78 = vld [vmem:[%s1 + $0x1] sm:$0x1]
    %v79 = vmul.f32 %v77, 30.0
    %v80 = vmul.f32 %v78, 30.0
    %v81 = vrcp.pop %v79
    %v82 = vrcp.pop %v80
    %v83 = vmul.f32 %v77, 8.0
    %v84 = vmul.f32 %v78, 8.0
    %v85 = vrcp.pop %v83
    %v86 = vrcp.pop %v84
    %v87 = vld [vmem:[%s8] sm:$0x1]
    %s88 = scalar_lea.vmem %s8, 1
    %v89 = vld [vmem:[%s88] sm:$0x1]
    %s90 = scalar_lea.vmem %s8, 2
    %v91 = vld [vmem:[%s90] sm:$0x1]
    %v92 = vpack.c.bf16 %v75, %v75
    %v93 = vpack.c.bf16 %v76, %v76
    %v94 = vld [vmem:[#allocation2] sm:$0xf]
    %v95 = vld [vmem:[#allocation2 + $0x4] sm:$0xf]
    %v96 = vld [vmem:[#allocation2 + $0x8] sm:$0xf]
    %v97 = vld [vmem:[#allocation2 + $0xc] sm:$0x7]
    %v100 = vunpack.c.l.b16 %v92
    %v101 = vunpack.c.l.b16 %v93
    %v102 = vpack.c.b16 %v101, %v100
    %v107 = vunpack.c.l.b16 %v94
    %v108 = vunpack.c.l.b16 %v95
    %v109 = vunpack.c.l.b16 %v96
    %v110 = vunpack.c.l.b16 %v97
    %v111 = vpack.c.b16 %v108, %v107
    %v112 = vpack.c.b16 %v110, %v109
    %vm114 = vcmask 244736
    %v116 = vsel %vm114, %v102, 0
    %vm118 = vcmask 1046528
    %v120 = vsel %vm118, %v112, 0
    %122 = vmatprep.subr.bf16.mxu0 0
    %123 = vmatpush1.bf16.msra.mxu0 %v111
    %124 = vmatprep.subr.bf16.mxu0 0
    %125 = vmatpush1.bf16.msra.mxu0 %v120
    %126 = vmatprep.subr.bf16.mxu0 0
    %127 = vmatpush1.bf16.msra.mxu0 0
    %128 = vmatprep.subr.bf16.mxu0 0
    %129 = vmatpush1.bf16.msra.mxu0 0
    %130 = vmatprep.subr.bf16.mxu0 0
    %131 = vmatpush1.bf16.msra.mxu0 0
    %132 = vmatprep.subr.bf16.mxu0 0
    %133 = vmatpush1.bf16.msra.mxu0 0
    %134 = vmatprep.subr.bf16.mxu0 0
    %135 = vmatpush1.bf16.msra.mxu0 0
    %136 = vmatprep.subr.bf16.mxu0 0
    %137 = vmatpush1.bf16.msra.mxu0 0
    %138 = vmatprep.subr.bf16.mxu0 0
    %139 = vmatpush1.bf16.msra.mxu0 0
    %140 = vmatprep.subr.bf16.mxu0 0
    %141 = vmatpush1.bf16.msra.mxu0 0
    %142 = vmatprep.subr.bf16.mxu0 0
    %143 = vmatpush1.bf16.msra.mxu0 0
    %144 = vmatprep.subr.bf16.mxu0 0
    %145 = vmatpush1.bf16.msra.mxu0 0
    %146 = vmatprep.subr.bf16.mxu0 0
    %147 = vmatpush1.bf16.msra.mxu0 0
    %148 = vmatprep.subr.bf16.mxu0 0
    %149 = vmatpush1.bf16.msra.mxu0 0
    %150 = vmatprep.subr.bf16.mxu0 0
    %151 = vmatpush1.bf16.msra.mxu0 0
    %152 = vmatprep.subr.bf16.mxu0 0
    %153 = vmatpush1.bf16.msra.mxu0 0
    %154 = vmatprep.mubr.bf16.mxu0 0
    %155 = vmatmul.mubr.bf16.gmra.mrb[0].mxu0 %v116
    %v156 = vpop.f32.mrb[0].mxu0
    %v157 = vadd.f32 0.0, %v156
    %v158 = vpop.f32.mrb[0].mxu0
    %v159 = vpop.f32.mrb[0].mxu0
    %v160 = vadd.f32 0.0, %v159
    %v161 = vpop.f32.mrb[0].mxu0
    %162 = vdwg.mxu0
    %v163 = vld [vmem:[%s3] sm:$0x1]
    %v165 = vlaneseq
    %v166 = vshrl.u32 %v165, 7
    %v167 = vsub.s32 0, %v166
    %v168 = vrot.slane %v163, %v167
    %v170 = vadd.f32 %v157, %v168
    %v171 = vadd.f32 %v160, %v168
    %v173 = vlaneseq
    %v174 = vshrl.u32 %v173, 7
    %v175 = vsub.s32 0, %v174
    %v176 = vrot.slane %v87, %v175
    %v178 = vmul.f32 %v170, %v176
    %v179 = vmul.f32 %v171, %v176
    %v181 = vlaneseq
    %v182 = vshrl.u32 %v181, 7
    %v183 = vsub.s32 0, %v182
    %v184 = vrot.slane %v89, %v183
    %v186 = vmul.f32 %v170, %v184
    %v187 = vmul.f32 %v171, %v184
    %v189 = vlaneseq
    %v190 = vshrl.u32 %v189, 7
    %v191 = vsub.s32 0, %v190
    %v192 = vrot.slane %v91, %v191
    %v194 = vmul.f32 %v170, %v192
    %v195 = vmul.f32 %v171, %v192
    %v196 = vpack.c.bf16 %v186, %v178
    %v197 = vpack.c.bf16 %v194, %v194
    %v198 = vpack.c.bf16 %v187, %v179
    %v199 = vpack.c.bf16 %v195, %v195
    %v200 = vpack.c.bf16 %v157, %v157
    %v201 = vpack.c.bf16 %v160, %v160
    %203 = vrot.lane.b32.xlu0 %v200, 98
    %v204 = vpop.permute.xlu0 %203
    %v206 = vsel %vm114, %v196, 0
    %v209 = vsel %vm114, %v197, 0
    %v212 = vsel %vm114, %v204, 0
    %214 = vmatprep.subr.bf16.mxu0 0
    %215 = vmatpush1.bf16.xpose.msra.mxu0 %v212
    %216 = vmatprep.subr.bf16.mxu0 0
    %217 = vmatpush1.bf16.xpose.msra.mxu0 0
    %218 = vmatprep.subr.bf16.mxu0 0
    %219 = vmatpush1.bf16.xpose.msra.mxu0 0
    %220 = vmatprep.subr.bf16.mxu0 0
    %221 = vmatpush1.bf16.xpose.msra.mxu0 0
    %222 = vmatprep.subr.bf16.mxu0 0
    %223 = vmatpush1.bf16.xpose.msra.mxu0 0
    %224 = vmatprep.subr.bf16.mxu0 0
    %225 = vmatpush1.bf16.xpose.msra.mxu0 0
    %226 = vmatprep.subr.bf16.mxu0 0
    %227 = vmatpush1.bf16.xpose.msra.mxu0 0
    %228 = vmatprep.subr.bf16.mxu0 0
    %229 = vmatpush1.bf16.xpose.msra.mxu0 0
    %230 = vmatprep.subr.bf16.mxu0 0
    %231 = vmatpush1.bf16.xpose.msra.mxu0 0
    %232 = vmatprep.subr.bf16.mxu0 0
    %233 = vmatpush1.bf16.xpose.msra.mxu0 0
    %234 = vmatprep.subr.bf16.mxu0 0
    %235 = vmatpush1.bf16.xpose.msra.mxu0 0
    %236 = vmatprep.subr.bf16.mxu0 0
    %237 = vmatpush1.bf16.xpose.msra.mxu0 0
    %238 = vmatprep.subr.bf16.mxu0 0
    %239 = vmatpush1.bf16.xpose.msra.mxu0 0
    %240 = vmatprep.subr.bf16.mxu0 0
    %241 = vmatpush1.bf16.xpose.msra.mxu0 0
    %242 = vmatprep.subr.bf16.mxu0 0
    %243 = vmatpush1.bf16.xpose.msra.mxu0 0
    %244 = vmatprep.subr.bf16.mxu0 0
    %245 = vmatpush1.bf16.xpose.msra.mxu0 0
    %246 = vmatprep.mubr.bf16.mxu0 0
    %247 = vmatmul.mubr.bf16.gmra.mrb[0].mxu0 %v206
    %v248 = vpop.f32.mrb[0].mxu0
    %v249 = vadd.f32 0.0, %v248
    %v250 = vpop.f32.mrb[0].mxu0
    %v251 = vpop.f32.mrb[0].mxu0
    %v252 = vadd.f32 0.0, %v251
    %v253 = vpop.f32.mrb[0].mxu0
    %254 = vmatprep.mubr.bf16.mxu0 0
    %255 = vmatmul.mubr.bf16.gmra.mrb[0].mxu0 %v209
    %v256 = vpop.f32.mrb[0].mxu0
    %v257 = vadd.f32 0.0, %v256
    %v258 = vpop.f32.mrb[0].mxu0
    %v259 = vpop.f32.mrb[0].mxu0
    %v260 = vpop.f32.mrb[0].mxu0
    %261 = vdwg.mxu0
    %263 = vrot.lane.b32.xlu0 %v201, 98
    %v264 = vpop.permute.xlu0 %263
    %v266 = vsel %vm114, %v198, 0
    %v269 = vsel %vm114, %v199, 0
    %v272 = vsel %vm114, %v264, 0
    %274 = vmatprep.subr.bf16.mxu0 0
    %275 = vmatpush1.bf16.xpose.msra.mxu0 %v272
    %276 = vmatprep.subr.bf16.mxu0 0
    %277 = vmatpush1.bf16.xpose.msra.mxu0 0
    %278 = vmatprep.subr.bf16.mxu0 0
    %279 = vmatpush1.bf16.xpose.msra.mxu0 0
    %280 = vmatprep.subr.bf16.mxu0 0
    %281 = vmatpush1.bf16.xpose.msra.mxu0 0
    %282 = vmatprep.subr.bf16.mxu0 0
    %283 = vmatpush1.bf16.xpose.msra.mxu0 0
    %284 = vmatprep.subr.bf16.mxu0 0
    %285 = vmatpush1.bf16.xpose.msra.mxu0 0
    %286 = vmatprep.subr.bf16.mxu0 0
    %287 = vmatpush1.bf16.xpose.msra.mxu0 0
    %288 = vmatprep.subr.bf16.mxu0 0
    %289 = vmatpush1.bf16.xpose.msra.mxu0 0
    %290 = vmatprep.subr.bf16.mxu0 0
    %291 = vmatpush1.bf16.xpose.msra.mxu0 0
    %292 = vmatprep.subr.bf16.mxu0 0
    %293 = vmatpush1.bf16.xpose.msra.mxu0 0
    %294 = vmatprep.subr.bf16.mxu0 0
    %295 = vmatpush1.bf16.xpose.msra.mxu0 0
    %296 = vmatprep.subr.bf16.mxu0 0
    %297 = vmatpush1.bf16.xpose.msra.mxu0 0
    %298 = vmatprep.subr.bf16.mxu0 0
    %299 = vmatpush1.bf16.xpose.msra.mxu0 0
    %300 = vmatprep.subr.bf16.mxu0 0
    %301 = vmatpush1.bf16.xpose.msra.mxu0 0
    %302 = vmatprep.subr.bf16.mxu0 0
    %303 = vmatpush1.bf16.xpose.msra.mxu0 0
    %304 = vmatprep.subr.bf16.mxu0 0
    %305 = vmatpush1.bf16.xpose.msra.mxu0 0
    %306 = vmatprep.mubr.bf16.mxu0 0
    %307 = vmatmul.mubr.bf16.gmra.mrb[0].mxu0 %v266
    %v308 = vpop.f32.mrb[0].mxu0
    %v309 = vadd.f32 0.0, %v308
    %v310 = vpop.f32.mrb[0].mxu0
    %v311 = vpop.f32.mrb[0].mxu0
    %v312 = vadd.f32 0.0, %v311
    %v313 = vpop.f32.mrb[0].mxu0
    %314 = vmatprep.mubr.bf16.mxu0 0
    %315 = vmatmul.mubr.bf16.gmra.mrb[0].mxu0 %v269
    %v316 = vpop.f32.mrb[0].mxu0
    %v317 = vadd.f32 0.0, %v316
    %v318 = vpop.f32.mrb[0].mxu0
    %v319 = vpop.f32.mrb[0].mxu0
    %v320 = vpop.f32.mrb[0].mxu0
    %321 = vdwg.mxu0
    %vm322 = vcmask 64512
    %v323 = vsel %vm322, %v249, -inf
    %324 = vmax.xlane.f32.xlu0 %v323
    %v325 = vpop.xlane.xlu0 %324
    %v326 = vsel %vm322, %v252, -inf
    %327 = vmax.xlane.f32.xlu0 %v326
    %v328 = vpop.xlane.xlu0 %327
    %v329 = vsel %vm322, %v257, -inf
    %330 = vmax.xlane.f32.xlu0 %v329
    %v331 = vpop.xlane.xlu0 %330
    %v332 = vsel %vm322, %v309, -inf
    %333 = vmax.xlane.f32.xlu0 %v332
    %v334 = vpop.xlane.xlu0 %333
    %v335 = vsel %vm322, %v312, -inf
    %336 = vmax.xlane.f32.xlu0 %v335
    %v337 = vpop.xlane.xlu0 %336
    %v338 = vsel %vm322, %v317, -inf
    %339 = vmax.xlane.f32.xlu0 %v338
    %v340 = vpop.xlane.xlu0 %339
    %v341 = vsub.f32 %v249, %v325
    %v342 = vsub.f32 %v252, %v328
    %v343 = vsub.f32 %v257, %v331
    %v344 = vsub.f32 %v309, %v334
    %v345 = vsub.f32 %v312, %v337
    %v346 = vsub.f32 %v317, %v340
    %v347 = vmul.f32 %v341, 1.442695
    %v348 = vpow.pop %v347
    %v349 = vmul.f32 %v342, 1.442695
    %v350 = vpow.pop %v349
    %v351 = vmul.f32 %v343, 1.442695
    %v352 = vpow.pop %v351
    %v353 = vmul.f32 %v344, 1.442695
    %v354 = vpow.pop %v353
    %v355 = vmul.f32 %v345, 1.442695
    %v356 = vpow.pop %v355
    %v357 = vmul.f32 %v346, 1.442695
    %v358 = vpow.pop %v357
    %v359 = vsel %vm322, %v348, 0.0
    %360 = vadd.xlane.f32.xlu0 %v359
    %v361 = vpop.xlane.xlu0 %360
    %v362 = vsel %vm322, %v350, 0.0
    %363 = vadd.xlane.f32.xlu0 %v362
    %v364 = vpop.xlane.xlu0 %363
    %v365 = vsel %vm322, %v352, 0.0
    %366 = vadd.xlane.f32.xlu0 %v365
    %v367 = vpop.xlane.xlu0 %366
    %v368 = vsel %vm322, %v354, 0.0
    %369 = vadd.xlane.f32.xlu0 %v368
    %v370 = vpop.xlane.xlu0 %369
    %v371 = vsel %vm322, %v356, 0.0
    %372 = vadd.xlane.f32.xlu0 %v371
    %v373 = vpop.xlane.xlu0 %372
    %v374 = vsel %vm322, %v358, 0.0
    %375 = vadd.xlane.f32.xlu0 %v374
    %v376 = vpop.xlane.xlu0 %375
    %v377 = vrcp.pop %v361
    %v378 = vrcp.pop %v364
    %v379 = vrcp.pop %v367
    %v380 = vrcp.pop %v370
    %v381 = vrcp.pop %v373
    %v382 = vrcp.pop %v376
    %v383 = vmul.f32 %v348, %v377
    %v384 = vmul.f32 %v350, %v378
    %v385 = vmul.f32 %v352, %v379
    %v386 = vmul.f32 %v354, %v380
    %v387 = vmul.f32 %v356, %v381
    %v388 = vmul.f32 %v358, %v382
    %v389 = vpack.c.bf16 %v384, %v383
    %v390 = vpack.c.bf16 %v385, %v385
    %v391 = vpack.c.bf16 %v387, %v386
    %v392 = vpack.c.bf16 %v388, %v388
    %393 = vrot.lane.b32.xlu0 %v200, 68
    %v394 = vpop.permute.xlu0 %393
    %v396 = vsel %vm322, %v389, 0
    %v399 = vsel %vm322, %v390, 0
    %vm401 = vcmask 1043456
    %v403 = vsel %vm401, %v394, 0
    %405 = vmatprep.subr.bf16.mxu0 0
    %406 = vmatpush1.bf16.msra.mxu0 %v403
    %407 = vmatprep.subr.bf16.mxu0 0
    %408 = vmatpush1.bf16.msra.mxu0 0
    %409 = vmatprep.subr.bf16.mxu0 0
    %410 = vmatpush1.bf16.msra.mxu0 0
    %411 = vmatprep.subr.bf16.mxu0 0
    %412 = vmatpush1.bf16.msra.mxu0 0
    %413 = vmatprep.subr.bf16.mxu0 0
    %414 = vmatpush1.bf16.msra.mxu0 0
    %415 = vmatprep.subr.bf16.mxu0 0
    %416 = vmatpush1.bf16.msra.mxu0 0
    %417 = vmatprep.subr.bf16.mxu0 0
    %418 = vmatpush1.bf16.msra.mxu0 0
    %419 = vmatprep.subr.bf16.mxu0 0
    %420 = vmatpush1.bf16.msra.mxu0 0
    %421 = vmatprep.subr.bf16.mxu0 0
    %422 = vmatpush1.bf16.msra.mxu0 0
    %423 = vmatprep.subr.bf16.mxu0 0
    %424 = vmatpush1.bf16.msra.mxu0 0
    %425 = vmatprep.subr.bf16.mxu0 0
    %426 = vmatpush1.bf16.msra.mxu0 0
    %427 = vmatprep.subr.bf16.mxu0 0
    %428 = vmatpush1.bf16.msra.mxu0 0
    %429 = vmatprep.subr.bf16.mxu0 0
    %430 = vmatpush1.bf16.msra.mxu0 0
    %431 = vmatprep.subr.bf16.mxu0 0
    %432 = vmatpush1.bf16.msra.mxu0 0
    %433 = vmatprep.subr.bf16.mxu0 0
    %434 = vmatpush1.bf16.msra.mxu0 0
    %435 = vmatprep.subr.bf16.mxu0 0
    %436 = vmatpush1.bf16.msra.mxu0 0
    %437 = vmatprep.mubr.bf16.mxu0 0
    %438 = vmatmul.mubr.bf16.gmra.mrb[0].mxu0 %v396
    %v439 = vpop.f32.mrb[0].mxu0
    %v440 = vadd.f32 0.0, %v439
    %v441 = vpop.f32.mrb[0].mxu0
    %v442 = vpop.f32.mrb[0].mxu0
    %v443 = vadd.f32 0.0, %v442
    %v444 = vpop.f32.mrb[0].mxu0
    %445 = vmatprep.mubr.bf16.mxu0 0
    %446 = vmatmul.mubr.bf16.gmra.mrb[0].mxu0 %v399
    %v447 = vpop.f32.mrb[0].mxu0
    %v448 = vadd.f32 0.0, %v447
    %v449 = vpop.f32.mrb[0].mxu0
    %v450 = vpop.f32.mrb[0].mxu0
    %v451 = vpop.f32.mrb[0].mxu0
    %452 = vdwg.mxu0
    %453 = vrot.lane.b32.xlu0 %v201, 68
    %v454 = vpop.permute.xlu0 %453
    %v456 = vsel %vm322, %v391, 0
    %v459 = vsel %vm322, %v392, 0
    %v462 = vsel %vm401, %v454, 0
    %464 = vmatprep.subr.bf16.mxu0 0
    %465 = vmatpush1.bf16.msra.mxu0 %v462
    %466 = vmatprep.subr.bf16.mxu0 0
    %467 = vmatpush1.bf16.msra.mxu0 0
    %468 = vmatprep.subr.bf16.mxu0 0
    %469 = vmatpush1.bf16.msra.mxu0 0
    %470 = vmatprep.subr.bf16.mxu0 0
    %471 = vmatpush1.bf16.msra.mxu0 0
    %472 = vmatprep.subr.bf16.mxu0 0
    %473 = vmatpush1.bf16.msra.mxu0 0
    %474 = vmatprep.subr.bf16.mxu0 0
    %475 = vmatpush1.bf16.msra.mxu0 0
    %476 = vmatprep.subr.bf16.mxu0 0
    %477 = vmatpush1.bf16.msra.mxu0 0
    %478 = vmatprep.subr.bf16.mxu0 0
    %479 = vmatpush1.bf16.msra.mxu0 0
    %480 = vmatprep.subr.bf16.mxu0 0
    %481 = vmatpush1.bf16.msra.mxu0 0
    %482 = vmatprep.subr.bf16.mxu0 0
    %483 = vmatpush1.bf16.msra.mxu0 0
    %484 = vmatprep.subr.bf16.mxu0 0
    %485 = vmatpush1.bf16.msra.mxu0 0
    %486 = vmatprep.subr.bf16.mxu0 0
    %487 = vmatpush1.bf16.msra.mxu0 0
    %488 = vmatprep.subr.bf16.mxu0 0
    %489 = vmatpush1.bf16.msra.mxu0 0
    %490 = vmatprep.subr.bf16.mxu0 0
    %491 = vmatpush1.bf16.msra.mxu0 0
    %492 = vmatprep.subr.bf16.mxu0 0
    %493 = vmatpush1.bf16.msra.mxu0 0
    %494 = vmatprep.subr.bf16.mxu0 0
    %495 = vmatpush1.bf16.msra.mxu0 0
    %496 = vmatprep.mubr.bf16.mxu0 0
    %497 = vmatmul.mubr.bf16.gmra.mrb[0].mxu0 %v456
    %v498 = vpop.f32.mrb[0].mxu0
    %v499 = vadd.f32 0.0, %v498
    %v500 = vpop.f32.mrb[0].mxu0
    %v501 = vpop.f32.mrb[0].mxu0
    %v502 = vadd.f32 0.0, %v501
    %v503 = vpop.f32.mrb[0].mxu0
    %504 = vmatprep.mubr.bf16.mxu0 0
    %505 = vmatmul.mubr.bf16.gmra.mrb[0].mxu0 %v459
    %v506 = vpop.f32.mrb[0].mxu0
    %v507 = vadd.f32 0.0, %v506
    %v508 = vpop.f32.mrb[0].mxu0
    %v509 = vpop.f32.mrb[0].mxu0
    %v510 = vpop.f32.mrb[0].mxu0
    %511 = vdwg.mxu0
    %v512 = vmul.f32 %v440, %v176
    %v513 = vmul.f32 %v499, %v176
    %v514 = vmul.f32 %v443, %v184
    %v515 = vmul.f32 %v502, %v184
    %v516 = vadd.f32 %v512, %v514
    %v517 = vadd.f32 %v513, %v515
    %v518 = vmul.f32 %v448, %v192
    %v519 = vmul.f32 %v507, %v192
    %v520 = vadd.f32 %v516, %v518
    %v521 = vadd.f32 %v517, %v519
    %v522 = vadd.f32 %v520, %v75
    %v523 = vadd.f32 %v521, %v76
    %v524 = vsel %vm114, %v522, 0.0
    %525 = vadd.xlane.f32.xlu0 %v524
    %v526 = vpop.xlane.xlu0 %525
    %v527 = vsel %vm114, %v523, 0.0
    %528 = vadd.xlane.f32.xlu0 %v527
    %v529 = vpop.xlane.xlu0 %528
    %v530 = vrot.slane %v526, 4
    %v531 = vadd.f32 %v526, %v530
    %v532 = vrot.slane %v531, 2
    %v533 = vadd.f32 %v531, %v532
    %v534 = vrot.slane %v533, 1
    %v535 = vadd.f32 %v533, %v534
    %v536 = vrot.slane %v529, 4
    %v537 = vadd.f32 %v529, %v536
    %v538 = vrot.slane %v537, 2
    %v539 = vadd.f32 %v537, %v538
    %v540 = vrot.slane %v539, 1
    %v541 = vadd.f32 %v539, %v540
    %v542 = vmul.f32 %v535, %v81
    %v543 = vmul.f32 %v541, %v82
    %v546 = vlaneseq
    %v547 = vshrl.u32 %v546, 7
    %v548 = vsub.s32 0, %v547
    %v549 = vrot.slane %v542, %v548
    %v550 = vlaneseq
    %v551 = vshrl.u32 %v550, 7
    %v552 = vsub.s32 0, %v551
    %v553 = vrot.slane %v543, %v552
    %554 = vset.pattern.permute.xlu0 0
    %555 = vperm.xlu0 %554, %v549
    %v556 = vpop.permute.xlu0 %555
    %558 = vset.pattern.permute.xlu0 0
    %559 = vperm.xlu0 %558, %v553
    %v560 = vpop.permute.xlu0 %559
    %v562 = vsub.f32 %v522, %v556
    %v563 = vsub.f32 %v523, %v560
    %v564 = vmul.f32 %v562, %v562
    %v565 = vmul.f32 %v563, %v563
    %v566 = vsel %vm114, %v564, 0.0
    %567 = vadd.xlane.f32.xlu0 %v566
    %v568 = vpop.xlane.xlu0 %567
    %v569 = vsel %vm114, %v565, 0.0
    %570 = vadd.xlane.f32.xlu0 %v569
    %v571 = vpop.xlane.xlu0 %570
    %v572 = vrot.slane %v568, 4
    %v573 = vadd.f32 %v568, %v572
    %v574 = vrot.slane %v573, 2
    %v575 = vadd.f32 %v573, %v574
    %v576 = vrot.slane %v575, 1
    %v577 = vadd.f32 %v575, %v576
    %v578 = vrot.slane %v571, 4
    %v579 = vadd.f32 %v571, %v578
    %v580 = vrot.slane %v579, 2
    %v581 = vadd.f32 %v579, %v580
    %v582 = vrot.slane %v581, 1
    %v583 = vadd.f32 %v581, %v582
    %v584 = vrsqrt.pop %v577
    %v585 = vrsqrt.pop %v583
    %v586 = vmul.f32 %v79, %v584
    %v587 = vmul.f32 %v80, %v585
    %v590 = vlaneseq
    %v591 = vshrl.u32 %v590, 7
    %v592 = vsub.s32 0, %v591
    %v593 = vrot.slane %v586, %v592
    %v594 = vlaneseq
    %v595 = vshrl.u32 %v594, 7
    %v596 = vsub.s32 0, %v595
    %v597 = vrot.slane %v587, %v596
    %598 = vset.pattern.permute.xlu0 0
    %599 = vperm.xlu0 %598, %v593
    %v600 = vpop.permute.xlu0 %599
    %602 = vset.pattern.permute.xlu0 0
    %603 = vperm.xlu0 %602, %v597
    %v604 = vpop.permute.xlu0 %603
    %v606 = vmul.f32 %v562, %v600
    %v607 = vmul.f32 %v563, %v604
    %v608 = vpack.c.bf16 %v606, %v606
    %v609 = vpack.c.bf16 %v607, %v607
    %v610 = vld [vmem:[#allocation5] sm:$0xf]
    %v611 = vld [vmem:[#allocation5 + $0x4] sm:$0xf]
    %v612 = vld [vmem:[#allocation5 + $0x8] sm:$0xf]
    %v613 = vld [vmem:[#allocation5 + $0xc] sm:$0x7]
    %v616 = vunpack.c.l.b16 %v608
    %v617 = vunpack.c.l.b16 %v609
    %v618 = vpack.c.b16 %v617, %v616
    %v623 = vunpack.c.l.b16 %v610
    %v624 = vunpack.c.l.b16 %v611
    %v625 = vunpack.c.l.b16 %v612
    %v626 = vunpack.c.l.b16 %v613
    %v627 = vpack.c.b16 %v624, %v623
    %v628 = vpack.c.b16 %v626, %v625
    %v631 = vsel %vm114, %v618, 0
    %v634 = vsel %vm118, %v628, 0
    %636 = vmatprep.subr.bf16.mxu0 0
    %637 = vmatpush1.bf16.msra.mxu0 %v627
    %638 = vmatprep.subr.bf16.mxu0 0
    %639 = vmatpush1.bf16.msra.mxu0 %v634
    %640 = vmatprep.subr.bf16.mxu0 0
    %641 = vmatpush1.bf16.msra.mxu0 0
    %642 = vmatprep.subr.bf16.mxu0 0
    %643 = vmatpush1.bf16.msra.mxu0 0
    %644 = vmatprep.subr.bf16.mxu0 0
    %645 = vmatpush1.bf16.msra.mxu0 0
    %646 = vmatprep.subr.bf16.mxu0 0
    %647 = vmatpush1.bf16.msra.mxu0 0
    %648 = vmatprep.subr.bf16.mxu0 0
    %649 = vmatpush1.bf16.msra.mxu0 0
    %650 = vmatprep.subr.bf16.mxu0 0
    %651 = vmatpush1.bf16.msra.mxu0 0
    %652 = vmatprep.subr.bf16.mxu0 0
    %653 = vmatpush1.bf16.msra.mxu0 0
    %654 = vmatprep.subr.bf16.mxu0 0
    %655 = vmatpush1.bf16.msra.mxu0 0
    %656 = vmatprep.subr.bf16.mxu0 0
    %657 = vmatpush1.bf16.msra.mxu0 0
    %658 = vmatprep.subr.bf16.mxu0 0
    %659 = vmatpush1.bf16.msra.mxu0 0
    %660 = vmatprep.subr.bf16.mxu0 0
    %661 = vmatpush1.bf16.msra.mxu0 0
    %662 = vmatprep.subr.bf16.mxu0 0
    %663 = vmatpush1.bf16.msra.mxu0 0
    %664 = vmatprep.subr.bf16.mxu0 0
    %665 = vmatpush1.bf16.msra.mxu0 0
    %666 = vmatprep.subr.bf16.mxu0 0
    %667 = vmatpush1.bf16.msra.mxu0 0
    %668 = vmatprep.mubr.bf16.mxu0 0
    %669 = vmatmul.mubr.bf16.gmra.mrb[0].mxu0 %v631
    %v670 = vpop.f32.mrb[0].mxu0
    %v671 = vadd.f32 0.0, %v670
    %v672 = vpop.f32.mrb[0].mxu0
    %v673 = vpop.f32.mrb[0].mxu0
    %v674 = vadd.f32 0.0, %v673
    %v675 = vpop.f32.mrb[0].mxu0
    %676 = vdwg.mxu0
    %v677 = vxor.u32 %v671, 2147483648
    %v678 = vxor.u32 %v674, 2147483648
    %v679 = vmul.f32 %v677, 1.442695
    %v680 = vpow.pop %v679
    %v681 = vmul.f32 %v678, 1.442695
    %v682 = vpow.pop %v681
    %v683 = vadd.f32 %v680, 1.0
    %v684 = vadd.f32 %v682, 1.0
    %v685 = vrcp.pop %v683
    %v686 = vmul.f32 1.0, %v685
    %v687 = vrcp.pop %v684
    %v688 = vmul.f32 1.0, %v687
    %v689 = vmul.f32 %v671, %v686
    %v690 = vmul.f32 %v674, %v688
    %v691 = vpack.c.bf16 %v689, %v689
    %v692 = vpack.c.bf16 %v690, %v690
    %v693 = vld [vmem:[#allocation7] sm:$0xf]
    %v694 = vld [vmem:[#allocation7 + $0x4] sm:$0xf]
    %v695 = vld [vmem:[#allocation7 + $0x8] sm:$0xf]
    %v696 = vld [vmem:[#allocation7 + $0xc] sm:$0x7]
    %v699 = vunpack.c.l.b16 %v691
    %v700 = vunpack.c.l.b16 %v692
    %v701 = vpack.c.b16 %v700, %v699
    %v706 = vunpack.c.l.b16 %v693
    %v707 = vunpack.c.l.b16 %v694
    %v708 = vunpack.c.l.b16 %v695
    %v709 = vunpack.c.l.b16 %v696
    %v710 = vpack.c.b16 %v707, %v706
    %v711 = vpack.c.b16 %v709, %v708
    %v714 = vsel %vm114, %v701, 0
    %v717 = vsel %vm118, %v711, 0
    %719 = vmatprep.subr.bf16.mxu0 0
    %720 = vmatpush1.bf16.msra.mxu0 %v710
    %721 = vmatprep.subr.bf16.mxu0 0
    %722 = vmatpush1.bf16.msra.mxu0 %v717
    %723 = vmatprep.subr.bf16.mxu0 0
    %724 = vmatpush1.bf16.msra.mxu0 0
    %725 = vmatprep.subr.bf16.mxu0 0
    %726 = vmatpush1.bf16.msra.mxu0 0
    %727 = vmatprep.subr.bf16.mxu0 0
    %728 = vmatpush1.bf16.msra.mxu0 0
    %729 = vmatprep.subr.bf16.mxu0 0
    %730 = vmatpush1.bf16.msra.mxu0 0
    %731 = vmatprep.subr.bf16.mxu0 0
    %732 = vmatpush1.bf16.msra.mxu0 0
    %733 = vmatprep.subr.bf16.mxu0 0
    %734 = vmatpush1.bf16.msra.mxu0 0
    %735 = vmatprep.subr.bf16.mxu0 0
    %736 = vmatpush1.bf16.msra.mxu0 0
    %737 = vmatprep.subr.bf16.mxu0 0
    %738 = vmatpush1.bf16.msra.mxu0 0
    %739 = vmatprep.subr.bf16.mxu0 0
    %740 = vmatpush1.bf16.msra.mxu0 0
    %741 = vmatprep.subr.bf16.mxu0 0
    %742 = vmatpush1.bf16.msra.mxu0 0
    %743 = vmatprep.subr.bf16.mxu0 0
    %744 = vmatpush1.bf16.msra.mxu0 0
    %745 = vmatprep.subr.bf16.mxu0 0
    %746 = vmatpush1.bf16.msra.mxu0 0
    %747 = vmatprep.subr.bf16.mxu0 0
    %748 = vmatpush1.bf16.msra.mxu0 0
    %749 = vmatprep.subr.bf16.mxu0 0
    %750 = vmatpush1.bf16.msra.mxu0 0
    %751 = vmatprep.mubr.bf16.mxu0 0
    %752 = vmatmul.mubr.bf16.gmra.mrb[0].mxu0 %v714
    %v753 = vpop.f32.mrb[0].mxu0
    %v754 = vadd.f32 %v606, %v753
    %v755 = vpop.f32.mrb[0].mxu0
    %v756 = vpop.f32.mrb[0].mxu0
    %v757 = vadd.f32 %v607, %v756
    %v758 = vpop.f32.mrb[0].mxu0
    %759 = vdwg.mxu0
    %v760 = vsel %vm114, %v754, 0.0
    %761 = vadd.xlane.f32.xlu0 %v760
    %v762 = vpop.xlane.xlu0 %761
    %v763 = vsel %vm114, %v757, 0.0
    %764 = vadd.xlane.f32.xlu0 %v763
    %v765 = vpop.xlane.xlu0 %764
    %v766 = vrot.slane %v762, 4
    %v767 = vadd.f32 %v762, %v766
    %v768 = vrot.slane %v767, 2
    %v769 = vadd.f32 %v767, %v768
    %v770 = vrot.slane %v769, 1
    %v771 = vadd.f32 %v769, %v770
    %v772 = vrot.slane %v765, 4
    %v773 = vadd.f32 %v765, %v772
    %v774 = vrot.slane %v773, 2
    %v775 = vadd.f32 %v773, %v774
    %v776 = vrot.slane %v775, 1
    %v777 = vadd.f32 %v775, %v776
    %v778 = vmul.f32 %v771, %v81
    %v779 = vmul.f32 %v777, %v82
    %v782 = vlaneseq
    %v783 = vshrl.u32 %v782, 7
    %v784 = vsub.s32 0, %v783
    %v785 = vrot.slane %v778, %v784
    %v786 = vlaneseq
    %v787 = vshrl.u32 %v786, 7
    %v788 = vsub.s32 0, %v787
    %v789 = vrot.slane %v779, %v788
    %790 = vset.pattern.permute.xlu0 0
    %791 = vperm.xlu0 %790, %v785
    %v792 = vpop.permute.xlu0 %791
    %794 = vset.pattern.permute.xlu0 0
    %795 = vperm.xlu0 %794, %v789
    %v796 = vpop.permute.xlu0 %795
    %v798 = vsub.f32 %v754, %v792
    %v799 = vsub.f32 %v757, %v796
    %v800 = vmul.f32 %v798, %v798
    %v801 = vmul.f32 %v799, %v799
    %v802 = vsel %vm114, %v800, 0.0
    %803 = vadd.xlane.f32.xlu0 %v802
    %v804 = vpop.xlane.xlu0 %803
    %v805 = vsel %vm114, %v801, 0.0
    %806 = vadd.xlane.f32.xlu0 %v805
    %v807 = vpop.xlane.xlu0 %806
    %v808 = vrot.slane %v804, 4
    %v809 = vadd.f32 %v804, %v808
    %v810 = vrot.slane %v809, 2
    %v811 = vadd.f32 %v809, %v810
    %v812 = vrot.slane %v811, 1
    %v813 = vadd.f32 %v811, %v812
    %v814 = vrot.slane %v807, 4
    %v815 = vadd.f32 %v807, %v814
    %v816 = vrot.slane %v815, 2
    %v817 = vadd.f32 %v815, %v816
    %v818 = vrot.slane %v817, 1
    %v819 = vadd.f32 %v817, %v818
    %v820 = vrsqrt.pop %v813
    %v821 = vrsqrt.pop %v819
    %v822 = vmul.f32 %v79, %v820
    %v823 = vmul.f32 %v80, %v821
    %v826 = vlaneseq
    %v827 = vshrl.u32 %v826, 7
    %v828 = vsub.s32 0, %v827
    %v829 = vrot.slane %v822, %v828
    %v830 = vlaneseq
    %v831 = vshrl.u32 %v830, 7
    %v832 = vsub.s32 0, %v831
    %v833 = vrot.slane %v823, %v832
    %834 = vset.pattern.permute.xlu0 0
    %835 = vperm.xlu0 %834, %v829
    %v836 = vpop.permute.xlu0 %835
    %838 = vset.pattern.permute.xlu0 0
    %839 = vperm.xlu0 %838, %v833
    %v840 = vpop.permute.xlu0 %839
    %v842 = vmul.f32 %v798, %v836
    %v843 = vmul.f32 %v799, %v840
    %v844 = vpack.c.bf16 %v842, %v842
    %v845 = vpack.c.bf16 %v843, %v843
    %s846 = scalar_lea.vmem [#allocation2], 16
    %v847 = vld [vmem:[%s846] sm:$0xf]
    %v848 = vld [vmem:[%s846 + $0x4] sm:$0xf]
    %v849 = vld [vmem:[%s846 + $0x8] sm:$0xf]
    %v850 = vld [vmem:[%s846 + $0xc] sm:$0x7]
    %v853 = vunpack.c.l.b16 %v844
    %v854 = vunpack.c.l.b16 %v845
    %v855 = vpack.c.b16 %v854, %v853
    %v860 = vunpack.c.l.b16 %v847
    %v861 = vunpack.c.l.b16 %v848
    %v862 = vunpack.c.l.b16 %v849
    %v863 = vunpack.c.l.b16 %v850
    %v864 = vpack.c.b16 %v861, %v860
    %v865 = vpack.c.b16 %v863, %v862
    %v868 = vsel %vm114, %v855, 0
    %v871 = vsel %vm118, %v865, 0
    %873 = vmatprep.subr.bf16.mxu0 0
    %874 = vmatpush1.bf16.msra.mxu0 %v864
    %875 = vmatprep.subr.bf16.mxu0 0
    %876 = vmatpush1.bf16.msra.mxu0 %v871
    %877 = vmatprep.subr.bf16.mxu0 0
    %878 = vmatpush1.bf16.msra.mxu0 0
    %879 = vmatprep.subr.bf16.mxu0 0
    %880 = vmatpush1.bf16.msra.mxu0 0
    %881 = vmatprep.subr.bf16.mxu0 0
    %882 = vmatpush1.bf16.msra.mxu0 0
    %883 = vmatprep.subr.bf16.mxu0 0
    %884 = vmatpush1.bf16.msra.mxu0 0
    %885 = vmatprep.subr.bf16.mxu0 0
    %886 = vmatpush1.bf16.msra.mxu0 0
    %887 = vmatprep.subr.bf16.mxu0 0
    %888 = vmatpush1.bf16.msra.mxu0 0
    %889 = vmatprep.subr.bf16.mxu0 0
    %890 = vmatpush1.bf16.msra.mxu0 0
    %891 = vmatprep.subr.bf16.mxu0 0
    %892 = vmatpush1.bf16.msra.mxu0 0
    %893 = vmatprep.subr.bf16.mxu0 0
    %894 = vmatpush1.bf16.msra.mxu0 0
    %895 = vmatprep.subr.bf16.mxu0 0
    %896 = vmatpush1.bf16.msra.mxu0 0
    %897 = vmatprep.subr.bf16.mxu0 0
    %898 = vmatpush1.bf16.msra.mxu0 0
    %899 = vmatprep.subr.bf16.mxu0 0
    %900 = vmatpush1.bf16.msra.mxu0 0
    %901 = vmatprep.subr.bf16.mxu0 0
    %902 = vmatpush1.bf16.msra.mxu0 0
    %903 = vmatprep.subr.bf16.mxu0 0
    %904 = vmatpush1.bf16.msra.mxu0 0
    %905 = vmatprep.mubr.bf16.mxu0 0
    %906 = vmatmul.mubr.bf16.gmra.mrb[0].mxu0 %v868
    %v907 = vpop.f32.mrb[0].mxu0
    %v908 = vadd.f32 0.0, %v907
    %v909 = vpop.f32.mrb[0].mxu0
    %v910 = vpop.f32.mrb[0].mxu0
    %v911 = vadd.f32 0.0, %v910
    %v912 = vpop.f32.mrb[0].mxu0
    %913 = vdwg.mxu0
    %s914 = scalar_lea.vmem %s3, 1
    %v915 = vld [vmem:[%s914] sm:$0x1]
    %v917 = vlaneseq
    %v918 = vshrl.u32 %v917, 7
    %v919 = vsub.s32 0, %v918
    %v920 = vrot.slane %v915, %v919
    %v922 = vadd.f32 %v908, %v920
    %v923 = vadd.f32 %v911, %v920
    %v924 = vmul.f32 %v922, %v176
    %v925 = vmul.f32 %v923, %v176
    %v926 = vmul.f32 %v922, %v184
    %v927 = vmul.f32 %v923, %v184
    %v928 = vmul.f32 %v922, %v192
    %v929 = vmul.f32 %v923, %v192
    %v930 = vpack.c.bf16 %v926, %v924
    %v931 = vpack.c.bf16 %v928, %v928
    %v932 = vpack.c.bf16 %v927, %v925
    %v933 = vpack.c.bf16 %v929, %v929
    %v934 = vpack.c.bf16 %v908, %v908
    %v935 = vpack.c.bf16 %v911, %v911
    %937 = vrot.lane.b32.xlu0 %v934, 98
    %v938 = vpop.permute.xlu0 %937
    %v940 = vsel %vm114, %v930, 0
    %v943 = vsel %vm114, %v931, 0
    %v946 = vsel %vm114, %v938, 0
    %948 = vmatprep.subr.bf16.mxu0 0
    %949 = vmatpush1.bf16.xpose.msra.mxu0 %v946
    %950 = vmatprep.subr.bf16.mxu0 0
    %951 = vmatpush1.bf16.xpose.msra.mxu0 0
    %952 = vmatprep.subr.bf16.mxu0 0
    %953 = vmatpush1.bf16.xpose.msra.mxu0 0
    %954 = vmatprep.subr.bf16.mxu0 0
    %955 = vmatpush1.bf16.xpose.msra.mxu0 0
    %956 = vmatprep.subr.bf16.mxu0 0
    %957 = vmatpush1.bf16.xpose.msra.mxu0 0
    %958 = vmatprep.subr.bf16.mxu0 0
    %959 = vmatpush1.bf16.xpose.msra.mxu0 0
    %960 = vmatprep.subr.bf16.mxu0 0
    %961 = vmatpush1.bf16.xpose.msra.mxu0 0
    %962 = vmatprep.subr.bf16.mxu0 0
    %963 = vmatpush1.bf16.xpose.msra.mxu0 0
    %964 = vmatprep.subr.bf16.mxu0 0
    %965 = vmatpush1.bf16.xpose.msra.mxu0 0
    %966 = vmatprep.subr.bf16.mxu0 0
    %967 = vmatpush1.bf16.xpose.msra.mxu0 0
    %968 = vmatprep.subr.bf16.mxu0 0
    %969 = vmatpush1.bf16.xpose.msra.mxu0 0
    %970 = vmatprep.subr.bf16.mxu0 0
    %971 = vmatpush1.bf16.xpose.msra.mxu0 0
    %972 = vmatprep.subr.bf16.mxu0 0
    %973 = vmatpush1.bf16.xpose.msra.mxu0 0
    %974 = vmatprep.subr.bf16.mxu0 0
    %975 = vmatpush1.bf16.xpose.msra.mxu0 0
    %976 = vmatprep.subr.bf16.mxu0 0
    %977 = vmatpush1.bf16.xpose.msra.mxu0 0
    %978 = vmatprep.subr.bf16.mxu0 0
    %979 = vmatpush1.bf16.xpose.msra.mxu0 0
    %980 = vmatprep.mubr.bf16.mxu0 0
    %981 = vmatmul.mubr.bf16.gmra.mrb[0].mxu0 %v940
    %v982 = vpop.f32.mrb[0].mxu0
    %v983 = vadd.f32 0.0, %v982
    %v984 = vpop.f32.mrb[0].mxu0
    %v985 = vpop.f32.mrb[0].mxu0
    %v986 = vadd.f32 0.0, %v985
    %v987 = vpop.f32.mrb[0].mxu0
    %988 = vmatprep.mubr.bf16.mxu0 0
    %989 = vmatmul.mubr.bf16.gmra.mrb[0].mxu0 %v943
    %v990 = vpop.f32.mrb[0].mxu0
    %v991 = vadd.f32 0.0, %v990
    %v992 = vpop.f32.mrb[0].mxu0
    %v993 = vpop.f32.mrb[0].mxu0
    %v994 = vpop.f32.mrb[0].mxu0
    %995 = vdwg.mxu0
    %997 = vrot.lane.b32.xlu0 %v935, 98
    %v998 = vpop.permute.xlu0 %997
    %v1000 = vsel %vm114, %v932, 0
    %v1003 = vsel %vm114, %v933, 0
    %v1006 = vsel %vm114, %v998, 0
    %1008 = vmatprep.subr.bf16.mxu0 0
    %1009 = vmatpush1.bf16.xpose.msra.mxu0 %v1006
    %1010 = vmatprep.subr.bf16.mxu0 0
    %1011 = vmatpush1.bf16.xpose.msra.mxu0 0
    %1012 = vmatprep.subr.bf16.mxu0 0
    %1013 = vmatpush1.bf16.xpose.msra.mxu0 0
    %1014 = vmatprep.subr.bf16.mxu0 0
    %1015 = vmatpush1.bf16.xpose.msra.mxu0 0
    %1016 = vmatprep.subr.bf16.mxu0 0
    %1017 = vmatpush1.bf16.xpose.msra.mxu0 0
    %1018 = vmatprep.subr.bf16.mxu0 0
    %1019 = vmatpush1.bf16.xpose.msra.mxu0 0
    %1020 = vmatprep.subr.bf16.mxu0 0
    %1021 = vmatpush1.bf16.xpose.msra.mxu0 0
    %1022 = vmatprep.subr.bf16.mxu0 0
    %1023 = vmatpush1.bf16.xpose.msra.mxu0 0
    %1024 = vmatprep.subr.bf16.mxu0 0
    %1025 = vmatpush1.bf16.xpose.msra.mxu0 0
    %1026 = vmatprep.subr.bf16.mxu0 0
    %1027 = vmatpush1.bf16.xpose.msra.mxu0 0
    %1028 = vmatprep.subr.bf16.mxu0 0
    %1029 = vmatpush1.bf16.xpose.msra.mxu0 0
    %1030 = vmatprep.subr.bf16.mxu0 0
    %1031 = vmatpush1.bf16.xpose.msra.mxu0 0
    %1032 = vmatprep.subr.bf16.mxu0 0
    %1033 = vmatpush1.bf16.xpose.msra.mxu0 0
    %1034 = vmatprep.subr.bf16.mxu0 0
    %1035 = vmatpush1.bf16.xpose.msra.mxu0 0
    %1036 = vmatprep.subr.bf16.mxu0 0
    %1037 = vmatpush1.bf16.xpose.msra.mxu0 0
    %1038 = vmatprep.subr.bf16.mxu0 0
    %1039 = vmatpush1.bf16.xpose.msra.mxu0 0
    %1040 = vmatprep.mubr.bf16.mxu0 0
    %1041 = vmatmul.mubr.bf16.gmra.mrb[0].mxu0 %v1000
    %v1042 = vpop.f32.mrb[0].mxu0
    %v1043 = vadd.f32 0.0, %v1042
    %v1044 = vpop.f32.mrb[0].mxu0
    %v1045 = vpop.f32.mrb[0].mxu0
    %v1046 = vadd.f32 0.0, %v1045
    %v1047 = vpop.f32.mrb[0].mxu0
    %1048 = vmatprep.mubr.bf16.mxu0 0
    %1049 = vmatmul.mubr.bf16.gmra.mrb[0].mxu0 %v1003
    %v1050 = vpop.f32.mrb[0].mxu0
    %v1051 = vadd.f32 0.0, %v1050
    %v1052 = vpop.f32.mrb[0].mxu0
    %v1053 = vpop.f32.mrb[0].mxu0
    %v1054 = vpop.f32.mrb[0].mxu0
    %1055 = vdwg.mxu0
    %v1056 = vsel %vm322, %v983, -inf
    %1057 = vmax.xlane.f32.xlu0 %v1056
    %v1058 = vpop.xlane.xlu0 %1057
    %v1059 = vsel %vm322, %v986, -inf
    %1060 = vmax.xlane.f32.xlu0 %v1059
    %v1061 = vpop.xlane.xlu0 %1060
    %v1062 = vsel %vm322, %v991, -inf
    %1063 = vmax.xlane.f32.xlu0 %v1062
    %v1064 = vpop.xlane.xlu0 %1063
    %v1065 = vsel %vm322, %v1043, -inf
    %1066 = vmax.xlane.f32.xlu0 %v1065
    %v1067 = vpop.xlane.xlu0 %1066
    %v1068 = vsel %vm322, %v1046, -inf
    %1069 = vmax.xlane.f32.xlu0 %v1068
    %v1070 = vpop.xlane.xlu0 %1069
    %v1071 = vsel %vm322, %v1051, -inf
    %1072 = vmax.xlane.f32.xlu0 %v1071
    %v1073 = vpop.xlane.xlu0 %1072
    %v1074 = vsub.f32 %v983, %v1058
    %v1075 = vsub.f32 %v986, %v1061
    %v1076 = vsub.f32 %v991, %v1064
    %v1077 = vsub.f32 %v1043, %v1067
    %v1078 = vsub.f32 %v1046, %v1070
    %v1079 = vsub.f32 %v1051, %v1073
    %v1080 = vmul.f32 %v1074, 1.442695
    %v1081 = vpow.pop %v1080
    %v1082 = vmul.f32 %v1075, 1.442695
    %v1083 = vpow.pop %v1082
    %v1084 = vmul.f32 %v1076, 1.442695
    %v1085 = vpow.pop %v1084
    %v1086 = vmul.f32 %v1077, 1.442695
    %v1087 = vpow.pop %v1086
    %v1088 = vmul.f32 %v1078, 1.442695
    %v1089 = vpow.pop %v1088
    %v1090 = vmul.f32 %v1079, 1.442695
    %v1091 = vpow.pop %v1090
    %v1092 = vsel %vm322, %v1081, 0.0
    %1093 = vadd.xlane.f32.xlu0 %v1092
    %v1094 = vpop.xlane.xlu0 %1093
    %v1095 = vsel %vm322, %v1083, 0.0
    %1096 = vadd.xlane.f32.xlu0 %v1095
    %v1097 = vpop.xlane.xlu0 %1096
    %v1098 = vsel %vm322, %v1085, 0.0
    %1099 = vadd.xlane.f32.xlu0 %v1098
    %v1100 = vpop.xlane.xlu0 %1099
    %v1101 = vsel %vm322, %v1087, 0.0
    %1102 = vadd.xlane.f32.xlu0 %v1101
    %v1103 = vpop.xlane.xlu0 %1102
    %v1104 = vsel %vm322, %v1089, 0.0
    %1105 = vadd.xlane.f32.xlu0 %v1104
    %v1106 = vpop.xlane.xlu0 %1105
    %v1107 = vsel %vm322, %v1091, 0.0
    %1108 = vadd.xlane.f32.xlu0 %v1107
    %v1109 = vpop.xlane.xlu0 %1108
    %v1110 = vrcp.pop %v1094
    %v1111 = vrcp.pop %v1097
    %v1112 = vrcp.pop %v1100
    %v1113 = vrcp.pop %v1103
    %v1114 = vrcp.pop %v1106
    %v1115 = vrcp.pop %v1109
    %v1116 = vmul.f32 %v1081, %v1110
    %v1117 = vmul.f32 %v1083, %v1111
    %v1118 = vmul.f32 %v1085, %v1112
    %v1119 = vmul.f32 %v1087, %v1113
    %v1120 = vmul.f32 %v1089, %v1114
    %v1121 = vmul.f32 %v1091, %v1115
    %v1122 = vpack.c.bf16 %v1117, %v1116
    %v1123 = vpack.c.bf16 %v1118, %v1118
    %v1124 = vpack.c.bf16 %v1120, %v1119
    %v1125 = vpack.c.bf16 %v1121, %v1121
    %1126 = vrot.lane.b32.xlu0 %v934, 68
    %v1127 = vpop.permute.xlu0 %1126
    %v1129 = vsel %vm322, %v1122, 0
    %v1132 = vsel %vm322, %v1123, 0
    %v1135 = vsel %vm401, %v1127, 0
    %1137 = vmatprep.subr.bf16.mxu0 0
    %1138 = vmatpush1.bf16.msra.mxu0 %v1135
    %1139 = vmatprep.subr.bf16.mxu0 0
    %1140 = vmatpush1.bf16.msra.mxu0 0
    %1141 = vmatprep.subr.bf16.mxu0 0
    %1142 = vmatpush1.bf16.msra.mxu0 0
    %1143 = vmatprep.subr.bf16.mxu0 0
    %1144 = vmatpush1.bf16.msra.mxu0 0
    %1145 = vmatprep.subr.bf16.mxu0 0
    %1146 = vmatpush1.bf16.msra.mxu0 0
    %1147 = vmatprep.subr.bf16.mxu0 0
    %1148 = vmatpush1.bf16.msra.mxu0 0
    %1149 = vmatprep.subr.bf16.mxu0 0
    %1150 = vmatpush1.bf16.msra.mxu0 0
    %1151 = vmatprep.subr.bf16.mxu0 0
    %1152 = vmatpush1.bf16.msra.mxu0 0
    %1153 = vmatprep.subr.bf16.mxu0 0
    %1154 = vmatpush1.bf16.msra.mxu0 0
    %1155 = vmatprep.subr.bf16.mxu0 0
    %1156 = vmatpush1.bf16.msra.mxu0 0
    %1157 = vmatprep.subr.bf16.mxu0 0
    %1158 = vmatpush1.bf16.msra.mxu0 0
    %1159 = vmatprep.subr.bf16.mxu0 0
    %1160 = vmatpush1.bf16.msra.mxu0 0
    %1161 = vmatprep.subr.bf16.mxu0 0
    %1162 = vmatpush1.bf16.msra.mxu0 0
    %1163 = vmatprep.subr.bf16.mxu0 0
    %1164 = vmatpush1.bf16.msra.mxu0 0
    %1165 = vmatprep.subr.bf16.mxu0 0
    %1166 = vmatpush1.bf16.msra.mxu0 0
    %1167 = vmatprep.subr.bf16.mxu0 0
    %1168 = vmatpush1.bf16.msra.mxu0 0
    %1169 = vmatprep.mubr.bf16.mxu0 0
    %1170 = vmatmul.mubr.bf16.gmra.mrb[0].mxu0 %v1129
    %v1171 = vpop.f32.mrb[0].mxu0
    %v1172 = vadd.f32 0.0, %v1171
    %v1173 = vpop.f32.mrb[0].mxu0
    %v1174 = vpop.f32.mrb[0].mxu0
    %v1175 = vadd.f32 0.0, %v1174
    %v1176 = vpop.f32.mrb[0].mxu0
    %1177 = vmatprep.mubr.bf16.mxu0 0
    %1178 = vmatmul.mubr.bf16.gmra.mrb[0].mxu0 %v1132
    %v1179 = vpop.f32.mrb[0].mxu0
    %v1180 = vadd.f32 0.0, %v1179
    %v1181 = vpop.f32.mrb[0].mxu0
    %v1182 = vpop.f32.mrb[0].mxu0
    %v1183 = vpop.f32.mrb[0].mxu0
    %1184 = vdwg.mxu0
    %1185 = vrot.lane.b32.xlu0 %v935, 68
    %v1186 = vpop.permute.xlu0 %1185
    %v1188 = vsel %vm322, %v1124, 0
    %v1191 = vsel %vm322, %v1125, 0
    %v1194 = vsel %vm401, %v1186, 0
    %1196 = vmatprep.subr.bf16.mxu0 0
    %1197 = vmatpush1.bf16.msra.mxu0 %v1194
    %1198 = vmatprep.subr.bf16.mxu0 0
    %1199 = vmatpush1.bf16.msra.mxu0 0
    %1200 = vmatprep.subr.bf16.mxu0 0
    %1201 = vmatpush1.bf16.msra.mxu0 0
    %1202 = vmatprep.subr.bf16.mxu0 0
    %1203 = vmatpush1.bf16.msra.mxu0 0
    %1204 = vmatprep.subr.bf16.mxu0 0
    %1205 = vmatpush1.bf16.msra.mxu0 0
    %1206 = vmatprep.subr.bf16.mxu0 0
    %1207 = vmatpush1.bf16.msra.mxu0 0
    %1208 = vmatprep.subr.bf16.mxu0 0
    %1209 = vmatpush1.bf16.msra.mxu0 0
    %1210 = vmatprep.subr.bf16.mxu0 0
    %1211 = vmatpush1.bf16.msra.mxu0 0
    %1212 = vmatprep.subr.bf16.mxu0 0
    %1213 = vmatpush1.bf16.msra.mxu0 0
    %1214 = vmatprep.subr.bf16.mxu0 0
    %1215 = vmatpush1.bf16.msra.mxu0 0
    %1216 = vmatprep.subr.bf16.mxu0 0
    %1217 = vmatpush1.bf16.msra.mxu0 0
    %1218 = vmatprep.subr.bf16.mxu0 0
    %1219 = vmatpush1.bf16.msra.mxu0 0
    %1220 = vmatprep.subr.bf16.mxu0 0
    %1221 = vmatpush1.bf16.msra.mxu0 0
    %1222 = vmatprep.subr.bf16.mxu0 0
    %1223 = vmatpush1.bf16.msra.mxu0 0
    %1224 = vmatprep.subr.bf16.mxu0 0
    %1225 = vmatpush1.bf16.msra.mxu0 0
    %1226 = vmatprep.subr.bf16.mxu0 0
    %1227 = vmatpush1.bf16.msra.mxu0 0
    %1228 = vmatprep.mubr.bf16.mxu0 0
    %1229 = vmatmul.mubr.bf16.gmra.mrb[0].mxu0 %v1188
    %v1230 = vpop.f32.mrb[0].mxu0
    %v1231 = vadd.f32 0.0, %v1230
    %v1232 = vpop.f32.mrb[0].mxu0
    %v1233 = vpop.f32.mrb[0].mxu0
    %v1234 = vadd.f32 0.0, %v1233
    %v1235 = vpop.f32.mrb[0].mxu0
    %1236 = vmatprep.mubr.bf16.mxu0 0
    %1237 = vmatmul.mubr.bf16.gmra.mrb[0].mxu0 %v1191
    %v1238 = vpop.f32.mrb[0].mxu0
    %v1239 = vadd.f32 0.0, %v1238
    %v1240 = vpop.f32.mrb[0].mxu0
    %v1241 = vpop.f32.mrb[0].mxu0
    %v1242 = vpop.f32.mrb[0].mxu0
    %1243 = vdwg.mxu0
    %v1244 = vmul.f32 %v1172, %v176
    %v1245 = vmul.f32 %v1231, %v176
    %v1246 = vmul.f32 %v1175, %v184
    %v1247 = vmul.f32 %v1234, %v184
    %v1248 = vadd.f32 %v1244, %v1246
    %v1249 = vadd.f32 %v1245, %v1247
    %v1250 = vmul.f32 %v1180, %v192
    %v1251 = vmul.f32 %v1239, %v192
    %v1252 = vadd.f32 %v1248, %v1250
    %v1253 = vadd.f32 %v1249, %v1251
    %v1254 = vadd.f32 %v1252, %v842
    %v1255 = vadd.f32 %v1253, %v843
    %v1256 = vsel %vm114, %v1254, 0.0
    %1257 = vadd.xlane.f32.xlu0 %v1256
    %v1258 = vpop.xlane.xlu0 %1257
    %v1259 = vsel %vm114, %v1255, 0.0
    %1260 = vadd.xlane.f32.xlu0 %v1259
    %v1261 = vpop.xlane.xlu0 %1260
    %v1262 = vrot.slane %v1258, 4
    %v1263 = vadd.f32 %v1258, %v1262
    %v1264 = vrot.slane %v1263, 2
    %v1265 = vadd.f32 %v1263, %v1264
    %v1266 = vrot.slane %v1265, 1
    %v1267 = vadd.f32 %v1265, %v1266
    %v1268 = vrot.slane %v1261, 4
    %v1269 = vadd.f32 %v1261, %v1268
    %v1270 = vrot.slane %v1269, 2
    %v1271 = vadd.f32 %v1269, %v1270
    %v1272 = vrot.slane %v1271, 1
    %v1273 = vadd.f32 %v1271, %v1272
    %v1274 = vmul.f32 %v1267, %v81
    %v1275 = vmul.f32 %v1273, %v82
    %v1278 = vlaneseq
    %v1279 = vshrl.u32 %v1278, 7
    %v1280 = vsub.s32 0, %v1279
    %v1281 = vrot.slane %v1274, %v1280
    %v1282 = vlaneseq
    %v1283 = vshrl.u32 %v1282, 7
    %v1284 = vsub.s32 0, %v1283
    %v1285 = vrot.slane %v1275, %v1284
    %1286 = vset.pattern.permute.xlu0 0
    %1287 = vperm.xlu0 %1286, %v1281
    %v1288 = vpop.permute.xlu0 %1287
    %1290 = vset.pattern.permute.xlu0 0
    %1291 = vperm.xlu0 %1290, %v1285
    %v1292 = vpop.permute.xlu0 %1291
    %v1294 = vsub.f32 %v1254, %v1288
    %v1295 = vsub.f32 %v1255, %v1292
    %v1296 = vmul.f32 %v1294, %v1294
    %v1297 = vmul.f32 %v1295, %v1295
    %v1298 = vsel %vm114, %v1296, 0.0
    %1299 = vadd.xlane.f32.xlu0 %v1298
    %v1300 = vpop.xlane.xlu0 %1299
    %v1301 = vsel %vm114, %v1297, 0.0
    %1302 = vadd.xlane.f32.xlu0 %v1301
    %v1303 = vpop.xlane.xlu0 %1302
    %v1304 = vrot.slane %v1300, 4
    %v1305 = vadd.f32 %v1300, %v1304
    %v1306 = vrot.slane %v1305, 2
    %v1307 = vadd.f32 %v1305, %v1306
    %v1308 = vrot.slane %v1307, 1
    %v1309 = vadd.f32 %v1307, %v1308
    %v1310 = vrot.slane %v1303, 4
    %v1311 = vadd.f32 %v1303, %v1310
    %v1312 = vrot.slane %v1311, 2
    %v1313 = vadd.f32 %v1311, %v1312
    %v1314 = vrot.slane %v1313, 1
    %v1315 = vadd.f32 %v1313, %v1314
    %v1316 = vrsqrt.pop %v1309
    %v1317 = vrsqrt.pop %v1315
    %v1318 = vmul.f32 %v79, %v1316
    %v1319 = vmul.f32 %v80, %v1317
    %v1322 = vlaneseq
    %v1323 = vshrl.u32 %v1322, 7
    %v1324 = vsub.s32 0, %v1323
    %v1325 = vrot.slane %v1318, %v1324
    %v1326 = vlaneseq
    %v1327 = vshrl.u32 %v1326, 7
    %v1328 = vsub.s32 0, %v1327
    %v1329 = vrot.slane %v1319, %v1328
    %1330 = vset.pattern.permute.xlu0 0
    %1331 = vperm.xlu0 %1330, %v1325
    %v1332 = vpop.permute.xlu0 %1331
    %1334 = vset.pattern.permute.xlu0 0
    %1335 = vperm.xlu0 %1334, %v1329
    %v1336 = vpop.permute.xlu0 %1335
    %v1338 = vmul.f32 %v1294, %v1332
    %v1339 = vmul.f32 %v1295, %v1336
    %v1340 = vpack.c.bf16 %v1338, %v1338
    %v1341 = vpack.c.bf16 %v1339, %v1339
    %s1342 = scalar_lea.vmem [#allocation5], 16
    %v1343 = vld [vmem:[%s1342] sm:$0xf]
    %v1344 = vld [vmem:[%s1342 + $0x4] sm:$0xf]
    %v1345 = vld [vmem:[%s1342 + $0x8] sm:$0xf]
    %v1346 = vld [vmem:[%s1342 + $0xc] sm:$0x7]
    %v1349 = vunpack.c.l.b16 %v1340
    %v1350 = vunpack.c.l.b16 %v1341
    %v1351 = vpack.c.b16 %v1350, %v1349
    %v1356 = vunpack.c.l.b16 %v1343
    %v1357 = vunpack.c.l.b16 %v1344
    %v1358 = vunpack.c.l.b16 %v1345
    %v1359 = vunpack.c.l.b16 %v1346
    %v1360 = vpack.c.b16 %v1357, %v1356
    %v1361 = vpack.c.b16 %v1359, %v1358
    %v1364 = vsel %vm114, %v1351, 0
    %v1367 = vsel %vm118, %v1361, 0
    %1369 = vmatprep.subr.bf16.mxu0 0
    %1370 = vmatpush1.bf16.msra.mxu0 %v1360
    %1371 = vmatprep.subr.bf16.mxu0 0
    %1372 = vmatpush1.bf16.msra.mxu0 %v1367
    %1373 = vmatprep.subr.bf16.mxu0 0
    %1374 = vmatpush1.bf16.msra.mxu0 0
    %1375 = vmatprep.subr.bf16.mxu0 0
    %1376 = vmatpush1.bf16.msra.mxu0 0
    %1377 = vmatprep.subr.bf16.mxu0 0
    %1378 = vmatpush1.bf16.msra.mxu0 0
    %1379 = vmatprep.subr.bf16.mxu0 0
    %1380 = vmatpush1.bf16.msra.mxu0 0
    %1381 = vmatprep.subr.bf16.mxu0 0
    %1382 = vmatpush1.bf16.msra.mxu0 0
    %1383 = vmatprep.subr.bf16.mxu0 0
    %1384 = vmatpush1.bf16.msra.mxu0 0
    %1385 = vmatprep.subr.bf16.mxu0 0
    %1386 = vmatpush1.bf16.msra.mxu0 0
    %1387 = vmatprep.subr.bf16.mxu0 0
    %1388 = vmatpush1.bf16.msra.mxu0 0
    %1389 = vmatprep.subr.bf16.mxu0 0
    %1390 = vmatpush1.bf16.msra.mxu0 0
    %1391 = vmatprep.subr.bf16.mxu0 0
    %1392 = vmatpush1.bf16.msra.mxu0 0
    %1393 = vmatprep.subr.bf16.mxu0 0
    %1394 = vmatpush1.bf16.msra.mxu0 0
    %1395 = vmatprep.subr.bf16.mxu0 0
    %1396 = vmatpush1.bf16.msra.mxu0 0
    %1397 = vmatprep.subr.bf16.mxu0 0
    %1398 = vmatpush1.bf16.msra.mxu0 0
    %1399 = vmatprep.subr.bf16.mxu0 0
    %1400 = vmatpush1.bf16.msra.mxu0 0
    %1401 = vmatprep.mubr.bf16.mxu0 0
    %1402 = vmatmul.mubr.bf16.gmra.mrb[0].mxu0 %v1364
    %v1403 = vpop.f32.mrb[0].mxu0
    %v1404 = vadd.f32 0.0, %v1403
    %v1405 = vpop.f32.mrb[0].mxu0
    %v1406 = vpop.f32.mrb[0].mxu0
    %v1407 = vadd.f32 0.0, %v1406
    %v1408 = vpop.f32.mrb[0].mxu0
    %1409 = vdwg.mxu0
    %v1410 = vxor.u32 %v1404, 2147483648
    %v1411 = vxor.u32 %v1407, 2147483648
    %v1412 = vmul.f32 %v1410, 1.442695
    %v1413 = vpow.pop %v1412
    %v1414 = vmul.f32 %v1411, 1.442695
    %v1415 = vpow.pop %v1414
    %v1416 = vadd.f32 %v1413, 1.0
    %v1417 = vadd.f32 %v1415, 1.0
    %v1418 = vrcp.pop %v1416
    %v1419 = vmul.f32 1.0, %v1418
    %v1420 = vrcp.pop %v1417
    %v1421 = vmul.f32 1.0, %v1420
    %v1422 = vmul.f32 %v1404, %v1419
    %v1423 = vmul.f32 %v1407, %v1421
    %v1424 = vpack.c.bf16 %v1422, %v1422
    %v1425 = vpack.c.bf16 %v1423, %v1423
    %s1426 = scalar_lea.vmem [#allocation7], 16
    %v1427 = vld [vmem:[%s1426] sm:$0xf]
    %v1428 = vld [vmem:[%s1426 + $0x4] sm:$0xf]
    %v1429 = vld [vmem:[%s1426 + $0x8] sm:$0xf]
    %v1430 = vld [vmem:[%s1426 + $0xc] sm:$0x7]
    %v1433 = vunpack.c.l.b16 %v1424
    %v1434 = vunpack.c.l.b16 %v1425
    %v1435 = vpack.c.b16 %v1434, %v1433
    %v1440 = vunpack.c.l.b16 %v1427
    %v1441 = vunpack.c.l.b16 %v1428
    %v1442 = vunpack.c.l.b16 %v1429
    %v1443 = vunpack.c.l.b16 %v1430
    %v1444 = vpack.c.b16 %v1441, %v1440
    %v1445 = vpack.c.b16 %v1443, %v1442
    %v1448 = vsel %vm114, %v1435, 0
    %v1451 = vsel %vm118, %v1445, 0
    %1453 = vmatprep.subr.bf16.mxu0 0
    %1454 = vmatpush1.bf16.msra.mxu0 %v1444
    %1455 = vmatprep.subr.bf16.mxu0 0
    %1456 = vmatpush1.bf16.msra.mxu0 %v1451
    %1457 = vmatprep.subr.bf16.mxu0 0
    %1458 = vmatpush1.bf16.msra.mxu0 0
    %1459 = vmatprep.subr.bf16.mxu0 0
    %1460 = vmatpush1.bf16.msra.mxu0 0
    %1461 = vmatprep.subr.bf16.mxu0 0
    %1462 = vmatpush1.bf16.msra.mxu0 0
    %1463 = vmatprep.subr.bf16.mxu0 0
    %1464 = vmatpush1.bf16.msra.mxu0 0
    %1465 = vmatprep.subr.bf16.mxu0 0
    %1466 = vmatpush1.bf16.msra.mxu0 0
    %1467 = vmatprep.subr.bf16.mxu0 0
    %1468 = vmatpush1.bf16.msra.mxu0 0
    %1469 = vmatprep.subr.bf16.mxu0 0
    %1470 = vmatpush1.bf16.msra.mxu0 0
    %1471 = vmatprep.subr.bf16.mxu0 0
    %1472 = vmatpush1.bf16.msra.mxu0 0
    %1473 = vmatprep.subr.bf16.mxu0 0
    %1474 = vmatpush1.bf16.msra.mxu0 0
    %1475 = vmatprep.subr.bf16.mxu0 0
    %1476 = vmatpush1.bf16.msra.mxu0 0
    %1477 = vmatprep.subr.bf16.mxu0 0
    %1478 = vmatpush1.bf16.msra.mxu0 0
    %1479 = vmatprep.subr.bf16.mxu0 0
    %1480 = vmatpush1.bf16.msra.mxu0 0
    %1481 = vmatprep.subr.bf16.mxu0 0
    %1482 = vmatpush1.bf16.msra.mxu0 0
    %1483 = vmatprep.subr.bf16.mxu0 0
    %1484 = vmatpush1.bf16.msra.mxu0 0
    %1485 = vmatprep.mubr.bf16.mxu0 0
    %1486 = vmatmul.mubr.bf16.gmra.mrb[0].mxu0 %v1448
    %v1487 = vpop.f32.mrb[0].mxu0
    %v1488 = vadd.f32 %v1338, %v1487
    %v1489 = vpop.f32.mrb[0].mxu0
    %v1490 = vpop.f32.mrb[0].mxu0
    %v1491 = vadd.f32 %v1339, %v1490
    %v1492 = vpop.f32.mrb[0].mxu0
    %1493 = vdwg.mxu0
    %v1494 = vsel %vm114, %v1488, 0.0
    %1495 = vadd.xlane.f32.xlu0 %v1494
    %v1496 = vpop.xlane.xlu0 %1495
    %v1497 = vsel %vm114, %v1491, 0.0
    %1498 = vadd.xlane.f32.xlu0 %v1497
    %v1499 = vpop.xlane.xlu0 %1498
    %v1500 = vrot.slane %v1496, 4
    %v1501 = vadd.f32 %v1496, %v1500
    %v1502 = vrot.slane %v1501, 2
    %v1503 = vadd.f32 %v1501, %v1502
    %v1504 = vrot.slane %v1503, 1
    %v1505 = vadd.f32 %v1503, %v1504
    %v1506 = vrot.slane %v1499, 4
    %v1507 = vadd.f32 %v1499, %v1506
    %v1508 = vrot.slane %v1507, 2
    %v1509 = vadd.f32 %v1507, %v1508
    %v1510 = vrot.slane %v1509, 1
    %v1511 = vadd.f32 %v1509, %v1510
    %v1512 = vmul.f32 %v1505, %v81
    %v1513 = vmul.f32 %v1511, %v82
    %v1516 = vlaneseq
    %v1517 = vshrl.u32 %v1516, 7
    %v1518 = vsub.s32 0, %v1517
    %v1519 = vrot.slane %v1512, %v1518
    %v1520 = vlaneseq
    %v1521 = vshrl.u32 %v1520, 7
    %v1522 = vsub.s32 0, %v1521
    %v1523 = vrot.slane %v1513, %v1522
    %1524 = vset.pattern.permute.xlu0 0
    %1525 = vperm.xlu0 %1524, %v1519
    %v1526 = vpop.permute.xlu0 %1525
    %1528 = vset.pattern.permute.xlu0 0
    %1529 = vperm.xlu0 %1528, %v1523
    %v1530 = vpop.permute.xlu0 %1529
    %v1532 = vsub.f32 %v1488, %v1526
    %v1533 = vsub.f32 %v1491, %v1530
    %v1534 = vmul.f32 %v1532, %v1532
    %v1535 = vmul.f32 %v1533, %v1533
    %v1536 = vsel %vm114, %v1534, 0.0
    %1537 = vadd.xlane.f32.xlu0 %v1536
    %v1538 = vpop.xlane.xlu0 %1537
    %v1539 = vsel %vm114, %v1535, 0.0
    %1540 = vadd.xlane.f32.xlu0 %v1539
    %v1541 = vpop.xlane.xlu0 %1540
    %v1542 = vrot.slane %v1538, 4
    %v1543 = vadd.f32 %v1538, %v1542
    %v1544 = vrot.slane %v1543, 2
    %v1545 = vadd.f32 %v1543, %v1544
    %v1546 = vrot.slane %v1545, 1
    %v1547 = vadd.f32 %v1545, %v1546
    %v1548 = vrot.slane %v1541, 4
    %v1549 = vadd.f32 %v1541, %v1548
    %v1550 = vrot.slane %v1549, 2
    %v1551 = vadd.f32 %v1549, %v1550
    %v1552 = vrot.slane %v1551, 1
    %v1553 = vadd.f32 %v1551, %v1552
    %v1554 = vrsqrt.pop %v1547
    %v1555 = vrsqrt.pop %v1553
    %v1556 = vmul.f32 %v79, %v1554
    %v1557 = vmul.f32 %v80, %v1555
    %v1560 = vlaneseq
    %v1561 = vshrl.u32 %v1560, 7
    %v1562 = vsub.s32 0, %v1561
    %v1563 = vrot.slane %v1556, %v1562
    %v1564 = vlaneseq
    %v1565 = vshrl.u32 %v1564, 7
    %v1566 = vsub.s32 0, %v1565
    %v1567 = vrot.slane %v1557, %v1566
    %1568 = vset.pattern.permute.xlu0 0
    %1569 = vperm.xlu0 %1568, %v1563
    %v1570 = vpop.permute.xlu0 %1569
    %1572 = vset.pattern.permute.xlu0 0
    %1573 = vperm.xlu0 %1572, %v1567
    %v1574 = vpop.permute.xlu0 %1573
    %v1576 = vmul.f32 %v1532, %v1570
    %v1577 = vmul.f32 %v1533, %v1574
    %v1578 = vpack.c.bf16 %v1576, %v1576
    %v1579 = vpack.c.bf16 %v1577, %v1577
    %s1580 = scalar_lea.vmem [#allocation2], 32
    %v1581 = vld [vmem:[%s1580] sm:$0xf]
    %v1582 = vld [vmem:[%s1580 + $0x4] sm:$0xf]
    %v1583 = vld [vmem:[%s1580 + $0x8] sm:$0xf]
    %v1584 = vld [vmem:[%s1580 + $0xc] sm:$0x7]
    %v1587 = vunpack.c.l.b16 %v1578
    %v1588 = vunpack.c.l.b16 %v1579
    %v1589 = vpack.c.b16 %v1588, %v1587
    %v1594 = vunpack.c.l.b16 %v1581
    %v1595 = vunpack.c.l.b16 %v1582
    %v1596 = vunpack.c.l.b16 %v1583
    %v1597 = vunpack.c.l.b16 %v1584
    %v1598 = vpack.c.b16 %v1595, %v1594
    %v1599 = vpack.c.b16 %v1597, %v1596
    %v1602 = vsel %vm114, %v1589, 0
    %v1605 = vsel %vm118, %v1599, 0
    %1607 = vmatprep.subr.bf16.mxu0 0
    %1608 = vmatpush1.bf16.msra.mxu0 %v1598
    %1609 = vmatprep.subr.bf16.mxu0 0
    %1610 = vmatpush1.bf16.msra.mxu0 %v1605
    %1611 = vmatprep.subr.bf16.mxu0 0
    %1612 = vmatpush1.bf16.msra.mxu0 0
    %1613 = vmatprep.subr.bf16.mxu0 0
    %1614 = vmatpush1.bf16.msra.mxu0 0
    %1615 = vmatprep.subr.bf16.mxu0 0
    %1616 = vmatpush1.bf16.msra.mxu0 0
    %1617 = vmatprep.subr.bf16.mxu0 0
    %1618 = vmatpush1.bf16.msra.mxu0 0
    %1619 = vmatprep.subr.bf16.mxu0 0
    %1620 = vmatpush1.bf16.msra.mxu0 0
    %1621 = vmatprep.subr.bf16.mxu0 0
    %1622 = vmatpush1.bf16.msra.mxu0 0
    %1623 = vmatprep.subr.bf16.mxu0 0
    %1624 = vmatpush1.bf16.msra.mxu0 0
    %1625 = vmatprep.subr.bf16.mxu0 0
    %1626 = vmatpush1.bf16.msra.mxu0 0
    %1627 = vmatprep.subr.bf16.mxu0 0
    %1628 = vmatpush1.bf16.msra.mxu0 0
    %1629 = vmatprep.subr.bf16.mxu0 0
    %1630 = vmatpush1.bf16.msra.mxu0 0
    %1631 = vmatprep.subr.bf16.mxu0 0
    %1632 = vmatpush1.bf16.msra.mxu0 0
    %1633 = vmatprep.subr.bf16.mxu0 0
    %1634 = vmatpush1.bf16.msra.mxu0 0
    %1635 = vmatprep.subr.bf16.mxu0 0
    %1636 = vmatpush1.bf16.msra.mxu0 0
    %1637 = vmatprep.subr.bf16.mxu0 0
    %1638 = vmatpush1.bf16.msra.mxu0 0
    %1639 = vmatprep.mubr.bf16.mxu0 0
    %1640 = vmatmul.mubr.bf16.gmra.mrb[0].mxu0 %v1602
    %v1641 = vpop.f32.mrb[0].mxu0
    %v1642 = vadd.f32 0.0, %v1641
    %v1643 = vpop.f32.mrb[0].mxu0
    %v1644 = vpop.f32.mrb[0].mxu0
    %v1645 = vadd.f32 0.0, %v1644
    %v1646 = vpop.f32.mrb[0].mxu0
    %1647 = vdwg.mxu0
    %s1648 = scalar_lea.vmem %s3, 2
    %v1649 = vld [vmem:[%s1648] sm:$0x1]
    %v1651 = vlaneseq
    %v1652 = vshrl.u32 %v1651, 7
    %v1653 = vsub.s32 0, %v1652
    %v1654 = vrot.slane %v1649, %v1653
    %v1656 = vadd.f32 %v1642, %v1654
    %v1657 = vadd.f32 %v1645, %v1654
    %v1658 = vmul.f32 %v1656, %v176
    %v1659 = vmul.f32 %v1657, %v176
    %v1660 = vmul.f32 %v1656, %v184
    %v1661 = vmul.f32 %v1657, %v184
    %v1662 = vmul.f32 %v1656, %v192
    %v1663 = vmul.f32 %v1657, %v192
    %v1664 = vpack.c.bf16 %v1660, %v1658
    %v1665 = vpack.c.bf16 %v1662, %v1662
    %v1666 = vpack.c.bf16 %v1661, %v1659
    %v1667 = vpack.c.bf16 %v1663, %v1663
    %v1668 = vpack.c.bf16 %v1642, %v1642
    %v1669 = vpack.c.bf16 %v1645, %v1645
    %1671 = vrot.lane.b32.xlu0 %v1668, 98
    %v1672 = vpop.permute.xlu0 %1671
    %v1674 = vsel %vm114, %v1664, 0
    %v1677 = vsel %vm114, %v1665, 0
    %v1680 = vsel %vm114, %v1672, 0
    %1682 = vmatprep.subr.bf16.mxu0 0
    %1683 = vmatpush1.bf16.xpose.msra.mxu0 %v1680
    %1684 = vmatprep.subr.bf16.mxu0 0
    %1685 = vmatpush1.bf16.xpose.msra.mxu0 0
    %1686 = vmatprep.subr.bf16.mxu0 0
    %1687 = vmatpush1.bf16.xpose.msra.mxu0 0
    %1688 = vmatprep.subr.bf16.mxu0 0
    %1689 = vmatpush1.bf16.xpose.msra.mxu0 0
    %1690 = vmatprep.subr.bf16.mxu0 0
    %1691 = vmatpush1.bf16.xpose.msra.mxu0 0
    %1692 = vmatprep.subr.bf16.mxu0 0
    %1693 = vmatpush1.bf16.xpose.msra.mxu0 0
    %1694 = vmatprep.subr.bf16.mxu0 0
    %1695 = vmatpush1.bf16.xpose.msra.mxu0 0
    %1696 = vmatprep.subr.bf16.mxu0 0
    %1697 = vmatpush1.bf16.xpose.msra.mxu0 0
    %1698 = vmatprep.subr.bf16.mxu0 0
    %1699 = vmatpush1.bf16.xpose.msra.mxu0 0
    %1700 = vmatprep.subr.bf16.mxu0 0
    %1701 = vmatpush1.bf16.xpose.msra.mxu0 0
    %1702 = vmatprep.subr.bf16.mxu0 0
    %1703 = vmatpush1.bf16.xpose.msra.mxu0 0
    %1704 = vmatprep.subr.bf16.mxu0 0
    %1705 = vmatpush1.bf16.xpose.msra.mxu0 0
    %1706 = vmatprep.subr.bf16.mxu0 0
    %1707 = vmatpush1.bf16.xpose.msra.mxu0 0
    %1708 = vmatprep.subr.bf16.mxu0 0
    %1709 = vmatpush1.bf16.xpose.msra.mxu0 0
    %1710 = vmatprep.subr.bf16.mxu0 0
    %1711 = vmatpush1.bf16.xpose.msra.mxu0 0
    %1712 = vmatprep.subr.bf16.mxu0 0
    %1713 = vmatpush1.bf16.xpose.msra.mxu0 0
    %1714 = vmatprep.mubr.bf16.mxu0 0
    %1715 = vmatmul.mubr.bf16.gmra.mrb[0].mxu0 %v1674
    %v1716 = vpop.f32.mrb[0].mxu0
    %v1717 = vadd.f32 0.0, %v1716
    %v1718 = vpop.f32.mrb[0].mxu0
    %v1719 = vpop.f32.mrb[0].mxu0
    %v1720 = vadd.f32 0.0, %v1719
    %v1721 = vpop.f32.mrb[0].mxu0
    %1722 = vmatprep.mubr.bf16.mxu0 0
    %1723 = vmatmul.mubr.bf16.gmra.mrb[0].mxu0 %v1677
    %v1724 = vpop.f32.mrb[0].mxu0
    %v1725 = vadd.f32 0.0, %v1724
    %v1726 = vpop.f32.mrb[0].mxu0
    %v1727 = vpop.f32.mrb[0].mxu0
    %v1728 = vpop.f32.mrb[0].mxu0
    %1729 = vdwg.mxu0
    %1731 = vrot.lane.b32.xlu0 %v1669, 98
    %v1732 = vpop.permute.xlu0 %1731
    %v1734 = vsel %vm114, %v1666, 0
    %v1737 = vsel %vm114, %v1667, 0
    %v1740 = vsel %vm114, %v1732, 0
    %1742 = vmatprep.subr.bf16.mxu0 0
    %1743 = vmatpush1.bf16.xpose.msra.mxu0 %v1740
    %1744 = vmatprep.subr.bf16.mxu0 0
    %1745 = vmatpush1.bf16.xpose.msra.mxu0 0
    %1746 = vmatprep.subr.bf16.mxu0 0
    %1747 = vmatpush1.bf16.xpose.msra.mxu0 0
    %1748 = vmatprep.subr.bf16.mxu0 0
    %1749 = vmatpush1.bf16.xpose.msra.mxu0 0
    %1750 = vmatprep.subr.bf16.mxu0 0
    %1751 = vmatpush1.bf16.xpose.msra.mxu0 0
    %1752 = vmatprep.subr.bf16.mxu0 0
    %1753 = vmatpush1.bf16.xpose.msra.mxu0 0
    %1754 = vmatprep.subr.bf16.mxu0 0
    %1755 = vmatpush1.bf16.xpose.msra.mxu0 0
    %1756 = vmatprep.subr.bf16.mxu0 0
    %1757 = vmatpush1.bf16.xpose.msra.mxu0 0
    %1758 = vmatprep.subr.bf16.mxu0 0
    %1759 = vmatpush1.bf16.xpose.msra.mxu0 0
    %1760 = vmatprep.subr.bf16.mxu0 0
    %1761 = vmatpush1.bf16.xpose.msra.mxu0 0
    %1762 = vmatprep.subr.bf16.mxu0 0
    %1763 = vmatpush1.bf16.xpose.msra.mxu0 0
    %1764 = vmatprep.subr.bf16.mxu0 0
    %1765 = vmatpush1.bf16.xpose.msra.mxu0 0
    %1766 = vmatprep.subr.bf16.mxu0 0
    %1767 = vmatpush1.bf16.xpose.msra.mxu0 0
    %1768 = vmatprep.subr.bf16.mxu0 0
    %1769 = vmatpush1.bf16.xpose.msra.mxu0 0
    %1770 = vmatprep.subr.bf16.mxu0 0
    %1771 = vmatpush1.bf16.xpose.msra.mxu0 0
    %1772 = vmatprep.subr.bf16.mxu0 0
    %1773 = vmatpush1.bf16.xpose.msra.mxu0 0
    %1774 = vmatprep.mubr.bf16.mxu0 0
    %1775 = vmatmul.mubr.bf16.gmra.mrb[0].mxu0 %v1734
    %v1776 = vpop.f32.mrb[0].mxu0
    %v1777 = vadd.f32 0.0, %v1776
    %v1778 = vpop.f32.mrb[0].mxu0
    %v1779 = vpop.f32.mrb[0].mxu0
    %v1780 = vadd.f32 0.0, %v1779
    %v1781 = vpop.f32.mrb[0].mxu0
    %1782 = vmatprep.mubr.bf16.mxu0 0
    %1783 = vmatmul.mubr.bf16.gmra.mrb[0].mxu0 %v1737
    %v1784 = vpop.f32.mrb[0].mxu0
    %v1785 = vadd.f32 0.0, %v1784
    %v1786 = vpop.f32.mrb[0].mxu0
    %v1787 = vpop.f32.mrb[0].mxu0
    %v1788 = vpop.f32.mrb[0].mxu0
    %1789 = vdwg.mxu0
    %v1790 = vsel %vm322, %v1717, -inf
    %1791 = vmax.xlane.f32.xlu0 %v1790
    %v1792 = vpop.xlane.xlu0 %1791
    %v1793 = vsel %vm322, %v1720, -inf
    %1794 = vmax.xlane.f32.xlu0 %v1793
    %v1795 = vpop.xlane.xlu0 %1794
    %v1796 = vsel %vm322, %v1725, -inf
    %1797 = vmax.xlane.f32.xlu0 %v1796
    %v1798 = vpop.xlane.xlu0 %1797
    %v1799 = vsel %vm322, %v1777, -inf
    %1800 = vmax.xlane.f32.xlu0 %v1799
    %v1801 = vpop.xlane.xlu0 %1800
    %v1802 = vsel %vm322, %v1780, -inf
    %1803 = vmax.xlane.f32.xlu0 %v1802
    %v1804 = vpop.xlane.xlu0 %1803
    %v1805 = vsel %vm322, %v1785, -inf
    %1806 = vmax.xlane.f32.xlu0 %v1805
    %v1807 = vpop.xlane.xlu0 %1806
    %v1808 = vsub.f32 %v1717, %v1792
    %v1809 = vsub.f32 %v1720, %v1795
    %v1810 = vsub.f32 %v1725, %v1798
    %v1811 = vsub.f32 %v1777, %v1801
    %v1812 = vsub.f32 %v1780, %v1804
    %v1813 = vsub.f32 %v1785, %v1807
    %v1814 = vmul.f32 %v1808, 1.442695
    %v1815 = vpow.pop %v1814
    %v1816 = vmul.f32 %v1809, 1.442695
    %v1817 = vpow.pop %v1816
    %v1818 = vmul.f32 %v1810, 1.442695
    %v1819 = vpow.pop %v1818
    %v1820 = vmul.f32 %v1811, 1.442695
    %v1821 = vpow.pop %v1820
    %v1822 = vmul.f32 %v1812, 1.442695
    %v1823 = vpow.pop %v1822
    %v1824 = vmul.f32 %v1813, 1.442695
    %v1825 = vpow.pop %v1824
    %v1826 = vsel %vm322, %v1815, 0.0
    %1827 = vadd.xlane.f32.xlu0 %v1826
    %v1828 = vpop.xlane.xlu0 %1827
    %v1829 = vsel %vm322, %v1817, 0.0
    %1830 = vadd.xlane.f32.xlu0 %v1829
    %v1831 = vpop.xlane.xlu0 %1830
    %v1832 = vsel %vm322, %v1819, 0.0
    %1833 = vadd.xlane.f32.xlu0 %v1832
    %v1834 = vpop.xlane.xlu0 %1833
    %v1835 = vsel %vm322, %v1821, 0.0
    %1836 = vadd.xlane.f32.xlu0 %v1835
    %v1837 = vpop.xlane.xlu0 %1836
    %v1838 = vsel %vm322, %v1823, 0.0
    %1839 = vadd.xlane.f32.xlu0 %v1838
    %v1840 = vpop.xlane.xlu0 %1839
    %v1841 = vsel %vm322, %v1825, 0.0
    %1842 = vadd.xlane.f32.xlu0 %v1841
    %v1843 = vpop.xlane.xlu0 %1842
    %v1844 = vrcp.pop %v1828
    %v1845 = vrcp.pop %v1831
    %v1846 = vrcp.pop %v1834
    %v1847 = vrcp.pop %v1837
    %v1848 = vrcp.pop %v1840
    %v1849 = vrcp.pop %v1843
    %v1850 = vmul.f32 %v1815, %v1844
    %v1851 = vmul.f32 %v1817, %v1845
    %v1852 = vmul.f32 %v1819, %v1846
    %v1853 = vmul.f32 %v1821, %v1847
    %v1854 = vmul.f32 %v1823, %v1848
    %v1855 = vmul.f32 %v1825, %v1849
    %v1856 = vpack.c.bf16 %v1851, %v1850
    %v1857 = vpack.c.bf16 %v1852, %v1852
    %v1858 = vpack.c.bf16 %v1854, %v1853
    %v1859 = vpack.c.bf16 %v1855, %v1855
    %1860 = vrot.lane.b32.xlu0 %v1668, 68
    %v1861 = vpop.permute.xlu0 %1860
    %v1863 = vsel %vm322, %v1856, 0
    %v1866 = vsel %vm322, %v1857, 0
    %v1869 = vsel %vm401, %v1861, 0
    %1871 = vmatprep.subr.bf16.mxu0 0
    %1872 = vmatpush1.bf16.msra.mxu0 %v1869
    %1873 = vmatprep.subr.bf16.mxu0 0
    %1874 = vmatpush1.bf16.msra.mxu0 0
    %1875 = vmatprep.subr.bf16.mxu0 0
    %1876 = vmatpush1.bf16.msra.mxu0 0
    %1877 = vmatprep.subr.bf16.mxu0 0
    %1878 = vmatpush1.bf16.msra.mxu0 0
    %1879 = vmatprep.subr.bf16.mxu0 0
    %1880 = vmatpush1.bf16.msra.mxu0 0
    %1881 = vmatprep.subr.bf16.mxu0 0
    %1882 = vmatpush1.bf16.msra.mxu0 0
    %1883 = vmatprep.subr.bf16.mxu0 0
    %1884 = vmatpush1.bf16.msra.mxu0 0
    %1885 = vmatprep.subr.bf16.mxu0 0
    %1886 = vmatpush1.bf16.msra.mxu0 0
    %1887 = vmatprep.subr.bf16.mxu0 0
    %1888 = vmatpush1.bf16.msra.mxu0 0
    %1889 = vmatprep.subr.bf16.mxu0 0
    %1890 = vmatpush1.bf16.msra.mxu0 0
    %1891 = vmatprep.subr.bf16.mxu0 0
    %1892 = vmatpush1.bf16.msra.mxu0 0
    %1893 = vmatprep.subr.bf16.mxu0 0
    %1894 = vmatpush1.bf16.msra.mxu0 0
    %1895 = vmatprep.subr.bf16.mxu0 0
    %1896 = vmatpush1.bf16.msra.mxu0 0
    %1897 = vmatprep.subr.bf16.mxu0 0
    %1898 = vmatpush1.bf16.msra.mxu0 0
    %1899 = vmatprep.subr.bf16.mxu0 0
    %1900 = vmatpush1.bf16.msra.mxu0 0
    %1901 = vmatprep.subr.bf16.mxu0 0
    %1902 = vmatpush1.bf16.msra.mxu0 0
    %1903 = vmatprep.mubr.bf16.mxu0 0
    %1904 = vmatmul.mubr.bf16.gmra.mrb[0].mxu0 %v1863
    %v1905 = vpop.f32.mrb[0].mxu0
    %v1906 = vadd.f32 0.0, %v1905
    %v1907 = vpop.f32.mrb[0].mxu0
    %v1908 = vpop.f32.mrb[0].mxu0
    %v1909 = vadd.f32 0.0, %v1908
    %v1910 = vpop.f32.mrb[0].mxu0
    %1911 = vmatprep.mubr.bf16.mxu0 0
    %1912 = vmatmul.mubr.bf16.gmra.mrb[0].mxu0 %v1866
    %v1913 = vpop.f32.mrb[0].mxu0
    %v1914 = vadd.f32 0.0, %v1913
    %v1915 = vpop.f32.mrb[0].mxu0
    %v1916 = vpop.f32.mrb[0].mxu0
    %v1917 = vpop.f32.mrb[0].mxu0
    %1918 = vdwg.mxu0
    %1919 = vrot.lane.b32.xlu0 %v1669, 68
    %v1920 = vpop.permute.xlu0 %1919
    %v1922 = vsel %vm322, %v1858, 0
    %v1925 = vsel %vm322, %v1859, 0
    %v1928 = vsel %vm401, %v1920, 0
    %1930 = vmatprep.subr.bf16.mxu0 0
    %1931 = vmatpush1.bf16.msra.mxu0 %v1928
    %1932 = vmatprep.subr.bf16.mxu0 0
    %1933 = vmatpush1.bf16.msra.mxu0 0
    %1934 = vmatprep.subr.bf16.mxu0 0
    %1935 = vmatpush1.bf16.msra.mxu0 0
    %1936 = vmatprep.subr.bf16.mxu0 0
    %1937 = vmatpush1.bf16.msra.mxu0 0
    %1938 = vmatprep.subr.bf16.mxu0 0
    %1939 = vmatpush1.bf16.msra.mxu0 0
    %1940 = vmatprep.subr.bf16.mxu0 0
    %1941 = vmatpush1.bf16.msra.mxu0 0
    %1942 = vmatprep.subr.bf16.mxu0 0
    %1943 = vmatpush1.bf16.msra.mxu0 0
    %1944 = vmatprep.subr.bf16.mxu0 0
    %1945 = vmatpush1.bf16.msra.mxu0 0
    %1946 = vmatprep.subr.bf16.mxu0 0
    %1947 = vmatpush1.bf16.msra.mxu0 0
    %1948 = vmatprep.subr.bf16.mxu0 0
    %1949 = vmatpush1.bf16.msra.mxu0 0
    %1950 = vmatprep.subr.bf16.mxu0 0
    %1951 = vmatpush1.bf16.msra.mxu0 0
    %1952 = vmatprep.subr.bf16.mxu0 0
    %1953 = vmatpush1.bf16.msra.mxu0 0
    %1954 = vmatprep.subr.bf16.mxu0 0
    %1955 = vmatpush1.bf16.msra.mxu0 0
    %1956 = vmatprep.subr.bf16.mxu0 0
    %1957 = vmatpush1.bf16.msra.mxu0 0
    %1958 = vmatprep.subr.bf16.mxu0 0
    %1959 = vmatpush1.bf16.msra.mxu0 0
    %1960 = vmatprep.subr.bf16.mxu0 0
    %1961 = vmatpush1.bf16.msra.mxu0 0
    %1962 = vmatprep.mubr.bf16.mxu0 0
    %1963 = vmatmul.mubr.bf16.gmra.mrb[0].mxu0 %v1922
    %v1964 = vpop.f32.mrb[0].mxu0
    %v1965 = vadd.f32 0.0, %v1964
    %v1966 = vpop.f32.mrb[0].mxu0
    %v1967 = vpop.f32.mrb[0].mxu0
    %v1968 = vadd.f32 0.0, %v1967
    %v1969 = vpop.f32.mrb[0].mxu0
    %1970 = vmatprep.mubr.bf16.mxu0 0
    %1971 = vmatmul.mubr.bf16.gmra.mrb[0].mxu0 %v1925
    %v1972 = vpop.f32.mrb[0].mxu0
    %v1973 = vadd.f32 0.0, %v1972
    %v1974 = vpop.f32.mrb[0].mxu0
    %v1975 = vpop.f32.mrb[0].mxu0
    %v1976 = vpop.f32.mrb[0].mxu0
    %1977 = vdwg.mxu0
    %v1978 = vmul.f32 %v1906, %v176
    %v1979 = vmul.f32 %v1965, %v176
    %v1980 = vmul.f32 %v1909, %v184
    %v1981 = vmul.f32 %v1968, %v184
    %v1982 = vadd.f32 %v1978, %v1980
    %v1983 = vadd.f32 %v1979, %v1981
    %v1984 = vmul.f32 %v1914, %v192
    %v1985 = vmul.f32 %v1973, %v192
    %v1986 = vadd.f32 %v1982, %v1984
    %v1987 = vadd.f32 %v1983, %v1985
    %v1988 = vadd.f32 %v1986, %v1576
    %v1989 = vadd.f32 %v1987, %v1577
    %v1990 = vsel %vm114, %v1988, 0.0
    %1991 = vadd.xlane.f32.xlu0 %v1990
    %v1992 = vpop.xlane.xlu0 %1991
    %v1993 = vsel %vm114, %v1989, 0.0
    %1994 = vadd.xlane.f32.xlu0 %v1993
    %v1995 = vpop.xlane.xlu0 %1994
    %v1996 = vrot.slane %v1992, 4
    %v1997 = vadd.f32 %v1992, %v1996
    %v1998 = vrot.slane %v1997, 2
    %v1999 = vadd.f32 %v1997, %v1998
    %v2000 = vrot.slane %v1999, 1
    %v2001 = vadd.f32 %v1999, %v2000
    %v2002 = vrot.slane %v1995, 4
    %v2003 = vadd.f32 %v1995, %v2002
    %v2004 = vrot.slane %v2003, 2
    %v2005 = vadd.f32 %v2003, %v2004
    %v2006 = vrot.slane %v2005, 1
    %v2007 = vadd.f32 %v2005, %v2006
    %v2008 = vmul.f32 %v2001, %v81
    %v2009 = vmul.f32 %v2007, %v82
    %v2012 = vlaneseq
    %v2013 = vshrl.u32 %v2012, 7
    %v2014 = vsub.s32 0, %v2013
    %v2015 = vrot.slane %v2008, %v2014
    %v2016 = vlaneseq
    %v2017 = vshrl.u32 %v2016, 7
    %v2018 = vsub.s32 0, %v2017
    %v2019 = vrot.slane %v2009, %v2018
    %2020 = vset.pattern.permute.xlu0 0
    %2021 = vperm.xlu0 %2020, %v2015
    %v2022 = vpop.permute.xlu0 %2021
    %2024 = vset.pattern.permute.xlu0 0
    %2025 = vperm.xlu0 %2024, %v2019
    %v2026 = vpop.permute.xlu0 %2025
    %v2028 = vsub.f32 %v1988, %v2022
    %v2029 = vsub.f32 %v1989, %v2026
    %v2030 = vmul.f32 %v2028, %v2028
    %v2031 = vmul.f32 %v2029, %v2029
    %v2032 = vsel %vm114, %v2030, 0.0
    %2033 = vadd.xlane.f32.xlu0 %v2032
    %v2034 = vpop.xlane.xlu0 %2033
    %v2035 = vsel %vm114, %v2031, 0.0
    %2036 = vadd.xlane.f32.xlu0 %v2035
    %v2037 = vpop.xlane.xlu0 %2036
    %v2038 = vrot.slane %v2034, 4
    %v2039 = vadd.f32 %v2034, %v2038
    %v2040 = vrot.slane %v2039, 2
    %v2041 = vadd.f32 %v2039, %v2040
    %v2042 = vrot.slane %v2041, 1
    %v2043 = vadd.f32 %v2041, %v2042
    %v2044 = vrot.slane %v2037, 4
    %v2045 = vadd.f32 %v2037, %v2044
    %v2046 = vrot.slane %v2045, 2
    %v2047 = vadd.f32 %v2045, %v2046
    %v2048 = vrot.slane %v2047, 1
    %v2049 = vadd.f32 %v2047, %v2048
    %v2050 = vrsqrt.pop %v2043
    %v2051 = vrsqrt.pop %v2049
    %v2052 = vmul.f32 %v79, %v2050
    %v2053 = vmul.f32 %v80, %v2051
    %v2056 = vlaneseq
    %v2057 = vshrl.u32 %v2056, 7
    %v2058 = vsub.s32 0, %v2057
    %v2059 = vrot.slane %v2052, %v2058
    %v2060 = vlaneseq
    %v2061 = vshrl.u32 %v2060, 7
    %v2062 = vsub.s32 0, %v2061
    %v2063 = vrot.slane %v2053, %v2062
    %2064 = vset.pattern.permute.xlu0 0
    %2065 = vperm.xlu0 %2064, %v2059
    %v2066 = vpop.permute.xlu0 %2065
    %2068 = vset.pattern.permute.xlu0 0
    %2069 = vperm.xlu0 %2068, %v2063
    %v2070 = vpop.permute.xlu0 %2069
    %v2072 = vmul.f32 %v2028, %v2066
    %v2073 = vmul.f32 %v2029, %v2070
    %v2074 = vpack.c.bf16 %v2072, %v2072
    %v2075 = vpack.c.bf16 %v2073, %v2073
    %s2076 = scalar_lea.vmem [#allocation5], 32
    %v2077 = vld [vmem:[%s2076] sm:$0xf]
    %v2078 = vld [vmem:[%s2076 + $0x4] sm:$0xf]
    %v2079 = vld [vmem:[%s2076 + $0x8] sm:$0xf]
    %v2080 = vld [vmem:[%s2076 + $0xc] sm:$0x7]
    %v2083 = vunpack.c.l.b16 %v2074
    %v2084 = vunpack.c.l.b16 %v2075
    %v2085 = vpack.c.b16 %v2084, %v2083
    %v2090 = vunpack.c.l.b16 %v2077
    %v2091 = vunpack.c.l.b16 %v2078
    %v2092 = vunpack.c.l.b16 %v2079
    %v2093 = vunpack.c.l.b16 %v2080
    %v2094 = vpack.c.b16 %v2091, %v2090
    %v2095 = vpack.c.b16 %v2093, %v2092
    %v2098 = vsel %vm114, %v2085, 0
    %v2101 = vsel %vm118, %v2095, 0
    %2103 = vmatprep.subr.bf16.mxu0 0
    %2104 = vmatpush1.bf16.msra.mxu0 %v2094
    %2105 = vmatprep.subr.bf16.mxu0 0
    %2106 = vmatpush1.bf16.msra.mxu0 %v2101
    %2107 = vmatprep.subr.bf16.mxu0 0
    %2108 = vmatpush1.bf16.msra.mxu0 0
    %2109 = vmatprep.subr.bf16.mxu0 0
    %2110 = vmatpush1.bf16.msra.mxu0 0
    %2111 = vmatprep.subr.bf16.mxu0 0
    %2112 = vmatpush1.bf16.msra.mxu0 0
    %2113 = vmatprep.subr.bf16.mxu0 0
    %2114 = vmatpush1.bf16.msra.mxu0 0
    %2115 = vmatprep.subr.bf16.mxu0 0
    %2116 = vmatpush1.bf16.msra.mxu0 0
    %2117 = vmatprep.subr.bf16.mxu0 0
    %2118 = vmatpush1.bf16.msra.mxu0 0
    %2119 = vmatprep.subr.bf16.mxu0 0
    %2120 = vmatpush1.bf16.msra.mxu0 0
    %2121 = vmatprep.subr.bf16.mxu0 0
    %2122 = vmatpush1.bf16.msra.mxu0 0
    %2123 = vmatprep.subr.bf16.mxu0 0
    %2124 = vmatpush1.bf16.msra.mxu0 0
    %2125 = vmatprep.subr.bf16.mxu0 0
    %2126 = vmatpush1.bf16.msra.mxu0 0
    %2127 = vmatprep.subr.bf16.mxu0 0
    %2128 = vmatpush1.bf16.msra.mxu0 0
    %2129 = vmatprep.subr.bf16.mxu0 0
    %2130 = vmatpush1.bf16.msra.mxu0 0
    %2131 = vmatprep.subr.bf16.mxu0 0
    %2132 = vmatpush1.bf16.msra.mxu0 0
    %2133 = vmatprep.subr.bf16.mxu0 0
    %2134 = vmatpush1.bf16.msra.mxu0 0
    %2135 = vmatprep.mubr.bf16.mxu0 0
    %2136 = vmatmul.mubr.bf16.gmra.mrb[0].mxu0 %v2098
    %v2137 = vpop.f32.mrb[0].mxu0
    %v2138 = vadd.f32 0.0, %v2137
    %v2139 = vpop.f32.mrb[0].mxu0
    %v2140 = vpop.f32.mrb[0].mxu0
    %v2141 = vadd.f32 0.0, %v2140
    %v2142 = vpop.f32.mrb[0].mxu0
    %2143 = vdwg.mxu0
    %v2144 = vxor.u32 %v2138, 2147483648
    %v2145 = vxor.u32 %v2141, 2147483648
    %v2146 = vmul.f32 %v2144, 1.442695
    %v2147 = vpow.pop %v2146
    %v2148 = vmul.f32 %v2145, 1.442695
    %v2149 = vpow.pop %v2148
    %v2150 = vadd.f32 %v2147, 1.0
    %v2151 = vadd.f32 %v2149, 1.0
    %v2152 = vrcp.pop %v2150
    %v2153 = vmul.f32 1.0, %v2152
    %v2154 = vrcp.pop %v2151
    %v2155 = vmul.f32 1.0, %v2154
    %v2156 = vmul.f32 %v2138, %v2153
    %v2157 = vmul.f32 %v2141, %v2155
    %v2158 = vpack.c.bf16 %v2156, %v2156
    %v2159 = vpack.c.bf16 %v2157, %v2157
    %s2160 = scalar_lea.vmem [#allocation7], 32
    %v2161 = vld [vmem:[%s2160] sm:$0xf]
    %v2162 = vld [vmem:[%s2160 + $0x4] sm:$0xf]
    %v2163 = vld [vmem:[%s2160 + $0x8] sm:$0xf]
    %v2164 = vld [vmem:[%s2160 + $0xc] sm:$0x7]
    %v2167 = vunpack.c.l.b16 %v2158
    %v2168 = vunpack.c.l.b16 %v2159
    %v2169 = vpack.c.b16 %v2168, %v2167
    %v2174 = vunpack.c.l.b16 %v2161
    %v2175 = vunpack.c.l.b16 %v2162
    %v2176 = vunpack.c.l.b16 %v2163
    %v2177 = vunpack.c.l.b16 %v2164
    %v2178 = vpack.c.b16 %v2175, %v2174
    %v2179 = vpack.c.b16 %v2177, %v2176
    %v2182 = vsel %vm114, %v2169, 0
    %v2185 = vsel %vm118, %v2179, 0
    %2187 = vmatprep.subr.bf16.mxu0 0
    %2188 = vmatpush1.bf16.msra.mxu0 %v2178
    %2189 = vmatprep.subr.bf16.mxu0 0
    %2190 = vmatpush1.bf16.msra.mxu0 %v2185
    %2191 = vmatprep.subr.bf16.mxu0 0
    %2192 = vmatpush1.bf16.msra.mxu0 0
    %2193 = vmatprep.subr.bf16.mxu0 0
    %2194 = vmatpush1.bf16.msra.mxu0 0
    %2195 = vmatprep.subr.bf16.mxu0 0
    %2196 = vmatpush1.bf16.msra.mxu0 0
    %2197 = vmatprep.subr.bf16.mxu0 0
    %2198 = vmatpush1.bf16.msra.mxu0 0
    %2199 = vmatprep.subr.bf16.mxu0 0
    %2200 = vmatpush1.bf16.msra.mxu0 0
    %2201 = vmatprep.subr.bf16.mxu0 0
    %2202 = vmatpush1.bf16.msra.mxu0 0
    %2203 = vmatprep.subr.bf16.mxu0 0
    %2204 = vmatpush1.bf16.msra.mxu0 0
    %2205 = vmatprep.subr.bf16.mxu0 0
    %2206 = vmatpush1.bf16.msra.mxu0 0
    %2207 = vmatprep.subr.bf16.mxu0 0
    %2208 = vmatpush1.bf16.msra.mxu0 0
    %2209 = vmatprep.subr.bf16.mxu0 0
    %2210 = vmatpush1.bf16.msra.mxu0 0
    %2211 = vmatprep.subr.bf16.mxu0 0
    %2212 = vmatpush1.bf16.msra.mxu0 0
    %2213 = vmatprep.subr.bf16.mxu0 0
    %2214 = vmatpush1.bf16.msra.mxu0 0
    %2215 = vmatprep.subr.bf16.mxu0 0
    %2216 = vmatpush1.bf16.msra.mxu0 0
    %2217 = vmatprep.subr.bf16.mxu0 0
    %2218 = vmatpush1.bf16.msra.mxu0 0
    %2219 = vmatprep.mubr.bf16.mxu0 0
    %2220 = vmatmul.mubr.bf16.gmra.mrb[0].mxu0 %v2182
    %v2221 = vpop.f32.mrb[0].mxu0
    %v2222 = vadd.f32 %v2072, %v2221
    %v2223 = vpop.f32.mrb[0].mxu0
    %v2224 = vpop.f32.mrb[0].mxu0
    %v2225 = vadd.f32 %v2073, %v2224
    %v2226 = vpop.f32.mrb[0].mxu0
    %2227 = vdwg.mxu0
    %v2228 = vsel %vm114, %v2222, 0.0
    %2229 = vadd.xlane.f32.xlu0 %v2228
    %v2230 = vpop.xlane.xlu0 %2229
    %v2231 = vsel %vm114, %v2225, 0.0
    %2232 = vadd.xlane.f32.xlu0 %v2231
    %v2233 = vpop.xlane.xlu0 %2232
    %v2234 = vrot.slane %v2230, 4
    %v2235 = vadd.f32 %v2230, %v2234
    %v2236 = vrot.slane %v2235, 2
    %v2237 = vadd.f32 %v2235, %v2236
    %v2238 = vrot.slane %v2237, 1
    %v2239 = vadd.f32 %v2237, %v2238
    %v2240 = vrot.slane %v2233, 4
    %v2241 = vadd.f32 %v2233, %v2240
    %v2242 = vrot.slane %v2241, 2
    %v2243 = vadd.f32 %v2241, %v2242
    %v2244 = vrot.slane %v2243, 1
    %v2245 = vadd.f32 %v2243, %v2244
    %v2246 = vmul.f32 %v2239, %v81
    %v2247 = vmul.f32 %v2245, %v82
    %v2250 = vlaneseq
    %v2251 = vshrl.u32 %v2250, 7
    %v2252 = vsub.s32 0, %v2251
    %v2253 = vrot.slane %v2246, %v2252
    %v2254 = vlaneseq
    %v2255 = vshrl.u32 %v2254, 7
    %v2256 = vsub.s32 0, %v2255
    %v2257 = vrot.slane %v2247, %v2256
    %2258 = vset.pattern.permute.xlu0 0
    %2259 = vperm.xlu0 %2258, %v2253
    %v2260 = vpop.permute.xlu0 %2259
    %2262 = vset.pattern.permute.xlu0 0
    %2263 = vperm.xlu0 %2262, %v2257
    %v2264 = vpop.permute.xlu0 %2263
    %v2266 = vsub.f32 %v2222, %v2260
    %v2267 = vsub.f32 %v2225, %v2264
    %v2268 = vmul.f32 %v2266, %v2266
    %v2269 = vmul.f32 %v2267, %v2267
    %v2270 = vsel %vm114, %v2268, 0.0
    %2271 = vadd.xlane.f32.xlu0 %v2270
    %v2272 = vpop.xlane.xlu0 %2271
    %v2273 = vsel %vm114, %v2269, 0.0
    %2274 = vadd.xlane.f32.xlu0 %v2273
    %v2275 = vpop.xlane.xlu0 %2274
    %v2276 = vrot.slane %v2272, 4
    %v2277 = vadd.f32 %v2272, %v2276
    %v2278 = vrot.slane %v2277, 2
    %v2279 = vadd.f32 %v2277, %v2278
    %v2280 = vrot.slane %v2279, 1
    %v2281 = vadd.f32 %v2279, %v2280
    %v2282 = vrot.slane %v2275, 4
    %v2283 = vadd.f32 %v2275, %v2282
    %v2284 = vrot.slane %v2283, 2
    %v2285 = vadd.f32 %v2283, %v2284
    %v2286 = vrot.slane %v2285, 1
    %v2287 = vadd.f32 %v2285, %v2286
    %v2288 = vrsqrt.pop %v2281
    %v2289 = vrsqrt.pop %v2287
    %v2290 = vmul.f32 %v79, %v2288
    %v2291 = vmul.f32 %v80, %v2289
    %v2294 = vlaneseq
    %v2295 = vshrl.u32 %v2294, 7
    %v2296 = vsub.s32 0, %v2295
    %v2297 = vrot.slane %v2290, %v2296
    %v2298 = vlaneseq
    %v2299 = vshrl.u32 %v2298, 7
    %v2300 = vsub.s32 0, %v2299
    %v2301 = vrot.slane %v2291, %v2300
    %2302 = vset.pattern.permute.xlu0 0
    %2303 = vperm.xlu0 %2302, %v2297
    %v2304 = vpop.permute.xlu0 %2303
    %2306 = vset.pattern.permute.xlu0 0
    %2307 = vperm.xlu0 %2306, %v2301
    %v2308 = vpop.permute.xlu0 %2307
    %v2310 = vmul.f32 %v2266, %v2304
    %v2311 = vmul.f32 %v2267, %v2308
    %v2312 = vpack.c.bf16 %v2310, %v2310
    %v2313 = vpack.c.bf16 %v2311, %v2311
    %s2314 = scalar_lea.vmem [#allocation2], 48
    %v2315 = vld [vmem:[%s2314] sm:$0xf]
    %v2316 = vld [vmem:[%s2314 + $0x4] sm:$0xf]
    %v2317 = vld [vmem:[%s2314 + $0x8] sm:$0xf]
    %v2318 = vld [vmem:[%s2314 + $0xc] sm:$0x7]
    %v2321 = vunpack.c.l.b16 %v2312
    %v2322 = vunpack.c.l.b16 %v2313
    %v2323 = vpack.c.b16 %v2322, %v2321
    %v2328 = vunpack.c.l.b16 %v2315
    %v2329 = vunpack.c.l.b16 %v2316
    %v2330 = vunpack.c.l.b16 %v2317
    %v2331 = vunpack.c.l.b16 %v2318
    %v2332 = vpack.c.b16 %v2329, %v2328
    %v2333 = vpack.c.b16 %v2331, %v2330
    %v2336 = vsel %vm114, %v2323, 0
    %v2339 = vsel %vm118, %v2333, 0
    %2341 = vmatprep.subr.bf16.mxu0 0
    %2342 = vmatpush1.bf16.msra.mxu0 %v2332
    %2343 = vmatprep.subr.bf16.mxu0 0
    %2344 = vmatpush1.bf16.msra.mxu0 %v2339
    %2345 = vmatprep.subr.bf16.mxu0 0
    %2346 = vmatpush1.bf16.msra.mxu0 0
    %2347 = vmatprep.subr.bf16.mxu0 0
    %2348 = vmatpush1.bf16.msra.mxu0 0
    %2349 = vmatprep.subr.bf16.mxu0 0
    %2350 = vmatpush1.bf16.msra.mxu0 0
    %2351 = vmatprep.subr.bf16.mxu0 0
    %2352 = vmatpush1.bf16.msra.mxu0 0
    %2353 = vmatprep.subr.bf16.mxu0 0
    %2354 = vmatpush1.bf16.msra.mxu0 0
    %2355 = vmatprep.subr.bf16.mxu0 0
    %2356 = vmatpush1.bf16.msra.mxu0 0
    %2357 = vmatprep.subr.bf16.mxu0 0
    %2358 = vmatpush1.bf16.msra.mxu0 0
    %2359 = vmatprep.subr.bf16.mxu0 0
    %2360 = vmatpush1.bf16.msra.mxu0 0
    %2361 = vmatprep.subr.bf16.mxu0 0
    %2362 = vmatpush1.bf16.msra.mxu0 0
    %2363 = vmatprep.subr.bf16.mxu0 0
    %2364 = vmatpush1.bf16.msra.mxu0 0
    %2365 = vmatprep.subr.bf16.mxu0 0
    %2366 = vmatpush1.bf16.msra.mxu0 0
    %2367 = vmatprep.subr.bf16.mxu0 0
    %2368 = vmatpush1.bf16.msra.mxu0 0
    %2369 = vmatprep.subr.bf16.mxu0 0
    %2370 = vmatpush1.bf16.msra.mxu0 0
    %2371 = vmatprep.subr.bf16.mxu0 0
    %2372 = vmatpush1.bf16.msra.mxu0 0
    %2373 = vmatprep.mubr.bf16.mxu0 0
    %2374 = vmatmul.mubr.bf16.gmra.mrb[0].mxu0 %v2336
    %v2375 = vpop.f32.mrb[0].mxu0
    %v2376 = vadd.f32 0.0, %v2375
    %v2377 = vpop.f32.mrb[0].mxu0
    %v2378 = vpop.f32.mrb[0].mxu0
    %v2379 = vadd.f32 0.0, %v2378
    %v2380 = vpop.f32.mrb[0].mxu0
    %2381 = vdwg.mxu0
    %s2382 = scalar_lea.vmem %s3, 3
    %v2383 = vld [vmem:[%s2382] sm:$0x1]
    %v2385 = vlaneseq
    %v2386 = vshrl.u32 %v2385, 7
    %v2387 = vsub.s32 0, %v2386
    %v2388 = vrot.slane %v2383, %v2387
    %v2390 = vadd.f32 %v2376, %v2388
    %v2391 = vadd.f32 %v2379, %v2388
    %v2392 = vmul.f32 %v2390, %v176
    %v2393 = vmul.f32 %v2391, %v176
    %v2394 = vmul.f32 %v2390, %v184
    %v2395 = vmul.f32 %v2391, %v184
    %v2396 = vmul.f32 %v2390, %v192
    %v2397 = vmul.f32 %v2391, %v192
    %v2398 = vpack.c.bf16 %v2394, %v2392
    %v2399 = vpack.c.bf16 %v2396, %v2396
    %v2400 = vpack.c.bf16 %v2395, %v2393
    %v2401 = vpack.c.bf16 %v2397, %v2397
    %v2402 = vpack.c.bf16 %v2376, %v2376
    %v2403 = vpack.c.bf16 %v2379, %v2379
    %2405 = vrot.lane.b32.xlu0 %v2402, 98
    %v2406 = vpop.permute.xlu0 %2405
    %v2408 = vsel %vm114, %v2398, 0
    %v2411 = vsel %vm114, %v2399, 0
    %v2414 = vsel %vm114, %v2406, 0
    %2416 = vmatprep.subr.bf16.mxu0 0
    %2417 = vmatpush1.bf16.xpose.msra.mxu0 %v2414
    %2418 = vmatprep.subr.bf16.mxu0 0
    %2419 = vmatpush1.bf16.xpose.msra.mxu0 0
    %2420 = vmatprep.subr.bf16.mxu0 0
    %2421 = vmatpush1.bf16.xpose.msra.mxu0 0
    %2422 = vmatprep.subr.bf16.mxu0 0
    %2423 = vmatpush1.bf16.xpose.msra.mxu0 0
    %2424 = vmatprep.subr.bf16.mxu0 0
    %2425 = vmatpush1.bf16.xpose.msra.mxu0 0
    %2426 = vmatprep.subr.bf16.mxu0 0
    %2427 = vmatpush1.bf16.xpose.msra.mxu0 0
    %2428 = vmatprep.subr.bf16.mxu0 0
    %2429 = vmatpush1.bf16.xpose.msra.mxu0 0
    %2430 = vmatprep.subr.bf16.mxu0 0
    %2431 = vmatpush1.bf16.xpose.msra.mxu0 0
    %2432 = vmatprep.subr.bf16.mxu0 0
    %2433 = vmatpush1.bf16.xpose.msra.mxu0 0
    %2434 = vmatprep.subr.bf16.mxu0 0
    %2435 = vmatpush1.bf16.xpose.msra.mxu0 0
    %2436 = vmatprep.subr.bf16.mxu0 0
    %2437 = vmatpush1.bf16.xpose.msra.mxu0 0
    %2438 = vmatprep.subr.bf16.mxu0 0
    %2439 = vmatpush1.bf16.xpose.msra.mxu0 0
    %2440 = vmatprep.subr.bf16.mxu0 0
    %2441 = vmatpush1.bf16.xpose.msra.mxu0 0
    %2442 = vmatprep.subr.bf16.mxu0 0
    %2443 = vmatpush1.bf16.xpose.msra.mxu0 0
    %2444 = vmatprep.subr.bf16.mxu0 0
    %2445 = vmatpush1.bf16.xpose.msra.mxu0 0
    %2446 = vmatprep.subr.bf16.mxu0 0
    %2447 = vmatpush1.bf16.xpose.msra.mxu0 0
    %2448 = vmatprep.mubr.bf16.mxu0 0
    %2449 = vmatmul.mubr.bf16.gmra.mrb[0].mxu0 %v2408
    %v2450 = vpop.f32.mrb[0].mxu0
    %v2451 = vadd.f32 0.0, %v2450
    %v2452 = vpop.f32.mrb[0].mxu0
    %v2453 = vpop.f32.mrb[0].mxu0
    %v2454 = vadd.f32 0.0, %v2453
    %v2455 = vpop.f32.mrb[0].mxu0
    %2456 = vmatprep.mubr.bf16.mxu0 0
    %2457 = vmatmul.mubr.bf16.gmra.mrb[0].mxu0 %v2411
    %v2458 = vpop.f32.mrb[0].mxu0
    %v2459 = vadd.f32 0.0, %v2458
    %v2460 = vpop.f32.mrb[0].mxu0
    %v2461 = vpop.f32.mrb[0].mxu0
    %v2462 = vpop.f32.mrb[0].mxu0
    %2463 = vdwg.mxu0
    %2465 = vrot.lane.b32.xlu0 %v2403, 98
    %v2466 = vpop.permute.xlu0 %2465
    %v2468 = vsel %vm114, %v2400, 0
    %v2471 = vsel %vm114, %v2401, 0
    %v2474 = vsel %vm114, %v2466, 0
    %2476 = vmatprep.subr.bf16.mxu0 0
    %2477 = vmatpush1.bf16.xpose.msra.mxu0 %v2474
    %2478 = vmatprep.subr.bf16.mxu0 0
    %2479 = vmatpush1.bf16.xpose.msra.mxu0 0
    %2480 = vmatprep.subr.bf16.mxu0 0
    %2481 = vmatpush1.bf16.xpose.msra.mxu0 0
    %2482 = vmatprep.subr.bf16.mxu0 0
    %2483 = vmatpush1.bf16.xpose.msra.mxu0 0
    %2484 = vmatprep.subr.bf16.mxu0 0
    %2485 = vmatpush1.bf16.xpose.msra.mxu0 0
    %2486 = vmatprep.subr.bf16.mxu0 0
    %2487 = vmatpush1.bf16.xpose.msra.mxu0 0
    %2488 = vmatprep.subr.bf16.mxu0 0
    %2489 = vmatpush1.bf16.xpose.msra.mxu0 0
    %2490 = vmatprep.subr.bf16.mxu0 0
    %2491 = vmatpush1.bf16.xpose.msra.mxu0 0
    %2492 = vmatprep.subr.bf16.mxu0 0
    %2493 = vmatpush1.bf16.xpose.msra.mxu0 0
    %2494 = vmatprep.subr.bf16.mxu0 0
    %2495 = vmatpush1.bf16.xpose.msra.mxu0 0
    %2496 = vmatprep.subr.bf16.mxu0 0
    %2497 = vmatpush1.bf16.xpose.msra.mxu0 0
    %2498 = vmatprep.subr.bf16.mxu0 0
    %2499 = vmatpush1.bf16.xpose.msra.mxu0 0
    %2500 = vmatprep.subr.bf16.mxu0 0
    %2501 = vmatpush1.bf16.xpose.msra.mxu0 0
    %2502 = vmatprep.subr.bf16.mxu0 0
    %2503 = vmatpush1.bf16.xpose.msra.mxu0 0
    %2504 = vmatprep.subr.bf16.mxu0 0
    %2505 = vmatpush1.bf16.xpose.msra.mxu0 0
    %2506 = vmatprep.subr.bf16.mxu0 0
    %2507 = vmatpush1.bf16.xpose.msra.mxu0 0
    %2508 = vmatprep.mubr.bf16.mxu0 0
    %2509 = vmatmul.mubr.bf16.gmra.mrb[0].mxu0 %v2468
    %v2510 = vpop.f32.mrb[0].mxu0
    %v2511 = vadd.f32 0.0, %v2510
    %v2512 = vpop.f32.mrb[0].mxu0
    %v2513 = vpop.f32.mrb[0].mxu0
    %v2514 = vadd.f32 0.0, %v2513
    %v2515 = vpop.f32.mrb[0].mxu0
    %2516 = vmatprep.mubr.bf16.mxu0 0
    %2517 = vmatmul.mubr.bf16.gmra.mrb[0].mxu0 %v2471
    %v2518 = vpop.f32.mrb[0].mxu0
    %v2519 = vadd.f32 0.0, %v2518
    %v2520 = vpop.f32.mrb[0].mxu0
    %v2521 = vpop.f32.mrb[0].mxu0
    %v2522 = vpop.f32.mrb[0].mxu0
    %2523 = vdwg.mxu0
    %v2524 = vsel %vm322, %v2451, -inf
    %2525 = vmax.xlane.f32.xlu0 %v2524
    %v2526 = vpop.xlane.xlu0 %2525
    %v2527 = vsel %vm322, %v2454, -inf
    %2528 = vmax.xlane.f32.xlu0 %v2527
    %v2529 = vpop.xlane.xlu0 %2528
    %v2530 = vsel %vm322, %v2459, -inf
    %2531 = vmax.xlane.f32.xlu0 %v2530
    %v2532 = vpop.xlane.xlu0 %2531
    %v2533 = vsel %vm322, %v2511, -inf
    %2534 = vmax.xlane.f32.xlu0 %v2533
    %v2535 = vpop.xlane.xlu0 %2534
    %v2536 = vsel %vm322, %v2514, -inf
    %2537 = vmax.xlane.f32.xlu0 %v2536
    %v2538 = vpop.xlane.xlu0 %2537
    %v2539 = vsel %vm322, %v2519, -inf
    %2540 = vmax.xlane.f32.xlu0 %v2539
    %v2541 = vpop.xlane.xlu0 %2540
    %v2542 = vsub.f32 %v2451, %v2526
    %v2543 = vsub.f32 %v2454, %v2529
    %v2544 = vsub.f32 %v2459, %v2532
    %v2545 = vsub.f32 %v2511, %v2535
    %v2546 = vsub.f32 %v2514, %v2538
    %v2547 = vsub.f32 %v2519, %v2541
    %v2548 = vmul.f32 %v2542, 1.442695
    %v2549 = vpow.pop %v2548
    %v2550 = vmul.f32 %v2543, 1.442695
    %v2551 = vpow.pop %v2550
    %v2552 = vmul.f32 %v2544, 1.442695
    %v2553 = vpow.pop %v2552
    %v2554 = vmul.f32 %v2545, 1.442695
    %v2555 = vpow.pop %v2554
    %v2556 = vmul.f32 %v2546, 1.442695
    %v2557 = vpow.pop %v2556
    %v2558 = vmul.f32 %v2547, 1.442695
    %v2559 = vpow.pop %v2558
    %v2560 = vsel %vm322, %v2549, 0.0
    %2561 = vadd.xlane.f32.xlu0 %v2560
    %v2562 = vpop.xlane.xlu0 %2561
    %v2563 = vsel %vm322, %v2551, 0.0
    %2564 = vadd.xlane.f32.xlu0 %v2563
    %v2565 = vpop.xlane.xlu0 %2564
    %v2566 = vsel %vm322, %v2553, 0.0
    %2567 = vadd.xlane.f32.xlu0 %v2566
    %v2568 = vpop.xlane.xlu0 %2567
    %v2569 = vsel %vm322, %v2555, 0.0
    %2570 = vadd.xlane.f32.xlu0 %v2569
    %v2571 = vpop.xlane.xlu0 %2570
    %v2572 = vsel %vm322, %v2557, 0.0
    %2573 = vadd.xlane.f32.xlu0 %v2572
    %v2574 = vpop.xlane.xlu0 %2573
    %v2575 = vsel %vm322, %v2559, 0.0
    %2576 = vadd.xlane.f32.xlu0 %v2575
    %v2577 = vpop.xlane.xlu0 %2576
    %v2578 = vrcp.pop %v2562
    %v2579 = vrcp.pop %v2565
    %v2580 = vrcp.pop %v2568
    %v2581 = vrcp.pop %v2571
    %v2582 = vrcp.pop %v2574
    %v2583 = vrcp.pop %v2577
    %v2584 = vmul.f32 %v2549, %v2578
    %v2585 = vmul.f32 %v2551, %v2579
    %v2586 = vmul.f32 %v2553, %v2580
    %v2587 = vmul.f32 %v2555, %v2581
    %v2588 = vmul.f32 %v2557, %v2582
    %v2589 = vmul.f32 %v2559, %v2583
    %v2590 = vpack.c.bf16 %v2585, %v2584
    %v2591 = vpack.c.bf16 %v2586, %v2586
    %v2592 = vpack.c.bf16 %v2588, %v2587
    %v2593 = vpack.c.bf16 %v2589, %v2589
    %2594 = vrot.lane.b32.xlu0 %v2402, 68
    %v2595 = vpop.permute.xlu0 %2594
    %v2597 = vsel %vm322, %v2590, 0
    %v2600 = vsel %vm322, %v2591, 0
    %v2603 = vsel %vm401, %v2595, 0
    %2605 = vmatprep.subr.bf16.mxu0 0
    %2606 = vmatpush1.bf16.msra.mxu0 %v2603
    %2607 = vmatprep.subr.bf16.mxu0 0
    %2608 = vmatpush1.bf16.msra.mxu0 0
    %2609 = vmatprep.subr.bf16.mxu0 0
    %2610 = vmatpush1.bf16.msra.mxu0 0
    %2611 = vmatprep.subr.bf16.mxu0 0
    %2612 = vmatpush1.bf16.msra.mxu0 0
    %2613 = vmatprep.subr.bf16.mxu0 0
    %2614 = vmatpush1.bf16.msra.mxu0 0
    %2615 = vmatprep.subr.bf16.mxu0 0
    %2616 = vmatpush1.bf16.msra.mxu0 0
    %2617 = vmatprep.subr.bf16.mxu0 0
    %2618 = vmatpush1.bf16.msra.mxu0 0
    %2619 = vmatprep.subr.bf16.mxu0 0
    %2620 = vmatpush1.bf16.msra.mxu0 0
    %2621 = vmatprep.subr.bf16.mxu0 0
    %2622 = vmatpush1.bf16.msra.mxu0 0
    %2623 = vmatprep.subr.bf16.mxu0 0
    %2624 = vmatpush1.bf16.msra.mxu0 0
    %2625 = vmatprep.subr.bf16.mxu0 0
    %2626 = vmatpush1.bf16.msra.mxu0 0
    %2627 = vmatprep.subr.bf16.mxu0 0
    %2628 = vmatpush1.bf16.msra.mxu0 0
    %2629 = vmatprep.subr.bf16.mxu0 0
    %2630 = vmatpush1.bf16.msra.mxu0 0
    %2631 = vmatprep.subr.bf16.mxu0 0
    %2632 = vmatpush1.bf16.msra.mxu0 0
    %2633 = vmatprep.subr.bf16.mxu0 0
    %2634 = vmatpush1.bf16.msra.mxu0 0
    %2635 = vmatprep.subr.bf16.mxu0 0
    %2636 = vmatpush1.bf16.msra.mxu0 0
    %2637 = vmatprep.mubr.bf16.mxu0 0
    %2638 = vmatmul.mubr.bf16.gmra.mrb[0].mxu0 %v2597
    %v2639 = vpop.f32.mrb[0].mxu0
    %v2640 = vadd.f32 0.0, %v2639
    %v2641 = vpop.f32.mrb[0].mxu0
    %v2642 = vpop.f32.mrb[0].mxu0
    %v2643 = vadd.f32 0.0, %v2642
    %v2644 = vpop.f32.mrb[0].mxu0
    %2645 = vmatprep.mubr.bf16.mxu0 0
    %2646 = vmatmul.mubr.bf16.gmra.mrb[0].mxu0 %v2600
    %v2647 = vpop.f32.mrb[0].mxu0
    %v2648 = vadd.f32 0.0, %v2647
    %v2649 = vpop.f32.mrb[0].mxu0
    %v2650 = vpop.f32.mrb[0].mxu0
    %v2651 = vpop.f32.mrb[0].mxu0
    %2652 = vdwg.mxu0
    %2653 = vrot.lane.b32.xlu0 %v2403, 68
    %v2654 = vpop.permute.xlu0 %2653
    %v2656 = vsel %vm322, %v2592, 0
    %v2659 = vsel %vm322, %v2593, 0
    %v2662 = vsel %vm401, %v2654, 0
    %2664 = vmatprep.subr.bf16.mxu0 0
    %2665 = vmatpush1.bf16.msra.mxu0 %v2662
    %2666 = vmatprep.subr.bf16.mxu0 0
    %2667 = vmatpush1.bf16.msra.mxu0 0
    %2668 = vmatprep.subr.bf16.mxu0 0
    %2669 = vmatpush1.bf16.msra.mxu0 0
    %2670 = vmatprep.subr.bf16.mxu0 0
    %2671 = vmatpush1.bf16.msra.mxu0 0
    %2672 = vmatprep.subr.bf16.mxu0 0
    %2673 = vmatpush1.bf16.msra.mxu0 0
    %2674 = vmatprep.subr.bf16.mxu0 0
    %2675 = vmatpush1.bf16.msra.mxu0 0
    %2676 = vmatprep.subr.bf16.mxu0 0
    %2677 = vmatpush1.bf16.msra.mxu0 0
    %2678 = vmatprep.subr.bf16.mxu0 0
    %2679 = vmatpush1.bf16.msra.mxu0 0
    %2680 = vmatprep.subr.bf16.mxu0 0
    %2681 = vmatpush1.bf16.msra.mxu0 0
    %2682 = vmatprep.subr.bf16.mxu0 0
    %2683 = vmatpush1.bf16.msra.mxu0 0
    %2684 = vmatprep.subr.bf16.mxu0 0
    %2685 = vmatpush1.bf16.msra.mxu0 0
    %2686 = vmatprep.subr.bf16.mxu0 0
    %2687 = vmatpush1.bf16.msra.mxu0 0
    %2688 = vmatprep.subr.bf16.mxu0 0
    %2689 = vmatpush1.bf16.msra.mxu0 0
    %2690 = vmatprep.subr.bf16.mxu0 0
    %2691 = vmatpush1.bf16.msra.mxu0 0
    %2692 = vmatprep.subr.bf16.mxu0 0
    %2693 = vmatpush1.bf16.msra.mxu0 0
    %2694 = vmatprep.subr.bf16.mxu0 0
    %2695 = vmatpush1.bf16.msra.mxu0 0
    %2696 = vmatprep.mubr.bf16.mxu0 0
    %2697 = vmatmul.mubr.bf16.gmra.mrb[0].mxu0 %v2656
    %v2698 = vpop.f32.mrb[0].mxu0
    %v2699 = vadd.f32 0.0, %v2698
    %v2700 = vpop.f32.mrb[0].mxu0
    %v2701 = vpop.f32.mrb[0].mxu0
    %v2702 = vadd.f32 0.0, %v2701
    %v2703 = vpop.f32.mrb[0].mxu0
    %2704 = vmatprep.mubr.bf16.mxu0 0
    %2705 = vmatmul.mubr.bf16.gmra.mrb[0].mxu0 %v2659
    %v2706 = vpop.f32.mrb[0].mxu0
    %v2707 = vadd.f32 0.0, %v2706
    %v2708 = vpop.f32.mrb[0].mxu0
    %v2709 = vpop.f32.mrb[0].mxu0
    %v2710 = vpop.f32.mrb[0].mxu0
    %2711 = vdwg.mxu0
    %v2712 = vmul.f32 %v2640, %v176
    %v2713 = vmul.f32 %v2699, %v176
    %v2714 = vmul.f32 %v2643, %v184
    %v2715 = vmul.f32 %v2702, %v184
    %v2716 = vadd.f32 %v2712, %v2714
    %v2717 = vadd.f32 %v2713, %v2715
    %v2718 = vmul.f32 %v2648, %v192
    %v2719 = vmul.f32 %v2707, %v192
    %v2720 = vadd.f32 %v2716, %v2718
    %v2721 = vadd.f32 %v2717, %v2719
    %v2722 = vadd.f32 %v2720, %v2310
    %v2723 = vadd.f32 %v2721, %v2311
    %v2724 = vsel %vm114, %v2722, 0.0
    %2725 = vadd.xlane.f32.xlu0 %v2724
    %v2726 = vpop.xlane.xlu0 %2725
    %v2727 = vsel %vm114, %v2723, 0.0
    %2728 = vadd.xlane.f32.xlu0 %v2727
    %v2729 = vpop.xlane.xlu0 %2728
    %v2730 = vrot.slane %v2726, 4
    %v2731 = vadd.f32 %v2726, %v2730
    %v2732 = vrot.slane %v2731, 2
    %v2733 = vadd.f32 %v2731, %v2732
    %v2734 = vrot.slane %v2733, 1
    %v2735 = vadd.f32 %v2733, %v2734
    %v2736 = vrot.slane %v2729, 4
    %v2737 = vadd.f32 %v2729, %v2736
    %v2738 = vrot.slane %v2737, 2
    %v2739 = vadd.f32 %v2737, %v2738
    %v2740 = vrot.slane %v2739, 1
    %v2741 = vadd.f32 %v2739, %v2740
    %v2742 = vmul.f32 %v2735, %v81
    %v2743 = vmul.f32 %v2741, %v82
    %v2746 = vlaneseq
    %v2747 = vshrl.u32 %v2746, 7
    %v2748 = vsub.s32 0, %v2747
    %v2749 = vrot.slane %v2742, %v2748
    %v2750 = vlaneseq
    %v2751 = vshrl.u32 %v2750, 7
    %v2752 = vsub.s32 0, %v2751
    %v2753 = vrot.slane %v2743, %v2752
    %2754 = vset.pattern.permute.xlu0 0
    %2755 = vperm.xlu0 %2754, %v2749
    %v2756 = vpop.permute.xlu0 %2755
    %2758 = vset.pattern.permute.xlu0 0
    %2759 = vperm.xlu0 %2758, %v2753
    %v2760 = vpop.permute.xlu0 %2759
    %v2762 = vsub.f32 %v2722, %v2756
    %v2763 = vsub.f32 %v2723, %v2760
    %v2764 = vmul.f32 %v2762, %v2762
    %v2765 = vmul.f32 %v2763, %v2763
    %v2766 = vsel %vm114, %v2764, 0.0
    %2767 = vadd.xlane.f32.xlu0 %v2766
    %v2768 = vpop.xlane.xlu0 %2767
    %v2769 = vsel %vm114, %v2765, 0.0
    %2770 = vadd.xlane.f32.xlu0 %v2769
    %v2771 = vpop.xlane.xlu0 %2770
    %v2772 = vrot.slane %v2768, 4
    %v2773 = vadd.f32 %v2768, %v2772
    %v2774 = vrot.slane %v2773, 2
    %v2775 = vadd.f32 %v2773, %v2774
    %v2776 = vrot.slane %v2775, 1
    %v2777 = vadd.f32 %v2775, %v2776
    %v2778 = vrot.slane %v2771, 4
    %v2779 = vadd.f32 %v2771, %v2778
    %v2780 = vrot.slane %v2779, 2
    %v2781 = vadd.f32 %v2779, %v2780
    %v2782 = vrot.slane %v2781, 1
    %v2783 = vadd.f32 %v2781, %v2782
    %v2784 = vrsqrt.pop %v2777
    %v2785 = vrsqrt.pop %v2783
    %v2786 = vmul.f32 %v79, %v2784
    %v2787 = vmul.f32 %v80, %v2785
    %v2790 = vlaneseq
    %v2791 = vshrl.u32 %v2790, 7
    %v2792 = vsub.s32 0, %v2791
    %v2793 = vrot.slane %v2786, %v2792
    %v2794 = vlaneseq
    %v2795 = vshrl.u32 %v2794, 7
    %v2796 = vsub.s32 0, %v2795
    %v2797 = vrot.slane %v2787, %v2796
    %2798 = vset.pattern.permute.xlu0 0
    %2799 = vperm.xlu0 %2798, %v2793
    %v2800 = vpop.permute.xlu0 %2799
    %2802 = vset.pattern.permute.xlu0 0
    %2803 = vperm.xlu0 %2802, %v2797
    %v2804 = vpop.permute.xlu0 %2803
    %v2806 = vmul.f32 %v2762, %v2800
    %v2807 = vmul.f32 %v2763, %v2804
    %v2808 = vpack.c.bf16 %v2806, %v2806
    %v2809 = vpack.c.bf16 %v2807, %v2807
    %s2810 = scalar_lea.vmem [#allocation5], 48
    %v2811 = vld [vmem:[%s2810] sm:$0xf]
    %v2812 = vld [vmem:[%s2810 + $0x4] sm:$0xf]
    %v2813 = vld [vmem:[%s2810 + $0x8] sm:$0xf]
    %v2814 = vld [vmem:[%s2810 + $0xc] sm:$0x7]
    %v2817 = vunpack.c.l.b16 %v2808
    %v2818 = vunpack.c.l.b16 %v2809
    %v2819 = vpack.c.b16 %v2818, %v2817
    %v2824 = vunpack.c.l.b16 %v2811
    %v2825 = vunpack.c.l.b16 %v2812
    %v2826 = vunpack.c.l.b16 %v2813
    %v2827 = vunpack.c.l.b16 %v2814
    %v2828 = vpack.c.b16 %v2825, %v2824
    %v2829 = vpack.c.b16 %v2827, %v2826
    %v2832 = vsel %vm114, %v2819, 0
    %v2835 = vsel %vm118, %v2829, 0
    %2837 = vmatprep.subr.bf16.mxu0 0
    %2838 = vmatpush1.bf16.msra.mxu0 %v2828
    %2839 = vmatprep.subr.bf16.mxu0 0
    %2840 = vmatpush1.bf16.msra.mxu0 %v2835
    %2841 = vmatprep.subr.bf16.mxu0 0
    %2842 = vmatpush1.bf16.msra.mxu0 0
    %2843 = vmatprep.subr.bf16.mxu0 0
    %2844 = vmatpush1.bf16.msra.mxu0 0
    %2845 = vmatprep.subr.bf16.mxu0 0
    %2846 = vmatpush1.bf16.msra.mxu0 0
    %2847 = vmatprep.subr.bf16.mxu0 0
    %2848 = vmatpush1.bf16.msra.mxu0 0
    %2849 = vmatprep.subr.bf16.mxu0 0
    %2850 = vmatpush1.bf16.msra.mxu0 0
    %2851 = vmatprep.subr.bf16.mxu0 0
    %2852 = vmatpush1.bf16.msra.mxu0 0
    %2853 = vmatprep.subr.bf16.mxu0 0
    %2854 = vmatpush1.bf16.msra.mxu0 0
    %2855 = vmatprep.subr.bf16.mxu0 0
    %2856 = vmatpush1.bf16.msra.mxu0 0
    %2857 = vmatprep.subr.bf16.mxu0 0
    %2858 = vmatpush1.bf16.msra.mxu0 0
    %2859 = vmatprep.subr.bf16.mxu0 0
    %2860 = vmatpush1.bf16.msra.mxu0 0
    %2861 = vmatprep.subr.bf16.mxu0 0
    %2862 = vmatpush1.bf16.msra.mxu0 0
    %2863 = vmatprep.subr.bf16.mxu0 0
    %2864 = vmatpush1.bf16.msra.mxu0 0
    %2865 = vmatprep.subr.bf16.mxu0 0
    %2866 = vmatpush1.bf16.msra.mxu0 0
    %2867 = vmatprep.subr.bf16.mxu0 0
    %2868 = vmatpush1.bf16.msra.mxu0 0
    %2869 = vmatprep.mubr.bf16.mxu0 0
    %2870 = vmatmul.mubr.bf16.gmra.mrb[0].mxu0 %v2832
    %v2871 = vpop.f32.mrb[0].mxu0
    %v2872 = vadd.f32 0.0, %v2871
    %v2873 = vpop.f32.mrb[0].mxu0
    %v2874 = vpop.f32.mrb[0].mxu0
    %v2875 = vadd.f32 0.0, %v2874
    %v2876 = vpop.f32.mrb[0].mxu0
    %2877 = vdwg.mxu0
    %v2878 = vxor.u32 %v2872, 2147483648
    %v2879 = vxor.u32 %v2875, 2147483648
    %v2880 = vmul.f32 %v2878, 1.442695
    %v2881 = vpow.pop %v2880
    %v2882 = vmul.f32 %v2879, 1.442695
    %v2883 = vpow.pop %v2882
    %v2884 = vadd.f32 %v2881, 1.0
    %v2885 = vadd.f32 %v2883, 1.0
    %v2886 = vrcp.pop %v2884
    %v2887 = vmul.f32 1.0, %v2886
    %v2888 = vrcp.pop %v2885
    %v2889 = vmul.f32 1.0, %v2888
    %v2890 = vmul.f32 %v2872, %v2887
    %v2891 = vmul.f32 %v2875, %v2889
    %v2892 = vpack.c.bf16 %v2890, %v2890
    %v2893 = vpack.c.bf16 %v2891, %v2891
    %s2894 = scalar_lea.vmem [#allocation7], 48
    %v2895 = vld [vmem:[%s2894] sm:$0xf]
    %v2896 = vld [vmem:[%s2894 + $0x4] sm:$0xf]
    %v2897 = vld [vmem:[%s2894 + $0x8] sm:$0xf]
    %v2898 = vld [vmem:[%s2894 + $0xc] sm:$0x7]
    %v2901 = vunpack.c.l.b16 %v2892
    %v2902 = vunpack.c.l.b16 %v2893
    %v2903 = vpack.c.b16 %v2902, %v2901
    %v2908 = vunpack.c.l.b16 %v2895
    %v2909 = vunpack.c.l.b16 %v2896
    %v2910 = vunpack.c.l.b16 %v2897
    %v2911 = vunpack.c.l.b16 %v2898
    %v2912 = vpack.c.b16 %v2909, %v2908
    %v2913 = vpack.c.b16 %v2911, %v2910
    %v2916 = vsel %vm114, %v2903, 0
    %v2919 = vsel %vm118, %v2913, 0
    %2921 = vmatprep.subr.bf16.mxu0 0
    %2922 = vmatpush1.bf16.msra.mxu0 %v2912
    %2923 = vmatprep.subr.bf16.mxu0 0
    %2924 = vmatpush1.bf16.msra.mxu0 %v2919
    %2925 = vmatprep.subr.bf16.mxu0 0
    %2926 = vmatpush1.bf16.msra.mxu0 0
    %2927 = vmatprep.subr.bf16.mxu0 0
    %2928 = vmatpush1.bf16.msra.mxu0 0
    %2929 = vmatprep.subr.bf16.mxu0 0
    %2930 = vmatpush1.bf16.msra.mxu0 0
    %2931 = vmatprep.subr.bf16.mxu0 0
    %2932 = vmatpush1.bf16.msra.mxu0 0
    %2933 = vmatprep.subr.bf16.mxu0 0
    %2934 = vmatpush1.bf16.msra.mxu0 0
    %2935 = vmatprep.subr.bf16.mxu0 0
    %2936 = vmatpush1.bf16.msra.mxu0 0
    %2937 = vmatprep.subr.bf16.mxu0 0
    %2938 = vmatpush1.bf16.msra.mxu0 0
    %2939 = vmatprep.subr.bf16.mxu0 0
    %2940 = vmatpush1.bf16.msra.mxu0 0
    %2941 = vmatprep.subr.bf16.mxu0 0
    %2942 = vmatpush1.bf16.msra.mxu0 0
    %2943 = vmatprep.subr.bf16.mxu0 0
    %2944 = vmatpush1.bf16.msra.mxu0 0
    %2945 = vmatprep.subr.bf16.mxu0 0
    %2946 = vmatpush1.bf16.msra.mxu0 0
    %2947 = vmatprep.subr.bf16.mxu0 0
    %2948 = vmatpush1.bf16.msra.mxu0 0
    %2949 = vmatprep.subr.bf16.mxu0 0
    %2950 = vmatpush1.bf16.msra.mxu0 0
    %2951 = vmatprep.subr.bf16.mxu0 0
    %2952 = vmatpush1.bf16.msra.mxu0 0
    %2953 = vmatprep.mubr.bf16.mxu0 0
    %2954 = vmatmul.mubr.bf16.gmra.mrb[0].mxu0 %v2916
    %v2955 = vpop.f32.mrb[0].mxu0
    %v2956 = vadd.f32 %v2806, %v2955
    %v2957 = vpop.f32.mrb[0].mxu0
    %v2958 = vpop.f32.mrb[0].mxu0
    %v2959 = vadd.f32 %v2807, %v2958
    %v2960 = vpop.f32.mrb[0].mxu0
    %2961 = vdwg.mxu0
    %v2962 = vsel %vm114, %v2956, 0.0
    %2963 = vadd.xlane.f32.xlu0 %v2962
    %v2964 = vpop.xlane.xlu0 %2963
    %v2965 = vsel %vm114, %v2959, 0.0
    %2966 = vadd.xlane.f32.xlu0 %v2965
    %v2967 = vpop.xlane.xlu0 %2966
    %v2968 = vrot.slane %v2964, 4
    %v2969 = vadd.f32 %v2964, %v2968
    %v2970 = vrot.slane %v2969, 2
    %v2971 = vadd.f32 %v2969, %v2970
    %v2972 = vrot.slane %v2971, 1
    %v2973 = vadd.f32 %v2971, %v2972
    %v2974 = vrot.slane %v2967, 4
    %v2975 = vadd.f32 %v2967, %v2974
    %v2976 = vrot.slane %v2975, 2
    %v2977 = vadd.f32 %v2975, %v2976
    %v2978 = vrot.slane %v2977, 1
    %v2979 = vadd.f32 %v2977, %v2978
    %v2980 = vmul.f32 %v2973, %v81
    %v2981 = vmul.f32 %v2979, %v82
    %v2984 = vlaneseq
    %v2985 = vshrl.u32 %v2984, 7
    %v2986 = vsub.s32 0, %v2985
    %v2987 = vrot.slane %v2980, %v2986
    %v2988 = vlaneseq
    %v2989 = vshrl.u32 %v2988, 7
    %v2990 = vsub.s32 0, %v2989
    %v2991 = vrot.slane %v2981, %v2990
    %2992 = vset.pattern.permute.xlu0 0
    %2993 = vperm.xlu0 %2992, %v2987
    %v2994 = vpop.permute.xlu0 %2993
    %2996 = vset.pattern.permute.xlu0 0
    %2997 = vperm.xlu0 %2996, %v2991
    %v2998 = vpop.permute.xlu0 %2997
    %v3000 = vsub.f32 %v2956, %v2994
    %v3001 = vsub.f32 %v2959, %v2998
    %v3002 = vmul.f32 %v3000, %v3000
    %v3003 = vmul.f32 %v3001, %v3001
    %v3004 = vsel %vm114, %v3002, 0.0
    %3005 = vadd.xlane.f32.xlu0 %v3004
    %v3006 = vpop.xlane.xlu0 %3005
    %v3007 = vsel %vm114, %v3003, 0.0
    %3008 = vadd.xlane.f32.xlu0 %v3007
    %v3009 = vpop.xlane.xlu0 %3008
    %v3010 = vrot.slane %v3006, 4
    %v3011 = vadd.f32 %v3006, %v3010
    %v3012 = vrot.slane %v3011, 2
    %v3013 = vadd.f32 %v3011, %v3012
    %v3014 = vrot.slane %v3013, 1
    %v3015 = vadd.f32 %v3013, %v3014
    %v3016 = vrot.slane %v3009, 4
    %v3017 = vadd.f32 %v3009, %v3016
    %v3018 = vrot.slane %v3017, 2
    %v3019 = vadd.f32 %v3017, %v3018
    %v3020 = vrot.slane %v3019, 1
    %v3021 = vadd.f32 %v3019, %v3020
    %v3022 = vrsqrt.pop %v3015
    %v3023 = vrsqrt.pop %v3021
    %v3024 = vmul.f32 %v79, %v3022
    %v3025 = vmul.f32 %v80, %v3023
    %v3028 = vlaneseq
    %v3029 = vshrl.u32 %v3028, 7
    %v3030 = vsub.s32 0, %v3029
    %v3031 = vrot.slane %v3024, %v3030
    %v3032 = vlaneseq
    %v3033 = vshrl.u32 %v3032, 7
    %v3034 = vsub.s32 0, %v3033
    %v3035 = vrot.slane %v3025, %v3034
    %3036 = vset.pattern.permute.xlu0 0
    %3037 = vperm.xlu0 %3036, %v3031
    %v3038 = vpop.permute.xlu0 %3037
    %3040 = vset.pattern.permute.xlu0 0
    %3041 = vperm.xlu0 %3040, %v3035
    %v3042 = vpop.permute.xlu0 %3041
    %v3044 = vmul.f32 %v3000, %v3038
    %v3045 = vmul.f32 %v3001, %v3042
    %v3046 = vpack.c.bf16 %v3044, %v3044
    %v3047 = vpack.c.bf16 %v3045, %v3045
    %s3048 = scalar_lea.vmem [#allocation2], 64
    %v3049 = vld [vmem:[%s3048] sm:$0xf]
    %v3050 = vld [vmem:[%s3048 + $0x4] sm:$0xf]
    %v3051 = vld [vmem:[%s3048 + $0x8] sm:$0xf]
    %v3052 = vld [vmem:[%s3048 + $0xc] sm:$0x7]
    %v3055 = vunpack.c.l.b16 %v3046
    %v3056 = vunpack.c.l.b16 %v3047
    %v3057 = vpack.c.b16 %v3056, %v3055
    %v3062 = vunpack.c.l.b16 %v3049
    %v3063 = vunpack.c.l.b16 %v3050
    %v3064 = vunpack.c.l.b16 %v3051
    %v3065 = vunpack.c.l.b16 %v3052
    %v3066 = vpack.c.b16 %v3063, %v3062
    %v3067 = vpack.c.b16 %v3065, %v3064
    %v3070 = vsel %vm114, %v3057, 0
    %v3073 = vsel %vm118, %v3067, 0
    %3075 = vmatprep.subr.bf16.mxu0 0
    %3076 = vmatpush1.bf16.msra.mxu0 %v3066
    %3077 = vmatprep.subr.bf16.mxu0 0
    %3078 = vmatpush1.bf16.msra.mxu0 %v3073
    %3079 = vmatprep.subr.bf16.mxu0 0
    %3080 = vmatpush1.bf16.msra.mxu0 0
    %3081 = vmatprep.subr.bf16.mxu0 0
    %3082 = vmatpush1.bf16.msra.mxu0 0
    %3083 = vmatprep.subr.bf16.mxu0 0
    %3084 = vmatpush1.bf16.msra.mxu0 0
    %3085 = vmatprep.subr.bf16.mxu0 0
    %3086 = vmatpush1.bf16.msra.mxu0 0
    %3087 = vmatprep.subr.bf16.mxu0 0
    %3088 = vmatpush1.bf16.msra.mxu0 0
    %3089 = vmatprep.subr.bf16.mxu0 0
    %3090 = vmatpush1.bf16.msra.mxu0 0
    %3091 = vmatprep.subr.bf16.mxu0 0
    %3092 = vmatpush1.bf16.msra.mxu0 0
    %3093 = vmatprep.subr.bf16.mxu0 0
    %3094 = vmatpush1.bf16.msra.mxu0 0
    %3095 = vmatprep.subr.bf16.mxu0 0
    %3096 = vmatpush1.bf16.msra.mxu0 0
    %3097 = vmatprep.subr.bf16.mxu0 0
    %3098 = vmatpush1.bf16.msra.mxu0 0
    %3099 = vmatprep.subr.bf16.mxu0 0
    %3100 = vmatpush1.bf16.msra.mxu0 0
    %3101 = vmatprep.subr.bf16.mxu0 0
    %3102 = vmatpush1.bf16.msra.mxu0 0
    %3103 = vmatprep.subr.bf16.mxu0 0
    %3104 = vmatpush1.bf16.msra.mxu0 0
    %3105 = vmatprep.subr.bf16.mxu0 0
    %3106 = vmatpush1.bf16.msra.mxu0 0
    %3107 = vmatprep.mubr.bf16.mxu0 0
    %3108 = vmatmul.mubr.bf16.gmra.mrb[0].mxu0 %v3070
    %v3109 = vpop.f32.mrb[0].mxu0
    %v3110 = vadd.f32 0.0, %v3109
    %v3111 = vpop.f32.mrb[0].mxu0
    %v3112 = vpop.f32.mrb[0].mxu0
    %v3113 = vadd.f32 0.0, %v3112
    %v3114 = vpop.f32.mrb[0].mxu0
    %3115 = vdwg.mxu0
    %s3116 = scalar_lea.vmem %s3, 4
    %v3117 = vld [vmem:[%s3116] sm:$0x1]
    %v3119 = vlaneseq
    %v3120 = vshrl.u32 %v3119, 7
    %v3121 = vsub.s32 0, %v3120
    %v3122 = vrot.slane %v3117, %v3121
    %v3124 = vadd.f32 %v3110, %v3122
    %v3125 = vadd.f32 %v3113, %v3122
    %v3126 = vmul.f32 %v3124, %v176
    %v3127 = vmul.f32 %v3125, %v176
    %v3128 = vmul.f32 %v3124, %v184
    %v3129 = vmul.f32 %v3125, %v184
    %v3130 = vmul.f32 %v3124, %v192
    %v3131 = vmul.f32 %v3125, %v192
    %v3132 = vpack.c.bf16 %v3128, %v3126
    %v3133 = vpack.c.bf16 %v3130, %v3130
    %v3134 = vpack.c.bf16 %v3129, %v3127
    %v3135 = vpack.c.bf16 %v3131, %v3131
    %v3136 = vpack.c.bf16 %v3110, %v3110
    %v3137 = vpack.c.bf16 %v3113, %v3113
    %3139 = vrot.lane.b32.xlu0 %v3136, 98
    %v3140 = vpop.permute.xlu0 %3139
    %v3142 = vsel %vm114, %v3132, 0
    %v3145 = vsel %vm114, %v3133, 0
    %v3148 = vsel %vm114, %v3140, 0
    %3150 = vmatprep.subr.bf16.mxu0 0
    %3151 = vmatpush1.bf16.xpose.msra.mxu0 %v3148
    %3152 = vmatprep.subr.bf16.mxu0 0
    %3153 = vmatpush1.bf16.xpose.msra.mxu0 0
    %3154 = vmatprep.subr.bf16.mxu0 0
    %3155 = vmatpush1.bf16.xpose.msra.mxu0 0
    %3156 = vmatprep.subr.bf16.mxu0 0
    %3157 = vmatpush1.bf16.xpose.msra.mxu0 0
    %3158 = vmatprep.subr.bf16.mxu0 0
    %3159 = vmatpush1.bf16.xpose.msra.mxu0 0
    %3160 = vmatprep.subr.bf16.mxu0 0
    %3161 = vmatpush1.bf16.xpose.msra.mxu0 0
    %3162 = vmatprep.subr.bf16.mxu0 0
    %3163 = vmatpush1.bf16.xpose.msra.mxu0 0
    %3164 = vmatprep.subr.bf16.mxu0 0
    %3165 = vmatpush1.bf16.xpose.msra.mxu0 0
    %3166 = vmatprep.subr.bf16.mxu0 0
    %3167 = vmatpush1.bf16.xpose.msra.mxu0 0
    %3168 = vmatprep.subr.bf16.mxu0 0
    %3169 = vmatpush1.bf16.xpose.msra.mxu0 0
    %3170 = vmatprep.subr.bf16.mxu0 0
    %3171 = vmatpush1.bf16.xpose.msra.mxu0 0
    %3172 = vmatprep.subr.bf16.mxu0 0
    %3173 = vmatpush1.bf16.xpose.msra.mxu0 0
    %3174 = vmatprep.subr.bf16.mxu0 0
    %3175 = vmatpush1.bf16.xpose.msra.mxu0 0
    %3176 = vmatprep.subr.bf16.mxu0 0
    %3177 = vmatpush1.bf16.xpose.msra.mxu0 0
    %3178 = vmatprep.subr.bf16.mxu0 0
    %3179 = vmatpush1.bf16.xpose.msra.mxu0 0
    %3180 = vmatprep.subr.bf16.mxu0 0
    %3181 = vmatpush1.bf16.xpose.msra.mxu0 0
    %3182 = vmatprep.mubr.bf16.mxu0 0
    %3183 = vmatmul.mubr.bf16.gmra.mrb[0].mxu0 %v3142
    %v3184 = vpop.f32.mrb[0].mxu0
    %v3185 = vadd.f32 0.0, %v3184
    %v3186 = vpop.f32.mrb[0].mxu0
    %v3187 = vpop.f32.mrb[0].mxu0
    %v3188 = vadd.f32 0.0, %v3187
    %v3189 = vpop.f32.mrb[0].mxu0
    %3190 = vmatprep.mubr.bf16.mxu0 0
    %3191 = vmatmul.mubr.bf16.gmra.mrb[0].mxu0 %v3145
    %v3192 = vpop.f32.mrb[0].mxu0
    %v3193 = vadd.f32 0.0, %v3192
    %v3194 = vpop.f32.mrb[0].mxu0
    %v3195 = vpop.f32.mrb[0].mxu0
    %v3196 = vpop.f32.mrb[0].mxu0
    %3197 = vdwg.mxu0
    %3199 = vrot.lane.b32.xlu0 %v3137, 98
    %v3200 = vpop.permute.xlu0 %3199
    %v3202 = vsel %vm114, %v3134, 0
    %v3205 = vsel %vm114, %v3135, 0
    %v3208 = vsel %vm114, %v3200, 0
    %3210 = vmatprep.subr.bf16.mxu0 0
    %3211 = vmatpush1.bf16.xpose.msra.mxu0 %v3208
    %3212 = vmatprep.subr.bf16.mxu0 0
    %3213 = vmatpush1.bf16.xpose.msra.mxu0 0
    %3214 = vmatprep.subr.bf16.mxu0 0
    %3215 = vmatpush1.bf16.xpose.msra.mxu0 0
    %3216 = vmatprep.subr.bf16.mxu0 0
    %3217 = vmatpush1.bf16.xpose.msra.mxu0 0
    %3218 = vmatprep.subr.bf16.mxu0 0
    %3219 = vmatpush1.bf16.xpose.msra.mxu0 0
    %3220 = vmatprep.subr.bf16.mxu0 0
    %3221 = vmatpush1.bf16.xpose.msra.mxu0 0
    %3222 = vmatprep.subr.bf16.mxu0 0
    %3223 = vmatpush1.bf16.xpose.msra.mxu0 0
    %3224 = vmatprep.subr.bf16.mxu0 0
    %3225 = vmatpush1.bf16.xpose.msra.mxu0 0
    %3226 = vmatprep.subr.bf16.mxu0 0
    %3227 = vmatpush1.bf16.xpose.msra.mxu0 0
    %3228 = vmatprep.subr.bf16.mxu0 0
    %3229 = vmatpush1.bf16.xpose.msra.mxu0 0
    %3230 = vmatprep.subr.bf16.mxu0 0
    %3231 = vmatpush1.bf16.xpose.msra.mxu0 0
    %3232 = vmatprep.subr.bf16.mxu0 0
    %3233 = vmatpush1.bf16.xpose.msra.mxu0 0
    %3234 = vmatprep.subr.bf16.mxu0 0
    %3235 = vmatpush1.bf16.xpose.msra.mxu0 0
    %3236 = vmatprep.subr.bf16.mxu0 0
    %3237 = vmatpush1.bf16.xpose.msra.mxu0 0
    %3238 = vmatprep.subr.bf16.mxu0 0
    %3239 = vmatpush1.bf16.xpose.msra.mxu0 0
    %3240 = vmatprep.subr.bf16.mxu0 0
    %3241 = vmatpush1.bf16.xpose.msra.mxu0 0
    %3242 = vmatprep.mubr.bf16.mxu0 0
    %3243 = vmatmul.mubr.bf16.gmra.mrb[0].mxu0 %v3202
    %v3244 = vpop.f32.mrb[0].mxu0
    %v3245 = vadd.f32 0.0, %v3244
    %v3246 = vpop.f32.mrb[0].mxu0
    %v3247 = vpop.f32.mrb[0].mxu0
    %v3248 = vadd.f32 0.0, %v3247
    %v3249 = vpop.f32.mrb[0].mxu0
    %3250 = vmatprep.mubr.bf16.mxu0 0
    %3251 = vmatmul.mubr.bf16.gmra.mrb[0].mxu0 %v3205
    %v3252 = vpop.f32.mrb[0].mxu0
    %v3253 = vadd.f32 0.0, %v3252
    %v3254 = vpop.f32.mrb[0].mxu0
    %v3255 = vpop.f32.mrb[0].mxu0
    %v3256 = vpop.f32.mrb[0].mxu0
    %3257 = vdwg.mxu0
    %v3258 = vsel %vm322, %v3185, -inf
    %3259 = vmax.xlane.f32.xlu0 %v3258
    %v3260 = vpop.xlane.xlu0 %3259
    %v3261 = vsel %vm322, %v3188, -inf
    %3262 = vmax.xlane.f32.xlu0 %v3261
    %v3263 = vpop.xlane.xlu0 %3262
    %v3264 = vsel %vm322, %v3193, -inf
    %3265 = vmax.xlane.f32.xlu0 %v3264
    %v3266 = vpop.xlane.xlu0 %3265
    %v3267 = vsel %vm322, %v3245, -inf
    %3268 = vmax.xlane.f32.xlu0 %v3267
    %v3269 = vpop.xlane.xlu0 %3268
    %v3270 = vsel %vm322, %v3248, -inf
    %3271 = vmax.xlane.f32.xlu0 %v3270
    %v3272 = vpop.xlane.xlu0 %3271
    %v3273 = vsel %vm322, %v3253, -inf
    %3274 = vmax.xlane.f32.xlu0 %v3273
    %v3275 = vpop.xlane.xlu0 %3274
    %v3276 = vsub.f32 %v3185, %v3260
    %v3277 = vsub.f32 %v3188, %v3263
    %v3278 = vsub.f32 %v3193, %v3266
    %v3279 = vsub.f32 %v3245, %v3269
    %v3280 = vsub.f32 %v3248, %v3272
    %v3281 = vsub.f32 %v3253, %v3275
    %v3282 = vmul.f32 %v3276, 1.442695
    %v3283 = vpow.pop %v3282
    %v3284 = vmul.f32 %v3277, 1.442695
    %v3285 = vpow.pop %v3284
    %v3286 = vmul.f32 %v3278, 1.442695
    %v3287 = vpow.pop %v3286
    %v3288 = vmul.f32 %v3279, 1.442695
    %v3289 = vpow.pop %v3288
    %v3290 = vmul.f32 %v3280, 1.442695
    %v3291 = vpow.pop %v3290
    %v3292 = vmul.f32 %v3281, 1.442695
    %v3293 = vpow.pop %v3292
    %v3294 = vsel %vm322, %v3283, 0.0
    %3295 = vadd.xlane.f32.xlu0 %v3294
    %v3296 = vpop.xlane.xlu0 %3295
    %v3297 = vsel %vm322, %v3285, 0.0
    %3298 = vadd.xlane.f32.xlu0 %v3297
    %v3299 = vpop.xlane.xlu0 %3298
    %v3300 = vsel %vm322, %v3287, 0.0
    %3301 = vadd.xlane.f32.xlu0 %v3300
    %v3302 = vpop.xlane.xlu0 %3301
    %v3303 = vsel %vm322, %v3289, 0.0
    %3304 = vadd.xlane.f32.xlu0 %v3303
    %v3305 = vpop.xlane.xlu0 %3304
    %v3306 = vsel %vm322, %v3291, 0.0
    %3307 = vadd.xlane.f32.xlu0 %v3306
    %v3308 = vpop.xlane.xlu0 %3307
    %v3309 = vsel %vm322, %v3293, 0.0
    %3310 = vadd.xlane.f32.xlu0 %v3309
    %v3311 = vpop.xlane.xlu0 %3310
    %v3312 = vrcp.pop %v3296
    %v3313 = vrcp.pop %v3299
    %v3314 = vrcp.pop %v3302
    %v3315 = vrcp.pop %v3305
    %v3316 = vrcp.pop %v3308
    %v3317 = vrcp.pop %v3311
    %v3318 = vmul.f32 %v3283, %v3312
    %v3319 = vmul.f32 %v3285, %v3313
    %v3320 = vmul.f32 %v3287, %v3314
    %v3321 = vmul.f32 %v3289, %v3315
    %v3322 = vmul.f32 %v3291, %v3316
    %v3323 = vmul.f32 %v3293, %v3317
    %v3324 = vpack.c.bf16 %v3319, %v3318
    %v3325 = vpack.c.bf16 %v3320, %v3320
    %v3326 = vpack.c.bf16 %v3322, %v3321
    %v3327 = vpack.c.bf16 %v3323, %v3323
    %3328 = vrot.lane.b32.xlu0 %v3136, 68
    %v3329 = vpop.permute.xlu0 %3328
    %v3331 = vsel %vm322, %v3324, 0
    %v3334 = vsel %vm322, %v3325, 0
    %v3337 = vsel %vm401, %v3329, 0
    %3339 = vmatprep.subr.bf16.mxu0 0
    %3340 = vmatpush1.bf16.msra.mxu0 %v3337
    %3341 = vmatprep.subr.bf16.mxu0 0
    %3342 = vmatpush1.bf16.msra.mxu0 0
    %3343 = vmatprep.subr.bf16.mxu0 0
    %3344 = vmatpush1.bf16.msra.mxu0 0
    %3345 = vmatprep.subr.bf16.mxu0 0
    %3346 = vmatpush1.bf16.msra.mxu0 0
    %3347 = vmatprep.subr.bf16.mxu0 0
    %3348 = vmatpush1.bf16.msra.mxu0 0
    %3349 = vmatprep.subr.bf16.mxu0 0
    %3350 = vmatpush1.bf16.msra.mxu0 0
    %3351 = vmatprep.subr.bf16.mxu0 0
    %3352 = vmatpush1.bf16.msra.mxu0 0
    %3353 = vmatprep.subr.bf16.mxu0 0
    %3354 = vmatpush1.bf16.msra.mxu0 0
    %3355 = vmatprep.subr.bf16.mxu0 0
    %3356 = vmatpush1.bf16.msra.mxu0 0
    %3357 = vmatprep.subr.bf16.mxu0 0
    %3358 = vmatpush1.bf16.msra.mxu0 0
    %3359 = vmatprep.subr.bf16.mxu0 0
    %3360 = vmatpush1.bf16.msra.mxu0 0
    %3361 = vmatprep.subr.bf16.mxu0 0
    %3362 = vmatpush1.bf16.msra.mxu0 0
    %3363 = vmatprep.subr.bf16.mxu0 0
    %3364 = vmatpush1.bf16.msra.mxu0 0
    %3365 = vmatprep.subr.bf16.mxu0 0
    %3366 = vmatpush1.bf16.msra.mxu0 0
    %3367 = vmatprep.subr.bf16.mxu0 0
    %3368 = vmatpush1.bf16.msra.mxu0 0
    %3369 = vmatprep.subr.bf16.mxu0 0
    %3370 = vmatpush1.bf16.msra.mxu0 0
    %3371 = vmatprep.mubr.bf16.mxu0 0
    %3372 = vmatmul.mubr.bf16.gmra.mrb[0].mxu0 %v3331
    %v3373 = vpop.f32.mrb[0].mxu0
    %v3374 = vadd.f32 0.0, %v3373
    %v3375 = vpop.f32.mrb[0].mxu0
    %v3376 = vpop.f32.mrb[0].mxu0
    %v3377 = vadd.f32 0.0, %v3376
    %v3378 = vpop.f32.mrb[0].mxu0
    %3379 = vmatprep.mubr.bf16.mxu0 0
    %3380 = vmatmul.mubr.bf16.gmra.mrb[0].mxu0 %v3334
    %v3381 = vpop.f32.mrb[0].mxu0
    %v3382 = vadd.f32 0.0, %v3381
    %v3383 = vpop.f32.mrb[0].mxu0
    %v3384 = vpop.f32.mrb[0].mxu0
    %v3385 = vpop.f32.mrb[0].mxu0
    %3386 = vdwg.mxu0
    %3387 = vrot.lane.b32.xlu0 %v3137, 68
    %v3388 = vpop.permute.xlu0 %3387
    %v3390 = vsel %vm322, %v3326, 0
    %v3393 = vsel %vm322, %v3327, 0
    %v3396 = vsel %vm401, %v3388, 0
    %3398 = vmatprep.subr.bf16.mxu0 0
    %3399 = vmatpush1.bf16.msra.mxu0 %v3396
    %3400 = vmatprep.subr.bf16.mxu0 0
    %3401 = vmatpush1.bf16.msra.mxu0 0
    %3402 = vmatprep.subr.bf16.mxu0 0
    %3403 = vmatpush1.bf16.msra.mxu0 0
    %3404 = vmatprep.subr.bf16.mxu0 0
    %3405 = vmatpush1.bf16.msra.mxu0 0
    %3406 = vmatprep.subr.bf16.mxu0 0
    %3407 = vmatpush1.bf16.msra.mxu0 0
    %3408 = vmatprep.subr.bf16.mxu0 0
    %3409 = vmatpush1.bf16.msra.mxu0 0
    %3410 = vmatprep.subr.bf16.mxu0 0
    %3411 = vmatpush1.bf16.msra.mxu0 0
    %3412 = vmatprep.subr.bf16.mxu0 0
    %3413 = vmatpush1.bf16.msra.mxu0 0
    %3414 = vmatprep.subr.bf16.mxu0 0
    %3415 = vmatpush1.bf16.msra.mxu0 0
    %3416 = vmatprep.subr.bf16.mxu0 0
    %3417 = vmatpush1.bf16.msra.mxu0 0
    %3418 = vmatprep.subr.bf16.mxu0 0
    %3419 = vmatpush1.bf16.msra.mxu0 0
    %3420 = vmatprep.subr.bf16.mxu0 0
    %3421 = vmatpush1.bf16.msra.mxu0 0
    %3422 = vmatprep.subr.bf16.mxu0 0
    %3423 = vmatpush1.bf16.msra.mxu0 0
    %3424 = vmatprep.subr.bf16.mxu0 0
    %3425 = vmatpush1.bf16.msra.mxu0 0
    %3426 = vmatprep.subr.bf16.mxu0 0
    %3427 = vmatpush1.bf16.msra.mxu0 0
    %3428 = vmatprep.subr.bf16.mxu0 0
    %3429 = vmatpush1.bf16.msra.mxu0 0
    %3430 = vmatprep.mubr.bf16.mxu0 0
    %3431 = vmatmul.mubr.bf16.gmra.mrb[0].mxu0 %v3390
    %v3432 = vpop.f32.mrb[0].mxu0
    %v3433 = vadd.f32 0.0, %v3432
    %v3434 = vpop.f32.mrb[0].mxu0
    %v3435 = vpop.f32.mrb[0].mxu0
    %v3436 = vadd.f32 0.0, %v3435
    %v3437 = vpop.f32.mrb[0].mxu0
    %3438 = vmatprep.mubr.bf16.mxu0 0
    %3439 = vmatmul.mubr.bf16.gmra.mrb[0].mxu0 %v3393
    %v3440 = vpop.f32.mrb[0].mxu0
    %v3441 = vadd.f32 0.0, %v3440
    %v3442 = vpop.f32.mrb[0].mxu0
    %v3443 = vpop.f32.mrb[0].mxu0
    %v3444 = vpop.f32.mrb[0].mxu0
    %3445 = vdwg.mxu0
    %v3446 = vmul.f32 %v3374, %v176
    %v3447 = vmul.f32 %v3433, %v176
    %v3448 = vmul.f32 %v3377, %v184
    %v3449 = vmul.f32 %v3436, %v184
    %v3450 = vadd.f32 %v3446, %v3448
    %v3451 = vadd.f32 %v3447, %v3449
    %v3452 = vmul.f32 %v3382, %v192
    %v3453 = vmul.f32 %v3441, %v192
    %v3454 = vadd.f32 %v3450, %v3452
    %v3455 = vadd.f32 %v3451, %v3453
    %v3456 = vadd.f32 %v3454, %v3044
    %v3457 = vadd.f32 %v3455, %v3045
    %v3458 = vsel %vm114, %v3456, 0.0
    %3459 = vadd.xlane.f32.xlu0 %v3458
    %v3460 = vpop.xlane.xlu0 %3459
    %v3461 = vsel %vm114, %v3457, 0.0
    %3462 = vadd.xlane.f32.xlu0 %v3461
    %v3463 = vpop.xlane.xlu0 %3462
    %v3464 = vrot.slane %v3460, 4
    %v3465 = vadd.f32 %v3460, %v3464
    %v3466 = vrot.slane %v3465, 2
    %v3467 = vadd.f32 %v3465, %v3466
    %v3468 = vrot.slane %v3467, 1
    %v3469 = vadd.f32 %v3467, %v3468
    %v3470 = vrot.slane %v3463, 4
    %v3471 = vadd.f32 %v3463, %v3470
    %v3472 = vrot.slane %v3471, 2
    %v3473 = vadd.f32 %v3471, %v3472
    %v3474 = vrot.slane %v3473, 1
    %v3475 = vadd.f32 %v3473, %v3474
    %v3476 = vmul.f32 %v3469, %v81
    %v3477 = vmul.f32 %v3475, %v82
    %v3480 = vlaneseq
    %v3481 = vshrl.u32 %v3480, 7
    %v3482 = vsub.s32 0, %v3481
    %v3483 = vrot.slane %v3476, %v3482
    %v3484 = vlaneseq
    %v3485 = vshrl.u32 %v3484, 7
    %v3486 = vsub.s32 0, %v3485
    %v3487 = vrot.slane %v3477, %v3486
    %3488 = vset.pattern.permute.xlu0 0
    %3489 = vperm.xlu0 %3488, %v3483
    %v3490 = vpop.permute.xlu0 %3489
    %3492 = vset.pattern.permute.xlu0 0
    %3493 = vperm.xlu0 %3492, %v3487
    %v3494 = vpop.permute.xlu0 %3493
    %v3496 = vsub.f32 %v3456, %v3490
    %v3497 = vsub.f32 %v3457, %v3494
    %v3498 = vmul.f32 %v3496, %v3496
    %v3499 = vmul.f32 %v3497, %v3497
    %v3500 = vsel %vm114, %v3498, 0.0
    %3501 = vadd.xlane.f32.xlu0 %v3500
    %v3502 = vpop.xlane.xlu0 %3501
    %v3503 = vsel %vm114, %v3499, 0.0
    %3504 = vadd.xlane.f32.xlu0 %v3503
    %v3505 = vpop.xlane.xlu0 %3504
    %v3506 = vrot.slane %v3502, 4
    %v3507 = vadd.f32 %v3502, %v3506
    %v3508 = vrot.slane %v3507, 2
    %v3509 = vadd.f32 %v3507, %v3508
    %v3510 = vrot.slane %v3509, 1
    %v3511 = vadd.f32 %v3509, %v3510
    %v3512 = vrot.slane %v3505, 4
    %v3513 = vadd.f32 %v3505, %v3512
    %v3514 = vrot.slane %v3513, 2
    %v3515 = vadd.f32 %v3513, %v3514
    %v3516 = vrot.slane %v3515, 1
    %v3517 = vadd.f32 %v3515, %v3516
    %v3518 = vrsqrt.pop %v3511
    %v3519 = vrsqrt.pop %v3517
    %v3520 = vmul.f32 %v79, %v3518
    %v3521 = vmul.f32 %v80, %v3519
    %v3524 = vlaneseq
    %v3525 = vshrl.u32 %v3524, 7
    %v3526 = vsub.s32 0, %v3525
    %v3527 = vrot.slane %v3520, %v3526
    %v3528 = vlaneseq
    %v3529 = vshrl.u32 %v3528, 7
    %v3530 = vsub.s32 0, %v3529
    %v3531 = vrot.slane %v3521, %v3530
    %3532 = vset.pattern.permute.xlu0 0
    %3533 = vperm.xlu0 %3532, %v3527
    %v3534 = vpop.permute.xlu0 %3533
    %3536 = vset.pattern.permute.xlu0 0
    %3537 = vperm.xlu0 %3536, %v3531
    %v3538 = vpop.permute.xlu0 %3537
    %v3540 = vmul.f32 %v3496, %v3534
    %v3541 = vmul.f32 %v3497, %v3538
    %v3542 = vpack.c.bf16 %v3540, %v3540
    %v3543 = vpack.c.bf16 %v3541, %v3541
    %s3544 = scalar_lea.vmem [#allocation5], 64
    %v3545 = vld [vmem:[%s3544] sm:$0xf]
    %v3546 = vld [vmem:[%s3544 + $0x4] sm:$0xf]
    %v3547 = vld [vmem:[%s3544 + $0x8] sm:$0xf]
    %v3548 = vld [vmem:[%s3544 + $0xc] sm:$0x7]
    %v3551 = vunpack.c.l.b16 %v3542
    %v3552 = vunpack.c.l.b16 %v3543
    %v3553 = vpack.c.b16 %v3552, %v3551
    %v3558 = vunpack.c.l.b16 %v3545
    %v3559 = vunpack.c.l.b16 %v3546
    %v3560 = vunpack.c.l.b16 %v3547
    %v3561 = vunpack.c.l.b16 %v3548
    %v3562 = vpack.c.b16 %v3559, %v3558
    %v3563 = vpack.c.b16 %v3561, %v3560
    %v3566 = vsel %vm114, %v3553, 0
    %v3569 = vsel %vm118, %v3563, 0
    %3571 = vmatprep.subr.bf16.mxu0 0
    %3572 = vmatpush1.bf16.msra.mxu0 %v3562
    %3573 = vmatprep.subr.bf16.mxu0 0
    %3574 = vmatpush1.bf16.msra.mxu0 %v3569
    %3575 = vmatprep.subr.bf16.mxu0 0
    %3576 = vmatpush1.bf16.msra.mxu0 0
    %3577 = vmatprep.subr.bf16.mxu0 0
    %3578 = vmatpush1.bf16.msra.mxu0 0
    %3579 = vmatprep.subr.bf16.mxu0 0
    %3580 = vmatpush1.bf16.msra.mxu0 0
    %3581 = vmatprep.subr.bf16.mxu0 0
    %3582 = vmatpush1.bf16.msra.mxu0 0
    %3583 = vmatprep.subr.bf16.mxu0 0
    %3584 = vmatpush1.bf16.msra.mxu0 0
    %3585 = vmatprep.subr.bf16.mxu0 0
    %3586 = vmatpush1.bf16.msra.mxu0 0
    %3587 = vmatprep.subr.bf16.mxu0 0
    %3588 = vmatpush1.bf16.msra.mxu0 0
    %3589 = vmatprep.subr.bf16.mxu0 0
    %3590 = vmatpush1.bf16.msra.mxu0 0
    %3591 = vmatprep.subr.bf16.mxu0 0
    %3592 = vmatpush1.bf16.msra.mxu0 0
    %3593 = vmatprep.subr.bf16.mxu0 0
    %3594 = vmatpush1.bf16.msra.mxu0 0
    %3595 = vmatprep.subr.bf16.mxu0 0
    %3596 = vmatpush1.bf16.msra.mxu0 0
    %3597 = vmatprep.subr.bf16.mxu0 0
    %3598 = vmatpush1.bf16.msra.mxu0 0
    %3599 = vmatprep.subr.bf16.mxu0 0
    %3600 = vmatpush1.bf16.msra.mxu0 0
    %3601 = vmatprep.subr.bf16.mxu0 0
    %3602 = vmatpush1.bf16.msra.mxu0 0
    %3603 = vmatprep.mubr.bf16.mxu0 0
    %3604 = vmatmul.mubr.bf16.gmra.mrb[0].mxu0 %v3566
    %v3605 = vpop.f32.mrb[0].mxu0
    %v3606 = vadd.f32 0.0, %v3605
    %v3607 = vpop.f32.mrb[0].mxu0
    %v3608 = vpop.f32.mrb[0].mxu0
    %v3609 = vadd.f32 0.0, %v3608
    %v3610 = vpop.f32.mrb[0].mxu0
    %3611 = vdwg.mxu0
    %v3612 = vxor.u32 %v3606, 2147483648
    %v3613 = vxor.u32 %v3609, 2147483648
    %v3614 = vmul.f32 %v3612, 1.442695
    %v3615 = vpow.pop %v3614
    %v3616 = vmul.f32 %v3613, 1.442695
    %v3617 = vpow.pop %v3616
    %v3618 = vadd.f32 %v3615, 1.0
    %v3619 = vadd.f32 %v3617, 1.0
    %v3620 = vrcp.pop %v3618
    %v3621 = vmul.f32 1.0, %v3620
    %v3622 = vrcp.pop %v3619
    %v3623 = vmul.f32 1.0, %v3622
    %v3624 = vmul.f32 %v3606, %v3621
    %v3625 = vmul.f32 %v3609, %v3623
    %v3626 = vpack.c.bf16 %v3624, %v3624
    %v3627 = vpack.c.bf16 %v3625, %v3625
    %s3628 = scalar_lea.vmem [#allocation7], 64
    %v3629 = vld [vmem:[%s3628] sm:$0xf]
    %v3630 = vld [vmem:[%s3628 + $0x4] sm:$0xf]
    %v3631 = vld [vmem:[%s3628 + $0x8] sm:$0xf]
    %v3632 = vld [vmem:[%s3628 + $0xc] sm:$0x7]
    %v3635 = vunpack.c.l.b16 %v3626
    %v3636 = vunpack.c.l.b16 %v3627
    %v3637 = vpack.c.b16 %v3636, %v3635
    %v3642 = vunpack.c.l.b16 %v3629
    %v3643 = vunpack.c.l.b16 %v3630
    %v3644 = vunpack.c.l.b16 %v3631
    %v3645 = vunpack.c.l.b16 %v3632
    %v3646 = vpack.c.b16 %v3643, %v3642
    %v3647 = vpack.c.b16 %v3645, %v3644
    %v3650 = vsel %vm114, %v3637, 0
    %v3653 = vsel %vm118, %v3647, 0
    %3655 = vmatprep.subr.bf16.mxu0 0
    %3656 = vmatpush1.bf16.msra.mxu0 %v3646
    %3657 = vmatprep.subr.bf16.mxu0 0
    %3658 = vmatpush1.bf16.msra.mxu0 %v3653
    %3659 = vmatprep.subr.bf16.mxu0 0
    %3660 = vmatpush1.bf16.msra.mxu0 0
    %3661 = vmatprep.subr.bf16.mxu0 0
    %3662 = vmatpush1.bf16.msra.mxu0 0
    %3663 = vmatprep.subr.bf16.mxu0 0
    %3664 = vmatpush1.bf16.msra.mxu0 0
    %3665 = vmatprep.subr.bf16.mxu0 0
    %3666 = vmatpush1.bf16.msra.mxu0 0
    %3667 = vmatprep.subr.bf16.mxu0 0
    %3668 = vmatpush1.bf16.msra.mxu0 0
    %3669 = vmatprep.subr.bf16.mxu0 0
    %3670 = vmatpush1.bf16.msra.mxu0 0
    %3671 = vmatprep.subr.bf16.mxu0 0
    %3672 = vmatpush1.bf16.msra.mxu0 0
    %3673 = vmatprep.subr.bf16.mxu0 0
    %3674 = vmatpush1.bf16.msra.mxu0 0
    %3675 = vmatprep.subr.bf16.mxu0 0
    %3676 = vmatpush1.bf16.msra.mxu0 0
    %3677 = vmatprep.subr.bf16.mxu0 0
    %3678 = vmatpush1.bf16.msra.mxu0 0
    %3679 = vmatprep.subr.bf16.mxu0 0
    %3680 = vmatpush1.bf16.msra.mxu0 0
    %3681 = vmatprep.subr.bf16.mxu0 0
    %3682 = vmatpush1.bf16.msra.mxu0 0
    %3683 = vmatprep.subr.bf16.mxu0 0
    %3684 = vmatpush1.bf16.msra.mxu0 0
    %3685 = vmatprep.subr.bf16.mxu0 0
    %3686 = vmatpush1.bf16.msra.mxu0 0
    %3687 = vmatprep.mubr.bf16.mxu0 0
    %3688 = vmatmul.mubr.bf16.gmra.mrb[0].mxu0 %v3650
    %v3689 = vpop.f32.mrb[0].mxu0
    %v3690 = vadd.f32 %v3540, %v3689
    %v3691 = vpop.f32.mrb[0].mxu0
    %v3692 = vpop.f32.mrb[0].mxu0
    %v3693 = vadd.f32 %v3541, %v3692
    %v3694 = vpop.f32.mrb[0].mxu0
    %3695 = vdwg.mxu0
    %v3696 = vsel %vm114, %v3690, 0.0
    %3697 = vadd.xlane.f32.xlu0 %v3696
    %v3698 = vpop.xlane.xlu0 %3697
    %v3699 = vsel %vm114, %v3693, 0.0
    %3700 = vadd.xlane.f32.xlu0 %v3699
    %v3701 = vpop.xlane.xlu0 %3700
    %v3702 = vrot.slane %v3698, 4
    %v3703 = vadd.f32 %v3698, %v3702
    %v3704 = vrot.slane %v3703, 2
    %v3705 = vadd.f32 %v3703, %v3704
    %v3706 = vrot.slane %v3705, 1
    %v3707 = vadd.f32 %v3705, %v3706
    %v3708 = vrot.slane %v3701, 4
    %v3709 = vadd.f32 %v3701, %v3708
    %v3710 = vrot.slane %v3709, 2
    %v3711 = vadd.f32 %v3709, %v3710
    %v3712 = vrot.slane %v3711, 1
    %v3713 = vadd.f32 %v3711, %v3712
    %v3714 = vmul.f32 %v3707, %v81
    %v3715 = vmul.f32 %v3713, %v82
    %v3718 = vlaneseq
    %v3719 = vshrl.u32 %v3718, 7
    %v3720 = vsub.s32 0, %v3719
    %v3721 = vrot.slane %v3714, %v3720
    %v3722 = vlaneseq
    %v3723 = vshrl.u32 %v3722, 7
    %v3724 = vsub.s32 0, %v3723
    %v3725 = vrot.slane %v3715, %v3724
    %3726 = vset.pattern.permute.xlu0 0
    %3727 = vperm.xlu0 %3726, %v3721
    %v3728 = vpop.permute.xlu0 %3727
    %3730 = vset.pattern.permute.xlu0 0
    %3731 = vperm.xlu0 %3730, %v3725
    %v3732 = vpop.permute.xlu0 %3731
    %v3734 = vsub.f32 %v3690, %v3728
    %v3735 = vsub.f32 %v3693, %v3732
    %v3736 = vmul.f32 %v3734, %v3734
    %v3737 = vmul.f32 %v3735, %v3735
    %v3738 = vsel %vm114, %v3736, 0.0
    %3739 = vadd.xlane.f32.xlu0 %v3738
    %v3740 = vpop.xlane.xlu0 %3739
    %v3741 = vsel %vm114, %v3737, 0.0
    %3742 = vadd.xlane.f32.xlu0 %v3741
    %v3743 = vpop.xlane.xlu0 %3742
    %v3744 = vrot.slane %v3740, 4
    %v3745 = vadd.f32 %v3740, %v3744
    %v3746 = vrot.slane %v3745, 2
    %v3747 = vadd.f32 %v3745, %v3746
    %v3748 = vrot.slane %v3747, 1
    %v3749 = vadd.f32 %v3747, %v3748
    %v3750 = vrot.slane %v3743, 4
    %v3751 = vadd.f32 %v3743, %v3750
    %v3752 = vrot.slane %v3751, 2
    %v3753 = vadd.f32 %v3751, %v3752
    %v3754 = vrot.slane %v3753, 1
    %v3755 = vadd.f32 %v3753, %v3754
    %v3756 = vrsqrt.pop %v3749
    %v3757 = vrsqrt.pop %v3755
    %v3758 = vmul.f32 %v79, %v3756
    %v3759 = vmul.f32 %v80, %v3757
    %v3762 = vlaneseq
    %v3763 = vshrl.u32 %v3762, 7
    %v3764 = vsub.s32 0, %v3763
    %v3765 = vrot.slane %v3758, %v3764
    %v3766 = vlaneseq
    %v3767 = vshrl.u32 %v3766, 7
    %v3768 = vsub.s32 0, %v3767
    %v3769 = vrot.slane %v3759, %v3768
    %3770 = vset.pattern.permute.xlu0 0
    %3771 = vperm.xlu0 %3770, %v3765
    %v3772 = vpop.permute.xlu0 %3771
    %3774 = vset.pattern.permute.xlu0 0
    %3775 = vperm.xlu0 %3774, %v3769
    %v3776 = vpop.permute.xlu0 %3775
    %v3778 = vmul.f32 %v3734, %v3772
    %v3779 = vmul.f32 %v3735, %v3776
    %v3780 = vpack.c.bf16 %v3778, %v3778
    %v3781 = vpack.c.bf16 %v3779, %v3779
    %s3782 = scalar_lea.vmem [#allocation2], 80
    %v3783 = vld [vmem:[%s3782] sm:$0xf]
    %v3784 = vld [vmem:[%s3782 + $0x4] sm:$0xf]
    %v3785 = vld [vmem:[%s3782 + $0x8] sm:$0xf]
    %v3786 = vld [vmem:[%s3782 + $0xc] sm:$0x7]
    %v3789 = vunpack.c.l.b16 %v3780
    %v3790 = vunpack.c.l.b16 %v3781
    %v3791 = vpack.c.b16 %v3790, %v3789
    %v3796 = vunpack.c.l.b16 %v3783
    %v3797 = vunpack.c.l.b16 %v3784
    %v3798 = vunpack.c.l.b16 %v3785
    %v3799 = vunpack.c.l.b16 %v3786
    %v3800 = vpack.c.b16 %v3797, %v3796
    %v3801 = vpack.c.b16 %v3799, %v3798
    %v3804 = vsel %vm114, %v3791, 0
    %v3807 = vsel %vm118, %v3801, 0
    %3809 = vmatprep.subr.bf16.mxu0 0
    %3810 = vmatpush1.bf16.msra.mxu0 %v3800
    %3811 = vmatprep.subr.bf16.mxu0 0
    %3812 = vmatpush1.bf16.msra.mxu0 %v3807
    %3813 = vmatprep.subr.bf16.mxu0 0
    %3814 = vmatpush1.bf16.msra.mxu0 0
    %3815 = vmatprep.subr.bf16.mxu0 0
    %3816 = vmatpush1.bf16.msra.mxu0 0
    %3817 = vmatprep.subr.bf16.mxu0 0
    %3818 = vmatpush1.bf16.msra.mxu0 0
    %3819 = vmatprep.subr.bf16.mxu0 0
    %3820 = vmatpush1.bf16.msra.mxu0 0
    %3821 = vmatprep.subr.bf16.mxu0 0
    %3822 = vmatpush1.bf16.msra.mxu0 0
    %3823 = vmatprep.subr.bf16.mxu0 0
    %3824 = vmatpush1.bf16.msra.mxu0 0
    %3825 = vmatprep.subr.bf16.mxu0 0
    %3826 = vmatpush1.bf16.msra.mxu0 0
    %3827 = vmatprep.subr.bf16.mxu0 0
    %3828 = vmatpush1.bf16.msra.mxu0 0
    %3829 = vmatprep.subr.bf16.mxu0 0
    %3830 = vmatpush1.bf16.msra.mxu0 0
    %3831 = vmatprep.subr.bf16.mxu0 0
    %3832 = vmatpush1.bf16.msra.mxu0 0
    %3833 = vmatprep.subr.bf16.mxu0 0
    %3834 = vmatpush1.bf16.msra.mxu0 0
    %3835 = vmatprep.subr.bf16.mxu0 0
    %3836 = vmatpush1.bf16.msra.mxu0 0
    %3837 = vmatprep.subr.bf16.mxu0 0
    %3838 = vmatpush1.bf16.msra.mxu0 0
    %3839 = vmatprep.subr.bf16.mxu0 0
    %3840 = vmatpush1.bf16.msra.mxu0 0
    %3841 = vmatprep.mubr.bf16.mxu0 0
    %3842 = vmatmul.mubr.bf16.gmra.mrb[0].mxu0 %v3804
    %v3843 = vpop.f32.mrb[0].mxu0
    %v3844 = vadd.f32 0.0, %v3843
    %v3845 = vpop.f32.mrb[0].mxu0
    %v3846 = vpop.f32.mrb[0].mxu0
    %v3847 = vadd.f32 0.0, %v3846
    %v3848 = vpop.f32.mrb[0].mxu0
    %3849 = vdwg.mxu0
    %s3850 = scalar_lea.vmem %s3, 5
    %v3851 = vld [vmem:[%s3850] sm:$0x1]
    %v3853 = vlaneseq
    %v3854 = vshrl.u32 %v3853, 7
    %v3855 = vsub.s32 0, %v3854
    %v3856 = vrot.slane %v3851, %v3855
    %v3858 = vadd.f32 %v3844, %v3856
    %v3859 = vadd.f32 %v3847, %v3856
    %v3860 = vmul.f32 %v3858, %v176
    %v3861 = vmul.f32 %v3859, %v176
    %v3862 = vmul.f32 %v3858, %v184
    %v3863 = vmul.f32 %v3859, %v184
    %v3864 = vmul.f32 %v3858, %v192
    %v3865 = vmul.f32 %v3859, %v192
    %v3866 = vpack.c.bf16 %v3862, %v3860
    %v3867 = vpack.c.bf16 %v3864, %v3864
    %v3868 = vpack.c.bf16 %v3863, %v3861
    %v3869 = vpack.c.bf16 %v3865, %v3865
    %v3870 = vpack.c.bf16 %v3844, %v3844
    %v3871 = vpack.c.bf16 %v3847, %v3847
    %3873 = vrot.lane.b32.xlu0 %v3870, 98
    %v3874 = vpop.permute.xlu0 %3873
    %v3876 = vsel %vm114, %v3866, 0
    %v3879 = vsel %vm114, %v3867, 0
    %v3882 = vsel %vm114, %v3874, 0
    %3884 = vmatprep.subr.bf16.mxu0 0
    %3885 = vmatpush1.bf16.xpose.msra.mxu0 %v3882
    %3886 = vmatprep.subr.bf16.mxu0 0
    %3887 = vmatpush1.bf16.xpose.msra.mxu0 0
    %3888 = vmatprep.subr.bf16.mxu0 0
    %3889 = vmatpush1.bf16.xpose.msra.mxu0 0
    %3890 = vmatprep.subr.bf16.mxu0 0
    %3891 = vmatpush1.bf16.xpose.msra.mxu0 0
    %3892 = vmatprep.subr.bf16.mxu0 0
    %3893 = vmatpush1.bf16.xpose.msra.mxu0 0
    %3894 = vmatprep.subr.bf16.mxu0 0
    %3895 = vmatpush1.bf16.xpose.msra.mxu0 0
    %3896 = vmatprep.subr.bf16.mxu0 0
    %3897 = vmatpush1.bf16.xpose.msra.mxu0 0
    %3898 = vmatprep.subr.bf16.mxu0 0
    %3899 = vmatpush1.bf16.xpose.msra.mxu0 0
    %3900 = vmatprep.subr.bf16.mxu0 0
    %3901 = vmatpush1.bf16.xpose.msra.mxu0 0
    %3902 = vmatprep.subr.bf16.mxu0 0
    %3903 = vmatpush1.bf16.xpose.msra.mxu0 0
    %3904 = vmatprep.subr.bf16.mxu0 0
    %3905 = vmatpush1.bf16.xpose.msra.mxu0 0
    %3906 = vmatprep.subr.bf16.mxu0 0
    %3907 = vmatpush1.bf16.xpose.msra.mxu0 0
    %3908 = vmatprep.subr.bf16.mxu0 0
    %3909 = vmatpush1.bf16.xpose.msra.mxu0 0
    %3910 = vmatprep.subr.bf16.mxu0 0
    %3911 = vmatpush1.bf16.xpose.msra.mxu0 0
    %3912 = vmatprep.subr.bf16.mxu0 0
    %3913 = vmatpush1.bf16.xpose.msra.mxu0 0
    %3914 = vmatprep.subr.bf16.mxu0 0
    %3915 = vmatpush1.bf16.xpose.msra.mxu0 0
    %3916 = vmatprep.mubr.bf16.mxu0 0
    %3917 = vmatmul.mubr.bf16.gmra.mrb[0].mxu0 %v3876
    %v3918 = vpop.f32.mrb[0].mxu0
    %v3919 = vadd.f32 0.0, %v3918
    %v3920 = vpop.f32.mrb[0].mxu0
    %v3921 = vpop.f32.mrb[0].mxu0
    %v3922 = vadd.f32 0.0, %v3921
    %v3923 = vpop.f32.mrb[0].mxu0
    %3924 = vmatprep.mubr.bf16.mxu0 0
    %3925 = vmatmul.mubr.bf16.gmra.mrb[0].mxu0 %v3879
    %v3926 = vpop.f32.mrb[0].mxu0
    %v3927 = vadd.f32 0.0, %v3926
    %v3928 = vpop.f32.mrb[0].mxu0
    %v3929 = vpop.f32.mrb[0].mxu0
    %v3930 = vpop.f32.mrb[0].mxu0
    %3931 = vdwg.mxu0
    %3933 = vrot.lane.b32.xlu0 %v3871, 98
    %v3934 = vpop.permute.xlu0 %3933
    %v3936 = vsel %vm114, %v3868, 0
    %v3939 = vsel %vm114, %v3869, 0
    %v3942 = vsel %vm114, %v3934, 0
    %3944 = vmatprep.subr.bf16.mxu0 0
    %3945 = vmatpush1.bf16.xpose.msra.mxu0 %v3942
    %3946 = vmatprep.subr.bf16.mxu0 0
    %3947 = vmatpush1.bf16.xpose.msra.mxu0 0
    %3948 = vmatprep.subr.bf16.mxu0 0
    %3949 = vmatpush1.bf16.xpose.msra.mxu0 0
    %3950 = vmatprep.subr.bf16.mxu0 0
    %3951 = vmatpush1.bf16.xpose.msra.mxu0 0
    %3952 = vmatprep.subr.bf16.mxu0 0
    %3953 = vmatpush1.bf16.xpose.msra.mxu0 0
    %3954 = vmatprep.subr.bf16.mxu0 0
    %3955 = vmatpush1.bf16.xpose.msra.mxu0 0
    %3956 = vmatprep.subr.bf16.mxu0 0
    %3957 = vmatpush1.bf16.xpose.msra.mxu0 0
    %3958 = vmatprep.subr.bf16.mxu0 0
    %3959 = vmatpush1.bf16.xpose.msra.mxu0 0
    %3960 = vmatprep.subr.bf16.mxu0 0
    %3961 = vmatpush1.bf16.xpose.msra.mxu0 0
    %3962 = vmatprep.subr.bf16.mxu0 0
    %3963 = vmatpush1.bf16.xpose.msra.mxu0 0
    %3964 = vmatprep.subr.bf16.mxu0 0
    %3965 = vmatpush1.bf16.xpose.msra.mxu0 0
    %3966 = vmatprep.subr.bf16.mxu0 0
    %3967 = vmatpush1.bf16.xpose.msra.mxu0 0
    %3968 = vmatprep.subr.bf16.mxu0 0
    %3969 = vmatpush1.bf16.xpose.msra.mxu0 0
    %3970 = vmatprep.subr.bf16.mxu0 0
    %3971 = vmatpush1.bf16.xpose.msra.mxu0 0
    %3972 = vmatprep.subr.bf16.mxu0 0
    %3973 = vmatpush1.bf16.xpose.msra.mxu0 0
    %3974 = vmatprep.subr.bf16.mxu0 0
    %3975 = vmatpush1.bf16.xpose.msra.mxu0 0
    %3976 = vmatprep.mubr.bf16.mxu0 0
    %3977 = vmatmul.mubr.bf16.gmra.mrb[0].mxu0 %v3936
    %v3978 = vpop.f32.mrb[0].mxu0
    %v3979 = vadd.f32 0.0, %v3978
    %v3980 = vpop.f32.mrb[0].mxu0
    %v3981 = vpop.f32.mrb[0].mxu0
    %v3982 = vadd.f32 0.0, %v3981
    %v3983 = vpop.f32.mrb[0].mxu0
    %3984 = vmatprep.mubr.bf16.mxu0 0
    %3985 = vmatmul.mubr.bf16.gmra.mrb[0].mxu0 %v3939
    %v3986 = vpop.f32.mrb[0].mxu0
    %v3987 = vadd.f32 0.0, %v3986
    %v3988 = vpop.f32.mrb[0].mxu0
    %v3989 = vpop.f32.mrb[0].mxu0
    %v3990 = vpop.f32.mrb[0].mxu0
    %3991 = vdwg.mxu0
    %v3992 = vsel %vm322, %v3919, -inf
    %3993 = vmax.xlane.f32.xlu0 %v3992
    %v3994 = vpop.xlane.xlu0 %3993
    %v3995 = vsel %vm322, %v3922, -inf
    %3996 = vmax.xlane.f32.xlu0 %v3995
    %v3997 = vpop.xlane.xlu0 %3996
    %v3998 = vsel %vm322, %v3927, -inf
    %3999 = vmax.xlane.f32.xlu0 %v3998
    %v4000 = vpop.xlane.xlu0 %3999
    %v4001 = vsel %vm322, %v3979, -inf
    %4002 = vmax.xlane.f32.xlu0 %v4001
    %v4003 = vpop.xlane.xlu0 %4002
    %v4004 = vsel %vm322, %v3982, -inf
    %4005 = vmax.xlane.f32.xlu0 %v4004
    %v4006 = vpop.xlane.xlu0 %4005
    %v4007 = vsel %vm322, %v3987, -inf
    %4008 = vmax.xlane.f32.xlu0 %v4007
    %v4009 = vpop.xlane.xlu0 %4008
    %v4010 = vsub.f32 %v3919, %v3994
    %v4011 = vsub.f32 %v3922, %v3997
    %v4012 = vsub.f32 %v3927, %v4000
    %v4013 = vsub.f32 %v3979, %v4003
    %v4014 = vsub.f32 %v3982, %v4006
    %v4015 = vsub.f32 %v3987, %v4009
    %v4016 = vmul.f32 %v4010, 1.442695
    %v4017 = vpow.pop %v4016
    %v4018 = vmul.f32 %v4011, 1.442695
    %v4019 = vpow.pop %v4018
    %v4020 = vmul.f32 %v4012, 1.442695
    %v4021 = vpow.pop %v4020
    %v4022 = vmul.f32 %v4013, 1.442695
    %v4023 = vpow.pop %v4022
    %v4024 = vmul.f32 %v4014, 1.442695
    %v4025 = vpow.pop %v4024
    %v4026 = vmul.f32 %v4015, 1.442695
    %v4027 = vpow.pop %v4026
    %v4028 = vsel %vm322, %v4017, 0.0
    %4029 = vadd.xlane.f32.xlu0 %v4028
    %v4030 = vpop.xlane.xlu0 %4029
    %v4031 = vsel %vm322, %v4019, 0.0
    %4032 = vadd.xlane.f32.xlu0 %v4031
    %v4033 = vpop.xlane.xlu0 %4032
    %v4034 = vsel %vm322, %v4021, 0.0
    %4035 = vadd.xlane.f32.xlu0 %v4034
    %v4036 = vpop.xlane.xlu0 %4035
    %v4037 = vsel %vm322, %v4023, 0.0
    %4038 = vadd.xlane.f32.xlu0 %v4037
    %v4039 = vpop.xlane.xlu0 %4038
    %v4040 = vsel %vm322, %v4025, 0.0
    %4041 = vadd.xlane.f32.xlu0 %v4040
    %v4042 = vpop.xlane.xlu0 %4041
    %v4043 = vsel %vm322, %v4027, 0.0
    %4044 = vadd.xlane.f32.xlu0 %v4043
    %v4045 = vpop.xlane.xlu0 %4044
    %v4046 = vrcp.pop %v4030
    %v4047 = vrcp.pop %v4033
    %v4048 = vrcp.pop %v4036
    %v4049 = vrcp.pop %v4039
    %v4050 = vrcp.pop %v4042
    %v4051 = vrcp.pop %v4045
    %v4052 = vmul.f32 %v4017, %v4046
    %v4053 = vmul.f32 %v4019, %v4047
    %v4054 = vmul.f32 %v4021, %v4048
    %v4055 = vmul.f32 %v4023, %v4049
    %v4056 = vmul.f32 %v4025, %v4050
    %v4057 = vmul.f32 %v4027, %v4051
    %v4058 = vpack.c.bf16 %v4053, %v4052
    %v4059 = vpack.c.bf16 %v4054, %v4054
    %v4060 = vpack.c.bf16 %v4056, %v4055
    %v4061 = vpack.c.bf16 %v4057, %v4057
    %4062 = vrot.lane.b32.xlu0 %v3870, 68
    %v4063 = vpop.permute.xlu0 %4062
    %v4065 = vsel %vm322, %v4058, 0
    %v4068 = vsel %vm322, %v4059, 0
    %v4071 = vsel %vm401, %v4063, 0
    %4073 = vmatprep.subr.bf16.mxu0 0
    %4074 = vmatpush1.bf16.msra.mxu0 %v4071
    %4075 = vmatprep.subr.bf16.mxu0 0
    %4076 = vmatpush1.bf16.msra.mxu0 0
    %4077 = vmatprep.subr.bf16.mxu0 0
    %4078 = vmatpush1.bf16.msra.mxu0 0
    %4079 = vmatprep.subr.bf16.mxu0 0
    %4080 = vmatpush1.bf16.msra.mxu0 0
    %4081 = vmatprep.subr.bf16.mxu0 0
    %4082 = vmatpush1.bf16.msra.mxu0 0
    %4083 = vmatprep.subr.bf16.mxu0 0
    %4084 = vmatpush1.bf16.msra.mxu0 0
    %4085 = vmatprep.subr.bf16.mxu0 0
    %4086 = vmatpush1.bf16.msra.mxu0 0
    %4087 = vmatprep.subr.bf16.mxu0 0
    %4088 = vmatpush1.bf16.msra.mxu0 0
    %4089 = vmatprep.subr.bf16.mxu0 0
    %4090 = vmatpush1.bf16.msra.mxu0 0
    %4091 = vmatprep.subr.bf16.mxu0 0
    %4092 = vmatpush1.bf16.msra.mxu0 0
    %4093 = vmatprep.subr.bf16.mxu0 0
    %4094 = vmatpush1.bf16.msra.mxu0 0
    %4095 = vmatprep.subr.bf16.mxu0 0
    %4096 = vmatpush1.bf16.msra.mxu0 0
    %4097 = vmatprep.subr.bf16.mxu0 0
    %4098 = vmatpush1.bf16.msra.mxu0 0
    %4099 = vmatprep.subr.bf16.mxu0 0
    %4100 = vmatpush1.bf16.msra.mxu0 0
    %4101 = vmatprep.subr.bf16.mxu0 0
    %4102 = vmatpush1.bf16.msra.mxu0 0
    %4103 = vmatprep.subr.bf16.mxu0 0
    %4104 = vmatpush1.bf16.msra.mxu0 0
    %4105 = vmatprep.mubr.bf16.mxu0 0
    %4106 = vmatmul.mubr.bf16.gmra.mrb[0].mxu0 %v4065
    %v4107 = vpop.f32.mrb[0].mxu0
    %v4108 = vadd.f32 0.0, %v4107
    %v4109 = vpop.f32.mrb[0].mxu0
    %v4110 = vpop.f32.mrb[0].mxu0
    %v4111 = vadd.f32 0.0, %v4110
    %v4112 = vpop.f32.mrb[0].mxu0
    %4113 = vmatprep.mubr.bf16.mxu0 0
    %4114 = vmatmul.mubr.bf16.gmra.mrb[0].mxu0 %v4068
    %v4115 = vpop.f32.mrb[0].mxu0
    %v4116 = vadd.f32 0.0, %v4115
    %v4117 = vpop.f32.mrb[0].mxu0
    %v4118 = vpop.f32.mrb[0].mxu0
    %v4119 = vpop.f32.mrb[0].mxu0
    %4120 = vdwg.mxu0
    %4121 = vrot.lane.b32.xlu0 %v3871, 68
    %v4122 = vpop.permute.xlu0 %4121
    %v4124 = vsel %vm322, %v4060, 0
    %v4127 = vsel %vm322, %v4061, 0
    %v4130 = vsel %vm401, %v4122, 0
    %4132 = vmatprep.subr.bf16.mxu0 0
    %4133 = vmatpush1.bf16.msra.mxu0 %v4130
    %4134 = vmatprep.subr.bf16.mxu0 0
    %4135 = vmatpush1.bf16.msra.mxu0 0
    %4136 = vmatprep.subr.bf16.mxu0 0
    %4137 = vmatpush1.bf16.msra.mxu0 0
    %4138 = vmatprep.subr.bf16.mxu0 0
    %4139 = vmatpush1.bf16.msra.mxu0 0
    %4140 = vmatprep.subr.bf16.mxu0 0
    %4141 = vmatpush1.bf16.msra.mxu0 0
    %4142 = vmatprep.subr.bf16.mxu0 0
    %4143 = vmatpush1.bf16.msra.mxu0 0
    %4144 = vmatprep.subr.bf16.mxu0 0
    %4145 = vmatpush1.bf16.msra.mxu0 0
    %4146 = vmatprep.subr.bf16.mxu0 0
    %4147 = vmatpush1.bf16.msra.mxu0 0
    %4148 = vmatprep.subr.bf16.mxu0 0
    %4149 = vmatpush1.bf16.msra.mxu0 0
    %4150 = vmatprep.subr.bf16.mxu0 0
    %4151 = vmatpush1.bf16.msra.mxu0 0
    %4152 = vmatprep.subr.bf16.mxu0 0
    %4153 = vmatpush1.bf16.msra.mxu0 0
    %4154 = vmatprep.subr.bf16.mxu0 0
    %4155 = vmatpush1.bf16.msra.mxu0 0
    %4156 = vmatprep.subr.bf16.mxu0 0
    %4157 = vmatpush1.bf16.msra.mxu0 0
    %4158 = vmatprep.subr.bf16.mxu0 0
    %4159 = vmatpush1.bf16.msra.mxu0 0
    %4160 = vmatprep.subr.bf16.mxu0 0
    %4161 = vmatpush1.bf16.msra.mxu0 0
    %4162 = vmatprep.subr.bf16.mxu0 0
    %4163 = vmatpush1.bf16.msra.mxu0 0
    %4164 = vmatprep.mubr.bf16.mxu0 0
    %4165 = vmatmul.mubr.bf16.gmra.mrb[0].mxu0 %v4124
    %v4166 = vpop.f32.mrb[0].mxu0
    %v4167 = vadd.f32 0.0, %v4166
    %v4168 = vpop.f32.mrb[0].mxu0
    %v4169 = vpop.f32.mrb[0].mxu0
    %v4170 = vadd.f32 0.0, %v4169
    %v4171 = vpop.f32.mrb[0].mxu0
    %4172 = vmatprep.mubr.bf16.mxu0 0
    %4173 = vmatmul.mubr.bf16.gmra.mrb[0].mxu0 %v4127
    %v4174 = vpop.f32.mrb[0].mxu0
    %v4175 = vadd.f32 0.0, %v4174
    %v4176 = vpop.f32.mrb[0].mxu0
    %v4177 = vpop.f32.mrb[0].mxu0
    %v4178 = vpop.f32.mrb[0].mxu0
    %4179 = vdwg.mxu0
    %v4180 = vmul.f32 %v4108, %v176
    %v4181 = vmul.f32 %v4167, %v176
    %v4182 = vmul.f32 %v4111, %v184
    %v4183 = vmul.f32 %v4170, %v184
    %v4184 = vadd.f32 %v4180, %v4182
    %v4185 = vadd.f32 %v4181, %v4183
    %v4186 = vmul.f32 %v4116, %v192
    %v4187 = vmul.f32 %v4175, %v192
    %v4188 = vadd.f32 %v4184, %v4186
    %v4189 = vadd.f32 %v4185, %v4187
    %v4190 = vadd.f32 %v4188, %v3778
    %v4191 = vadd.f32 %v4189, %v3779
    %v4192 = vsel %vm114, %v4190, 0.0
    %4193 = vadd.xlane.f32.xlu0 %v4192
    %v4194 = vpop.xlane.xlu0 %4193
    %v4195 = vsel %vm114, %v4191, 0.0
    %4196 = vadd.xlane.f32.xlu0 %v4195
    %v4197 = vpop.xlane.xlu0 %4196
    %v4198 = vrot.slane %v4194, 4
    %v4199 = vadd.f32 %v4194, %v4198
    %v4200 = vrot.slane %v4199, 2
    %v4201 = vadd.f32 %v4199, %v4200
    %v4202 = vrot.slane %v4201, 1
    %v4203 = vadd.f32 %v4201, %v4202
    %v4204 = vrot.slane %v4197, 4
    %v4205 = vadd.f32 %v4197, %v4204
    %v4206 = vrot.slane %v4205, 2
    %v4207 = vadd.f32 %v4205, %v4206
    %v4208 = vrot.slane %v4207, 1
    %v4209 = vadd.f32 %v4207, %v4208
    %v4210 = vmul.f32 %v4203, %v81
    %v4211 = vmul.f32 %v4209, %v82
    %v4214 = vlaneseq
    %v4215 = vshrl.u32 %v4214, 7
    %v4216 = vsub.s32 0, %v4215
    %v4217 = vrot.slane %v4210, %v4216
    %v4218 = vlaneseq
    %v4219 = vshrl.u32 %v4218, 7
    %v4220 = vsub.s32 0, %v4219
    %v4221 = vrot.slane %v4211, %v4220
    %4222 = vset.pattern.permute.xlu0 0
    %4223 = vperm.xlu0 %4222, %v4217
    %v4224 = vpop.permute.xlu0 %4223
    %4226 = vset.pattern.permute.xlu0 0
    %4227 = vperm.xlu0 %4226, %v4221
    %v4228 = vpop.permute.xlu0 %4227
    %v4230 = vsub.f32 %v4190, %v4224
    %v4231 = vsub.f32 %v4191, %v4228
    %v4232 = vmul.f32 %v4230, %v4230
    %v4233 = vmul.f32 %v4231, %v4231
    %v4234 = vsel %vm114, %v4232, 0.0
    %4235 = vadd.xlane.f32.xlu0 %v4234
    %v4236 = vpop.xlane.xlu0 %4235
    %v4237 = vsel %vm114, %v4233, 0.0
    %4238 = vadd.xlane.f32.xlu0 %v4237
    %v4239 = vpop.xlane.xlu0 %4238
    %v4240 = vrot.slane %v4236, 4
    %v4241 = vadd.f32 %v4236, %v4240
    %v4242 = vrot.slane %v4241, 2
    %v4243 = vadd.f32 %v4241, %v4242
    %v4244 = vrot.slane %v4243, 1
    %v4245 = vadd.f32 %v4243, %v4244
    %v4246 = vrot.slane %v4239, 4
    %v4247 = vadd.f32 %v4239, %v4246
    %v4248 = vrot.slane %v4247, 2
    %v4249 = vadd.f32 %v4247, %v4248
    %v4250 = vrot.slane %v4249, 1
    %v4251 = vadd.f32 %v4249, %v4250
    %v4252 = vrsqrt.pop %v4245
    %v4253 = vrsqrt.pop %v4251
    %v4254 = vmul.f32 %v79, %v4252
    %v4255 = vmul.f32 %v80, %v4253
    %v4258 = vlaneseq
    %v4259 = vshrl.u32 %v4258, 7
    %v4260 = vsub.s32 0, %v4259
    %v4261 = vrot.slane %v4254, %v4260
    %v4262 = vlaneseq
    %v4263 = vshrl.u32 %v4262, 7
    %v4264 = vsub.s32 0, %v4263
    %v4265 = vrot.slane %v4255, %v4264
    %4266 = vset.pattern.permute.xlu0 0
    %4267 = vperm.xlu0 %4266, %v4261
    %v4268 = vpop.permute.xlu0 %4267
    %4270 = vset.pattern.permute.xlu0 0
    %4271 = vperm.xlu0 %4270, %v4265
    %v4272 = vpop.permute.xlu0 %4271
    %v4274 = vmul.f32 %v4230, %v4268
    %v4275 = vmul.f32 %v4231, %v4272
    %v4276 = vpack.c.bf16 %v4274, %v4274
    %v4277 = vpack.c.bf16 %v4275, %v4275
    %s4278 = scalar_lea.vmem [#allocation5], 80
    %v4279 = vld [vmem:[%s4278] sm:$0xf]
    %v4280 = vld [vmem:[%s4278 + $0x4] sm:$0xf]
    %v4281 = vld [vmem:[%s4278 + $0x8] sm:$0xf]
    %v4282 = vld [vmem:[%s4278 + $0xc] sm:$0x7]
    %v4285 = vunpack.c.l.b16 %v4276
    %v4286 = vunpack.c.l.b16 %v4277
    %v4287 = vpack.c.b16 %v4286, %v4285
    %v4292 = vunpack.c.l.b16 %v4279
    %v4293 = vunpack.c.l.b16 %v4280
    %v4294 = vunpack.c.l.b16 %v4281
    %v4295 = vunpack.c.l.b16 %v4282
    %v4296 = vpack.c.b16 %v4293, %v4292
    %v4297 = vpack.c.b16 %v4295, %v4294
    %v4300 = vsel %vm114, %v4287, 0
    %v4303 = vsel %vm118, %v4297, 0
    %4305 = vmatprep.subr.bf16.mxu0 0
    %4306 = vmatpush1.bf16.msra.mxu0 %v4296
    %4307 = vmatprep.subr.bf16.mxu0 0
    %4308 = vmatpush1.bf16.msra.mxu0 %v4303
    %4309 = vmatprep.subr.bf16.mxu0 0
    %4310 = vmatpush1.bf16.msra.mxu0 0
    %4311 = vmatprep.subr.bf16.mxu0 0
    %4312 = vmatpush1.bf16.msra.mxu0 0
    %4313 = vmatprep.subr.bf16.mxu0 0
    %4314 = vmatpush1.bf16.msra.mxu0 0
    %4315 = vmatprep.subr.bf16.mxu0 0
    %4316 = vmatpush1.bf16.msra.mxu0 0
    %4317 = vmatprep.subr.bf16.mxu0 0
    %4318 = vmatpush1.bf16.msra.mxu0 0
    %4319 = vmatprep.subr.bf16.mxu0 0
    %4320 = vmatpush1.bf16.msra.mxu0 0
    %4321 = vmatprep.subr.bf16.mxu0 0
    %4322 = vmatpush1.bf16.msra.mxu0 0
    %4323 = vmatprep.subr.bf16.mxu0 0
    %4324 = vmatpush1.bf16.msra.mxu0 0
    %4325 = vmatprep.subr.bf16.mxu0 0
    %4326 = vmatpush1.bf16.msra.mxu0 0
    %4327 = vmatprep.subr.bf16.mxu0 0
    %4328 = vmatpush1.bf16.msra.mxu0 0
    %4329 = vmatprep.subr.bf16.mxu0 0
    %4330 = vmatpush1.bf16.msra.mxu0 0
    %4331 = vmatprep.subr.bf16.mxu0 0
    %4332 = vmatpush1.bf16.msra.mxu0 0
    %4333 = vmatprep.subr.bf16.mxu0 0
    %4334 = vmatpush1.bf16.msra.mxu0 0
    %4335 = vmatprep.subr.bf16.mxu0 0
    %4336 = vmatpush1.bf16.msra.mxu0 0
    %4337 = vmatprep.mubr.bf16.mxu0 0
    %4338 = vmatmul.mubr.bf16.gmra.mrb[0].mxu0 %v4300
    %v4339 = vpop.f32.mrb[0].mxu0
    %v4340 = vadd.f32 0.0, %v4339
    %v4341 = vpop.f32.mrb[0].mxu0
    %v4342 = vpop.f32.mrb[0].mxu0
    %v4343 = vadd.f32 0.0, %v4342
    %v4344 = vpop.f32.mrb[0].mxu0
    %4345 = vdwg.mxu0
    %v4346 = vxor.u32 %v4340, 2147483648
    %v4347 = vxor.u32 %v4343, 2147483648
    %v4348 = vmul.f32 %v4346, 1.442695
    %v4349 = vpow.pop %v4348
    %v4350 = vmul.f32 %v4347, 1.442695
    %v4351 = vpow.pop %v4350
    %v4352 = vadd.f32 %v4349, 1.0
    %v4353 = vadd.f32 %v4351, 1.0
    %v4354 = vrcp.pop %v4352
    %v4355 = vmul.f32 1.0, %v4354
    %v4356 = vrcp.pop %v4353
    %v4357 = vmul.f32 1.0, %v4356
    %v4358 = vmul.f32 %v4340, %v4355
    %v4359 = vmul.f32 %v4343, %v4357
    %v4360 = vpack.c.bf16 %v4358, %v4358
    %v4361 = vpack.c.bf16 %v4359, %v4359
    %s4362 = scalar_lea.vmem [#allocation7], 80
    %v4363 = vld [vmem:[%s4362] sm:$0xf]
    %v4364 = vld [vmem:[%s4362 + $0x4] sm:$0xf]
    %v4365 = vld [vmem:[%s4362 + $0x8] sm:$0xf]
    %v4366 = vld [vmem:[%s4362 + $0xc] sm:$0x7]
    %v4369 = vunpack.c.l.b16 %v4360
    %v4370 = vunpack.c.l.b16 %v4361
    %v4371 = vpack.c.b16 %v4370, %v4369
    %v4376 = vunpack.c.l.b16 %v4363
    %v4377 = vunpack.c.l.b16 %v4364
    %v4378 = vunpack.c.l.b16 %v4365
    %v4379 = vunpack.c.l.b16 %v4366
    %v4380 = vpack.c.b16 %v4377, %v4376
    %v4381 = vpack.c.b16 %v4379, %v4378
    %v4384 = vsel %vm114, %v4371, 0
    %v4387 = vsel %vm118, %v4381, 0
    %4389 = vmatprep.subr.bf16.mxu0 0
    %4390 = vmatpush1.bf16.msra.mxu0 %v4380
    %4391 = vmatprep.subr.bf16.mxu0 0
    %4392 = vmatpush1.bf16.msra.mxu0 %v4387
    %4393 = vmatprep.subr.bf16.mxu0 0
    %4394 = vmatpush1.bf16.msra.mxu0 0
    %4395 = vmatprep.subr.bf16.mxu0 0
    %4396 = vmatpush1.bf16.msra.mxu0 0
    %4397 = vmatprep.subr.bf16.mxu0 0
    %4398 = vmatpush1.bf16.msra.mxu0 0
    %4399 = vmatprep.subr.bf16.mxu0 0
    %4400 = vmatpush1.bf16.msra.mxu0 0
    %4401 = vmatprep.subr.bf16.mxu0 0
    %4402 = vmatpush1.bf16.msra.mxu0 0
    %4403 = vmatprep.subr.bf16.mxu0 0
    %4404 = vmatpush1.bf16.msra.mxu0 0
    %4405 = vmatprep.subr.bf16.mxu0 0
    %4406 = vmatpush1.bf16.msra.mxu0 0
    %4407 = vmatprep.subr.bf16.mxu0 0
    %4408 = vmatpush1.bf16.msra.mxu0 0
    %4409 = vmatprep.subr.bf16.mxu0 0
    %4410 = vmatpush1.bf16.msra.mxu0 0
    %4411 = vmatprep.subr.bf16.mxu0 0
    %4412 = vmatpush1.bf16.msra.mxu0 0
    %4413 = vmatprep.subr.bf16.mxu0 0
    %4414 = vmatpush1.bf16.msra.mxu0 0
    %4415 = vmatprep.subr.bf16.mxu0 0
    %4416 = vmatpush1.bf16.msra.mxu0 0
    %4417 = vmatprep.subr.bf16.mxu0 0
    %4418 = vmatpush1.bf16.msra.mxu0 0
    %4419 = vmatprep.subr.bf16.mxu0 0
    %4420 = vmatpush1.bf16.msra.mxu0 0
    %4421 = vmatprep.mubr.bf16.mxu0 0
    %4422 = vmatmul.mubr.bf16.gmra.mrb[0].mxu0 %v4384
    %v4423 = vpop.f32.mrb[0].mxu0
    %v4424 = vadd.f32 %v4274, %v4423
    %v4425 = vpop.f32.mrb[0].mxu0
    %v4426 = vpop.f32.mrb[0].mxu0
    %v4427 = vadd.f32 %v4275, %v4426
    %v4428 = vpop.f32.mrb[0].mxu0
    %4429 = vdwg.mxu0
    %v4430 = vsel %vm114, %v4424, 0.0
    %4431 = vadd.xlane.f32.xlu0 %v4430
    %v4432 = vpop.xlane.xlu0 %4431
    %v4433 = vsel %vm114, %v4427, 0.0
    %4434 = vadd.xlane.f32.xlu0 %v4433
    %v4435 = vpop.xlane.xlu0 %4434
    %v4436 = vrot.slane %v4432, 4
    %v4437 = vadd.f32 %v4432, %v4436
    %v4438 = vrot.slane %v4437, 2
    %v4439 = vadd.f32 %v4437, %v4438
    %v4440 = vrot.slane %v4439, 1
    %v4441 = vadd.f32 %v4439, %v4440
    %v4442 = vrot.slane %v4435, 4
    %v4443 = vadd.f32 %v4435, %v4442
    %v4444 = vrot.slane %v4443, 2
    %v4445 = vadd.f32 %v4443, %v4444
    %v4446 = vrot.slane %v4445, 1
    %v4447 = vadd.f32 %v4445, %v4446
    %v4448 = vmul.f32 %v4441, %v81
    %v4449 = vmul.f32 %v4447, %v82
    %v4452 = vlaneseq
    %v4453 = vshrl.u32 %v4452, 7
    %v4454 = vsub.s32 0, %v4453
    %v4455 = vrot.slane %v4448, %v4454
    %v4456 = vlaneseq
    %v4457 = vshrl.u32 %v4456, 7
    %v4458 = vsub.s32 0, %v4457
    %v4459 = vrot.slane %v4449, %v4458
    %4460 = vset.pattern.permute.xlu0 0
    %4461 = vperm.xlu0 %4460, %v4455
    %v4462 = vpop.permute.xlu0 %4461
    %4464 = vset.pattern.permute.xlu0 0
    %4465 = vperm.xlu0 %4464, %v4459
    %v4466 = vpop.permute.xlu0 %4465
    %v4468 = vsub.f32 %v4424, %v4462
    %v4469 = vsub.f32 %v4427, %v4466
    %v4470 = vmul.f32 %v4468, %v4468
    %v4471 = vmul.f32 %v4469, %v4469
    %v4472 = vsel %vm114, %v4470, 0.0
    %4473 = vadd.xlane.f32.xlu0 %v4472
    %v4474 = vpop.xlane.xlu0 %4473
    %v4475 = vsel %vm114, %v4471, 0.0
    %4476 = vadd.xlane.f32.xlu0 %v4475
    %v4477 = vpop.xlane.xlu0 %4476
    %v4478 = vrot.slane %v4474, 4
    %v4479 = vadd.f32 %v4474, %v4478
    %v4480 = vrot.slane %v4479, 2
    %v4481 = vadd.f32 %v4479, %v4480
    %v4482 = vrot.slane %v4481, 1
    %v4483 = vadd.f32 %v4481, %v4482
    %v4484 = vrot.slane %v4477, 4
    %v4485 = vadd.f32 %v4477, %v4484
    %v4486 = vrot.slane %v4485, 2
    %v4487 = vadd.f32 %v4485, %v4486
    %v4488 = vrot.slane %v4487, 1
    %v4489 = vadd.f32 %v4487, %v4488
    %v4490 = vrsqrt.pop %v4483
    %v4491 = vrsqrt.pop %v4489
    %v4492 = vmul.f32 %v79, %v4490
    %v4493 = vmul.f32 %v80, %v4491
    %v4496 = vlaneseq
    %v4497 = vshrl.u32 %v4496, 7
    %v4498 = vsub.s32 0, %v4497
    %v4499 = vrot.slane %v4492, %v4498
    %v4500 = vlaneseq
    %v4501 = vshrl.u32 %v4500, 7
    %v4502 = vsub.s32 0, %v4501
    %v4503 = vrot.slane %v4493, %v4502
    %4504 = vset.pattern.permute.xlu0 0
    %4505 = vperm.xlu0 %4504, %v4499
    %v4506 = vpop.permute.xlu0 %4505
    %4508 = vset.pattern.permute.xlu0 0
    %4509 = vperm.xlu0 %4508, %v4503
    %v4510 = vpop.permute.xlu0 %4509
    %v4512 = vmul.f32 %v4468, %v4506
    %v4513 = vmul.f32 %v4469, %v4510
    %v4514 = vpack.c.bf16 %v4512, %v4512
    %v4515 = vpack.c.bf16 %v4513, %v4513
    %s4516 = scalar_lea.vmem [#allocation2], 96
    %v4517 = vld [vmem:[%s4516] sm:$0xf]
    %v4518 = vld [vmem:[%s4516 + $0x4] sm:$0xf]
    %v4519 = vld [vmem:[%s4516 + $0x8] sm:$0xf]
    %v4520 = vld [vmem:[%s4516 + $0xc] sm:$0x7]
    %v4523 = vunpack.c.l.b16 %v4514
    %v4524 = vunpack.c.l.b16 %v4515
    %v4525 = vpack.c.b16 %v4524, %v4523
    %v4530 = vunpack.c.l.b16 %v4517
    %v4531 = vunpack.c.l.b16 %v4518
    %v4532 = vunpack.c.l.b16 %v4519
    %v4533 = vunpack.c.l.b16 %v4520
    %v4534 = vpack.c.b16 %v4531, %v4530
    %v4535 = vpack.c.b16 %v4533, %v4532
    %v4538 = vsel %vm114, %v4525, 0
    %v4541 = vsel %vm118, %v4535, 0
    %4543 = vmatprep.subr.bf16.mxu0 0
    %4544 = vmatpush1.bf16.msra.mxu0 %v4534
    %4545 = vmatprep.subr.bf16.mxu0 0
    %4546 = vmatpush1.bf16.msra.mxu0 %v4541
    %4547 = vmatprep.subr.bf16.mxu0 0
    %4548 = vmatpush1.bf16.msra.mxu0 0
    %4549 = vmatprep.subr.bf16.mxu0 0
    %4550 = vmatpush1.bf16.msra.mxu0 0
    %4551 = vmatprep.subr.bf16.mxu0 0
    %4552 = vmatpush1.bf16.msra.mxu0 0
    %4553 = vmatprep.subr.bf16.mxu0 0
    %4554 = vmatpush1.bf16.msra.mxu0 0
    %4555 = vmatprep.subr.bf16.mxu0 0
    %4556 = vmatpush1.bf16.msra.mxu0 0
    %4557 = vmatprep.subr.bf16.mxu0 0
    %4558 = vmatpush1.bf16.msra.mxu0 0
    %4559 = vmatprep.subr.bf16.mxu0 0
    %4560 = vmatpush1.bf16.msra.mxu0 0
    %4561 = vmatprep.subr.bf16.mxu0 0
    %4562 = vmatpush1.bf16.msra.mxu0 0
    %4563 = vmatprep.subr.bf16.mxu0 0
    %4564 = vmatpush1.bf16.msra.mxu0 0
    %4565 = vmatprep.subr.bf16.mxu0 0
    %4566 = vmatpush1.bf16.msra.mxu0 0
    %4567 = vmatprep.subr.bf16.mxu0 0
    %4568 = vmatpush1.bf16.msra.mxu0 0
    %4569 = vmatprep.subr.bf16.mxu0 0
    %4570 = vmatpush1.bf16.msra.mxu0 0
    %4571 = vmatprep.subr.bf16.mxu0 0
    %4572 = vmatpush1.bf16.msra.mxu0 0
    %4573 = vmatprep.subr.bf16.mxu0 0
    %4574 = vmatpush1.bf16.msra.mxu0 0
    %4575 = vmatprep.mubr.bf16.mxu0 0
    %4576 = vmatmul.mubr.bf16.gmra.mrb[0].mxu0 %v4538
    %v4577 = vpop.f32.mrb[0].mxu0
    %v4578 = vadd.f32 0.0, %v4577
    %v4579 = vpop.f32.mrb[0].mxu0
    %v4580 = vpop.f32.mrb[0].mxu0
    %v4581 = vadd.f32 0.0, %v4580
    %v4582 = vpop.f32.mrb[0].mxu0
    %4583 = vdwg.mxu0
    %s4584 = scalar_lea.vmem %s3, 6
    %v4585 = vld [vmem:[%s4584] sm:$0x1]
    %v4587 = vlaneseq
    %v4588 = vshrl.u32 %v4587, 7
    %v4589 = vsub.s32 0, %v4588
    %v4590 = vrot.slane %v4585, %v4589
    %v4592 = vadd.f32 %v4578, %v4590
    %v4593 = vadd.f32 %v4581, %v4590
    %v4594 = vmul.f32 %v4592, %v176
    %v4595 = vmul.f32 %v4593, %v176
    %v4596 = vmul.f32 %v4592, %v184
    %v4597 = vmul.f32 %v4593, %v184
    %v4598 = vmul.f32 %v4592, %v192
    %v4599 = vmul.f32 %v4593, %v192
    %v4600 = vpack.c.bf16 %v4596, %v4594
    %v4601 = vpack.c.bf16 %v4598, %v4598
    %v4602 = vpack.c.bf16 %v4597, %v4595
    %v4603 = vpack.c.bf16 %v4599, %v4599
    %v4604 = vpack.c.bf16 %v4578, %v4578
    %v4605 = vpack.c.bf16 %v4581, %v4581
    %4607 = vrot.lane.b32.xlu0 %v4604, 98
    %v4608 = vpop.permute.xlu0 %4607
    %v4610 = vsel %vm114, %v4600, 0
    %v4613 = vsel %vm114, %v4601, 0
    %v4616 = vsel %vm114, %v4608, 0
    %4618 = vmatprep.subr.bf16.mxu0 0
    %4619 = vmatpush1.bf16.xpose.msra.mxu0 %v4616
    %4620 = vmatprep.subr.bf16.mxu0 0
    %4621 = vmatpush1.bf16.xpose.msra.mxu0 0
    %4622 = vmatprep.subr.bf16.mxu0 0
    %4623 = vmatpush1.bf16.xpose.msra.mxu0 0
    %4624 = vmatprep.subr.bf16.mxu0 0
    %4625 = vmatpush1.bf16.xpose.msra.mxu0 0
    %4626 = vmatprep.subr.bf16.mxu0 0
    %4627 = vmatpush1.bf16.xpose.msra.mxu0 0
    %4628 = vmatprep.subr.bf16.mxu0 0
    %4629 = vmatpush1.bf16.xpose.msra.mxu0 0
    %4630 = vmatprep.subr.bf16.mxu0 0
    %4631 = vmatpush1.bf16.xpose.msra.mxu0 0
    %4632 = vmatprep.subr.bf16.mxu0 0
    %4633 = vmatpush1.bf16.xpose.msra.mxu0 0
    %4634 = vmatprep.subr.bf16.mxu0 0
    %4635 = vmatpush1.bf16.xpose.msra.mxu0 0
    %4636 = vmatprep.subr.bf16.mxu0 0
    %4637 = vmatpush1.bf16.xpose.msra.mxu0 0
    %4638 = vmatprep.subr.bf16.mxu0 0
    %4639 = vmatpush1.bf16.xpose.msra.mxu0 0
    %4640 = vmatprep.subr.bf16.mxu0 0
    %4641 = vmatpush1.bf16.xpose.msra.mxu0 0
    %4642 = vmatprep.subr.bf16.mxu0 0
    %4643 = vmatpush1.bf16.xpose.msra.mxu0 0
    %4644 = vmatprep.subr.bf16.mxu0 0
    %4645 = vmatpush1.bf16.xpose.msra.mxu0 0
    %4646 = vmatprep.subr.bf16.mxu0 0
    %4647 = vmatpush1.bf16.xpose.msra.mxu0 0
    %4648 = vmatprep.subr.bf16.mxu0 0
    %4649 = vmatpush1.bf16.xpose.msra.mxu0 0
    %4650 = vmatprep.mubr.bf16.mxu0 0
    %4651 = vmatmul.mubr.bf16.gmra.mrb[0].mxu0 %v4610
    %v4652 = vpop.f32.mrb[0].mxu0
    %v4653 = vadd.f32 0.0, %v4652
    %v4654 = vpop.f32.mrb[0].mxu0
    %v4655 = vpop.f32.mrb[0].mxu0
    %v4656 = vadd.f32 0.0, %v4655
    %v4657 = vpop.f32.mrb[0].mxu0
    %4658 = vmatprep.mubr.bf16.mxu0 0
    %4659 = vmatmul.mubr.bf16.gmra.mrb[0].mxu0 %v4613
    %v4660 = vpop.f32.mrb[0].mxu0
    %v4661 = vadd.f32 0.0, %v4660
    %v4662 = vpop.f32.mrb[0].mxu0
    %v4663 = vpop.f32.mrb[0].mxu0
    %v4664 = vpop.f32.mrb[0].mxu0
    %4665 = vdwg.mxu0
    %4667 = vrot.lane.b32.xlu0 %v4605, 98
    %v4668 = vpop.permute.xlu0 %4667
    %v4670 = vsel %vm114, %v4602, 0
    %v4673 = vsel %vm114, %v4603, 0
    %v4676 = vsel %vm114, %v4668, 0
    %4678 = vmatprep.subr.bf16.mxu0 0
    %4679 = vmatpush1.bf16.xpose.msra.mxu0 %v4676
    %4680 = vmatprep.subr.bf16.mxu0 0
    %4681 = vmatpush1.bf16.xpose.msra.mxu0 0
    %4682 = vmatprep.subr.bf16.mxu0 0
    %4683 = vmatpush1.bf16.xpose.msra.mxu0 0
    %4684 = vmatprep.subr.bf16.mxu0 0
    %4685 = vmatpush1.bf16.xpose.msra.mxu0 0
    %4686 = vmatprep.subr.bf16.mxu0 0
    %4687 = vmatpush1.bf16.xpose.msra.mxu0 0
    %4688 = vmatprep.subr.bf16.mxu0 0
    %4689 = vmatpush1.bf16.xpose.msra.mxu0 0
    %4690 = vmatprep.subr.bf16.mxu0 0
    %4691 = vmatpush1.bf16.xpose.msra.mxu0 0
    %4692 = vmatprep.subr.bf16.mxu0 0
    %4693 = vmatpush1.bf16.xpose.msra.mxu0 0
    %4694 = vmatprep.subr.bf16.mxu0 0
    %4695 = vmatpush1.bf16.xpose.msra.mxu0 0
    %4696 = vmatprep.subr.bf16.mxu0 0
    %4697 = vmatpush1.bf16.xpose.msra.mxu0 0
    %4698 = vmatprep.subr.bf16.mxu0 0
    %4699 = vmatpush1.bf16.xpose.msra.mxu0 0
    %4700 = vmatprep.subr.bf16.mxu0 0
    %4701 = vmatpush1.bf16.xpose.msra.mxu0 0
    %4702 = vmatprep.subr.bf16.mxu0 0
    %4703 = vmatpush1.bf16.xpose.msra.mxu0 0
    %4704 = vmatprep.subr.bf16.mxu0 0
    %4705 = vmatpush1.bf16.xpose.msra.mxu0 0
    %4706 = vmatprep.subr.bf16.mxu0 0
    %4707 = vmatpush1.bf16.xpose.msra.mxu0 0
    %4708 = vmatprep.subr.bf16.mxu0 0
    %4709 = vmatpush1.bf16.xpose.msra.mxu0 0
    %4710 = vmatprep.mubr.bf16.mxu0 0
    %4711 = vmatmul.mubr.bf16.gmra.mrb[0].mxu0 %v4670
    %v4712 = vpop.f32.mrb[0].mxu0
    %v4713 = vadd.f32 0.0, %v4712
    %v4714 = vpop.f32.mrb[0].mxu0
    %v4715 = vpop.f32.mrb[0].mxu0
    %v4716 = vadd.f32 0.0, %v4715
    %v4717 = vpop.f32.mrb[0].mxu0
    %4718 = vmatprep.mubr.bf16.mxu0 0
    %4719 = vmatmul.mubr.bf16.gmra.mrb[0].mxu0 %v4673
    %v4720 = vpop.f32.mrb[0].mxu0
    %v4721 = vadd.f32 0.0, %v4720
    %v4722 = vpop.f32.mrb[0].mxu0
    %v4723 = vpop.f32.mrb[0].mxu0
    %v4724 = vpop.f32.mrb[0].mxu0
    %4725 = vdwg.mxu0
    %v4726 = vsel %vm322, %v4653, -inf
    %4727 = vmax.xlane.f32.xlu0 %v4726
    %v4728 = vpop.xlane.xlu0 %4727
    %v4729 = vsel %vm322, %v4656, -inf
    %4730 = vmax.xlane.f32.xlu0 %v4729
    %v4731 = vpop.xlane.xlu0 %4730
    %v4732 = vsel %vm322, %v4661, -inf
    %4733 = vmax.xlane.f32.xlu0 %v4732
    %v4734 = vpop.xlane.xlu0 %4733
    %v4735 = vsel %vm322, %v4713, -inf
    %4736 = vmax.xlane.f32.xlu0 %v4735
    %v4737 = vpop.xlane.xlu0 %4736
    %v4738 = vsel %vm322, %v4716, -inf
    %4739 = vmax.xlane.f32.xlu0 %v4738
    %v4740 = vpop.xlane.xlu0 %4739
    %v4741 = vsel %vm322, %v4721, -inf
    %4742 = vmax.xlane.f32.xlu0 %v4741
    %v4743 = vpop.xlane.xlu0 %4742
    %v4744 = vsub.f32 %v4653, %v4728
    %v4745 = vsub.f32 %v4656, %v4731
    %v4746 = vsub.f32 %v4661, %v4734
    %v4747 = vsub.f32 %v4713, %v4737
    %v4748 = vsub.f32 %v4716, %v4740
    %v4749 = vsub.f32 %v4721, %v4743
    %v4750 = vmul.f32 %v4744, 1.442695
    %v4751 = vpow.pop %v4750
    %v4752 = vmul.f32 %v4745, 1.442695
    %v4753 = vpow.pop %v4752
    %v4754 = vmul.f32 %v4746, 1.442695
    %v4755 = vpow.pop %v4754
    %v4756 = vmul.f32 %v4747, 1.442695
    %v4757 = vpow.pop %v4756
    %v4758 = vmul.f32 %v4748, 1.442695
    %v4759 = vpow.pop %v4758
    %v4760 = vmul.f32 %v4749, 1.442695
    %v4761 = vpow.pop %v4760
    %v4762 = vsel %vm322, %v4751, 0.0
    %4763 = vadd.xlane.f32.xlu0 %v4762
    %v4764 = vpop.xlane.xlu0 %4763
    %v4765 = vsel %vm322, %v4753, 0.0
    %4766 = vadd.xlane.f32.xlu0 %v4765
    %v4767 = vpop.xlane.xlu0 %4766
    %v4768 = vsel %vm322, %v4755, 0.0
    %4769 = vadd.xlane.f32.xlu0 %v4768
    %v4770 = vpop.xlane.xlu0 %4769
    %v4771 = vsel %vm322, %v4757, 0.0
    %4772 = vadd.xlane.f32.xlu0 %v4771
    %v4773 = vpop.xlane.xlu0 %4772
    %v4774 = vsel %vm322, %v4759, 0.0
    %4775 = vadd.xlane.f32.xlu0 %v4774
    %v4776 = vpop.xlane.xlu0 %4775
    %v4777 = vsel %vm322, %v4761, 0.0
    %4778 = vadd.xlane.f32.xlu0 %v4777
    %v4779 = vpop.xlane.xlu0 %4778
    %v4780 = vrcp.pop %v4764
    %v4781 = vrcp.pop %v4767
    %v4782 = vrcp.pop %v4770
    %v4783 = vrcp.pop %v4773
    %v4784 = vrcp.pop %v4776
    %v4785 = vrcp.pop %v4779
    %v4786 = vmul.f32 %v4751, %v4780
    %v4787 = vmul.f32 %v4753, %v4781
    %v4788 = vmul.f32 %v4755, %v4782
    %v4789 = vmul.f32 %v4757, %v4783
    %v4790 = vmul.f32 %v4759, %v4784
    %v4791 = vmul.f32 %v4761, %v4785
    %v4792 = vpack.c.bf16 %v4787, %v4786
    %v4793 = vpack.c.bf16 %v4788, %v4788
    %v4794 = vpack.c.bf16 %v4790, %v4789
    %v4795 = vpack.c.bf16 %v4791, %v4791
    %4796 = vrot.lane.b32.xlu0 %v4604, 68
    %v4797 = vpop.permute.xlu0 %4796
    %v4799 = vsel %vm322, %v4792, 0
    %v4802 = vsel %vm322, %v4793, 0
    %v4805 = vsel %vm401, %v4797, 0
    %4807 = vmatprep.subr.bf16.mxu0 0
    %4808 = vmatpush1.bf16.msra.mxu0 %v4805
    %4809 = vmatprep.subr.bf16.mxu0 0
    %4810 = vmatpush1.bf16.msra.mxu0 0
    %4811 = vmatprep.subr.bf16.mxu0 0
    %4812 = vmatpush1.bf16.msra.mxu0 0
    %4813 = vmatprep.subr.bf16.mxu0 0
    %4814 = vmatpush1.bf16.msra.mxu0 0
    %4815 = vmatprep.subr.bf16.mxu0 0
    %4816 = vmatpush1.bf16.msra.mxu0 0
    %4817 = vmatprep.subr.bf16.mxu0 0
    %4818 = vmatpush1.bf16.msra.mxu0 0
    %4819 = vmatprep.subr.bf16.mxu0 0
    %4820 = vmatpush1.bf16.msra.mxu0 0
    %4821 = vmatprep.subr.bf16.mxu0 0
    %4822 = vmatpush1.bf16.msra.mxu0 0
    %4823 = vmatprep.subr.bf16.mxu0 0
    %4824 = vmatpush1.bf16.msra.mxu0 0
    %4825 = vmatprep.subr.bf16.mxu0 0
    %4826 = vmatpush1.bf16.msra.mxu0 0
    %4827 = vmatprep.subr.bf16.mxu0 0
    %4828 = vmatpush1.bf16.msra.mxu0 0
    %4829 = vmatprep.subr.bf16.mxu0 0
    %4830 = vmatpush1.bf16.msra.mxu0 0
    %4831 = vmatprep.subr.bf16.mxu0 0
    %4832 = vmatpush1.bf16.msra.mxu0 0
    %4833 = vmatprep.subr.bf16.mxu0 0
    %4834 = vmatpush1.bf16.msra.mxu0 0
    %4835 = vmatprep.subr.bf16.mxu0 0
    %4836 = vmatpush1.bf16.msra.mxu0 0
    %4837 = vmatprep.subr.bf16.mxu0 0
    %4838 = vmatpush1.bf16.msra.mxu0 0
    %4839 = vmatprep.mubr.bf16.mxu0 0
    %4840 = vmatmul.mubr.bf16.gmra.mrb[0].mxu0 %v4799
    %v4841 = vpop.f32.mrb[0].mxu0
    %v4842 = vadd.f32 0.0, %v4841
    %v4843 = vpop.f32.mrb[0].mxu0
    %v4844 = vpop.f32.mrb[0].mxu0
    %v4845 = vadd.f32 0.0, %v4844
    %v4846 = vpop.f32.mrb[0].mxu0
    %4847 = vmatprep.mubr.bf16.mxu0 0
    %4848 = vmatmul.mubr.bf16.gmra.mrb[0].mxu0 %v4802
    %v4849 = vpop.f32.mrb[0].mxu0
    %v4850 = vadd.f32 0.0, %v4849
    %v4851 = vpop.f32.mrb[0].mxu0
    %v4852 = vpop.f32.mrb[0].mxu0
    %v4853 = vpop.f32.mrb[0].mxu0
    %4854 = vdwg.mxu0
    %4855 = vrot.lane.b32.xlu0 %v4605, 68
    %v4856 = vpop.permute.xlu0 %4855
    %v4858 = vsel %vm322, %v4794, 0
    %v4861 = vsel %vm322, %v4795, 0
    %v4864 = vsel %vm401, %v4856, 0
    %4866 = vmatprep.subr.bf16.mxu0 0
    %4867 = vmatpush1.bf16.msra.mxu0 %v4864
    %4868 = vmatprep.subr.bf16.mxu0 0
    %4869 = vmatpush1.bf16.msra.mxu0 0
    %4870 = vmatprep.subr.bf16.mxu0 0
    %4871 = vmatpush1.bf16.msra.mxu0 0
    %4872 = vmatprep.subr.bf16.mxu0 0
    %4873 = vmatpush1.bf16.msra.mxu0 0
    %4874 = vmatprep.subr.bf16.mxu0 0
    %4875 = vmatpush1.bf16.msra.mxu0 0
    %4876 = vmatprep.subr.bf16.mxu0 0
    %4877 = vmatpush1.bf16.msra.mxu0 0
    %4878 = vmatprep.subr.bf16.mxu0 0
    %4879 = vmatpush1.bf16.msra.mxu0 0
    %4880 = vmatprep.subr.bf16.mxu0 0
    %4881 = vmatpush1.bf16.msra.mxu0 0
    %4882 = vmatprep.subr.bf16.mxu0 0
    %4883 = vmatpush1.bf16.msra.mxu0 0
    %4884 = vmatprep.subr.bf16.mxu0 0
    %4885 = vmatpush1.bf16.msra.mxu0 0
    %4886 = vmatprep.subr.bf16.mxu0 0
    %4887 = vmatpush1.bf16.msra.mxu0 0
    %4888 = vmatprep.subr.bf16.mxu0 0
    %4889 = vmatpush1.bf16.msra.mxu0 0
    %4890 = vmatprep.subr.bf16.mxu0 0
    %4891 = vmatpush1.bf16.msra.mxu0 0
    %4892 = vmatprep.subr.bf16.mxu0 0
    %4893 = vmatpush1.bf16.msra.mxu0 0
    %4894 = vmatprep.subr.bf16.mxu0 0
    %4895 = vmatpush1.bf16.msra.mxu0 0
    %4896 = vmatprep.subr.bf16.mxu0 0
    %4897 = vmatpush1.bf16.msra.mxu0 0
    %4898 = vmatprep.mubr.bf16.mxu0 0
    %4899 = vmatmul.mubr.bf16.gmra.mrb[0].mxu0 %v4858
    %v4900 = vpop.f32.mrb[0].mxu0
    %v4901 = vadd.f32 0.0, %v4900
    %v4902 = vpop.f32.mrb[0].mxu0
    %v4903 = vpop.f32.mrb[0].mxu0
    %v4904 = vadd.f32 0.0, %v4903
    %v4905 = vpop.f32.mrb[0].mxu0
    %4906 = vmatprep.mubr.bf16.mxu0 0
    %4907 = vmatmul.mubr.bf16.gmra.mrb[0].mxu0 %v4861
    %v4908 = vpop.f32.mrb[0].mxu0
    %v4909 = vadd.f32 0.0, %v4908
    %v4910 = vpop.f32.mrb[0].mxu0
    %v4911 = vpop.f32.mrb[0].mxu0
    %v4912 = vpop.f32.mrb[0].mxu0
    %4913 = vdwg.mxu0
    %v4914 = vmul.f32 %v4842, %v176
    %v4915 = vmul.f32 %v4901, %v176
    %v4916 = vmul.f32 %v4845, %v184
    %v4917 = vmul.f32 %v4904, %v184
    %v4918 = vadd.f32 %v4914, %v4916
    %v4919 = vadd.f32 %v4915, %v4917
    %v4920 = vmul.f32 %v4850, %v192
    %v4921 = vmul.f32 %v4909, %v192
    %v4922 = vadd.f32 %v4918, %v4920
    %v4923 = vadd.f32 %v4919, %v4921
    %v4924 = vadd.f32 %v4922, %v4512
    %v4925 = vadd.f32 %v4923, %v4513
    %v4926 = vsel %vm114, %v4924, 0.0
    %4927 = vadd.xlane.f32.xlu0 %v4926
    %v4928 = vpop.xlane.xlu0 %4927
    %v4929 = vsel %vm114, %v4925, 0.0
    %4930 = vadd.xlane.f32.xlu0 %v4929
    %v4931 = vpop.xlane.xlu0 %4930
    %v4932 = vrot.slane %v4928, 4
    %v4933 = vadd.f32 %v4928, %v4932
    %v4934 = vrot.slane %v4933, 2
    %v4935 = vadd.f32 %v4933, %v4934
    %v4936 = vrot.slane %v4935, 1
    %v4937 = vadd.f32 %v4935, %v4936
    %v4938 = vrot.slane %v4931, 4
    %v4939 = vadd.f32 %v4931, %v4938
    %v4940 = vrot.slane %v4939, 2
    %v4941 = vadd.f32 %v4939, %v4940
    %v4942 = vrot.slane %v4941, 1
    %v4943 = vadd.f32 %v4941, %v4942
    %v4944 = vmul.f32 %v4937, %v81
    %v4945 = vmul.f32 %v4943, %v82
    %v4948 = vlaneseq
    %v4949 = vshrl.u32 %v4948, 7
    %v4950 = vsub.s32 0, %v4949
    %v4951 = vrot.slane %v4944, %v4950
    %v4952 = vlaneseq
    %v4953 = vshrl.u32 %v4952, 7
    %v4954 = vsub.s32 0, %v4953
    %v4955 = vrot.slane %v4945, %v4954
    %4956 = vset.pattern.permute.xlu0 0
    %4957 = vperm.xlu0 %4956, %v4951
    %v4958 = vpop.permute.xlu0 %4957
    %4960 = vset.pattern.permute.xlu0 0
    %4961 = vperm.xlu0 %4960, %v4955
    %v4962 = vpop.permute.xlu0 %4961
    %v4964 = vsub.f32 %v4924, %v4958
    %v4965 = vsub.f32 %v4925, %v4962
    %v4966 = vmul.f32 %v4964, %v4964
    %v4967 = vmul.f32 %v4965, %v4965
    %v4968 = vsel %vm114, %v4966, 0.0
    %4969 = vadd.xlane.f32.xlu0 %v4968
    %v4970 = vpop.xlane.xlu0 %4969
    %v4971 = vsel %vm114, %v4967, 0.0
    %4972 = vadd.xlane.f32.xlu0 %v4971
    %v4973 = vpop.xlane.xlu0 %4972
    %v4974 = vrot.slane %v4970, 4
    %v4975 = vadd.f32 %v4970, %v4974
    %v4976 = vrot.slane %v4975, 2
    %v4977 = vadd.f32 %v4975, %v4976
    %v4978 = vrot.slane %v4977, 1
    %v4979 = vadd.f32 %v4977, %v4978
    %v4980 = vrot.slane %v4973, 4
    %v4981 = vadd.f32 %v4973, %v4980
    %v4982 = vrot.slane %v4981, 2
    %v4983 = vadd.f32 %v4981, %v4982
    %v4984 = vrot.slane %v4983, 1
    %v4985 = vadd.f32 %v4983, %v4984
    %v4986 = vrsqrt.pop %v4979
    %v4987 = vrsqrt.pop %v4985
    %v4988 = vmul.f32 %v79, %v4986
    %v4989 = vmul.f32 %v80, %v4987
    %v4992 = vlaneseq
    %v4993 = vshrl.u32 %v4992, 7
    %v4994 = vsub.s32 0, %v4993
    %v4995 = vrot.slane %v4988, %v4994
    %v4996 = vlaneseq
    %v4997 = vshrl.u32 %v4996, 7
    %v4998 = vsub.s32 0, %v4997
    %v4999 = vrot.slane %v4989, %v4998
    %5000 = vset.pattern.permute.xlu0 0
    %5001 = vperm.xlu0 %5000, %v4995
    %v5002 = vpop.permute.xlu0 %5001
    %5004 = vset.pattern.permute.xlu0 0
    %5005 = vperm.xlu0 %5004, %v4999
    %v5006 = vpop.permute.xlu0 %5005
    %v5008 = vmul.f32 %v4964, %v5002
    %v5009 = vmul.f32 %v4965, %v5006
    %v5010 = vpack.c.bf16 %v5008, %v5008
    %v5011 = vpack.c.bf16 %v5009, %v5009
    %s5012 = scalar_lea.vmem [#allocation5], 96
    %v5013 = vld [vmem:[%s5012] sm:$0xf]
    %v5014 = vld [vmem:[%s5012 + $0x4] sm:$0xf]
    %v5015 = vld [vmem:[%s5012 + $0x8] sm:$0xf]
    %v5016 = vld [vmem:[%s5012 + $0xc] sm:$0x7]
    %v5019 = vunpack.c.l.b16 %v5010
    %v5020 = vunpack.c.l.b16 %v5011
    %v5021 = vpack.c.b16 %v5020, %v5019
    %v5026 = vunpack.c.l.b16 %v5013
    %v5027 = vunpack.c.l.b16 %v5014
    %v5028 = vunpack.c.l.b16 %v5015
    %v5029 = vunpack.c.l.b16 %v5016
    %v5030 = vpack.c.b16 %v5027, %v5026
    %v5031 = vpack.c.b16 %v5029, %v5028
    %v5034 = vsel %vm114, %v5021, 0
    %v5037 = vsel %vm118, %v5031, 0
    %5039 = vmatprep.subr.bf16.mxu0 0
    %5040 = vmatpush1.bf16.msra.mxu0 %v5030
    %5041 = vmatprep.subr.bf16.mxu0 0
    %5042 = vmatpush1.bf16.msra.mxu0 %v5037
    %5043 = vmatprep.subr.bf16.mxu0 0
    %5044 = vmatpush1.bf16.msra.mxu0 0
    %5045 = vmatprep.subr.bf16.mxu0 0
    %5046 = vmatpush1.bf16.msra.mxu0 0
    %5047 = vmatprep.subr.bf16.mxu0 0
    %5048 = vmatpush1.bf16.msra.mxu0 0
    %5049 = vmatprep.subr.bf16.mxu0 0
    %5050 = vmatpush1.bf16.msra.mxu0 0
    %5051 = vmatprep.subr.bf16.mxu0 0
    %5052 = vmatpush1.bf16.msra.mxu0 0
    %5053 = vmatprep.subr.bf16.mxu0 0
    %5054 = vmatpush1.bf16.msra.mxu0 0
    %5055 = vmatprep.subr.bf16.mxu0 0
    %5056 = vmatpush1.bf16.msra.mxu0 0
    %5057 = vmatprep.subr.bf16.mxu0 0
    %5058 = vmatpush1.bf16.msra.mxu0 0
    %5059 = vmatprep.subr.bf16.mxu0 0
    %5060 = vmatpush1.bf16.msra.mxu0 0
    %5061 = vmatprep.subr.bf16.mxu0 0
    %5062 = vmatpush1.bf16.msra.mxu0 0
    %5063 = vmatprep.subr.bf16.mxu0 0
    %5064 = vmatpush1.bf16.msra.mxu0 0
    %5065 = vmatprep.subr.bf16.mxu0 0
    %5066 = vmatpush1.bf16.msra.mxu0 0
    %5067 = vmatprep.subr.bf16.mxu0 0
    %5068 = vmatpush1.bf16.msra.mxu0 0
    %5069 = vmatprep.subr.bf16.mxu0 0
    %5070 = vmatpush1.bf16.msra.mxu0 0
    %5071 = vmatprep.mubr.bf16.mxu0 0
    %5072 = vmatmul.mubr.bf16.gmra.mrb[0].mxu0 %v5034
    %v5073 = vpop.f32.mrb[0].mxu0
    %v5074 = vadd.f32 0.0, %v5073
    %v5075 = vpop.f32.mrb[0].mxu0
    %v5076 = vpop.f32.mrb[0].mxu0
    %v5077 = vadd.f32 0.0, %v5076
    %v5078 = vpop.f32.mrb[0].mxu0
    %5079 = vdwg.mxu0
    %v5080 = vxor.u32 %v5074, 2147483648
    %v5081 = vxor.u32 %v5077, 2147483648
    %v5082 = vmul.f32 %v5080, 1.442695
    %v5083 = vpow.pop %v5082
    %v5084 = vmul.f32 %v5081, 1.442695
    %v5085 = vpow.pop %v5084
    %v5086 = vadd.f32 %v5083, 1.0
    %v5087 = vadd.f32 %v5085, 1.0
    %v5088 = vrcp.pop %v5086
    %v5089 = vmul.f32 1.0, %v5088
    %v5090 = vrcp.pop %v5087
    %v5091 = vmul.f32 1.0, %v5090
    %v5092 = vmul.f32 %v5074, %v5089
    %v5093 = vmul.f32 %v5077, %v5091
    %v5094 = vpack.c.bf16 %v5092, %v5092
    %v5095 = vpack.c.bf16 %v5093, %v5093
    %s5096 = scalar_lea.vmem [#allocation7], 96
    %v5097 = vld [vmem:[%s5096] sm:$0xf]
    %v5098 = vld [vmem:[%s5096 + $0x4] sm:$0xf]
    %v5099 = vld [vmem:[%s5096 + $0x8] sm:$0xf]
    %v5100 = vld [vmem:[%s5096 + $0xc] sm:$0x7]
    %v5103 = vunpack.c.l.b16 %v5094
    %v5104 = vunpack.c.l.b16 %v5095
    %v5105 = vpack.c.b16 %v5104, %v5103
    %v5110 = vunpack.c.l.b16 %v5097
    %v5111 = vunpack.c.l.b16 %v5098
    %v5112 = vunpack.c.l.b16 %v5099
    %v5113 = vunpack.c.l.b16 %v5100
    %v5114 = vpack.c.b16 %v5111, %v5110
    %v5115 = vpack.c.b16 %v5113, %v5112
    %v5118 = vsel %vm114, %v5105, 0
    %v5121 = vsel %vm118, %v5115, 0
    %5123 = vmatprep.subr.bf16.mxu0 0
    %5124 = vmatpush1.bf16.msra.mxu0 %v5114
    %5125 = vmatprep.subr.bf16.mxu0 0
    %5126 = vmatpush1.bf16.msra.mxu0 %v5121
    %5127 = vmatprep.subr.bf16.mxu0 0
    %5128 = vmatpush1.bf16.msra.mxu0 0
    %5129 = vmatprep.subr.bf16.mxu0 0
    %5130 = vmatpush1.bf16.msra.mxu0 0
    %5131 = vmatprep.subr.bf16.mxu0 0
    %5132 = vmatpush1.bf16.msra.mxu0 0
    %5133 = vmatprep.subr.bf16.mxu0 0
    %5134 = vmatpush1.bf16.msra.mxu0 0
    %5135 = vmatprep.subr.bf16.mxu0 0
    %5136 = vmatpush1.bf16.msra.mxu0 0
    %5137 = vmatprep.subr.bf16.mxu0 0
    %5138 = vmatpush1.bf16.msra.mxu0 0
    %5139 = vmatprep.subr.bf16.mxu0 0
    %5140 = vmatpush1.bf16.msra.mxu0 0
    %5141 = vmatprep.subr.bf16.mxu0 0
    %5142 = vmatpush1.bf16.msra.mxu0 0
    %5143 = vmatprep.subr.bf16.mxu0 0
    %5144 = vmatpush1.bf16.msra.mxu0 0
    %5145 = vmatprep.subr.bf16.mxu0 0
    %5146 = vmatpush1.bf16.msra.mxu0 0
    %5147 = vmatprep.subr.bf16.mxu0 0
    %5148 = vmatpush1.bf16.msra.mxu0 0
    %5149 = vmatprep.subr.bf16.mxu0 0
    %5150 = vmatpush1.bf16.msra.mxu0 0
    %5151 = vmatprep.subr.bf16.mxu0 0
    %5152 = vmatpush1.bf16.msra.mxu0 0
    %5153 = vmatprep.subr.bf16.mxu0 0
    %5154 = vmatpush1.bf16.msra.mxu0 0
    %5155 = vmatprep.mubr.bf16.mxu0 0
    %5156 = vmatmul.mubr.bf16.gmra.mrb[0].mxu0 %v5118
    %v5157 = vpop.f32.mrb[0].mxu0
    %v5158 = vadd.f32 %v5008, %v5157
    %v5159 = vpop.f32.mrb[0].mxu0
    %v5160 = vpop.f32.mrb[0].mxu0
    %v5161 = vadd.f32 %v5009, %v5160
    %v5162 = vpop.f32.mrb[0].mxu0
    %5163 = vdwg.mxu0
    %v5164 = vsel %vm114, %v5158, 0.0
    %5165 = vadd.xlane.f32.xlu0 %v5164
    %v5166 = vpop.xlane.xlu0 %5165
    %v5167 = vsel %vm114, %v5161, 0.0
    %5168 = vadd.xlane.f32.xlu0 %v5167
    %v5169 = vpop.xlane.xlu0 %5168
    %v5170 = vrot.slane %v5166, 4
    %v5171 = vadd.f32 %v5166, %v5170
    %v5172 = vrot.slane %v5171, 2
    %v5173 = vadd.f32 %v5171, %v5172
    %v5174 = vrot.slane %v5173, 1
    %v5175 = vadd.f32 %v5173, %v5174
    %v5176 = vrot.slane %v5169, 4
    %v5177 = vadd.f32 %v5169, %v5176
    %v5178 = vrot.slane %v5177, 2
    %v5179 = vadd.f32 %v5177, %v5178
    %v5180 = vrot.slane %v5179, 1
    %v5181 = vadd.f32 %v5179, %v5180
    %v5182 = vmul.f32 %v5175, %v81
    %v5183 = vmul.f32 %v5181, %v82
    %v5186 = vlaneseq
    %v5187 = vshrl.u32 %v5186, 7
    %v5188 = vsub.s32 0, %v5187
    %v5189 = vrot.slane %v5182, %v5188
    %v5190 = vlaneseq
    %v5191 = vshrl.u32 %v5190, 7
    %v5192 = vsub.s32 0, %v5191
    %v5193 = vrot.slane %v5183, %v5192
    %5194 = vset.pattern.permute.xlu0 0
    %5195 = vperm.xlu0 %5194, %v5189
    %v5196 = vpop.permute.xlu0 %5195
    %5198 = vset.pattern.permute.xlu0 0
    %5199 = vperm.xlu0 %5198, %v5193
    %v5200 = vpop.permute.xlu0 %5199
    %v5202 = vsub.f32 %v5158, %v5196
    %v5203 = vsub.f32 %v5161, %v5200
    %v5204 = vmul.f32 %v5202, %v5202
    %v5205 = vmul.f32 %v5203, %v5203
    %v5206 = vsel %vm114, %v5204, 0.0
    %5207 = vadd.xlane.f32.xlu0 %v5206
    %v5208 = vpop.xlane.xlu0 %5207
    %v5209 = vsel %vm114, %v5205, 0.0
    %5210 = vadd.xlane.f32.xlu0 %v5209
    %v5211 = vpop.xlane.xlu0 %5210
    %v5212 = vrot.slane %v5208, 4
    %v5213 = vadd.f32 %v5208, %v5212
    %v5214 = vrot.slane %v5213, 2
    %v5215 = vadd.f32 %v5213, %v5214
    %v5216 = vrot.slane %v5215, 1
    %v5217 = vadd.f32 %v5215, %v5216
    %v5218 = vrot.slane %v5211, 4
    %v5219 = vadd.f32 %v5211, %v5218
    %v5220 = vrot.slane %v5219, 2
    %v5221 = vadd.f32 %v5219, %v5220
    %v5222 = vrot.slane %v5221, 1
    %v5223 = vadd.f32 %v5221, %v5222
    %v5224 = vrsqrt.pop %v5217
    %v5225 = vrsqrt.pop %v5223
    %v5226 = vmul.f32 %v79, %v5224
    %v5227 = vmul.f32 %v80, %v5225
    %v5230 = vlaneseq
    %v5231 = vshrl.u32 %v5230, 7
    %v5232 = vsub.s32 0, %v5231
    %v5233 = vrot.slane %v5226, %v5232
    %v5234 = vlaneseq
    %v5235 = vshrl.u32 %v5234, 7
    %v5236 = vsub.s32 0, %v5235
    %v5237 = vrot.slane %v5227, %v5236
    %5238 = vset.pattern.permute.xlu0 0
    %5239 = vperm.xlu0 %5238, %v5233
    %v5240 = vpop.permute.xlu0 %5239
    %5242 = vset.pattern.permute.xlu0 0
    %5243 = vperm.xlu0 %5242, %v5237
    %v5244 = vpop.permute.xlu0 %5243
    %v5246 = vmul.f32 %v5202, %v5240
    %v5247 = vmul.f32 %v5203, %v5244
    %v5248 = vpack.c.bf16 %v5246, %v5246
    %v5249 = vpack.c.bf16 %v5247, %v5247
    %s5250 = scalar_lea.vmem [#allocation2], 112
    %v5251 = vld [vmem:[%s5250] sm:$0xf]
    %v5252 = vld [vmem:[%s5250 + $0x4] sm:$0xf]
    %v5253 = vld [vmem:[%s5250 + $0x8] sm:$0xf]
    %v5254 = vld [vmem:[%s5250 + $0xc] sm:$0x7]
    %v5257 = vunpack.c.l.b16 %v5248
    %v5258 = vunpack.c.l.b16 %v5249
    %v5259 = vpack.c.b16 %v5258, %v5257
    %v5264 = vunpack.c.l.b16 %v5251
    %v5265 = vunpack.c.l.b16 %v5252
    %v5266 = vunpack.c.l.b16 %v5253
    %v5267 = vunpack.c.l.b16 %v5254
    %v5268 = vpack.c.b16 %v5265, %v5264
    %v5269 = vpack.c.b16 %v5267, %v5266
    %v5272 = vsel %vm114, %v5259, 0
    %v5275 = vsel %vm118, %v5269, 0
    %5277 = vmatprep.subr.bf16.mxu0 0
    %5278 = vmatpush1.bf16.msra.mxu0 %v5268
    %5279 = vmatprep.subr.bf16.mxu0 0
    %5280 = vmatpush1.bf16.msra.mxu0 %v5275
    %5281 = vmatprep.subr.bf16.mxu0 0
    %5282 = vmatpush1.bf16.msra.mxu0 0
    %5283 = vmatprep.subr.bf16.mxu0 0
    %5284 = vmatpush1.bf16.msra.mxu0 0
    %5285 = vmatprep.subr.bf16.mxu0 0
    %5286 = vmatpush1.bf16.msra.mxu0 0
    %5287 = vmatprep.subr.bf16.mxu0 0
    %5288 = vmatpush1.bf16.msra.mxu0 0
    %5289 = vmatprep.subr.bf16.mxu0 0
    %5290 = vmatpush1.bf16.msra.mxu0 0
    %5291 = vmatprep.subr.bf16.mxu0 0
    %5292 = vmatpush1.bf16.msra.mxu0 0
    %5293 = vmatprep.subr.bf16.mxu0 0
    %5294 = vmatpush1.bf16.msra.mxu0 0
    %5295 = vmatprep.subr.bf16.mxu0 0
    %5296 = vmatpush1.bf16.msra.mxu0 0
    %5297 = vmatprep.subr.bf16.mxu0 0
    %5298 = vmatpush1.bf16.msra.mxu0 0
    %5299 = vmatprep.subr.bf16.mxu0 0
    %5300 = vmatpush1.bf16.msra.mxu0 0
    %5301 = vmatprep.subr.bf16.mxu0 0
    %5302 = vmatpush1.bf16.msra.mxu0 0
    %5303 = vmatprep.subr.bf16.mxu0 0
    %5304 = vmatpush1.bf16.msra.mxu0 0
    %5305 = vmatprep.subr.bf16.mxu0 0
    %5306 = vmatpush1.bf16.msra.mxu0 0
    %5307 = vmatprep.subr.bf16.mxu0 0
    %5308 = vmatpush1.bf16.msra.mxu0 0
    %5309 = vmatprep.mubr.bf16.mxu0 0
    %5310 = vmatmul.mubr.bf16.gmra.mrb[0].mxu0 %v5272
    %v5311 = vpop.f32.mrb[0].mxu0
    %v5312 = vadd.f32 0.0, %v5311
    %v5313 = vpop.f32.mrb[0].mxu0
    %v5314 = vpop.f32.mrb[0].mxu0
    %v5315 = vadd.f32 0.0, %v5314
    %v5316 = vpop.f32.mrb[0].mxu0
    %5317 = vdwg.mxu0
    %s5318 = scalar_lea.vmem %s3, 7
    %v5319 = vld [vmem:[%s5318] sm:$0x1]
    %v5321 = vlaneseq
    %v5322 = vshrl.u32 %v5321, 7
    %v5323 = vsub.s32 0, %v5322
    %v5324 = vrot.slane %v5319, %v5323
    %v5326 = vadd.f32 %v5312, %v5324
    %v5327 = vadd.f32 %v5315, %v5324
    %v5328 = vmul.f32 %v5326, %v176
    %v5329 = vmul.f32 %v5327, %v176
    %v5330 = vmul.f32 %v5326, %v184
    %v5331 = vmul.f32 %v5327, %v184
    %v5332 = vmul.f32 %v5326, %v192
    %v5333 = vmul.f32 %v5327, %v192
    %v5334 = vpack.c.bf16 %v5330, %v5328
    %v5335 = vpack.c.bf16 %v5332, %v5332
    %v5336 = vpack.c.bf16 %v5331, %v5329
    %v5337 = vpack.c.bf16 %v5333, %v5333
    %v5338 = vpack.c.bf16 %v5312, %v5312
    %v5339 = vpack.c.bf16 %v5315, %v5315
    %5341 = vrot.lane.b32.xlu0 %v5338, 98
    %v5342 = vpop.permute.xlu0 %5341
    %v5344 = vsel %vm114, %v5334, 0
    %v5347 = vsel %vm114, %v5335, 0
    %v5350 = vsel %vm114, %v5342, 0
    %5352 = vmatprep.subr.bf16.mxu0 0
    %5353 = vmatpush1.bf16.xpose.msra.mxu0 %v5350
    %5354 = vmatprep.subr.bf16.mxu0 0
    %5355 = vmatpush1.bf16.xpose.msra.mxu0 0
    %5356 = vmatprep.subr.bf16.mxu0 0
    %5357 = vmatpush1.bf16.xpose.msra.mxu0 0
    %5358 = vmatprep.subr.bf16.mxu0 0
    %5359 = vmatpush1.bf16.xpose.msra.mxu0 0
    %5360 = vmatprep.subr.bf16.mxu0 0
    %5361 = vmatpush1.bf16.xpose.msra.mxu0 0
    %5362 = vmatprep.subr.bf16.mxu0 0
    %5363 = vmatpush1.bf16.xpose.msra.mxu0 0
    %5364 = vmatprep.subr.bf16.mxu0 0
    %5365 = vmatpush1.bf16.xpose.msra.mxu0 0
    %5366 = vmatprep.subr.bf16.mxu0 0
    %5367 = vmatpush1.bf16.xpose.msra.mxu0 0
    %5368 = vmatprep.subr.bf16.mxu0 0
    %5369 = vmatpush1.bf16.xpose.msra.mxu0 0
    %5370 = vmatprep.subr.bf16.mxu0 0
    %5371 = vmatpush1.bf16.xpose.msra.mxu0 0
    %5372 = vmatprep.subr.bf16.mxu0 0
    %5373 = vmatpush1.bf16.xpose.msra.mxu0 0
    %5374 = vmatprep.subr.bf16.mxu0 0
    %5375 = vmatpush1.bf16.xpose.msra.mxu0 0
    %5376 = vmatprep.subr.bf16.mxu0 0
    %5377 = vmatpush1.bf16.xpose.msra.mxu0 0
    %5378 = vmatprep.subr.bf16.mxu0 0
    %5379 = vmatpush1.bf16.xpose.msra.mxu0 0
    %5380 = vmatprep.subr.bf16.mxu0 0
    %5381 = vmatpush1.bf16.xpose.msra.mxu0 0
    %5382 = vmatprep.subr.bf16.mxu0 0
    %5383 = vmatpush1.bf16.xpose.msra.mxu0 0
    %5384 = vmatprep.mubr.bf16.mxu0 0
    %5385 = vmatmul.mubr.bf16.gmra.mrb[0].mxu0 %v5344
    %v5386 = vpop.f32.mrb[0].mxu0
    %v5387 = vadd.f32 0.0, %v5386
    %v5388 = vpop.f32.mrb[0].mxu0
    %v5389 = vpop.f32.mrb[0].mxu0
    %v5390 = vadd.f32 0.0, %v5389
    %v5391 = vpop.f32.mrb[0].mxu0
    %5392 = vmatprep.mubr.bf16.mxu0 0
    %5393 = vmatmul.mubr.bf16.gmra.mrb[0].mxu0 %v5347
    %v5394 = vpop.f32.mrb[0].mxu0
    %v5395 = vadd.f32 0.0, %v5394
    %v5396 = vpop.f32.mrb[0].mxu0
    %v5397 = vpop.f32.mrb[0].mxu0
    %v5398 = vpop.f32.mrb[0].mxu0
    %5399 = vdwg.mxu0
    %5401 = vrot.lane.b32.xlu0 %v5339, 98
    %v5402 = vpop.permute.xlu0 %5401
    %v5404 = vsel %vm114, %v5336, 0
    %v5407 = vsel %vm114, %v5337, 0
    %v5410 = vsel %vm114, %v5402, 0
    %5412 = vmatprep.subr.bf16.mxu0 0
    %5413 = vmatpush1.bf16.xpose.msra.mxu0 %v5410
    %5414 = vmatprep.subr.bf16.mxu0 0
    %5415 = vmatpush1.bf16.xpose.msra.mxu0 0
    %5416 = vmatprep.subr.bf16.mxu0 0
    %5417 = vmatpush1.bf16.xpose.msra.mxu0 0
    %5418 = vmatprep.subr.bf16.mxu0 0
    %5419 = vmatpush1.bf16.xpose.msra.mxu0 0
    %5420 = vmatprep.subr.bf16.mxu0 0
    %5421 = vmatpush1.bf16.xpose.msra.mxu0 0
    %5422 = vmatprep.subr.bf16.mxu0 0
    %5423 = vmatpush1.bf16.xpose.msra.mxu0 0
    %5424 = vmatprep.subr.bf16.mxu0 0
    %5425 = vmatpush1.bf16.xpose.msra.mxu0 0
    %5426 = vmatprep.subr.bf16.mxu0 0
    %5427 = vmatpush1.bf16.xpose.msra.mxu0 0
    %5428 = vmatprep.subr.bf16.mxu0 0
    %5429 = vmatpush1.bf16.xpose.msra.mxu0 0
    %5430 = vmatprep.subr.bf16.mxu0 0
    %5431 = vmatpush1.bf16.xpose.msra.mxu0 0
    %5432 = vmatprep.subr.bf16.mxu0 0
    %5433 = vmatpush1.bf16.xpose.msra.mxu0 0
    %5434 = vmatprep.subr.bf16.mxu0 0
    %5435 = vmatpush1.bf16.xpose.msra.mxu0 0
    %5436 = vmatprep.subr.bf16.mxu0 0
    %5437 = vmatpush1.bf16.xpose.msra.mxu0 0
    %5438 = vmatprep.subr.bf16.mxu0 0
    %5439 = vmatpush1.bf16.xpose.msra.mxu0 0
    %5440 = vmatprep.subr.bf16.mxu0 0
    %5441 = vmatpush1.bf16.xpose.msra.mxu0 0
    %5442 = vmatprep.subr.bf16.mxu0 0
    %5443 = vmatpush1.bf16.xpose.msra.mxu0 0
    %5444 = vmatprep.mubr.bf16.mxu0 0
    %5445 = vmatmul.mubr.bf16.gmra.mrb[0].mxu0 %v5404
    %v5446 = vpop.f32.mrb[0].mxu0
    %v5447 = vadd.f32 0.0, %v5446
    %v5448 = vpop.f32.mrb[0].mxu0
    %v5449 = vpop.f32.mrb[0].mxu0
    %v5450 = vadd.f32 0.0, %v5449
    %v5451 = vpop.f32.mrb[0].mxu0
    %5452 = vmatprep.mubr.bf16.mxu0 0
    %5453 = vmatmul.mubr.bf16.gmra.mrb[0].mxu0 %v5407
    %v5454 = vpop.f32.mrb[0].mxu0
    %v5455 = vadd.f32 0.0, %v5454
    %v5456 = vpop.f32.mrb[0].mxu0
    %v5457 = vpop.f32.mrb[0].mxu0
    %v5458 = vpop.f32.mrb[0].mxu0
    %5459 = vdwg.mxu0
    %v5460 = vsel %vm322, %v5387, -inf
    %5461 = vmax.xlane.f32.xlu0 %v5460
    %v5462 = vpop.xlane.xlu0 %5461
    %v5463 = vsel %vm322, %v5390, -inf
    %5464 = vmax.xlane.f32.xlu0 %v5463
    %v5465 = vpop.xlane.xlu0 %5464
    %v5466 = vsel %vm322, %v5395, -inf
    %5467 = vmax.xlane.f32.xlu0 %v5466
    %v5468 = vpop.xlane.xlu0 %5467
    %v5469 = vsel %vm322, %v5447, -inf
    %5470 = vmax.xlane.f32.xlu0 %v5469
    %v5471 = vpop.xlane.xlu0 %5470
    %v5472 = vsel %vm322, %v5450, -inf
    %5473 = vmax.xlane.f32.xlu0 %v5472
    %v5474 = vpop.xlane.xlu0 %5473
    %v5475 = vsel %vm322, %v5455, -inf
    %5476 = vmax.xlane.f32.xlu0 %v5475
    %v5477 = vpop.xlane.xlu0 %5476
    %v5478 = vsub.f32 %v5387, %v5462
    %v5479 = vsub.f32 %v5390, %v5465
    %v5480 = vsub.f32 %v5395, %v5468
    %v5481 = vsub.f32 %v5447, %v5471
    %v5482 = vsub.f32 %v5450, %v5474
    %v5483 = vsub.f32 %v5455, %v5477
    %v5484 = vmul.f32 %v5478, 1.442695
    %v5485 = vpow.pop %v5484
    %v5486 = vmul.f32 %v5479, 1.442695
    %v5487 = vpow.pop %v5486
    %v5488 = vmul.f32 %v5480, 1.442695
    %v5489 = vpow.pop %v5488
    %v5490 = vmul.f32 %v5481, 1.442695
    %v5491 = vpow.pop %v5490
    %v5492 = vmul.f32 %v5482, 1.442695
    %v5493 = vpow.pop %v5492
    %v5494 = vmul.f32 %v5483, 1.442695
    %v5495 = vpow.pop %v5494
    %v5496 = vsel %vm322, %v5485, 0.0
    %5497 = vadd.xlane.f32.xlu0 %v5496
    %v5498 = vpop.xlane.xlu0 %5497
    %v5499 = vsel %vm322, %v5487, 0.0
    %5500 = vadd.xlane.f32.xlu0 %v5499
    %v5501 = vpop.xlane.xlu0 %5500
    %v5502 = vsel %vm322, %v5489, 0.0
    %5503 = vadd.xlane.f32.xlu0 %v5502
    %v5504 = vpop.xlane.xlu0 %5503
    %v5505 = vsel %vm322, %v5491, 0.0
    %5506 = vadd.xlane.f32.xlu0 %v5505
    %v5507 = vpop.xlane.xlu0 %5506
    %v5508 = vsel %vm322, %v5493, 0.0
    %5509 = vadd.xlane.f32.xlu0 %v5508
    %v5510 = vpop.xlane.xlu0 %5509
    %v5511 = vsel %vm322, %v5495, 0.0
    %5512 = vadd.xlane.f32.xlu0 %v5511
    %v5513 = vpop.xlane.xlu0 %5512
    %v5514 = vrcp.pop %v5498
    %v5515 = vrcp.pop %v5501
    %v5516 = vrcp.pop %v5504
    %v5517 = vrcp.pop %v5507
    %v5518 = vrcp.pop %v5510
    %v5519 = vrcp.pop %v5513
    %v5520 = vmul.f32 %v5485, %v5514
    %v5521 = vmul.f32 %v5487, %v5515
    %v5522 = vmul.f32 %v5489, %v5516
    %v5523 = vmul.f32 %v5491, %v5517
    %v5524 = vmul.f32 %v5493, %v5518
    %v5525 = vmul.f32 %v5495, %v5519
    %v5526 = vpack.c.bf16 %v5521, %v5520
    %v5527 = vpack.c.bf16 %v5522, %v5522
    %v5528 = vpack.c.bf16 %v5524, %v5523
    %v5529 = vpack.c.bf16 %v5525, %v5525
    %5530 = vrot.lane.b32.xlu0 %v5338, 68
    %v5531 = vpop.permute.xlu0 %5530
    %v5533 = vsel %vm322, %v5526, 0
    %v5536 = vsel %vm322, %v5527, 0
    %v5539 = vsel %vm401, %v5531, 0
    %5541 = vmatprep.subr.bf16.mxu0 0
    %5542 = vmatpush1.bf16.msra.mxu0 %v5539
    %5543 = vmatprep.subr.bf16.mxu0 0
    %5544 = vmatpush1.bf16.msra.mxu0 0
    %5545 = vmatprep.subr.bf16.mxu0 0
    %5546 = vmatpush1.bf16.msra.mxu0 0
    %5547 = vmatprep.subr.bf16.mxu0 0
    %5548 = vmatpush1.bf16.msra.mxu0 0
    %5549 = vmatprep.subr.bf16.mxu0 0
    %5550 = vmatpush1.bf16.msra.mxu0 0
    %5551 = vmatprep.subr.bf16.mxu0 0
    %5552 = vmatpush1.bf16.msra.mxu0 0
    %5553 = vmatprep.subr.bf16.mxu0 0
    %5554 = vmatpush1.bf16.msra.mxu0 0
    %5555 = vmatprep.subr.bf16.mxu0 0
    %5556 = vmatpush1.bf16.msra.mxu0 0
    %5557 = vmatprep.subr.bf16.mxu0 0
    %5558 = vmatpush1.bf16.msra.mxu0 0
    %5559 = vmatprep.subr.bf16.mxu0 0
    %5560 = vmatpush1.bf16.msra.mxu0 0
    %5561 = vmatprep.subr.bf16.mxu0 0
    %5562 = vmatpush1.bf16.msra.mxu0 0
    %5563 = vmatprep.subr.bf16.mxu0 0
    %5564 = vmatpush1.bf16.msra.mxu0 0
    %5565 = vmatprep.subr.bf16.mxu0 0
    %5566 = vmatpush1.bf16.msra.mxu0 0
    %5567 = vmatprep.subr.bf16.mxu0 0
    %5568 = vmatpush1.bf16.msra.mxu0 0
    %5569 = vmatprep.subr.bf16.mxu0 0
    %5570 = vmatpush1.bf16.msra.mxu0 0
    %5571 = vmatprep.subr.bf16.mxu0 0
    %5572 = vmatpush1.bf16.msra.mxu0 0
    %5573 = vmatprep.mubr.bf16.mxu0 0
    %5574 = vmatmul.mubr.bf16.gmra.mrb[0].mxu0 %v5533
    %v5575 = vpop.f32.mrb[0].mxu0
    %v5576 = vadd.f32 0.0, %v5575
    %v5577 = vpop.f32.mrb[0].mxu0
    %v5578 = vpop.f32.mrb[0].mxu0
    %v5579 = vadd.f32 0.0, %v5578
    %v5580 = vpop.f32.mrb[0].mxu0
    %5581 = vmatprep.mubr.bf16.mxu0 0
    %5582 = vmatmul.mubr.bf16.gmra.mrb[0].mxu0 %v5536
    %v5583 = vpop.f32.mrb[0].mxu0
    %v5584 = vadd.f32 0.0, %v5583
    %v5585 = vpop.f32.mrb[0].mxu0
    %v5586 = vpop.f32.mrb[0].mxu0
    %v5587 = vpop.f32.mrb[0].mxu0
    %5588 = vdwg.mxu0
    %5589 = vrot.lane.b32.xlu0 %v5339, 68
    %v5590 = vpop.permute.xlu0 %5589
    %v5592 = vsel %vm322, %v5528, 0
    %v5595 = vsel %vm322, %v5529, 0
    %v5598 = vsel %vm401, %v5590, 0
    %5600 = vmatprep.subr.bf16.mxu0 0
    %5601 = vmatpush1.bf16.msra.mxu0 %v5598
    %5602 = vmatprep.subr.bf16.mxu0 0
    %5603 = vmatpush1.bf16.msra.mxu0 0
    %5604 = vmatprep.subr.bf16.mxu0 0
    %5605 = vmatpush1.bf16.msra.mxu0 0
    %5606 = vmatprep.subr.bf16.mxu0 0
    %5607 = vmatpush1.bf16.msra.mxu0 0
    %5608 = vmatprep.subr.bf16.mxu0 0
    %5609 = vmatpush1.bf16.msra.mxu0 0
    %5610 = vmatprep.subr.bf16.mxu0 0
    %5611 = vmatpush1.bf16.msra.mxu0 0
    %5612 = vmatprep.subr.bf16.mxu0 0
    %5613 = vmatpush1.bf16.msra.mxu0 0
    %5614 = vmatprep.subr.bf16.mxu0 0
    %5615 = vmatpush1.bf16.msra.mxu0 0
    %5616 = vmatprep.subr.bf16.mxu0 0
    %5617 = vmatpush1.bf16.msra.mxu0 0
    %5618 = vmatprep.subr.bf16.mxu0 0
    %5619 = vmatpush1.bf16.msra.mxu0 0
    %5620 = vmatprep.subr.bf16.mxu0 0
    %5621 = vmatpush1.bf16.msra.mxu0 0
    %5622 = vmatprep.subr.bf16.mxu0 0
    %5623 = vmatpush1.bf16.msra.mxu0 0
    %5624 = vmatprep.subr.bf16.mxu0 0
    %5625 = vmatpush1.bf16.msra.mxu0 0
    %5626 = vmatprep.subr.bf16.mxu0 0
    %5627 = vmatpush1.bf16.msra.mxu0 0
    %5628 = vmatprep.subr.bf16.mxu0 0
    %5629 = vmatpush1.bf16.msra.mxu0 0
    %5630 = vmatprep.subr.bf16.mxu0 0
    %5631 = vmatpush1.bf16.msra.mxu0 0
    %5632 = vmatprep.mubr.bf16.mxu0 0
    %5633 = vmatmul.mubr.bf16.gmra.mrb[0].mxu0 %v5592
    %v5634 = vpop.f32.mrb[0].mxu0
    %v5635 = vadd.f32 0.0, %v5634
    %v5636 = vpop.f32.mrb[0].mxu0
    %v5637 = vpop.f32.mrb[0].mxu0
    %v5638 = vadd.f32 0.0, %v5637
    %v5639 = vpop.f32.mrb[0].mxu0
    %5640 = vmatprep.mubr.bf16.mxu0 0
    %5641 = vmatmul.mubr.bf16.gmra.mrb[0].mxu0 %v5595
    %v5642 = vpop.f32.mrb[0].mxu0
    %v5643 = vadd.f32 0.0, %v5642
    %v5644 = vpop.f32.mrb[0].mxu0
    %v5645 = vpop.f32.mrb[0].mxu0
    %v5646 = vpop.f32.mrb[0].mxu0
    %5647 = vdwg.mxu0
    %v5648 = vmul.f32 %v5576, %v176
    %v5649 = vmul.f32 %v5635, %v176
    %v5650 = vmul.f32 %v5579, %v184
    %v5651 = vmul.f32 %v5638, %v184
    %v5652 = vadd.f32 %v5648, %v5650
    %v5653 = vadd.f32 %v5649, %v5651
    %v5654 = vmul.f32 %v5584, %v192
    %v5655 = vmul.f32 %v5643, %v192
    %v5656 = vadd.f32 %v5652, %v5654
    %v5657 = vadd.f32 %v5653, %v5655
    %v5658 = vadd.f32 %v5656, %v5246
    %v5659 = vadd.f32 %v5657, %v5247
    %v5660 = vsel %vm114, %v5658, 0.0
    %5661 = vadd.xlane.f32.xlu0 %v5660
    %v5662 = vpop.xlane.xlu0 %5661
    %v5663 = vsel %vm114, %v5659, 0.0
    %5664 = vadd.xlane.f32.xlu0 %v5663
    %v5665 = vpop.xlane.xlu0 %5664
    %v5666 = vrot.slane %v5662, 4
    %v5667 = vadd.f32 %v5662, %v5666
    %v5668 = vrot.slane %v5667, 2
    %v5669 = vadd.f32 %v5667, %v5668
    %v5670 = vrot.slane %v5669, 1
    %v5671 = vadd.f32 %v5669, %v5670
    %v5672 = vrot.slane %v5665, 4
    %v5673 = vadd.f32 %v5665, %v5672
    %v5674 = vrot.slane %v5673, 2
    %v5675 = vadd.f32 %v5673, %v5674
    %v5676 = vrot.slane %v5675, 1
    %v5677 = vadd.f32 %v5675, %v5676
    %v5678 = vmul.f32 %v5671, %v81
    %v5679 = vmul.f32 %v5677, %v82
    %v5682 = vlaneseq
    %v5683 = vshrl.u32 %v5682, 7
    %v5684 = vsub.s32 0, %v5683
    %v5685 = vrot.slane %v5678, %v5684
    %v5686 = vlaneseq
    %v5687 = vshrl.u32 %v5686, 7
    %v5688 = vsub.s32 0, %v5687
    %v5689 = vrot.slane %v5679, %v5688
    %5690 = vset.pattern.permute.xlu0 0
    %5691 = vperm.xlu0 %5690, %v5685
    %v5692 = vpop.permute.xlu0 %5691
    %5694 = vset.pattern.permute.xlu0 0
    %5695 = vperm.xlu0 %5694, %v5689
    %v5696 = vpop.permute.xlu0 %5695
    %v5698 = vsub.f32 %v5658, %v5692
    %v5699 = vsub.f32 %v5659, %v5696
    %v5700 = vmul.f32 %v5698, %v5698
    %v5701 = vmul.f32 %v5699, %v5699
    %v5702 = vsel %vm114, %v5700, 0.0
    %5703 = vadd.xlane.f32.xlu0 %v5702
    %v5704 = vpop.xlane.xlu0 %5703
    %v5705 = vsel %vm114, %v5701, 0.0
    %5706 = vadd.xlane.f32.xlu0 %v5705
    %v5707 = vpop.xlane.xlu0 %5706
    %v5708 = vrot.slane %v5704, 4
    %v5709 = vadd.f32 %v5704, %v5708
    %v5710 = vrot.slane %v5709, 2
    %v5711 = vadd.f32 %v5709, %v5710
    %v5712 = vrot.slane %v5711, 1
    %v5713 = vadd.f32 %v5711, %v5712
    %v5714 = vrot.slane %v5707, 4
    %v5715 = vadd.f32 %v5707, %v5714
    %v5716 = vrot.slane %v5715, 2
    %v5717 = vadd.f32 %v5715, %v5716
    %v5718 = vrot.slane %v5717, 1
    %v5719 = vadd.f32 %v5717, %v5718
    %v5720 = vrsqrt.pop %v5713
    %v5721 = vrsqrt.pop %v5719
    %v5722 = vmul.f32 %v79, %v5720
    %v5723 = vmul.f32 %v80, %v5721
    %v5726 = vlaneseq
    %v5727 = vshrl.u32 %v5726, 7
    %v5728 = vsub.s32 0, %v5727
    %v5729 = vrot.slane %v5722, %v5728
    %v5730 = vlaneseq
    %v5731 = vshrl.u32 %v5730, 7
    %v5732 = vsub.s32 0, %v5731
    %v5733 = vrot.slane %v5723, %v5732
    %5734 = vset.pattern.permute.xlu0 0
    %5735 = vperm.xlu0 %5734, %v5729
    %v5736 = vpop.permute.xlu0 %5735
    %5738 = vset.pattern.permute.xlu0 0
    %5739 = vperm.xlu0 %5738, %v5733
    %v5740 = vpop.permute.xlu0 %5739
    %v5742 = vmul.f32 %v5698, %v5736
    %v5743 = vmul.f32 %v5699, %v5740
    %v5744 = vpack.c.bf16 %v5742, %v5742
    %v5745 = vpack.c.bf16 %v5743, %v5743
    %s5746 = scalar_lea.vmem [#allocation5], 112
    %v5747 = vld [vmem:[%s5746] sm:$0xf]
    %v5748 = vld [vmem:[%s5746 + $0x4] sm:$0xf]
    %v5749 = vld [vmem:[%s5746 + $0x8] sm:$0xf]
    %v5750 = vld [vmem:[%s5746 + $0xc] sm:$0x7]
    %v5753 = vunpack.c.l.b16 %v5744
    %v5754 = vunpack.c.l.b16 %v5745
    %v5755 = vpack.c.b16 %v5754, %v5753
    %v5760 = vunpack.c.l.b16 %v5747
    %v5761 = vunpack.c.l.b16 %v5748
    %v5762 = vunpack.c.l.b16 %v5749
    %v5763 = vunpack.c.l.b16 %v5750
    %v5764 = vpack.c.b16 %v5761, %v5760
    %v5765 = vpack.c.b16 %v5763, %v5762
    %v5768 = vsel %vm114, %v5755, 0
    %v5771 = vsel %vm118, %v5765, 0
    %5773 = vmatprep.subr.bf16.mxu0 0
    %5774 = vmatpush1.bf16.msra.mxu0 %v5764
    %5775 = vmatprep.subr.bf16.mxu0 0
    %5776 = vmatpush1.bf16.msra.mxu0 %v5771
    %5777 = vmatprep.subr.bf16.mxu0 0
    %5778 = vmatpush1.bf16.msra.mxu0 0
    %5779 = vmatprep.subr.bf16.mxu0 0
    %5780 = vmatpush1.bf16.msra.mxu0 0
    %5781 = vmatprep.subr.bf16.mxu0 0
    %5782 = vmatpush1.bf16.msra.mxu0 0
    %5783 = vmatprep.subr.bf16.mxu0 0
    %5784 = vmatpush1.bf16.msra.mxu0 0
    %5785 = vmatprep.subr.bf16.mxu0 0
    %5786 = vmatpush1.bf16.msra.mxu0 0
    %5787 = vmatprep.subr.bf16.mxu0 0
    %5788 = vmatpush1.bf16.msra.mxu0 0
    %5789 = vmatprep.subr.bf16.mxu0 0
    %5790 = vmatpush1.bf16.msra.mxu0 0
    %5791 = vmatprep.subr.bf16.mxu0 0
    %5792 = vmatpush1.bf16.msra.mxu0 0
    %5793 = vmatprep.subr.bf16.mxu0 0
    %5794 = vmatpush1.bf16.msra.mxu0 0
    %5795 = vmatprep.subr.bf16.mxu0 0
    %5796 = vmatpush1.bf16.msra.mxu0 0
    %5797 = vmatprep.subr.bf16.mxu0 0
    %5798 = vmatpush1.bf16.msra.mxu0 0
    %5799 = vmatprep.subr.bf16.mxu0 0
    %5800 = vmatpush1.bf16.msra.mxu0 0
    %5801 = vmatprep.subr.bf16.mxu0 0
    %5802 = vmatpush1.bf16.msra.mxu0 0
    %5803 = vmatprep.subr.bf16.mxu0 0
    %5804 = vmatpush1.bf16.msra.mxu0 0
    %5805 = vmatprep.mubr.bf16.mxu0 0
    %5806 = vmatmul.mubr.bf16.gmra.mrb[0].mxu0 %v5768
    %v5807 = vpop.f32.mrb[0].mxu0
    %v5808 = vadd.f32 0.0, %v5807
    %v5809 = vpop.f32.mrb[0].mxu0
    %v5810 = vpop.f32.mrb[0].mxu0
    %v5811 = vadd.f32 0.0, %v5810
    %v5812 = vpop.f32.mrb[0].mxu0
    %5813 = vdwg.mxu0
    %v5814 = vxor.u32 %v5808, 2147483648
    %v5815 = vxor.u32 %v5811, 2147483648
    %v5816 = vmul.f32 %v5814, 1.442695
    %v5817 = vpow.pop %v5816
    %v5818 = vmul.f32 %v5815, 1.442695
    %v5819 = vpow.pop %v5818
    %v5820 = vadd.f32 %v5817, 1.0
    %v5821 = vadd.f32 %v5819, 1.0
    %v5822 = vrcp.pop %v5820
    %v5823 = vmul.f32 1.0, %v5822
    %v5824 = vrcp.pop %v5821
    %v5825 = vmul.f32 1.0, %v5824
    %v5826 = vmul.f32 %v5808, %v5823
    %v5827 = vmul.f32 %v5811, %v5825
    %v5828 = vpack.c.bf16 %v5826, %v5826
    %v5829 = vpack.c.bf16 %v5827, %v5827
    %s5830 = scalar_lea.vmem [#allocation7], 112
    %v5831 = vld [vmem:[%s5830] sm:$0xf]
    %v5832 = vld [vmem:[%s5830 + $0x4] sm:$0xf]
    %v5833 = vld [vmem:[%s5830 + $0x8] sm:$0xf]
    %v5834 = vld [vmem:[%s5830 + $0xc] sm:$0x7]
    %v5837 = vunpack.c.l.b16 %v5828
    %v5838 = vunpack.c.l.b16 %v5829
    %v5839 = vpack.c.b16 %v5838, %v5837
    %v5844 = vunpack.c.l.b16 %v5831
    %v5845 = vunpack.c.l.b16 %v5832
    %v5846 = vunpack.c.l.b16 %v5833
    %v5847 = vunpack.c.l.b16 %v5834
    %v5848 = vpack.c.b16 %v5845, %v5844
    %v5849 = vpack.c.b16 %v5847, %v5846
    %v5852 = vsel %vm114, %v5839, 0
    %v5855 = vsel %vm118, %v5849, 0
    %5857 = vmatprep.subr.bf16.mxu0 0
    %5858 = vmatpush1.bf16.msra.mxu0 %v5848
    %5859 = vmatprep.subr.bf16.mxu0 0
    %5860 = vmatpush1.bf16.msra.mxu0 %v5855
    %5861 = vmatprep.subr.bf16.mxu0 0
    %5862 = vmatpush1.bf16.msra.mxu0 0
    %5863 = vmatprep.subr.bf16.mxu0 0
    %5864 = vmatpush1.bf16.msra.mxu0 0
    %5865 = vmatprep.subr.bf16.mxu0 0
    %5866 = vmatpush1.bf16.msra.mxu0 0
    %5867 = vmatprep.subr.bf16.mxu0 0
    %5868 = vmatpush1.bf16.msra.mxu0 0
    %5869 = vmatprep.subr.bf16.mxu0 0
    %5870 = vmatpush1.bf16.msra.mxu0 0
    %5871 = vmatprep.subr.bf16.mxu0 0
    %5872 = vmatpush1.bf16.msra.mxu0 0
    %5873 = vmatprep.subr.bf16.mxu0 0
    %5874 = vmatpush1.bf16.msra.mxu0 0
    %5875 = vmatprep.subr.bf16.mxu0 0
    %5876 = vmatpush1.bf16.msra.mxu0 0
    %5877 = vmatprep.subr.bf16.mxu0 0
    %5878 = vmatpush1.bf16.msra.mxu0 0
    %5879 = vmatprep.subr.bf16.mxu0 0
    %5880 = vmatpush1.bf16.msra.mxu0 0
    %5881 = vmatprep.subr.bf16.mxu0 0
    %5882 = vmatpush1.bf16.msra.mxu0 0
    %5883 = vmatprep.subr.bf16.mxu0 0
    %5884 = vmatpush1.bf16.msra.mxu0 0
    %5885 = vmatprep.subr.bf16.mxu0 0
    %5886 = vmatpush1.bf16.msra.mxu0 0
    %5887 = vmatprep.subr.bf16.mxu0 0
    %5888 = vmatpush1.bf16.msra.mxu0 0
    %5889 = vmatprep.mubr.bf16.mxu0 0
    %5890 = vmatmul.mubr.bf16.gmra.mrb[0].mxu0 %v5852
    %v5891 = vpop.f32.mrb[0].mxu0
    %v5892 = vadd.f32 %v5742, %v5891
    %v5893 = vpop.f32.mrb[0].mxu0
    %v5894 = vpop.f32.mrb[0].mxu0
    %v5895 = vadd.f32 %v5743, %v5894
    %v5896 = vpop.f32.mrb[0].mxu0
    %5897 = vdwg.mxu0
    %v5898 = vsel %vm114, %v5892, 0.0
    %5899 = vadd.xlane.f32.xlu0 %v5898
    %v5900 = vpop.xlane.xlu0 %5899
    %v5901 = vsel %vm114, %v5895, 0.0
    %5902 = vadd.xlane.f32.xlu0 %v5901
    %v5903 = vpop.xlane.xlu0 %5902
    %v5904 = vrot.slane %v5900, 4
    %v5905 = vadd.f32 %v5900, %v5904
    %v5906 = vrot.slane %v5905, 2
    %v5907 = vadd.f32 %v5905, %v5906
    %v5908 = vrot.slane %v5907, 1
    %v5909 = vadd.f32 %v5907, %v5908
    %v5910 = vrot.slane %v5903, 4
    %v5911 = vadd.f32 %v5903, %v5910
    %v5912 = vrot.slane %v5911, 2
    %v5913 = vadd.f32 %v5911, %v5912
    %v5914 = vrot.slane %v5913, 1
    %v5915 = vadd.f32 %v5913, %v5914
    %v5916 = vmul.f32 %v5909, %v81
    %v5917 = vmul.f32 %v5915, %v82
    %v5920 = vlaneseq
    %v5921 = vshrl.u32 %v5920, 7
    %v5922 = vsub.s32 0, %v5921
    %v5923 = vrot.slane %v5916, %v5922
    %v5924 = vlaneseq
    %v5925 = vshrl.u32 %v5924, 7
    %v5926 = vsub.s32 0, %v5925
    %v5927 = vrot.slane %v5917, %v5926
    %5928 = vset.pattern.permute.xlu0 0
    %5929 = vperm.xlu0 %5928, %v5923
    %v5930 = vpop.permute.xlu0 %5929
    %5932 = vset.pattern.permute.xlu0 0
    %5933 = vperm.xlu0 %5932, %v5927
    %v5934 = vpop.permute.xlu0 %5933
    %v5936 = vsub.f32 %v5892, %v5930
    %v5937 = vsub.f32 %v5895, %v5934
    %v5938 = vmul.f32 %v5936, %v5936
    %v5939 = vmul.f32 %v5937, %v5937
    %v5940 = vsel %vm114, %v5938, 0.0
    %5941 = vadd.xlane.f32.xlu0 %v5940
    %v5942 = vpop.xlane.xlu0 %5941
    %v5943 = vsel %vm114, %v5939, 0.0
    %5944 = vadd.xlane.f32.xlu0 %v5943
    %v5945 = vpop.xlane.xlu0 %5944
    %v5946 = vrot.slane %v5942, 4
    %v5947 = vadd.f32 %v5942, %v5946
    %v5948 = vrot.slane %v5947, 2
    %v5949 = vadd.f32 %v5947, %v5948
    %v5950 = vrot.slane %v5949, 1
    %v5951 = vadd.f32 %v5949, %v5950
    %v5952 = vrot.slane %v5945, 4
    %v5953 = vadd.f32 %v5945, %v5952
    %v5954 = vrot.slane %v5953, 2
    %v5955 = vadd.f32 %v5953, %v5954
    %v5956 = vrot.slane %v5955, 1
    %v5957 = vadd.f32 %v5955, %v5956
    %v5958 = vrsqrt.pop %v5951
    %v5959 = vrsqrt.pop %v5957
    %v5960 = vmul.f32 %v79, %v5958
    %v5961 = vmul.f32 %v80, %v5959
    %v5964 = vlaneseq
    %v5965 = vshrl.u32 %v5964, 7
    %v5966 = vsub.s32 0, %v5965
    %v5967 = vrot.slane %v5960, %v5966
    %v5968 = vlaneseq
    %v5969 = vshrl.u32 %v5968, 7
    %v5970 = vsub.s32 0, %v5969
    %v5971 = vrot.slane %v5961, %v5970
    %5972 = vset.pattern.permute.xlu0 0
    %5973 = vperm.xlu0 %5972, %v5967
    %v5974 = vpop.permute.xlu0 %5973
    %5976 = vset.pattern.permute.xlu0 0
    %5977 = vperm.xlu0 %5976, %v5971
    %v5978 = vpop.permute.xlu0 %5977
    %v5980 = vmul.f32 %v5936, %v5974
    %v5981 = vmul.f32 %v5937, %v5978
    %v5982 = vpack.c.bf16 %v5980, %v5980
    %v5983 = vpack.c.bf16 %v5981, %v5981
    %s5984 = scalar_lea.vmem [#allocation2], 128
    %v5985 = vld [vmem:[%s5984] sm:$0xf]
    %v5986 = vld [vmem:[%s5984 + $0x4] sm:$0xf]
    %v5987 = vld [vmem:[%s5984 + $0x8] sm:$0xf]
    %v5988 = vld [vmem:[%s5984 + $0xc] sm:$0x7]
    %v5991 = vunpack.c.l.b16 %v5982
    %v5992 = vunpack.c.l.b16 %v5983
    %v5993 = vpack.c.b16 %v5992, %v5991
    %v5998 = vunpack.c.l.b16 %v5985
    %v5999 = vunpack.c.l.b16 %v5986
    %v6000 = vunpack.c.l.b16 %v5987
    %v6001 = vunpack.c.l.b16 %v5988
    %v6002 = vpack.c.b16 %v5999, %v5998
    %v6003 = vpack.c.b16 %v6001, %v6000
    %v6006 = vsel %vm114, %v5993, 0
    %v6009 = vsel %vm118, %v6003, 0
    %6011 = vmatprep.subr.bf16.mxu0 0
    %6012 = vmatpush1.bf16.msra.mxu0 %v6002
    %6013 = vmatprep.subr.bf16.mxu0 0
    %6014 = vmatpush1.bf16.msra.mxu0 %v6009
    %6015 = vmatprep.subr.bf16.mxu0 0
    %6016 = vmatpush1.bf16.msra.mxu0 0
    %6017 = vmatprep.subr.bf16.mxu0 0
    %6018 = vmatpush1.bf16.msra.mxu0 0
    %6019 = vmatprep.subr.bf16.mxu0 0
    %6020 = vmatpush1.bf16.msra.mxu0 0
    %6021 = vmatprep.subr.bf16.mxu0 0
    %6022 = vmatpush1.bf16.msra.mxu0 0
    %6023 = vmatprep.subr.bf16.mxu0 0
    %6024 = vmatpush1.bf16.msra.mxu0 0
    %6025 = vmatprep.subr.bf16.mxu0 0
    %6026 = vmatpush1.bf16.msra.mxu0 0
    %6027 = vmatprep.subr.bf16.mxu0 0
    %6028 = vmatpush1.bf16.msra.mxu0 0
    %6029 = vmatprep.subr.bf16.mxu0 0
    %6030 = vmatpush1.bf16.msra.mxu0 0
    %6031 = vmatprep.subr.bf16.mxu0 0
    %6032 = vmatpush1.bf16.msra.mxu0 0
    %6033 = vmatprep.subr.bf16.mxu0 0
    %6034 = vmatpush1.bf16.msra.mxu0 0
    %6035 = vmatprep.subr.bf16.mxu0 0
    %6036 = vmatpush1.bf16.msra.mxu0 0
    %6037 = vmatprep.subr.bf16.mxu0 0
    %6038 = vmatpush1.bf16.msra.mxu0 0
    %6039 = vmatprep.subr.bf16.mxu0 0
    %6040 = vmatpush1.bf16.msra.mxu0 0
    %6041 = vmatprep.subr.bf16.mxu0 0
    %6042 = vmatpush1.bf16.msra.mxu0 0
    %6043 = vmatprep.mubr.bf16.mxu0 0
    %6044 = vmatmul.mubr.bf16.gmra.mrb[0].mxu0 %v6006
    %v6045 = vpop.f32.mrb[0].mxu0
    %v6046 = vadd.f32 0.0, %v6045
    %v6047 = vpop.f32.mrb[0].mxu0
    %v6048 = vpop.f32.mrb[0].mxu0
    %v6049 = vadd.f32 0.0, %v6048
    %v6050 = vpop.f32.mrb[0].mxu0
    %6051 = vdwg.mxu0
    %s6052 = scalar_lea.vmem %s3, 8
    %v6053 = vld [vmem:[%s6052] sm:$0x1]
    %v6055 = vlaneseq
    %v6056 = vshrl.u32 %v6055, 7
    %v6057 = vsub.s32 0, %v6056
    %v6058 = vrot.slane %v6053, %v6057
    %v6060 = vadd.f32 %v6046, %v6058
    %v6061 = vadd.f32 %v6049, %v6058
    %v6062 = vmul.f32 %v6060, %v176
    %v6063 = vmul.f32 %v6061, %v176
    %v6064 = vmul.f32 %v6060, %v184
    %v6065 = vmul.f32 %v6061, %v184
    %v6066 = vmul.f32 %v6060, %v192
    %v6067 = vmul.f32 %v6061, %v192
    %v6068 = vpack.c.bf16 %v6064, %v6062
    %v6069 = vpack.c.bf16 %v6066, %v6066
    %v6070 = vpack.c.bf16 %v6065, %v6063
    %v6071 = vpack.c.bf16 %v6067, %v6067
    %v6072 = vpack.c.bf16 %v6046, %v6046
    %v6073 = vpack.c.bf16 %v6049, %v6049
    %6075 = vrot.lane.b32.xlu0 %v6072, 98
    %v6076 = vpop.permute.xlu0 %6075
    %v6078 = vsel %vm114, %v6068, 0
    %v6081 = vsel %vm114, %v6069, 0
    %v6084 = vsel %vm114, %v6076, 0
    %6086 = vmatprep.subr.bf16.mxu0 0
    %6087 = vmatpush1.bf16.xpose.msra.mxu0 %v6084
    %6088 = vmatprep.subr.bf16.mxu0 0
    %6089 = vmatpush1.bf16.xpose.msra.mxu0 0
    %6090 = vmatprep.subr.bf16.mxu0 0
    %6091 = vmatpush1.bf16.xpose.msra.mxu0 0
    %6092 = vmatprep.subr.bf16.mxu0 0
    %6093 = vmatpush1.bf16.xpose.msra.mxu0 0
    %6094 = vmatprep.subr.bf16.mxu0 0
    %6095 = vmatpush1.bf16.xpose.msra.mxu0 0
    %6096 = vmatprep.subr.bf16.mxu0 0
    %6097 = vmatpush1.bf16.xpose.msra.mxu0 0
    %6098 = vmatprep.subr.bf16.mxu0 0
    %6099 = vmatpush1.bf16.xpose.msra.mxu0 0
    %6100 = vmatprep.subr.bf16.mxu0 0
    %6101 = vmatpush1.bf16.xpose.msra.mxu0 0
    %6102 = vmatprep.subr.bf16.mxu0 0
    %6103 = vmatpush1.bf16.xpose.msra.mxu0 0
    %6104 = vmatprep.subr.bf16.mxu0 0
    %6105 = vmatpush1.bf16.xpose.msra.mxu0 0
    %6106 = vmatprep.subr.bf16.mxu0 0
    %6107 = vmatpush1.bf16.xpose.msra.mxu0 0
    %6108 = vmatprep.subr.bf16.mxu0 0
    %6109 = vmatpush1.bf16.xpose.msra.mxu0 0
    %6110 = vmatprep.subr.bf16.mxu0 0
    %6111 = vmatpush1.bf16.xpose.msra.mxu0 0
    %6112 = vmatprep.subr.bf16.mxu0 0
    %6113 = vmatpush1.bf16.xpose.msra.mxu0 0
    %6114 = vmatprep.subr.bf16.mxu0 0
    %6115 = vmatpush1.bf16.xpose.msra.mxu0 0
    %6116 = vmatprep.subr.bf16.mxu0 0
    %6117 = vmatpush1.bf16.xpose.msra.mxu0 0
    %6118 = vmatprep.mubr.bf16.mxu0 0
    %6119 = vmatmul.mubr.bf16.gmra.mrb[0].mxu0 %v6078
    %v6120 = vpop.f32.mrb[0].mxu0
    %v6121 = vadd.f32 0.0, %v6120
    %v6122 = vpop.f32.mrb[0].mxu0
    %v6123 = vpop.f32.mrb[0].mxu0
    %v6124 = vadd.f32 0.0, %v6123
    %v6125 = vpop.f32.mrb[0].mxu0
    %6126 = vmatprep.mubr.bf16.mxu0 0
    %6127 = vmatmul.mubr.bf16.gmra.mrb[0].mxu0 %v6081
    %v6128 = vpop.f32.mrb[0].mxu0
    %v6129 = vadd.f32 0.0, %v6128
    %v6130 = vpop.f32.mrb[0].mxu0
    %v6131 = vpop.f32.mrb[0].mxu0
    %v6132 = vpop.f32.mrb[0].mxu0
    %6133 = vdwg.mxu0
    %6135 = vrot.lane.b32.xlu0 %v6073, 98
    %v6136 = vpop.permute.xlu0 %6135
    %v6138 = vsel %vm114, %v6070, 0
    %v6141 = vsel %vm114, %v6071, 0
    %v6144 = vsel %vm114, %v6136, 0
    %6146 = vmatprep.subr.bf16.mxu0 0
    %6147 = vmatpush1.bf16.xpose.msra.mxu0 %v6144
    %6148 = vmatprep.subr.bf16.mxu0 0
    %6149 = vmatpush1.bf16.xpose.msra.mxu0 0
    %6150 = vmatprep.subr.bf16.mxu0 0
    %6151 = vmatpush1.bf16.xpose.msra.mxu0 0
    %6152 = vmatprep.subr.bf16.mxu0 0
    %6153 = vmatpush1.bf16.xpose.msra.mxu0 0
    %6154 = vmatprep.subr.bf16.mxu0 0
    %6155 = vmatpush1.bf16.xpose.msra.mxu0 0
    %6156 = vmatprep.subr.bf16.mxu0 0
    %6157 = vmatpush1.bf16.xpose.msra.mxu0 0
    %6158 = vmatprep.subr.bf16.mxu0 0
    %6159 = vmatpush1.bf16.xpose.msra.mxu0 0
    %6160 = vmatprep.subr.bf16.mxu0 0
    %6161 = vmatpush1.bf16.xpose.msra.mxu0 0
    %6162 = vmatprep.subr.bf16.mxu0 0
    %6163 = vmatpush1.bf16.xpose.msra.mxu0 0
    %6164 = vmatprep.subr.bf16.mxu0 0
    %6165 = vmatpush1.bf16.xpose.msra.mxu0 0
    %6166 = vmatprep.subr.bf16.mxu0 0
    %6167 = vmatpush1.bf16.xpose.msra.mxu0 0
    %6168 = vmatprep.subr.bf16.mxu0 0
    %6169 = vmatpush1.bf16.xpose.msra.mxu0 0
    %6170 = vmatprep.subr.bf16.mxu0 0
    %6171 = vmatpush1.bf16.xpose.msra.mxu0 0
    %6172 = vmatprep.subr.bf16.mxu0 0
    %6173 = vmatpush1.bf16.xpose.msra.mxu0 0
    %6174 = vmatprep.subr.bf16.mxu0 0
    %6175 = vmatpush1.bf16.xpose.msra.mxu0 0
    %6176 = vmatprep.subr.bf16.mxu0 0
    %6177 = vmatpush1.bf16.xpose.msra.mxu0 0
    %6178 = vmatprep.mubr.bf16.mxu0 0
    %6179 = vmatmul.mubr.bf16.gmra.mrb[0].mxu0 %v6138
    %v6180 = vpop.f32.mrb[0].mxu0
    %v6181 = vadd.f32 0.0, %v6180
    %v6182 = vpop.f32.mrb[0].mxu0
    %v6183 = vpop.f32.mrb[0].mxu0
    %v6184 = vadd.f32 0.0, %v6183
    %v6185 = vpop.f32.mrb[0].mxu0
    %6186 = vmatprep.mubr.bf16.mxu0 0
    %6187 = vmatmul.mubr.bf16.gmra.mrb[0].mxu0 %v6141
    %v6188 = vpop.f32.mrb[0].mxu0
    %v6189 = vadd.f32 0.0, %v6188
    %v6190 = vpop.f32.mrb[0].mxu0
    %v6191 = vpop.f32.mrb[0].mxu0
    %v6192 = vpop.f32.mrb[0].mxu0
    %6193 = vdwg.mxu0
    %v6194 = vsel %vm322, %v6121, -inf
    %6195 = vmax.xlane.f32.xlu0 %v6194
    %v6196 = vpop.xlane.xlu0 %6195
    %v6197 = vsel %vm322, %v6124, -inf
    %6198 = vmax.xlane.f32.xlu0 %v6197
    %v6199 = vpop.xlane.xlu0 %6198
    %v6200 = vsel %vm322, %v6129, -inf
    %6201 = vmax.xlane.f32.xlu0 %v6200
    %v6202 = vpop.xlane.xlu0 %6201
    %v6203 = vsel %vm322, %v6181, -inf
    %6204 = vmax.xlane.f32.xlu0 %v6203
    %v6205 = vpop.xlane.xlu0 %6204
    %v6206 = vsel %vm322, %v6184, -inf
    %6207 = vmax.xlane.f32.xlu0 %v6206
    %v6208 = vpop.xlane.xlu0 %6207
    %v6209 = vsel %vm322, %v6189, -inf
    %6210 = vmax.xlane.f32.xlu0 %v6209
    %v6211 = vpop.xlane.xlu0 %6210
    %v6212 = vsub.f32 %v6121, %v6196
    %v6213 = vsub.f32 %v6124, %v6199
    %v6214 = vsub.f32 %v6129, %v6202
    %v6215 = vsub.f32 %v6181, %v6205
    %v6216 = vsub.f32 %v6184, %v6208
    %v6217 = vsub.f32 %v6189, %v6211
    %v6218 = vmul.f32 %v6212, 1.442695
    %v6219 = vpow.pop %v6218
    %v6220 = vmul.f32 %v6213, 1.442695
    %v6221 = vpow.pop %v6220
    %v6222 = vmul.f32 %v6214, 1.442695
    %v6223 = vpow.pop %v6222
    %v6224 = vmul.f32 %v6215, 1.442695
    %v6225 = vpow.pop %v6224
    %v6226 = vmul.f32 %v6216, 1.442695
    %v6227 = vpow.pop %v6226
    %v6228 = vmul.f32 %v6217, 1.442695
    %v6229 = vpow.pop %v6228
    %v6230 = vsel %vm322, %v6219, 0.0
    %6231 = vadd.xlane.f32.xlu0 %v6230
    %v6232 = vpop.xlane.xlu0 %6231
    %v6233 = vsel %vm322, %v6221, 0.0
    %6234 = vadd.xlane.f32.xlu0 %v6233
    %v6235 = vpop.xlane.xlu0 %6234
    %v6236 = vsel %vm322, %v6223, 0.0
    %6237 = vadd.xlane.f32.xlu0 %v6236
    %v6238 = vpop.xlane.xlu0 %6237
    %v6239 = vsel %vm322, %v6225, 0.0
    %6240 = vadd.xlane.f32.xlu0 %v6239
    %v6241 = vpop.xlane.xlu0 %6240
    %v6242 = vsel %vm322, %v6227, 0.0
    %6243 = vadd.xlane.f32.xlu0 %v6242
    %v6244 = vpop.xlane.xlu0 %6243
    %v6245 = vsel %vm322, %v6229, 0.0
    %6246 = vadd.xlane.f32.xlu0 %v6245
    %v6247 = vpop.xlane.xlu0 %6246
    %v6248 = vrcp.pop %v6232
    %v6249 = vrcp.pop %v6235
    %v6250 = vrcp.pop %v6238
    %v6251 = vrcp.pop %v6241
    %v6252 = vrcp.pop %v6244
    %v6253 = vrcp.pop %v6247
    %v6254 = vmul.f32 %v6219, %v6248
    %v6255 = vmul.f32 %v6221, %v6249
    %v6256 = vmul.f32 %v6223, %v6250
    %v6257 = vmul.f32 %v6225, %v6251
    %v6258 = vmul.f32 %v6227, %v6252
    %v6259 = vmul.f32 %v6229, %v6253
    %v6260 = vpack.c.bf16 %v6255, %v6254
    %v6261 = vpack.c.bf16 %v6256, %v6256
    %v6262 = vpack.c.bf16 %v6258, %v6257
    %v6263 = vpack.c.bf16 %v6259, %v6259
    %6264 = vrot.lane.b32.xlu0 %v6072, 68
    %v6265 = vpop.permute.xlu0 %6264
    %v6267 = vsel %vm322, %v6260, 0
    %v6270 = vsel %vm322, %v6261, 0
    %v6273 = vsel %vm401, %v6265, 0
    %6275 = vmatprep.subr.bf16.mxu0 0
    %6276 = vmatpush1.bf16.msra.mxu0 %v6273
    %6277 = vmatprep.subr.bf16.mxu0 0
    %6278 = vmatpush1.bf16.msra.mxu0 0
    %6279 = vmatprep.subr.bf16.mxu0 0
    %6280 = vmatpush1.bf16.msra.mxu0 0
    %6281 = vmatprep.subr.bf16.mxu0 0
    %6282 = vmatpush1.bf16.msra.mxu0 0
    %6283 = vmatprep.subr.bf16.mxu0 0
    %6284 = vmatpush1.bf16.msra.mxu0 0
    %6285 = vmatprep.subr.bf16.mxu0 0
    %6286 = vmatpush1.bf16.msra.mxu0 0
    %6287 = vmatprep.subr.bf16.mxu0 0
    %6288 = vmatpush1.bf16.msra.mxu0 0
    %6289 = vmatprep.subr.bf16.mxu0 0
    %6290 = vmatpush1.bf16.msra.mxu0 0
    %6291 = vmatprep.subr.bf16.mxu0 0
    %6292 = vmatpush1.bf16.msra.mxu0 0
    %6293 = vmatprep.subr.bf16.mxu0 0
    %6294 = vmatpush1.bf16.msra.mxu0 0
    %6295 = vmatprep.subr.bf16.mxu0 0
    %6296 = vmatpush1.bf16.msra.mxu0 0
    %6297 = vmatprep.subr.bf16.mxu0 0
    %6298 = vmatpush1.bf16.msra.mxu0 0
    %6299 = vmatprep.subr.bf16.mxu0 0
    %6300 = vmatpush1.bf16.msra.mxu0 0
    %6301 = vmatprep.subr.bf16.mxu0 0
    %6302 = vmatpush1.bf16.msra.mxu0 0
    %6303 = vmatprep.subr.bf16.mxu0 0
    %6304 = vmatpush1.bf16.msra.mxu0 0
    %6305 = vmatprep.subr.bf16.mxu0 0
    %6306 = vmatpush1.bf16.msra.mxu0 0
    %6307 = vmatprep.mubr.bf16.mxu0 0
    %6308 = vmatmul.mubr.bf16.gmra.mrb[0].mxu0 %v6267
    %v6309 = vpop.f32.mrb[0].mxu0
    %v6310 = vadd.f32 0.0, %v6309
    %v6311 = vpop.f32.mrb[0].mxu0
    %v6312 = vpop.f32.mrb[0].mxu0
    %v6313 = vadd.f32 0.0, %v6312
    %v6314 = vpop.f32.mrb[0].mxu0
    %6315 = vmatprep.mubr.bf16.mxu0 0
    %6316 = vmatmul.mubr.bf16.gmra.mrb[0].mxu0 %v6270
    %v6317 = vpop.f32.mrb[0].mxu0
    %v6318 = vadd.f32 0.0, %v6317
    %v6319 = vpop.f32.mrb[0].mxu0
    %v6320 = vpop.f32.mrb[0].mxu0
    %v6321 = vpop.f32.mrb[0].mxu0
    %6322 = vdwg.mxu0
    %6323 = vrot.lane.b32.xlu0 %v6073, 68
    %v6324 = vpop.permute.xlu0 %6323
    %v6326 = vsel %vm322, %v6262, 0
    %v6329 = vsel %vm322, %v6263, 0
    %v6332 = vsel %vm401, %v6324, 0
    %6334 = vmatprep.subr.bf16.mxu0 0
    %6335 = vmatpush1.bf16.msra.mxu0 %v6332
    %6336 = vmatprep.subr.bf16.mxu0 0
    %6337 = vmatpush1.bf16.msra.mxu0 0
    %6338 = vmatprep.subr.bf16.mxu0 0
    %6339 = vmatpush1.bf16.msra.mxu0 0
    %6340 = vmatprep.subr.bf16.mxu0 0
    %6341 = vmatpush1.bf16.msra.mxu0 0
    %6342 = vmatprep.subr.bf16.mxu0 0
    %6343 = vmatpush1.bf16.msra.mxu0 0
    %6344 = vmatprep.subr.bf16.mxu0 0
    %6345 = vmatpush1.bf16.msra.mxu0 0
    %6346 = vmatprep.subr.bf16.mxu0 0
    %6347 = vmatpush1.bf16.msra.mxu0 0
    %6348 = vmatprep.subr.bf16.mxu0 0
    %6349 = vmatpush1.bf16.msra.mxu0 0
    %6350 = vmatprep.subr.bf16.mxu0 0
    %6351 = vmatpush1.bf16.msra.mxu0 0
    %6352 = vmatprep.subr.bf16.mxu0 0
    %6353 = vmatpush1.bf16.msra.mxu0 0
    %6354 = vmatprep.subr.bf16.mxu0 0
    %6355 = vmatpush1.bf16.msra.mxu0 0
    %6356 = vmatprep.subr.bf16.mxu0 0
    %6357 = vmatpush1.bf16.msra.mxu0 0
    %6358 = vmatprep.subr.bf16.mxu0 0
    %6359 = vmatpush1.bf16.msra.mxu0 0
    %6360 = vmatprep.subr.bf16.mxu0 0
    %6361 = vmatpush1.bf16.msra.mxu0 0
    %6362 = vmatprep.subr.bf16.mxu0 0
    %6363 = vmatpush1.bf16.msra.mxu0 0
    %6364 = vmatprep.subr.bf16.mxu0 0
    %6365 = vmatpush1.bf16.msra.mxu0 0
    %6366 = vmatprep.mubr.bf16.mxu0 0
    %6367 = vmatmul.mubr.bf16.gmra.mrb[0].mxu0 %v6326
    %v6368 = vpop.f32.mrb[0].mxu0
    %v6369 = vadd.f32 0.0, %v6368
    %v6370 = vpop.f32.mrb[0].mxu0
    %v6371 = vpop.f32.mrb[0].mxu0
    %v6372 = vadd.f32 0.0, %v6371
    %v6373 = vpop.f32.mrb[0].mxu0
    %6374 = vmatprep.mubr.bf16.mxu0 0
    %6375 = vmatmul.mubr.bf16.gmra.mrb[0].mxu0 %v6329
    %v6376 = vpop.f32.mrb[0].mxu0
    %v6377 = vadd.f32 0.0, %v6376
    %v6378 = vpop.f32.mrb[0].mxu0
    %v6379 = vpop.f32.mrb[0].mxu0
    %v6380 = vpop.f32.mrb[0].mxu0
    %6381 = vdwg.mxu0
    %v6382 = vmul.f32 %v6310, %v176
    %v6383 = vmul.f32 %v6369, %v176
    %v6384 = vmul.f32 %v6313, %v184
    %v6385 = vmul.f32 %v6372, %v184
    %v6386 = vadd.f32 %v6382, %v6384
    %v6387 = vadd.f32 %v6383, %v6385
    %v6388 = vmul.f32 %v6318, %v192
    %v6389 = vmul.f32 %v6377, %v192
    %v6390 = vadd.f32 %v6386, %v6388
    %v6391 = vadd.f32 %v6387, %v6389
    %v6392 = vadd.f32 %v6390, %v5980
    %v6393 = vadd.f32 %v6391, %v5981
    %v6394 = vsel %vm114, %v6392, 0.0
    %6395 = vadd.xlane.f32.xlu0 %v6394
    %v6396 = vpop.xlane.xlu0 %6395
    %v6397 = vsel %vm114, %v6393, 0.0
    %6398 = vadd.xlane.f32.xlu0 %v6397
    %v6399 = vpop.xlane.xlu0 %6398
    %v6400 = vrot.slane %v6396, 4
    %v6401 = vadd.f32 %v6396, %v6400
    %v6402 = vrot.slane %v6401, 2
    %v6403 = vadd.f32 %v6401, %v6402
    %v6404 = vrot.slane %v6403, 1
    %v6405 = vadd.f32 %v6403, %v6404
    %v6406 = vrot.slane %v6399, 4
    %v6407 = vadd.f32 %v6399, %v6406
    %v6408 = vrot.slane %v6407, 2
    %v6409 = vadd.f32 %v6407, %v6408
    %v6410 = vrot.slane %v6409, 1
    %v6411 = vadd.f32 %v6409, %v6410
    %v6412 = vmul.f32 %v6405, %v81
    %v6413 = vmul.f32 %v6411, %v82
    %v6416 = vlaneseq
    %v6417 = vshrl.u32 %v6416, 7
    %v6418 = vsub.s32 0, %v6417
    %v6419 = vrot.slane %v6412, %v6418
    %v6420 = vlaneseq
    %v6421 = vshrl.u32 %v6420, 7
    %v6422 = vsub.s32 0, %v6421
    %v6423 = vrot.slane %v6413, %v6422
    %6424 = vset.pattern.permute.xlu0 0
    %6425 = vperm.xlu0 %6424, %v6419
    %v6426 = vpop.permute.xlu0 %6425
    %6428 = vset.pattern.permute.xlu0 0
    %6429 = vperm.xlu0 %6428, %v6423
    %v6430 = vpop.permute.xlu0 %6429
    %v6432 = vsub.f32 %v6392, %v6426
    %v6433 = vsub.f32 %v6393, %v6430
    %v6434 = vmul.f32 %v6432, %v6432
    %v6435 = vmul.f32 %v6433, %v6433
    %v6436 = vsel %vm114, %v6434, 0.0
    %6437 = vadd.xlane.f32.xlu0 %v6436
    %v6438 = vpop.xlane.xlu0 %6437
    %v6439 = vsel %vm114, %v6435, 0.0
    %6440 = vadd.xlane.f32.xlu0 %v6439
    %v6441 = vpop.xlane.xlu0 %6440
    %v6442 = vrot.slane %v6438, 4
    %v6443 = vadd.f32 %v6438, %v6442
    %v6444 = vrot.slane %v6443, 2
    %v6445 = vadd.f32 %v6443, %v6444
    %v6446 = vrot.slane %v6445, 1
    %v6447 = vadd.f32 %v6445, %v6446
    %v6448 = vrot.slane %v6441, 4
    %v6449 = vadd.f32 %v6441, %v6448
    %v6450 = vrot.slane %v6449, 2
    %v6451 = vadd.f32 %v6449, %v6450
    %v6452 = vrot.slane %v6451, 1
    %v6453 = vadd.f32 %v6451, %v6452
    %v6454 = vrsqrt.pop %v6447
    %v6455 = vrsqrt.pop %v6453
    %v6456 = vmul.f32 %v79, %v6454
    %v6457 = vmul.f32 %v80, %v6455
    %v6460 = vlaneseq
    %v6461 = vshrl.u32 %v6460, 7
    %v6462 = vsub.s32 0, %v6461
    %v6463 = vrot.slane %v6456, %v6462
    %v6464 = vlaneseq
    %v6465 = vshrl.u32 %v6464, 7
    %v6466 = vsub.s32 0, %v6465
    %v6467 = vrot.slane %v6457, %v6466
    %6468 = vset.pattern.permute.xlu0 0
    %6469 = vperm.xlu0 %6468, %v6463
    %v6470 = vpop.permute.xlu0 %6469
    %6472 = vset.pattern.permute.xlu0 0
    %6473 = vperm.xlu0 %6472, %v6467
    %v6474 = vpop.permute.xlu0 %6473
    %v6476 = vmul.f32 %v6432, %v6470
    %v6477 = vmul.f32 %v6433, %v6474
    %v6478 = vpack.c.bf16 %v6476, %v6476
    %v6479 = vpack.c.bf16 %v6477, %v6477
    %s6480 = scalar_lea.vmem [#allocation5], 128
    %v6481 = vld [vmem:[%s6480] sm:$0xf]
    %v6482 = vld [vmem:[%s6480 + $0x4] sm:$0xf]
    %v6483 = vld [vmem:[%s6480 + $0x8] sm:$0xf]
    %v6484 = vld [vmem:[%s6480 + $0xc] sm:$0x7]
    %v6487 = vunpack.c.l.b16 %v6478
    %v6488 = vunpack.c.l.b16 %v6479
    %v6489 = vpack.c.b16 %v6488, %v6487
    %v6494 = vunpack.c.l.b16 %v6481
    %v6495 = vunpack.c.l.b16 %v6482
    %v6496 = vunpack.c.l.b16 %v6483
    %v6497 = vunpack.c.l.b16 %v6484
    %v6498 = vpack.c.b16 %v6495, %v6494
    %v6499 = vpack.c.b16 %v6497, %v6496
    %v6502 = vsel %vm114, %v6489, 0
    %v6505 = vsel %vm118, %v6499, 0
    %6507 = vmatprep.subr.bf16.mxu0 0
    %6508 = vmatpush1.bf16.msra.mxu0 %v6498
    %6509 = vmatprep.subr.bf16.mxu0 0
    %6510 = vmatpush1.bf16.msra.mxu0 %v6505
    %6511 = vmatprep.subr.bf16.mxu0 0
    %6512 = vmatpush1.bf16.msra.mxu0 0
    %6513 = vmatprep.subr.bf16.mxu0 0
    %6514 = vmatpush1.bf16.msra.mxu0 0
    %6515 = vmatprep.subr.bf16.mxu0 0
    %6516 = vmatpush1.bf16.msra.mxu0 0
    %6517 = vmatprep.subr.bf16.mxu0 0
    %6518 = vmatpush1.bf16.msra.mxu0 0
    %6519 = vmatprep.subr.bf16.mxu0 0
    %6520 = vmatpush1.bf16.msra.mxu0 0
    %6521 = vmatprep.subr.bf16.mxu0 0
    %6522 = vmatpush1.bf16.msra.mxu0 0
    %6523 = vmatprep.subr.bf16.mxu0 0
    %6524 = vmatpush1.bf16.msra.mxu0 0
    %6525 = vmatprep.subr.bf16.mxu0 0
    %6526 = vmatpush1.bf16.msra.mxu0 0
    %6527 = vmatprep.subr.bf16.mxu0 0
    %6528 = vmatpush1.bf16.msra.mxu0 0
    %6529 = vmatprep.subr.bf16.mxu0 0
    %6530 = vmatpush1.bf16.msra.mxu0 0
    %6531 = vmatprep.subr.bf16.mxu0 0
    %6532 = vmatpush1.bf16.msra.mxu0 0
    %6533 = vmatprep.subr.bf16.mxu0 0
    %6534 = vmatpush1.bf16.msra.mxu0 0
    %6535 = vmatprep.subr.bf16.mxu0 0
    %6536 = vmatpush1.bf16.msra.mxu0 0
    %6537 = vmatprep.subr.bf16.mxu0 0
    %6538 = vmatpush1.bf16.msra.mxu0 0
    %6539 = vmatprep.mubr.bf16.mxu0 0
    %6540 = vmatmul.mubr.bf16.gmra.mrb[0].mxu0 %v6502
    %v6541 = vpop.f32.mrb[0].mxu0
    %v6542 = vadd.f32 0.0, %v6541
    %v6543 = vpop.f32.mrb[0].mxu0
    %v6544 = vpop.f32.mrb[0].mxu0
    %v6545 = vadd.f32 0.0, %v6544
    %v6546 = vpop.f32.mrb[0].mxu0
    %6547 = vdwg.mxu0
    %v6548 = vxor.u32 %v6542, 2147483648
    %v6549 = vxor.u32 %v6545, 2147483648
    %v6550 = vmul.f32 %v6548, 1.442695
    %v6551 = vpow.pop %v6550
    %v6552 = vmul.f32 %v6549, 1.442695
    %v6553 = vpow.pop %v6552
    %v6554 = vadd.f32 %v6551, 1.0
    %v6555 = vadd.f32 %v6553, 1.0
    %v6556 = vrcp.pop %v6554
    %v6557 = vmul.f32 1.0, %v6556
    %v6558 = vrcp.pop %v6555
    %v6559 = vmul.f32 1.0, %v6558
    %v6560 = vmul.f32 %v6542, %v6557
    %v6561 = vmul.f32 %v6545, %v6559
    %v6562 = vpack.c.bf16 %v6560, %v6560
    %v6563 = vpack.c.bf16 %v6561, %v6561
    %s6564 = scalar_lea.vmem [#allocation7], 128
    %v6565 = vld [vmem:[%s6564] sm:$0xf]
    %v6566 = vld [vmem:[%s6564 + $0x4] sm:$0xf]
    %v6567 = vld [vmem:[%s6564 + $0x8] sm:$0xf]
    %v6568 = vld [vmem:[%s6564 + $0xc] sm:$0x7]
    %v6571 = vunpack.c.l.b16 %v6562
    %v6572 = vunpack.c.l.b16 %v6563
    %v6573 = vpack.c.b16 %v6572, %v6571
    %v6578 = vunpack.c.l.b16 %v6565
    %v6579 = vunpack.c.l.b16 %v6566
    %v6580 = vunpack.c.l.b16 %v6567
    %v6581 = vunpack.c.l.b16 %v6568
    %v6582 = vpack.c.b16 %v6579, %v6578
    %v6583 = vpack.c.b16 %v6581, %v6580
    %v6586 = vsel %vm114, %v6573, 0
    %v6589 = vsel %vm118, %v6583, 0
    %6591 = vmatprep.subr.bf16.mxu0 0
    %6592 = vmatpush1.bf16.msra.mxu0 %v6582
    %6593 = vmatprep.subr.bf16.mxu0 0
    %6594 = vmatpush1.bf16.msra.mxu0 %v6589
    %6595 = vmatprep.subr.bf16.mxu0 0
    %6596 = vmatpush1.bf16.msra.mxu0 0
    %6597 = vmatprep.subr.bf16.mxu0 0
    %6598 = vmatpush1.bf16.msra.mxu0 0
    %6599 = vmatprep.subr.bf16.mxu0 0
    %6600 = vmatpush1.bf16.msra.mxu0 0
    %6601 = vmatprep.subr.bf16.mxu0 0
    %6602 = vmatpush1.bf16.msra.mxu0 0
    %6603 = vmatprep.subr.bf16.mxu0 0
    %6604 = vmatpush1.bf16.msra.mxu0 0
    %6605 = vmatprep.subr.bf16.mxu0 0
    %6606 = vmatpush1.bf16.msra.mxu0 0
    %6607 = vmatprep.subr.bf16.mxu0 0
    %6608 = vmatpush1.bf16.msra.mxu0 0
    %6609 = vmatprep.subr.bf16.mxu0 0
    %6610 = vmatpush1.bf16.msra.mxu0 0
    %6611 = vmatprep.subr.bf16.mxu0 0
    %6612 = vmatpush1.bf16.msra.mxu0 0
    %6613 = vmatprep.subr.bf16.mxu0 0
    %6614 = vmatpush1.bf16.msra.mxu0 0
    %6615 = vmatprep.subr.bf16.mxu0 0
    %6616 = vmatpush1.bf16.msra.mxu0 0
    %6617 = vmatprep.subr.bf16.mxu0 0
    %6618 = vmatpush1.bf16.msra.mxu0 0
    %6619 = vmatprep.subr.bf16.mxu0 0
    %6620 = vmatpush1.bf16.msra.mxu0 0
    %6621 = vmatprep.subr.bf16.mxu0 0
    %6622 = vmatpush1.bf16.msra.mxu0 0
    %6623 = vmatprep.mubr.bf16.mxu0 0
    %6624 = vmatmul.mubr.bf16.gmra.mrb[0].mxu0 %v6586
    %v6625 = vpop.f32.mrb[0].mxu0
    %v6626 = vadd.f32 %v6476, %v6625
    %v6627 = vpop.f32.mrb[0].mxu0
    %v6628 = vpop.f32.mrb[0].mxu0
    %v6629 = vadd.f32 %v6477, %v6628
    %v6630 = vpop.f32.mrb[0].mxu0
    %6631 = vdwg.mxu0
    %v6632 = vsel %vm114, %v6626, 0.0
    %6633 = vadd.xlane.f32.xlu0 %v6632
    %v6634 = vpop.xlane.xlu0 %6633
    %v6635 = vsel %vm114, %v6629, 0.0
    %6636 = vadd.xlane.f32.xlu0 %v6635
    %v6637 = vpop.xlane.xlu0 %6636
    %v6638 = vrot.slane %v6634, 4
    %v6639 = vadd.f32 %v6634, %v6638
    %v6640 = vrot.slane %v6639, 2
    %v6641 = vadd.f32 %v6639, %v6640
    %v6642 = vrot.slane %v6641, 1
    %v6643 = vadd.f32 %v6641, %v6642
    %v6644 = vrot.slane %v6637, 4
    %v6645 = vadd.f32 %v6637, %v6644
    %v6646 = vrot.slane %v6645, 2
    %v6647 = vadd.f32 %v6645, %v6646
    %v6648 = vrot.slane %v6647, 1
    %v6649 = vadd.f32 %v6647, %v6648
    %v6650 = vmul.f32 %v6643, %v81
    %v6651 = vmul.f32 %v6649, %v82
    %v6654 = vlaneseq
    %v6655 = vshrl.u32 %v6654, 7
    %v6656 = vsub.s32 0, %v6655
    %v6657 = vrot.slane %v6650, %v6656
    %v6658 = vlaneseq
    %v6659 = vshrl.u32 %v6658, 7
    %v6660 = vsub.s32 0, %v6659
    %v6661 = vrot.slane %v6651, %v6660
    %6662 = vset.pattern.permute.xlu0 0
    %6663 = vperm.xlu0 %6662, %v6657
    %v6664 = vpop.permute.xlu0 %6663
    %6666 = vset.pattern.permute.xlu0 0
    %6667 = vperm.xlu0 %6666, %v6661
    %v6668 = vpop.permute.xlu0 %6667
    %v6670 = vsub.f32 %v6626, %v6664
    %v6671 = vsub.f32 %v6629, %v6668
    %v6672 = vmul.f32 %v6670, %v6670
    %v6673 = vmul.f32 %v6671, %v6671
    %v6674 = vsel %vm114, %v6672, 0.0
    %6675 = vadd.xlane.f32.xlu0 %v6674
    %v6676 = vpop.xlane.xlu0 %6675
    %v6677 = vsel %vm114, %v6673, 0.0
    %6678 = vadd.xlane.f32.xlu0 %v6677
    %v6679 = vpop.xlane.xlu0 %6678
    %v6680 = vrot.slane %v6676, 4
    %v6681 = vadd.f32 %v6676, %v6680
    %v6682 = vrot.slane %v6681, 2
    %v6683 = vadd.f32 %v6681, %v6682
    %v6684 = vrot.slane %v6683, 1
    %v6685 = vadd.f32 %v6683, %v6684
    %v6686 = vrot.slane %v6679, 4
    %v6687 = vadd.f32 %v6679, %v6686
    %v6688 = vrot.slane %v6687, 2
    %v6689 = vadd.f32 %v6687, %v6688
    %v6690 = vrot.slane %v6689, 1
    %v6691 = vadd.f32 %v6689, %v6690
    %v6692 = vrsqrt.pop %v6685
    %v6693 = vrsqrt.pop %v6691
    %v6694 = vmul.f32 %v79, %v6692
    %v6695 = vmul.f32 %v80, %v6693
    %v6698 = vlaneseq
    %v6699 = vshrl.u32 %v6698, 7
    %v6700 = vsub.s32 0, %v6699
    %v6701 = vrot.slane %v6694, %v6700
    %v6702 = vlaneseq
    %v6703 = vshrl.u32 %v6702, 7
    %v6704 = vsub.s32 0, %v6703
    %v6705 = vrot.slane %v6695, %v6704
    %6706 = vset.pattern.permute.xlu0 0
    %6707 = vperm.xlu0 %6706, %v6701
    %v6708 = vpop.permute.xlu0 %6707
    %6710 = vset.pattern.permute.xlu0 0
    %6711 = vperm.xlu0 %6710, %v6705
    %v6712 = vpop.permute.xlu0 %6711
    %v6714 = vmul.f32 %v6670, %v6708
    %v6715 = vmul.f32 %v6671, %v6712
    %v6716 = vpack.c.bf16 %v6714, %v6714
    %v6717 = vpack.c.bf16 %v6715, %v6715
    %s6718 = scalar_lea.vmem [#allocation2], 144
    %v6719 = vld [vmem:[%s6718] sm:$0xf]
    %v6720 = vld [vmem:[%s6718 + $0x4] sm:$0xf]
    %v6721 = vld [vmem:[%s6718 + $0x8] sm:$0xf]
    %v6722 = vld [vmem:[%s6718 + $0xc] sm:$0x7]
    %v6725 = vunpack.c.l.b16 %v6716
    %v6726 = vunpack.c.l.b16 %v6717
    %v6727 = vpack.c.b16 %v6726, %v6725
    %v6732 = vunpack.c.l.b16 %v6719
    %v6733 = vunpack.c.l.b16 %v6720
    %v6734 = vunpack.c.l.b16 %v6721
    %v6735 = vunpack.c.l.b16 %v6722
    %v6736 = vpack.c.b16 %v6733, %v6732
    %v6737 = vpack.c.b16 %v6735, %v6734
    %v6740 = vsel %vm114, %v6727, 0
    %v6743 = vsel %vm118, %v6737, 0
    %6745 = vmatprep.subr.bf16.mxu0 0
    %6746 = vmatpush1.bf16.msra.mxu0 %v6736
    %6747 = vmatprep.subr.bf16.mxu0 0
    %6748 = vmatpush1.bf16.msra.mxu0 %v6743
    %6749 = vmatprep.subr.bf16.mxu0 0
    %6750 = vmatpush1.bf16.msra.mxu0 0
    %6751 = vmatprep.subr.bf16.mxu0 0
    %6752 = vmatpush1.bf16.msra.mxu0 0
    %6753 = vmatprep.subr.bf16.mxu0 0
    %6754 = vmatpush1.bf16.msra.mxu0 0
    %6755 = vmatprep.subr.bf16.mxu0 0
    %6756 = vmatpush1.bf16.msra.mxu0 0
    %6757 = vmatprep.subr.bf16.mxu0 0
    %6758 = vmatpush1.bf16.msra.mxu0 0
    %6759 = vmatprep.subr.bf16.mxu0 0
    %6760 = vmatpush1.bf16.msra.mxu0 0
    %6761 = vmatprep.subr.bf16.mxu0 0
    %6762 = vmatpush1.bf16.msra.mxu0 0
    %6763 = vmatprep.subr.bf16.mxu0 0
    %6764 = vmatpush1.bf16.msra.mxu0 0
    %6765 = vmatprep.subr.bf16.mxu0 0
    %6766 = vmatpush1.bf16.msra.mxu0 0
    %6767 = vmatprep.subr.bf16.mxu0 0
    %6768 = vmatpush1.bf16.msra.mxu0 0
    %6769 = vmatprep.subr.bf16.mxu0 0
    %6770 = vmatpush1.bf16.msra.mxu0 0
    %6771 = vmatprep.subr.bf16.mxu0 0
    %6772 = vmatpush1.bf16.msra.mxu0 0
    %6773 = vmatprep.subr.bf16.mxu0 0
    %6774 = vmatpush1.bf16.msra.mxu0 0
    %6775 = vmatprep.subr.bf16.mxu0 0
    %6776 = vmatpush1.bf16.msra.mxu0 0
    %6777 = vmatprep.mubr.bf16.mxu0 0
    %6778 = vmatmul.mubr.bf16.gmra.mrb[0].mxu0 %v6740
    %v6779 = vpop.f32.mrb[0].mxu0
    %v6780 = vadd.f32 0.0, %v6779
    %v6781 = vpop.f32.mrb[0].mxu0
    %v6782 = vpop.f32.mrb[0].mxu0
    %v6783 = vadd.f32 0.0, %v6782
    %v6784 = vpop.f32.mrb[0].mxu0
    %6785 = vdwg.mxu0
    %s6786 = scalar_lea.vmem %s3, 9
    %v6787 = vld [vmem:[%s6786] sm:$0x1]
    %v6789 = vlaneseq
    %v6790 = vshrl.u32 %v6789, 7
    %v6791 = vsub.s32 0, %v6790
    %v6792 = vrot.slane %v6787, %v6791
    %v6794 = vadd.f32 %v6780, %v6792
    %v6795 = vadd.f32 %v6783, %v6792
    %v6796 = vmul.f32 %v6794, %v176
    %v6797 = vmul.f32 %v6795, %v176
    %v6798 = vmul.f32 %v6794, %v184
    %v6799 = vmul.f32 %v6795, %v184
    %v6800 = vmul.f32 %v6794, %v192
    %v6801 = vmul.f32 %v6795, %v192
    %v6802 = vpack.c.bf16 %v6798, %v6796
    %v6803 = vpack.c.bf16 %v6800, %v6800
    %v6804 = vpack.c.bf16 %v6799, %v6797
    %v6805 = vpack.c.bf16 %v6801, %v6801
    %v6806 = vpack.c.bf16 %v6780, %v6780
    %v6807 = vpack.c.bf16 %v6783, %v6783
    %6809 = vrot.lane.b32.xlu0 %v6806, 98
    %v6810 = vpop.permute.xlu0 %6809
    %v6812 = vsel %vm114, %v6802, 0
    %v6815 = vsel %vm114, %v6803, 0
    %v6818 = vsel %vm114, %v6810, 0
    %6820 = vmatprep.subr.bf16.mxu0 0
    %6821 = vmatpush1.bf16.xpose.msra.mxu0 %v6818
    %6822 = vmatprep.subr.bf16.mxu0 0
    %6823 = vmatpush1.bf16.xpose.msra.mxu0 0
    %6824 = vmatprep.subr.bf16.mxu0 0
    %6825 = vmatpush1.bf16.xpose.msra.mxu0 0
    %6826 = vmatprep.subr.bf16.mxu0 0
    %6827 = vmatpush1.bf16.xpose.msra.mxu0 0
    %6828 = vmatprep.subr.bf16.mxu0 0
    %6829 = vmatpush1.bf16.xpose.msra.mxu0 0
    %6830 = vmatprep.subr.bf16.mxu0 0
    %6831 = vmatpush1.bf16.xpose.msra.mxu0 0
    %6832 = vmatprep.subr.bf16.mxu0 0
    %6833 = vmatpush1.bf16.xpose.msra.mxu0 0
    %6834 = vmatprep.subr.bf16.mxu0 0
    %6835 = vmatpush1.bf16.xpose.msra.mxu0 0
    %6836 = vmatprep.subr.bf16.mxu0 0
    %6837 = vmatpush1.bf16.xpose.msra.mxu0 0
    %6838 = vmatprep.subr.bf16.mxu0 0
    %6839 = vmatpush1.bf16.xpose.msra.mxu0 0
    %6840 = vmatprep.subr.bf16.mxu0 0
    %6841 = vmatpush1.bf16.xpose.msra.mxu0 0
    %6842 = vmatprep.subr.bf16.mxu0 0
    %6843 = vmatpush1.bf16.xpose.msra.mxu0 0
    %6844 = vmatprep.subr.bf16.mxu0 0
    %6845 = vmatpush1.bf16.xpose.msra.mxu0 0
    %6846 = vmatprep.subr.bf16.mxu0 0
    %6847 = vmatpush1.bf16.xpose.msra.mxu0 0
    %6848 = vmatprep.subr.bf16.mxu0 0
    %6849 = vmatpush1.bf16.xpose.msra.mxu0 0
    %6850 = vmatprep.subr.bf16.mxu0 0
    %6851 = vmatpush1.bf16.xpose.msra.mxu0 0
    %6852 = vmatprep.mubr.bf16.mxu0 0
    %6853 = vmatmul.mubr.bf16.gmra.mrb[0].mxu0 %v6812
    %v6854 = vpop.f32.mrb[0].mxu0
    %v6855 = vadd.f32 0.0, %v6854
    %v6856 = vpop.f32.mrb[0].mxu0
    %v6857 = vpop.f32.mrb[0].mxu0
    %v6858 = vadd.f32 0.0, %v6857
    %v6859 = vpop.f32.mrb[0].mxu0
    %6860 = vmatprep.mubr.bf16.mxu0 0
    %6861 = vmatmul.mubr.bf16.gmra.mrb[0].mxu0 %v6815
    %v6862 = vpop.f32.mrb[0].mxu0
    %v6863 = vadd.f32 0.0, %v6862
    %v6864 = vpop.f32.mrb[0].mxu0
    %v6865 = vpop.f32.mrb[0].mxu0
    %v6866 = vpop.f32.mrb[0].mxu0
    %6867 = vdwg.mxu0
    %6869 = vrot.lane.b32.xlu0 %v6807, 98
    %v6870 = vpop.permute.xlu0 %6869
    %v6872 = vsel %vm114, %v6804, 0
    %v6875 = vsel %vm114, %v6805, 0
    %v6878 = vsel %vm114, %v6870, 0
    %6880 = vmatprep.subr.bf16.mxu0 0
    %6881 = vmatpush1.bf16.xpose.msra.mxu0 %v6878
    %6882 = vmatprep.subr.bf16.mxu0 0
    %6883 = vmatpush1.bf16.xpose.msra.mxu0 0
    %6884 = vmatprep.subr.bf16.mxu0 0
    %6885 = vmatpush1.bf16.xpose.msra.mxu0 0
    %6886 = vmatprep.subr.bf16.mxu0 0
    %6887 = vmatpush1.bf16.xpose.msra.mxu0 0
    %6888 = vmatprep.subr.bf16.mxu0 0
    %6889 = vmatpush1.bf16.xpose.msra.mxu0 0
    %6890 = vmatprep.subr.bf16.mxu0 0
    %6891 = vmatpush1.bf16.xpose.msra.mxu0 0
    %6892 = vmatprep.subr.bf16.mxu0 0
    %6893 = vmatpush1.bf16.xpose.msra.mxu0 0
    %6894 = vmatprep.subr.bf16.mxu0 0
    %6895 = vmatpush1.bf16.xpose.msra.mxu0 0
    %6896 = vmatprep.subr.bf16.mxu0 0
    %6897 = vmatpush1.bf16.xpose.msra.mxu0 0
    %6898 = vmatprep.subr.bf16.mxu0 0
    %6899 = vmatpush1.bf16.xpose.msra.mxu0 0
    %6900 = vmatprep.subr.bf16.mxu0 0
    %6901 = vmatpush1.bf16.xpose.msra.mxu0 0
    %6902 = vmatprep.subr.bf16.mxu0 0
    %6903 = vmatpush1.bf16.xpose.msra.mxu0 0
    %6904 = vmatprep.subr.bf16.mxu0 0
    %6905 = vmatpush1.bf16.xpose.msra.mxu0 0
    %6906 = vmatprep.subr.bf16.mxu0 0
    %6907 = vmatpush1.bf16.xpose.msra.mxu0 0
    %6908 = vmatprep.subr.bf16.mxu0 0
    %6909 = vmatpush1.bf16.xpose.msra.mxu0 0
    %6910 = vmatprep.subr.bf16.mxu0 0
    %6911 = vmatpush1.bf16.xpose.msra.mxu0 0
    %6912 = vmatprep.mubr.bf16.mxu0 0
    %6913 = vmatmul.mubr.bf16.gmra.mrb[0].mxu0 %v6872
    %v6914 = vpop.f32.mrb[0].mxu0
    %v6915 = vadd.f32 0.0, %v6914
    %v6916 = vpop.f32.mrb[0].mxu0
    %v6917 = vpop.f32.mrb[0].mxu0
    %v6918 = vadd.f32 0.0, %v6917
    %v6919 = vpop.f32.mrb[0].mxu0
    %6920 = vmatprep.mubr.bf16.mxu0 0
    %6921 = vmatmul.mubr.bf16.gmra.mrb[0].mxu0 %v6875
    %v6922 = vpop.f32.mrb[0].mxu0
    %v6923 = vadd.f32 0.0, %v6922
    %v6924 = vpop.f32.mrb[0].mxu0
    %v6925 = vpop.f32.mrb[0].mxu0
    %v6926 = vpop.f32.mrb[0].mxu0
    %6927 = vdwg.mxu0
    %v6928 = vsel %vm322, %v6855, -inf
    %6929 = vmax.xlane.f32.xlu0 %v6928
    %v6930 = vpop.xlane.xlu0 %6929
    %v6931 = vsel %vm322, %v6858, -inf
    %6932 = vmax.xlane.f32.xlu0 %v6931
    %v6933 = vpop.xlane.xlu0 %6932
    %v6934 = vsel %vm322, %v6863, -inf
    %6935 = vmax.xlane.f32.xlu0 %v6934
    %v6936 = vpop.xlane.xlu0 %6935
    %v6937 = vsel %vm322, %v6915, -inf
    %6938 = vmax.xlane.f32.xlu0 %v6937
    %v6939 = vpop.xlane.xlu0 %6938
    %v6940 = vsel %vm322, %v6918, -inf
    %6941 = vmax.xlane.f32.xlu0 %v6940
    %v6942 = vpop.xlane.xlu0 %6941
    %v6943 = vsel %vm322, %v6923, -inf
    %6944 = vmax.xlane.f32.xlu0 %v6943
    %v6945 = vpop.xlane.xlu0 %6944
    %v6946 = vsub.f32 %v6855, %v6930
    %v6947 = vsub.f32 %v6858, %v6933
    %v6948 = vsub.f32 %v6863, %v6936
    %v6949 = vsub.f32 %v6915, %v6939
    %v6950 = vsub.f32 %v6918, %v6942
    %v6951 = vsub.f32 %v6923, %v6945
    %v6952 = vmul.f32 %v6946, 1.442695
    %v6953 = vpow.pop %v6952
    %v6954 = vmul.f32 %v6947, 1.442695
    %v6955 = vpow.pop %v6954
    %v6956 = vmul.f32 %v6948, 1.442695
    %v6957 = vpow.pop %v6956
    %v6958 = vmul.f32 %v6949, 1.442695
    %v6959 = vpow.pop %v6958
    %v6960 = vmul.f32 %v6950, 1.442695
    %v6961 = vpow.pop %v6960
    %v6962 = vmul.f32 %v6951, 1.442695
    %v6963 = vpow.pop %v6962
    %v6964 = vsel %vm322, %v6953, 0.0
    %6965 = vadd.xlane.f32.xlu0 %v6964
    %v6966 = vpop.xlane.xlu0 %6965
    %v6967 = vsel %vm322, %v6955, 0.0
    %6968 = vadd.xlane.f32.xlu0 %v6967
    %v6969 = vpop.xlane.xlu0 %6968
    %v6970 = vsel %vm322, %v6957, 0.0
    %6971 = vadd.xlane.f32.xlu0 %v6970
    %v6972 = vpop.xlane.xlu0 %6971
    %v6973 = vsel %vm322, %v6959, 0.0
    %6974 = vadd.xlane.f32.xlu0 %v6973
    %v6975 = vpop.xlane.xlu0 %6974
    %v6976 = vsel %vm322, %v6961, 0.0
    %6977 = vadd.xlane.f32.xlu0 %v6976
    %v6978 = vpop.xlane.xlu0 %6977
    %v6979 = vsel %vm322, %v6963, 0.0
    %6980 = vadd.xlane.f32.xlu0 %v6979
    %v6981 = vpop.xlane.xlu0 %6980
    %v6982 = vrcp.pop %v6966
    %v6983 = vrcp.pop %v6969
    %v6984 = vrcp.pop %v6972
    %v6985 = vrcp.pop %v6975
    %v6986 = vrcp.pop %v6978
    %v6987 = vrcp.pop %v6981
    %v6988 = vmul.f32 %v6953, %v6982
    %v6989 = vmul.f32 %v6955, %v6983
    %v6990 = vmul.f32 %v6957, %v6984
    %v6991 = vmul.f32 %v6959, %v6985
    %v6992 = vmul.f32 %v6961, %v6986
    %v6993 = vmul.f32 %v6963, %v6987
    %v6994 = vpack.c.bf16 %v6989, %v6988
    %v6995 = vpack.c.bf16 %v6990, %v6990
    %v6996 = vpack.c.bf16 %v6992, %v6991
    %v6997 = vpack.c.bf16 %v6993, %v6993
    %6998 = vrot.lane.b32.xlu0 %v6806, 68
    %v6999 = vpop.permute.xlu0 %6998
    %v7001 = vsel %vm322, %v6994, 0
    %v7004 = vsel %vm322, %v6995, 0
    %v7007 = vsel %vm401, %v6999, 0
    %7009 = vmatprep.subr.bf16.mxu0 0
    %7010 = vmatpush1.bf16.msra.mxu0 %v7007
    %7011 = vmatprep.subr.bf16.mxu0 0
    %7012 = vmatpush1.bf16.msra.mxu0 0
    %7013 = vmatprep.subr.bf16.mxu0 0
    %7014 = vmatpush1.bf16.msra.mxu0 0
    %7015 = vmatprep.subr.bf16.mxu0 0
    %7016 = vmatpush1.bf16.msra.mxu0 0
    %7017 = vmatprep.subr.bf16.mxu0 0
    %7018 = vmatpush1.bf16.msra.mxu0 0
    %7019 = vmatprep.subr.bf16.mxu0 0
    %7020 = vmatpush1.bf16.msra.mxu0 0
    %7021 = vmatprep.subr.bf16.mxu0 0
    %7022 = vmatpush1.bf16.msra.mxu0 0
    %7023 = vmatprep.subr.bf16.mxu0 0
    %7024 = vmatpush1.bf16.msra.mxu0 0
    %7025 = vmatprep.subr.bf16.mxu0 0
    %7026 = vmatpush1.bf16.msra.mxu0 0
    %7027 = vmatprep.subr.bf16.mxu0 0
    %7028 = vmatpush1.bf16.msra.mxu0 0
    %7029 = vmatprep.subr.bf16.mxu0 0
    %7030 = vmatpush1.bf16.msra.mxu0 0
    %7031 = vmatprep.subr.bf16.mxu0 0
    %7032 = vmatpush1.bf16.msra.mxu0 0
    %7033 = vmatprep.subr.bf16.mxu0 0
    %7034 = vmatpush1.bf16.msra.mxu0 0
    %7035 = vmatprep.subr.bf16.mxu0 0
    %7036 = vmatpush1.bf16.msra.mxu0 0
    %7037 = vmatprep.subr.bf16.mxu0 0
    %7038 = vmatpush1.bf16.msra.mxu0 0
    %7039 = vmatprep.subr.bf16.mxu0 0
    %7040 = vmatpush1.bf16.msra.mxu0 0
    %7041 = vmatprep.mubr.bf16.mxu0 0
    %7042 = vmatmul.mubr.bf16.gmra.mrb[0].mxu0 %v7001
    %v7043 = vpop.f32.mrb[0].mxu0
    %v7044 = vadd.f32 0.0, %v7043
    %v7045 = vpop.f32.mrb[0].mxu0
    %v7046 = vpop.f32.mrb[0].mxu0
    %v7047 = vadd.f32 0.0, %v7046
    %v7048 = vpop.f32.mrb[0].mxu0
    %7049 = vmatprep.mubr.bf16.mxu0 0
    %7050 = vmatmul.mubr.bf16.gmra.mrb[0].mxu0 %v7004
    %v7051 = vpop.f32.mrb[0].mxu0
    %v7052 = vadd.f32 0.0, %v7051
    %v7053 = vpop.f32.mrb[0].mxu0
    %v7054 = vpop.f32.mrb[0].mxu0
    %v7055 = vpop.f32.mrb[0].mxu0
    %7056 = vdwg.mxu0
    %7057 = vrot.lane.b32.xlu0 %v6807, 68
    %v7058 = vpop.permute.xlu0 %7057
    %v7060 = vsel %vm322, %v6996, 0
    %v7063 = vsel %vm322, %v6997, 0
    %v7066 = vsel %vm401, %v7058, 0
    %7068 = vmatprep.subr.bf16.mxu0 0
    %7069 = vmatpush1.bf16.msra.mxu0 %v7066
    %7070 = vmatprep.subr.bf16.mxu0 0
    %7071 = vmatpush1.bf16.msra.mxu0 0
    %7072 = vmatprep.subr.bf16.mxu0 0
    %7073 = vmatpush1.bf16.msra.mxu0 0
    %7074 = vmatprep.subr.bf16.mxu0 0
    %7075 = vmatpush1.bf16.msra.mxu0 0
    %7076 = vmatprep.subr.bf16.mxu0 0
    %7077 = vmatpush1.bf16.msra.mxu0 0
    %7078 = vmatprep.subr.bf16.mxu0 0
    %7079 = vmatpush1.bf16.msra.mxu0 0
    %7080 = vmatprep.subr.bf16.mxu0 0
    %7081 = vmatpush1.bf16.msra.mxu0 0
    %7082 = vmatprep.subr.bf16.mxu0 0
    %7083 = vmatpush1.bf16.msra.mxu0 0
    %7084 = vmatprep.subr.bf16.mxu0 0
    %7085 = vmatpush1.bf16.msra.mxu0 0
    %7086 = vmatprep.subr.bf16.mxu0 0
    %7087 = vmatpush1.bf16.msra.mxu0 0
    %7088 = vmatprep.subr.bf16.mxu0 0
    %7089 = vmatpush1.bf16.msra.mxu0 0
    %7090 = vmatprep.subr.bf16.mxu0 0
    %7091 = vmatpush1.bf16.msra.mxu0 0
    %7092 = vmatprep.subr.bf16.mxu0 0
    %7093 = vmatpush1.bf16.msra.mxu0 0
    %7094 = vmatprep.subr.bf16.mxu0 0
    %7095 = vmatpush1.bf16.msra.mxu0 0
    %7096 = vmatprep.subr.bf16.mxu0 0
    %7097 = vmatpush1.bf16.msra.mxu0 0
    %7098 = vmatprep.subr.bf16.mxu0 0
    %7099 = vmatpush1.bf16.msra.mxu0 0
    %7100 = vmatprep.mubr.bf16.mxu0 0
    %7101 = vmatmul.mubr.bf16.gmra.mrb[0].mxu0 %v7060
    %v7102 = vpop.f32.mrb[0].mxu0
    %v7103 = vadd.f32 0.0, %v7102
    %v7104 = vpop.f32.mrb[0].mxu0
    %v7105 = vpop.f32.mrb[0].mxu0
    %v7106 = vadd.f32 0.0, %v7105
    %v7107 = vpop.f32.mrb[0].mxu0
    %7108 = vmatprep.mubr.bf16.mxu0 0
    %7109 = vmatmul.mubr.bf16.gmra.mrb[0].mxu0 %v7063
    %v7110 = vpop.f32.mrb[0].mxu0
    %v7111 = vadd.f32 0.0, %v7110
    %v7112 = vpop.f32.mrb[0].mxu0
    %v7113 = vpop.f32.mrb[0].mxu0
    %v7114 = vpop.f32.mrb[0].mxu0
    %7115 = vdwg.mxu0
    %v7116 = vmul.f32 %v7044, %v176
    %v7117 = vmul.f32 %v7103, %v176
    %v7118 = vmul.f32 %v7047, %v184
    %v7119 = vmul.f32 %v7106, %v184
    %v7120 = vadd.f32 %v7116, %v7118
    %v7121 = vadd.f32 %v7117, %v7119
    %v7122 = vmul.f32 %v7052, %v192
    %v7123 = vmul.f32 %v7111, %v192
    %v7124 = vadd.f32 %v7120, %v7122
    %v7125 = vadd.f32 %v7121, %v7123
    %v7126 = vadd.f32 %v7124, %v6714
    %v7127 = vadd.f32 %v7125, %v6715
    %v7128 = vsel %vm114, %v7126, 0.0
    %7129 = vadd.xlane.f32.xlu0 %v7128
    %v7130 = vpop.xlane.xlu0 %7129
    %v7131 = vsel %vm114, %v7127, 0.0
    %7132 = vadd.xlane.f32.xlu0 %v7131
    %v7133 = vpop.xlane.xlu0 %7132
    %v7134 = vrot.slane %v7130, 4
    %v7135 = vadd.f32 %v7130, %v7134
    %v7136 = vrot.slane %v7135, 2
    %v7137 = vadd.f32 %v7135, %v7136
    %v7138 = vrot.slane %v7137, 1
    %v7139 = vadd.f32 %v7137, %v7138
    %v7140 = vrot.slane %v7133, 4
    %v7141 = vadd.f32 %v7133, %v7140
    %v7142 = vrot.slane %v7141, 2
    %v7143 = vadd.f32 %v7141, %v7142
    %v7144 = vrot.slane %v7143, 1
    %v7145 = vadd.f32 %v7143, %v7144
    %v7146 = vmul.f32 %v7139, %v81
    %v7147 = vmul.f32 %v7145, %v82
    %v7150 = vlaneseq
    %v7151 = vshrl.u32 %v7150, 7
    %v7152 = vsub.s32 0, %v7151
    %v7153 = vrot.slane %v7146, %v7152
    %v7154 = vlaneseq
    %v7155 = vshrl.u32 %v7154, 7
    %v7156 = vsub.s32 0, %v7155
    %v7157 = vrot.slane %v7147, %v7156
    %7158 = vset.pattern.permute.xlu0 0
    %7159 = vperm.xlu0 %7158, %v7153
    %v7160 = vpop.permute.xlu0 %7159
    %7162 = vset.pattern.permute.xlu0 0
    %7163 = vperm.xlu0 %7162, %v7157
    %v7164 = vpop.permute.xlu0 %7163
    %v7166 = vsub.f32 %v7126, %v7160
    %v7167 = vsub.f32 %v7127, %v7164
    %v7168 = vmul.f32 %v7166, %v7166
    %v7169 = vmul.f32 %v7167, %v7167
    %v7170 = vsel %vm114, %v7168, 0.0
    %7171 = vadd.xlane.f32.xlu0 %v7170
    %v7172 = vpop.xlane.xlu0 %7171
    %v7173 = vsel %vm114, %v7169, 0.0
    %7174 = vadd.xlane.f32.xlu0 %v7173
    %v7175 = vpop.xlane.xlu0 %7174
    %v7176 = vrot.slane %v7172, 4
    %v7177 = vadd.f32 %v7172, %v7176
    %v7178 = vrot.slane %v7177, 2
    %v7179 = vadd.f32 %v7177, %v7178
    %v7180 = vrot.slane %v7179, 1
    %v7181 = vadd.f32 %v7179, %v7180
    %v7182 = vrot.slane %v7175, 4
    %v7183 = vadd.f32 %v7175, %v7182
    %v7184 = vrot.slane %v7183, 2
    %v7185 = vadd.f32 %v7183, %v7184
    %v7186 = vrot.slane %v7185, 1
    %v7187 = vadd.f32 %v7185, %v7186
    %v7188 = vrsqrt.pop %v7181
    %v7189 = vrsqrt.pop %v7187
    %v7190 = vmul.f32 %v79, %v7188
    %v7191 = vmul.f32 %v80, %v7189
    %v7194 = vlaneseq
    %v7195 = vshrl.u32 %v7194, 7
    %v7196 = vsub.s32 0, %v7195
    %v7197 = vrot.slane %v7190, %v7196
    %v7198 = vlaneseq
    %v7199 = vshrl.u32 %v7198, 7
    %v7200 = vsub.s32 0, %v7199
    %v7201 = vrot.slane %v7191, %v7200
    %7202 = vset.pattern.permute.xlu0 0
    %7203 = vperm.xlu0 %7202, %v7197
    %v7204 = vpop.permute.xlu0 %7203
    %7206 = vset.pattern.permute.xlu0 0
    %7207 = vperm.xlu0 %7206, %v7201
    %v7208 = vpop.permute.xlu0 %7207
    %v7210 = vmul.f32 %v7166, %v7204
    %v7211 = vmul.f32 %v7167, %v7208
    %v7212 = vpack.c.bf16 %v7210, %v7210
    %v7213 = vpack.c.bf16 %v7211, %v7211
    %s7214 = scalar_lea.vmem [#allocation5], 144
    %v7215 = vld [vmem:[%s7214] sm:$0xf]
    %v7216 = vld [vmem:[%s7214 + $0x4] sm:$0xf]
    %v7217 = vld [vmem:[%s7214 + $0x8] sm:$0xf]
    %v7218 = vld [vmem:[%s7214 + $0xc] sm:$0x7]
    %v7221 = vunpack.c.l.b16 %v7212
    %v7222 = vunpack.c.l.b16 %v7213
    %v7223 = vpack.c.b16 %v7222, %v7221
    %v7228 = vunpack.c.l.b16 %v7215
    %v7229 = vunpack.c.l.b16 %v7216
    %v7230 = vunpack.c.l.b16 %v7217
    %v7231 = vunpack.c.l.b16 %v7218
    %v7232 = vpack.c.b16 %v7229, %v7228
    %v7233 = vpack.c.b16 %v7231, %v7230
    %v7236 = vsel %vm114, %v7223, 0
    %v7239 = vsel %vm118, %v7233, 0
    %7241 = vmatprep.subr.bf16.mxu0 0
    %7242 = vmatpush1.bf16.msra.mxu0 %v7232
    %7243 = vmatprep.subr.bf16.mxu0 0
    %7244 = vmatpush1.bf16.msra.mxu0 %v7239
    %7245 = vmatprep.subr.bf16.mxu0 0
    %7246 = vmatpush1.bf16.msra.mxu0 0
    %7247 = vmatprep.subr.bf16.mxu0 0
    %7248 = vmatpush1.bf16.msra.mxu0 0
    %7249 = vmatprep.subr.bf16.mxu0 0
    %7250 = vmatpush1.bf16.msra.mxu0 0
    %7251 = vmatprep.subr.bf16.mxu0 0
    %7252 = vmatpush1.bf16.msra.mxu0 0
    %7253 = vmatprep.subr.bf16.mxu0 0
    %7254 = vmatpush1.bf16.msra.mxu0 0
    %7255 = vmatprep.subr.bf16.mxu0 0
    %7256 = vmatpush1.bf16.msra.mxu0 0
    %7257 = vmatprep.subr.bf16.mxu0 0
    %7258 = vmatpush1.bf16.msra.mxu0 0
    %7259 = vmatprep.subr.bf16.mxu0 0
    %7260 = vmatpush1.bf16.msra.mxu0 0
    %7261 = vmatprep.subr.bf16.mxu0 0
    %7262 = vmatpush1.bf16.msra.mxu0 0
    %7263 = vmatprep.subr.bf16.mxu0 0
    %7264 = vmatpush1.bf16.msra.mxu0 0
    %7265 = vmatprep.subr.bf16.mxu0 0
    %7266 = vmatpush1.bf16.msra.mxu0 0
    %7267 = vmatprep.subr.bf16.mxu0 0
    %7268 = vmatpush1.bf16.msra.mxu0 0
    %7269 = vmatprep.subr.bf16.mxu0 0
    %7270 = vmatpush1.bf16.msra.mxu0 0
    %7271 = vmatprep.subr.bf16.mxu0 0
    %7272 = vmatpush1.bf16.msra.mxu0 0
    %7273 = vmatprep.mubr.bf16.mxu0 0
    %7274 = vmatmul.mubr.bf16.gmra.mrb[0].mxu0 %v7236
    %v7275 = vpop.f32.mrb[0].mxu0
    %v7276 = vadd.f32 0.0, %v7275
    %v7277 = vpop.f32.mrb[0].mxu0
    %v7278 = vpop.f32.mrb[0].mxu0
    %v7279 = vadd.f32 0.0, %v7278
    %v7280 = vpop.f32.mrb[0].mxu0
    %7281 = vdwg.mxu0
    %v7282 = vxor.u32 %v7276, 2147483648
    %v7283 = vxor.u32 %v7279, 2147483648
    %v7284 = vmul.f32 %v7282, 1.442695
    %v7285 = vpow.pop %v7284
    %v7286 = vmul.f32 %v7283, 1.442695
    %v7287 = vpow.pop %v7286
    %v7288 = vadd.f32 %v7285, 1.0
    %v7289 = vadd.f32 %v7287, 1.0
    %v7290 = vrcp.pop %v7288
    %v7291 = vmul.f32 1.0, %v7290
    %v7292 = vrcp.pop %v7289
    %v7293 = vmul.f32 1.0, %v7292
    %v7294 = vmul.f32 %v7276, %v7291
    %v7295 = vmul.f32 %v7279, %v7293
    %v7296 = vpack.c.bf16 %v7294, %v7294
    %v7297 = vpack.c.bf16 %v7295, %v7295
    %s7298 = scalar_lea.vmem [#allocation7], 144
    %v7299 = vld [vmem:[%s7298] sm:$0xf]
    %v7300 = vld [vmem:[%s7298 + $0x4] sm:$0xf]
    %v7301 = vld [vmem:[%s7298 + $0x8] sm:$0xf]
    %v7302 = vld [vmem:[%s7298 + $0xc] sm:$0x7]
    %v7305 = vunpack.c.l.b16 %v7296
    %v7306 = vunpack.c.l.b16 %v7297
    %v7307 = vpack.c.b16 %v7306, %v7305
    %v7312 = vunpack.c.l.b16 %v7299
    %v7313 = vunpack.c.l.b16 %v7300
    %v7314 = vunpack.c.l.b16 %v7301
    %v7315 = vunpack.c.l.b16 %v7302
    %v7316 = vpack.c.b16 %v7313, %v7312
    %v7317 = vpack.c.b16 %v7315, %v7314
    %v7320 = vsel %vm114, %v7307, 0
    %v7323 = vsel %vm118, %v7317, 0
    %7325 = vmatprep.subr.bf16.mxu0 0
    %7326 = vmatpush1.bf16.msra.mxu0 %v7316
    %7327 = vmatprep.subr.bf16.mxu0 0
    %7328 = vmatpush1.bf16.msra.mxu0 %v7323
    %7329 = vmatprep.subr.bf16.mxu0 0
    %7330 = vmatpush1.bf16.msra.mxu0 0
    %7331 = vmatprep.subr.bf16.mxu0 0
    %7332 = vmatpush1.bf16.msra.mxu0 0
    %7333 = vmatprep.subr.bf16.mxu0 0
    %7334 = vmatpush1.bf16.msra.mxu0 0
    %7335 = vmatprep.subr.bf16.mxu0 0
    %7336 = vmatpush1.bf16.msra.mxu0 0
    %7337 = vmatprep.subr.bf16.mxu0 0
    %7338 = vmatpush1.bf16.msra.mxu0 0
    %7339 = vmatprep.subr.bf16.mxu0 0
    %7340 = vmatpush1.bf16.msra.mxu0 0
    %7341 = vmatprep.subr.bf16.mxu0 0
    %7342 = vmatpush1.bf16.msra.mxu0 0
    %7343 = vmatprep.subr.bf16.mxu0 0
    %7344 = vmatpush1.bf16.msra.mxu0 0
    %7345 = vmatprep.subr.bf16.mxu0 0
    %7346 = vmatpush1.bf16.msra.mxu0 0
    %7347 = vmatprep.subr.bf16.mxu0 0
    %7348 = vmatpush1.bf16.msra.mxu0 0
    %7349 = vmatprep.subr.bf16.mxu0 0
    %7350 = vmatpush1.bf16.msra.mxu0 0
    %7351 = vmatprep.subr.bf16.mxu0 0
    %7352 = vmatpush1.bf16.msra.mxu0 0
    %7353 = vmatprep.subr.bf16.mxu0 0
    %7354 = vmatpush1.bf16.msra.mxu0 0
    %7355 = vmatprep.subr.bf16.mxu0 0
    %7356 = vmatpush1.bf16.msra.mxu0 0
    %7357 = vmatprep.mubr.bf16.mxu0 0
    %7358 = vmatmul.mubr.bf16.gmra.mrb[0].mxu0 %v7320
    %v7359 = vpop.f32.mrb[0].mxu0
    %v7360 = vadd.f32 %v7210, %v7359
    %v7361 = vpop.f32.mrb[0].mxu0
    %v7362 = vpop.f32.mrb[0].mxu0
    %v7363 = vadd.f32 %v7211, %v7362
    %v7364 = vpop.f32.mrb[0].mxu0
    %7365 = vdwg.mxu0
    %v7366 = vsel %vm114, %v7360, 0.0
    %7367 = vadd.xlane.f32.xlu0 %v7366
    %v7368 = vpop.xlane.xlu0 %7367
    %v7369 = vsel %vm114, %v7363, 0.0
    %7370 = vadd.xlane.f32.xlu0 %v7369
    %v7371 = vpop.xlane.xlu0 %7370
    %v7372 = vrot.slane %v7368, 4
    %v7373 = vadd.f32 %v7368, %v7372
    %v7374 = vrot.slane %v7373, 2
    %v7375 = vadd.f32 %v7373, %v7374
    %v7376 = vrot.slane %v7375, 1
    %v7377 = vadd.f32 %v7375, %v7376
    %v7378 = vrot.slane %v7371, 4
    %v7379 = vadd.f32 %v7371, %v7378
    %v7380 = vrot.slane %v7379, 2
    %v7381 = vadd.f32 %v7379, %v7380
    %v7382 = vrot.slane %v7381, 1
    %v7383 = vadd.f32 %v7381, %v7382
    %v7384 = vmul.f32 %v7377, %v81
    %v7385 = vmul.f32 %v7383, %v82
    %v7388 = vlaneseq
    %v7389 = vshrl.u32 %v7388, 7
    %v7390 = vsub.s32 0, %v7389
    %v7391 = vrot.slane %v7384, %v7390
    %v7392 = vlaneseq
    %v7393 = vshrl.u32 %v7392, 7
    %v7394 = vsub.s32 0, %v7393
    %v7395 = vrot.slane %v7385, %v7394
    %7396 = vset.pattern.permute.xlu0 0
    %7397 = vperm.xlu0 %7396, %v7391
    %v7398 = vpop.permute.xlu0 %7397
    %7400 = vset.pattern.permute.xlu0 0
    %7401 = vperm.xlu0 %7400, %v7395
    %v7402 = vpop.permute.xlu0 %7401
    %v7404 = vsub.f32 %v7360, %v7398
    %v7405 = vsub.f32 %v7363, %v7402
    %v7406 = vmul.f32 %v7404, %v7404
    %v7407 = vmul.f32 %v7405, %v7405
    %v7408 = vsel %vm114, %v7406, 0.0
    %7409 = vadd.xlane.f32.xlu0 %v7408
    %v7410 = vpop.xlane.xlu0 %7409
    %v7411 = vsel %vm114, %v7407, 0.0
    %7412 = vadd.xlane.f32.xlu0 %v7411
    %v7413 = vpop.xlane.xlu0 %7412
    %v7414 = vrot.slane %v7410, 4
    %v7415 = vadd.f32 %v7410, %v7414
    %v7416 = vrot.slane %v7415, 2
    %v7417 = vadd.f32 %v7415, %v7416
    %v7418 = vrot.slane %v7417, 1
    %v7419 = vadd.f32 %v7417, %v7418
    %v7420 = vrot.slane %v7413, 4
    %v7421 = vadd.f32 %v7413, %v7420
    %v7422 = vrot.slane %v7421, 2
    %v7423 = vadd.f32 %v7421, %v7422
    %v7424 = vrot.slane %v7423, 1
    %v7425 = vadd.f32 %v7423, %v7424
    %v7426 = vrsqrt.pop %v7419
    %v7427 = vrsqrt.pop %v7425
    %v7428 = vmul.f32 %v79, %v7426
    %v7429 = vmul.f32 %v80, %v7427
    %v7432 = vlaneseq
    %v7433 = vshrl.u32 %v7432, 7
    %v7434 = vsub.s32 0, %v7433
    %v7435 = vrot.slane %v7428, %v7434
    %v7436 = vlaneseq
    %v7437 = vshrl.u32 %v7436, 7
    %v7438 = vsub.s32 0, %v7437
    %v7439 = vrot.slane %v7429, %v7438
    %7440 = vset.pattern.permute.xlu0 0
    %7441 = vperm.xlu0 %7440, %v7435
    %v7442 = vpop.permute.xlu0 %7441
    %7444 = vset.pattern.permute.xlu0 0
    %7445 = vperm.xlu0 %7444, %v7439
    %v7446 = vpop.permute.xlu0 %7445
    %v7448 = vmul.f32 %v7404, %v7442
    %v7449 = vmul.f32 %v7405, %v7446
    %v7450 = vsel %vm114, %v7448, 0.0
    %v7451 = vrot.slane %v7450, 4
    %v7452 = vadd.f32 %v7450, %v7451
    %v7453 = vrot.slane %v7452, 2
    %v7454 = vadd.f32 %v7452, %v7453
    %v7455 = vrot.slane %v7454, 1
    %v7456 = vadd.f32 %v7454, %v7455
    %v7457 = vsel %vm114, %v7449, 0.0
    %v7458 = vrot.slane %v7457, 4
    %v7459 = vadd.f32 %v7457, %v7458
    %v7460 = vrot.slane %v7459, 2
    %v7461 = vadd.f32 %v7459, %v7460
    %v7462 = vrot.slane %v7461, 1
    %v7463 = vadd.f32 %v7461, %v7462
    %7465 = vset.pattern.permute.xlu0 0
    %7466 = vperm.xlu0 %7465, %v85
    %v7467 = vpop.permute.xlu0 %7466
    %v7469 = vlaneseq
    %v7470 = vshrl.u32 %v7469, 7
    %v7471 = vsub.s32 0, %v7470
    %v7472 = vrot.slane %v7467, %v7471
    %7474 = vset.pattern.permute.xlu0 0
    %7475 = vperm.xlu0 %7474, %v86
    %v7476 = vpop.permute.xlu0 %7475
    %v7478 = vlaneseq
    %v7479 = vshrl.u32 %v7478, 7
    %v7480 = vsub.s32 0, %v7479
    %v7481 = vrot.slane %v7476, %v7480
    %v7482 = vmul.f32 %v7456, %v7472
    %v7483 = vmul.f32 %v7463, %v7481
    %v7484 = vpack.c.bf16 %v7482, %v7482
    %v7485 = vpack.c.bf16 %v7483, %v7483
    %v7486 = vld [vmem:[%s6] sm:$0xff]
    %v7487 = vld [vmem:[%s6 + $0x8] sm:$0xff]
    %v7488 = vld [vmem:[%s6 + $0x10] sm:$0xff]
    %v7489 = vld [vmem:[%s6 + $0x18] sm:$0x77]
    %v7492 = vunpack.c.l.b16 %v7484
    %v7493 = vunpack.c.l.b16 %v7485
    %vm7494 = vcmask 1041409
    %v7495 = vsel %vm7494, %v7493, %v7492
    %v7496 = vpack.c.b16 %v7495, %v7495
    %v7501 = vunpack.c.l.b16 %v7486
    %v7502 = vunpack.c.h.b16 %v7486
    %v7503 = vunpack.c.l.b16 %v7487
    %v7504 = vunpack.c.h.b16 %v7487
    %v7505 = vunpack.c.l.b16 %v7488
    %v7506 = vunpack.c.h.b16 %v7488
    %v7507 = vunpack.c.l.b16 %v7489
    %v7508 = vunpack.c.h.b16 %v7489
    %v7509 = vpack.c.b16 %v7503, %v7501
    %v7510 = vpack.c.b16 %v7504, %v7502
    %v7511 = vpack.c.b16 %v7507, %v7505
    %v7512 = vpack.c.b16 %v7508, %v7506
    %v7516 = vsel %vm114, %v7496, 0
    %v7519 = vsel %vm118, %v7511, 0
    %v7522 = vsel %vm118, %v7512, 0
    %7524 = vmatprep.subr.bf16.mxu0 %v7510
    %7525 = vmatpush1.bf16.msra.mxu0 %v7509
    %7526 = vmatprep.subr.bf16.mxu0 %v7522
    %7527 = vmatpush1.bf16.msra.mxu0 %v7519
    %7528 = vmatprep.subr.bf16.mxu0 0
    %7529 = vmatpush1.bf16.msra.mxu0 0
    %7530 = vmatprep.subr.bf16.mxu0 0
    %7531 = vmatpush1.bf16.msra.mxu0 0
    %7532 = vmatprep.subr.bf16.mxu0 0
    %7533 = vmatpush1.bf16.msra.mxu0 0
    %7534 = vmatprep.subr.bf16.mxu0 0
    %7535 = vmatpush1.bf16.msra.mxu0 0
    %7536 = vmatprep.subr.bf16.mxu0 0
    %7537 = vmatpush1.bf16.msra.mxu0 0
    %7538 = vmatprep.subr.bf16.mxu0 0
    %7539 = vmatpush1.bf16.msra.mxu0 0
    %7540 = vmatprep.subr.bf16.mxu0 0
    %7541 = vmatpush1.bf16.msra.mxu0 0
    %7542 = vmatprep.subr.bf16.mxu0 0
    %7543 = vmatpush1.bf16.msra.mxu0 0
    %7544 = vmatprep.subr.bf16.mxu0 0
    %7545 = vmatpush1.bf16.msra.mxu0 0
    %7546 = vmatprep.subr.bf16.mxu0 0
    %7547 = vmatpush1.bf16.msra.mxu0 0
    %7548 = vmatprep.subr.bf16.mxu0 0
    %7549 = vmatpush1.bf16.msra.mxu0 0
    %7550 = vmatprep.subr.bf16.mxu0 0
    %7551 = vmatpush1.bf16.msra.mxu0 0
    %7552 = vmatprep.subr.bf16.mxu0 0
    %7553 = vmatpush1.bf16.msra.mxu0 0
    %7554 = vmatprep.subr.bf16.mxu0 0
    %7555 = vmatpush1.bf16.msra.mxu0 0
    %7556 = vmatprep.mubr.bf16.mxu0 0
    %7557 = vmatmul.mubr.bf16.gmra.mrb[0].mxu0 %v7516
    %v7558 = vpop.f32.mrb[0].mxu0
    %v7559 = vadd.f32 0.0, %v7558
    %v7560 = vpop.f32.mrb[0].mxu0
    %v7561 = vadd.f32 0.0, %v7560
    %v7562 = vpop.f32.mrb[0].mxu0
    %v7563 = vpop.f32.mrb[0].mxu0
    %7564 = vdwg.mxu0
    %v7567 = vcombine.low %v7559, %v7561
    %v7569 = vunpack.c.l.s4 1966171168
    %v7570 = vunpack.c.0.s8 %v7569
    %v7571 = vlaneseq
    %v7572 = vshrl.u32 %v7571, 7
    %v7573 = vsub.s32 %v7570, %v7572
    %v7574 = vrot.slane %v7567, %v7573
    %v7575 = vcombine.high %v7574, %v7574
    %v7577 = vunpack.c.l.s4 1966171168
    %v7578 = vunpack.c.0.s8 %v7577
    %v7579 = vlaneseq
    %v7580 = vshrl.u32 %v7579, 7
    %v7581 = vsub.s32 %v7578, %v7580
    %v7582 = vrot.slane %v7574, %v7581
    %v7584 = vunpack.c.l.s4 1966171168
    %v7585 = vunpack.c.0.s8 %v7584
    %v7586 = vlaneseq
    %v7587 = vshrl.u32 %v7586, 7
    %v7588 = vsub.s32 %v7585, %v7587
    %v7589 = vrot.slane %v7575, %v7588
    %v7592 = vxor.u32 %v7582, 2147483648
    %v7593 = vxor.u32 %v7589, 2147483648
    %v7594 = vmul.f32 %v7592, 1.442695
    %v7595 = vpow.pop %v7594
    %v7596 = vmul.f32 %v7593, 1.442695
    %v7597 = vpow.pop %v7596
    %v7598 = vadd.f32 %v7595, 1.0
    %v7599 = vadd.f32 %v7597, 1.0
    %v7600 = vrcp.pop %v7598
    %v7601 = vmul.f32 1.0, %v7600
    %v7602 = vrcp.pop %v7599
    %v7603 = vmul.f32 1.0, %v7602
    %v7604 = vmul.f32 %v7582, %v7601
    %v7605 = vmul.f32 %v7589, %v7603
    %v7608 = vlaneseq
    %v7609 = vshrl.u32 %v7608, 7
    %v7610 = vsub.s32 0, %v7609
    %v7611 = vrot.slane %v7604, %v7610
    %v7612 = vlaneseq
    %v7613 = vshrl.u32 %v7612, 7
    %v7614 = vsub.s32 1, %v7613
    %v7615 = vrot.slane %v7604, %v7614
    %v7616 = vlaneseq
    %v7617 = vshrl.u32 %v7616, 7
    %v7618 = vsub.s32 0, %v7617
    %v7619 = vrot.slane %v7605, %v7618
    %v7620 = vlaneseq
    %v7621 = vshrl.u32 %v7620, 7
    %v7622 = vsub.s32 1, %v7621
    %v7623 = vrot.slane %v7605, %v7622
    %v7628 = vpack.c.bf16 %v7611, %v7611
    %v7629 = vpack.c.bf16 %v7615, %v7615
    %v7630 = vpack.c.bf16 %v7619, %v7619
    %v7631 = vpack.c.bf16 %v7623, %v7623
    %v7632 = vld [vmem:[%s7] sm:$0xf]
    %v7633 = vld [vmem:[%s7 + $0x4] sm:$0xf]
    %v7634 = vld [vmem:[%s7 + $0x8] sm:$0xf]
    %v7635 = vld [vmem:[%s7 + $0xc] sm:$0xf]
    %v7636 = vld [vmem:[%s7 + $0x10] sm:$0xf]
    %v7637 = vld [vmem:[%s7 + $0x14] sm:$0xf]
    %v7638 = vld [vmem:[%s7 + $0x18] sm:$0xf]
    %v7639 = vld [vmem:[%s7 + $0x1c] sm:$0xf]
    %v7640 = vld [vmem:[%s7 + $0x20] sm:$0xf]
    %v7641 = vld [vmem:[%s7 + $0x24] sm:$0xf]
    %v7642 = vld [vmem:[%s7 + $0x28] sm:$0xf]
    %v7643 = vld [vmem:[%s7 + $0x2c] sm:$0xf]
    %v7644 = vld [vmem:[%s7 + $0x30] sm:$0xf]
    %v7645 = vld [vmem:[%s7 + $0x34] sm:$0xf]
    %v7646 = vld [vmem:[%s7 + $0x38] sm:$0xf]
    %v7647 = vld [vmem:[%s7 + $0x3c] sm:$0xf]
    %v7648 = vld [vmem:[%s7 + $0x40] sm:$0xf]
    %v7649 = vld [vmem:[%s7 + $0x44] sm:$0xf]
    %v7650 = vld [vmem:[%s7 + $0x48] sm:$0xf]
    %v7651 = vld [vmem:[%s7 + $0x4c] sm:$0xf]
    %v7652 = vld [vmem:[%s7 + $0x50] sm:$0xf]
    %v7653 = vld [vmem:[%s7 + $0x54] sm:$0xf]
    %v7654 = vld [vmem:[%s7 + $0x58] sm:$0xf]
    %v7655 = vld [vmem:[%s7 + $0x5c] sm:$0xf]
    %v7656 = vld [vmem:[%s7 + $0x60] sm:$0xf]
    %v7661 = vunpack.c.l.b16 %v7628
    %v7662 = vunpack.c.l.b16 %v7629
    %v7663 = vunpack.c.l.b16 %v7630
    %v7664 = vunpack.c.l.b16 %v7631
    %v7665 = vrot.slane %v7663, 7
    %v7666 = vsel %vm7494, %v7665, %v7661
    %v7667 = vrot.slane %v7664, 7
    %v7668 = vsel %vm7494, %v7667, %v7662
    %v7669 = vpack.c.b16 %v7666, %v7666
    %v7670 = vpack.c.b16 %v7668, %v7668
    %v7697 = vunpack.c.l.b16 %v7632
    %v7698 = vunpack.c.l.b16 %v7633
    %v7699 = vunpack.c.l.b16 %v7634
    %v7700 = vunpack.c.l.b16 %v7635
    %v7701 = vunpack.c.l.b16 %v7636
    %v7702 = vunpack.c.l.b16 %v7637
    %v7703 = vunpack.c.l.b16 %v7638
    %v7704 = vunpack.c.l.b16 %v7639
    %v7705 = vunpack.c.l.b16 %v7640
    %v7706 = vunpack.c.l.b16 %v7641
    %v7707 = vunpack.c.l.b16 %v7642
    %v7708 = vunpack.c.l.b16 %v7643
    %v7709 = vunpack.c.l.b16 %v7644
    %v7710 = vunpack.c.l.b16 %v7645
    %v7711 = vunpack.c.l.b16 %v7646
    %v7712 = vunpack.c.l.b16 %v7647
    %v7713 = vunpack.c.l.b16 %v7648
    %v7714 = vunpack.c.l.b16 %v7649
    %v7715 = vunpack.c.l.b16 %v7650
    %v7716 = vunpack.c.l.b16 %v7651
    %v7717 = vunpack.c.l.b16 %v7652
    %v7718 = vunpack.c.l.b16 %v7653
    %v7719 = vunpack.c.l.b16 %v7654
    %v7720 = vunpack.c.l.b16 %v7655
    %v7721 = vunpack.c.l.b16 %v7656
    %v7722 = vpack.c.b16 %v7698, %v7697
    %v7723 = vpack.c.b16 %v7700, %v7699
    %v7724 = vpack.c.b16 %v7702, %v7701
    %v7725 = vpack.c.b16 %v7704, %v7703
    %v7726 = vpack.c.b16 %v7706, %v7705
    %v7727 = vpack.c.b16 %v7708, %v7707
    %v7728 = vpack.c.b16 %v7710, %v7709
    %v7729 = vpack.c.b16 %v7712, %v7711
    %v7730 = vpack.c.b16 %v7714, %v7713
    %v7731 = vpack.c.b16 %v7716, %v7715
    %v7732 = vpack.c.b16 %v7718, %v7717
    %v7733 = vpack.c.b16 %v7720, %v7719
    %v7734 = vpack.c.b16 %v7721, %v7721
    %vm7747 = vcmask 588800
    %v7749 = vsel %vm7747, %v7670, 0
    %v7752 = vsel %vm401, %v7734, 0
    %7754 = vmatprep.subr.bf16.mxu0 0
    %7755 = vmatpush1.bf16.msra.mxu0 %v7722
    %7756 = vmatprep.subr.bf16.mxu0 0
    %7757 = vmatpush1.bf16.msra.mxu0 %v7723
    %7758 = vmatprep.subr.bf16.mxu0 0
    %7759 = vmatpush1.bf16.msra.mxu0 %v7724
    %7760 = vmatprep.subr.bf16.mxu0 0
    %7761 = vmatpush1.bf16.msra.mxu0 %v7725
    %7762 = vmatprep.subr.bf16.mxu0 0
    %7763 = vmatpush1.bf16.msra.mxu0 %v7726
    %7764 = vmatprep.subr.bf16.mxu0 0
    %7765 = vmatpush1.bf16.msra.mxu0 %v7727
    %7766 = vmatprep.subr.bf16.mxu0 0
    %7767 = vmatpush1.bf16.msra.mxu0 %v7728
    %7768 = vmatprep.subr.bf16.mxu0 0
    %7769 = vmatpush1.bf16.msra.mxu0 %v7729
    %7770 = vmatprep.subr.bf16.mxu0 0
    %7771 = vmatpush1.bf16.msra.mxu0 %v7730
    %7772 = vmatprep.subr.bf16.mxu0 0
    %7773 = vmatpush1.bf16.msra.mxu0 %v7731
    %7774 = vmatprep.subr.bf16.mxu0 0
    %7775 = vmatpush1.bf16.msra.mxu0 %v7732
    %7776 = vmatprep.subr.bf16.mxu0 0
    %7777 = vmatpush1.bf16.msra.mxu0 %v7733
    %7778 = vmatprep.subr.bf16.mxu0 0
    %7779 = vmatpush1.bf16.msra.mxu0 %v7752
    %7780 = vmatprep.subr.bf16.mxu0 0
    %7781 = vmatpush1.bf16.msra.mxu0 0
    %7782 = vmatprep.subr.bf16.mxu0 0
    %7783 = vmatpush1.bf16.msra.mxu0 0
    %7784 = vmatprep.subr.bf16.mxu0 0
    %7785 = vmatpush1.bf16.msra.mxu0 0
    %7786 = vmatprep.mubr.bf16.mxu0 %v7749
    %7787 = vmatmul.mubr.bf16.gmra.mrb[0].mxu0 %v7669
    %v7788 = vpop.f32.mrb[0].mxu0
    %v7789 = vadd.f32 0.0, %v7788
    %v7790 = vpop.f32.mrb[0].mxu0
    %v7791 = vpop.f32.mrb[0].mxu0
    %v7792 = vpop.f32.mrb[0].mxu0
    %7793 = vdwg.mxu0
    %v7796 = vunpack.c.l.s4 1966171168
    %v7797 = vunpack.c.0.s8 %v7796
    %v7798 = vlaneseq
    %v7799 = vshrl.u32 %v7798, 7
    %v7800 = vsub.s32 %v7797, %v7799
    %v7801 = vrot.slane %v7789, %v7800
    %v7802 = vcombine.high %v7801, %v7801
    %v7804 = vunpack.c.l.s4 1966171168
    %v7805 = vunpack.c.0.s8 %v7804
    %v7806 = vlaneseq
    %v7807 = vshrl.u32 %v7806, 7
    %v7808 = vsub.s32 %v7805, %v7807
    %v7809 = vrot.slane %v7801, %v7808
    %v7811 = vunpack.c.l.s4 1966171168
    %v7812 = vunpack.c.0.s8 %v7811
    %v7813 = vlaneseq
    %v7814 = vshrl.u32 %v7813, 7
    %v7815 = vsub.s32 %v7812, %v7814
    %v7816 = vrot.slane %v7802, %v7815
    %vm7819 = vcmask 24576
    %7820 = vst.msk [vmem:[#allocation8] sm:$0x1] %vm7819, %v7809
    %7821 = vst.msk [vmem:[#allocation8 + $0x1] sm:$0x1] %vm7819, %v7816
    // Predicated region
    $region50: #{transformer_forward.1} parent=1 // pred_check
      _
    $region51: #{transformer_forward.1} parent=1 // pred_check_branch
      %7823 = sbr.rel (0) target = $region53
    $region52: #{transformer_forward.1} parent=1 // pred_region
      %s7825 = ssub.s32 32, 32
      %7826 = vsyncadd [#allocation4], %s7825
      %s7827 = sshll.u32 [#allocation8], 4
      %s7828 = int_to_ptr.vmem [resolvable:$true] %s7827
      %7833 = dma.vmem_to_hbm [thread:$0]  %s7828, 32, %s9, [#allocation4], 16, 16, 1
    $region53: #{transformer_forward.1} parent=1 // pred_fallthru
      _
    // Predicated region
    $region54: #{transformer_forward.1} parent=1 // pred_check
      _
    $region55: #{transformer_forward.1} parent=1 // pred_check_branch
      %7835 = sbr.rel (0) target = $region57
    $region56: #{transformer_forward.1} parent=1 // pred_region
      %7836 = dma.done [#allocation4], 32
    $region57: #{transformer_forward.1} parent=1 // pred_fallthru
      _
    %7837 = vsyncpa [#allocation3], 1
    %7838 = vsyncpa [#allocation6], 1
    %7839 = vsyncpa [#allocation4], 1

</llo_original>
